<compile_context>
chip_gen: v7x
topology: tpu7x:2x2x1
jax: 0.10.0
libtpu: 0.0.40
codegen_flags: <defaults>
</compile_context>

<pallas_src>
import functools

import jax
import jax.numpy as jnp
from jax import lax
from jax.experimental import pallas as pl
from jax.experimental.pallas import tpu as pltpu

N_CLASSES = 104
CPAD = 128            # lane-padded classifier width
FEAT = 1920
H1 = 1024
H2 = 512


def _round_up(x, m):
    return (x + m - 1) // m * m


def model_kernel(img_ref, wstem_ref,
                 w1_ref, s1_ref, t1_ref,
                 w2_ref, s2_ref, t2_ref,
                 w3_ref, b3_ref, tgt_ref,
                 logits_ref, loss_rows_ref,
                 feat_acc,
                 *, n_actual):
    i = pl.program_id(0)          # batch tile
    k = pl.program_id(1)          # stem reduction tile (trailing, "arbitrary")
    nk = pl.num_programs(1)

    # ---- stand-in backbone stem: K-tiled bf16 matmul, f32 accumulate ----
    @pl.when(k == 0)
    def _():
        feat_acc[...] = jnp.zeros_like(feat_acc)

    feat_acc[...] += jnp.dot(img_ref[...], wstem_ref[...],
                             preferred_element_type=jnp.float32)

    # ---- head + loss once the full feature vector has been accumulated ----
    @pl.when(k == nk - 1)
    def _():
        feat = jnp.maximum(feat_acc[...], 0.0).astype(jnp.bfloat16)

        # Linear -> BN(eval, folded; bias folded into shift) -> ReLU (Dropout = id)
        h1 = jnp.dot(feat, w1_ref[...], preferred_element_type=jnp.float32)
        h1 = jnp.maximum(h1 * s1_ref[...] + t1_ref[...], 0.0).astype(jnp.bfloat16)

        h2 = jnp.dot(h1, w2_ref[...], preferred_element_type=jnp.float32)
        h2 = jnp.maximum(h2 * s2_ref[...] + t2_ref[...], 0.0).astype(jnp.bfloat16)

        # final Linear, lane-padded to 128 output columns (pad weights/bias = 0)
        logits = jnp.dot(h2, w3_ref[...],
                         preferred_element_type=jnp.float32) + b3_ref[...]
        logits_ref[...] = logits

        # ---- cross-entropy per row (padded columns masked out of the LSE) ----
        tm = logits.shape[0]
        col = lax.broadcasted_iota(jnp.int32, (tm, CPAD), 1)
        masked = jnp.where(col < N_CLASSES, logits, jnp.float32(-1e30))
        m = jnp.max(masked, axis=-1, keepdims=True)
        lse = m + jnp.log(jnp.sum(jnp.exp(masked - m), axis=-1, keepdims=True))
        tgt_logit = jnp.sum(jnp.where(col == tgt_ref[...], logits, 0.0),
                            axis=-1, keepdims=True)
        row = lax.broadcasted_iota(jnp.int32, (tm, 1), 0) + i * tm
        loss_rows_ref[...] = jnp.where(row < n_actual, lse - tgt_logit, 0.0)


def model_forward(image_nchw, targets, params, *, tk=256):
    n = image_nchw.shape[0]
    img_flat = image_nchw.reshape(n, -1)
    in_dim = img_flat.shape[1]

    # batch tiling: sublane-multiple tiles, pad rows with zeros
    tm = 128 if n >= 128 else _round_up(max(n, 1), 8)
    n_pad = _round_up(n, tm)
    nbt = n_pad // tm

    # stem K tiling: pad the feature dim to a multiple of the K tile
    tk = min(tk, _round_up(in_dim, 128))
    k_pad = _round_up(in_dim, tk)
    nk = k_pad // tk

    img = jnp.pad(img_flat.astype(jnp.bfloat16),
                  ((0, n_pad - n), (0, k_pad - in_dim)))
    tgt = jnp.pad(targets.astype(jnp.int32), (0, n_pad - n)).reshape(n_pad, 1)

    # fold BatchNorm1d(eval) into scale/shift and fold the Linear bias in too:
    #   y = (x@W + b) * scale + shift  ==  x@W * scale + (b*scale + shift)
    def fold(gamma, beta, mean, var, bias, eps=1e-5):
        scale = gamma / jnp.sqrt(var + eps)
        shift = beta - mean * scale + bias * scale
        return (scale[None, :].astype(jnp.float32),
                shift[None, :].astype(jnp.float32))

    s1, t1 = fold(params["bn1_gamma"], params["bn1_beta"],
                  params["bn1_mean"], params["bn1_var"], params["b1"])
    s2, t2 = fold(params["bn2_gamma"], params["bn2_beta"],
                  params["bn2_mean"], params["bn2_var"], params["b2"])

    # bf16 MXU operands; classifier padded to 128 lanes with zeros
    w_stem = jnp.pad(params["w_stem"],
                     ((0, k_pad - in_dim), (0, 0))).astype(jnp.bfloat16)
    w1 = params["w1"].astype(jnp.bfloat16)
    w2 = params["w2"].astype(jnp.bfloat16)
    w3 = jnp.pad(params["w3"],
                 ((0, 0), (0, CPAD - N_CLASSES))).astype(jnp.bfloat16)
    b3 = jnp.pad(params["b3"],
                 (0, CPAD - N_CLASSES))[None, :].astype(jnp.float32)

    const = lambda shape: pl.BlockSpec(shape, lambda i, k: (0, 0))
    in_specs = [
        pl.BlockSpec((tm, tk), lambda i, k: (i, k)),      # image tile
        pl.BlockSpec((tk, FEAT), lambda i, k: (k, 0)),    # stem weight K-tile
        const((FEAT, H1)), const((1, H1)), const((1, H1)),
        const((H1, H2)), const((1, H2)), const((1, H2)),
        const((H2, CPAD)), const((1, CPAD)),
        pl.BlockSpec((tm, 1), lambda i, k: (i, 0)),       # int32 targets
    ]
    out_specs = [
        pl.BlockSpec((tm, CPAD), lambda i, k: (i, 0)),    # lane-dense logits
        pl.BlockSpec((tm, 1), lambda i, k: (i, 0)),       # per-row loss
    ]

    logits_pad, loss_rows = pl.pallas_call(
        functools.partial(model_kernel, n_actual=n),
        out_shape=(jax.ShapeDtypeStruct((n_pad, CPAD), jnp.float32),
                   jax.ShapeDtypeStruct((n_pad, 1), jnp.float32)),
        grid_spec=pltpu.PrefetchScalarGridSpec(
            num_scalar_prefetch=0,
            grid=(nbt, nk),
            in_specs=in_specs,
            out_specs=out_specs,
            scratch_shapes=[pltpu.VMEM((tm, FEAT), jnp.float32)],
        ),
        compiler_params=pltpu.CompilerParams(
            dimension_semantics=("parallel", "arbitrary"),
            vmem_limit_bytes=48 * 1024 * 1024,   # fits v7x's 64 MiB physical VMEM
        ),
    )(img, w_stem, w1, s1, t1, w2, s2, t2, w3, b3, tgt)

    logits = logits_pad[:n, :N_CLASSES]
    loss = jnp.sum(loss_rows) / n
    return logits, loss


def init_params(key, in_dim):
    ks = jax.random.split(key, 8)
    return {
        # stand-in stem projection (deterministic init)
        "w_stem": jax.random.normal(ks[0], (in_dim, FEAT), jnp.float32) * 0.02,
        # fc head (matches nn.Linear shapes, stored as (in, out) for x @ W)
        "w1": jax.random.normal(ks[1], (FEAT, H1), jnp.float32) * 0.02,
        "b1": jax.random.normal(ks[2], (H1,), jnp.float32) * 0.01,
        "w2": jax.random.normal(ks[3], (H1, H2), jnp.float32) * 0.02,
        "b2": jax.random.normal(ks[4], (H2,), jnp.float32) * 0.01,
        "w3": jax.random.normal(ks[5], (H2, N_CLASSES), jnp.float32) * 0.02,
        "b3": jax.random.normal(ks[6], (N_CLASSES,), jnp.float32) * 0.01,
        # BatchNorm1d params / running stats (fresh-init values)
        "bn1_gamma": jnp.ones((H1,), jnp.float32),
        "bn1_beta": jnp.zeros((H1,), jnp.float32),
        "bn1_mean": jnp.zeros((H1,), jnp.float32),
        "bn1_var": jnp.ones((H1,), jnp.float32),
        "bn2_gamma": jnp.ones((H2,), jnp.float32),
        "bn2_beta": jnp.zeros((H2,), jnp.float32),
        "bn2_mean": jnp.zeros((H2,), jnp.float32),
        "bn2_var": jnp.ones((H2,), jnp.float32),
    }


if __name__ == "__main__":
    key = jax.random.PRNGKey(0)
    k_img, k_tgt, k_par = jax.random.split(key, 3)

    N, C, H, W = 2, 3, 16, 16
    image = jax.random.normal(k_img, (N, C, H, W), jnp.float32)      # NCHW
    targets = jax.random.randint(k_tgt, (N,), 0, N_CLASSES, jnp.int32)
    params = init_params(k_par, C * H * W)

    logits, loss = model_forward(image, targets, params)
    jax.block_until_ready((logits, loss))

    assert logits.shape == (N, N_CLASSES)
    assert loss.shape == ()
    assert bool(jnp.isfinite(loss))
    assert bool(jnp.all(jnp.isfinite(logits)))
    print("KERNEL_OK")
</pallas_src>

<mosaic_0001>
module attributes {stable_mosaic.version = 11 : i64} {
  func.func @model_kernel(%arg0: i32, %arg1: i32, %arg2: memref<8x256xbf16, #tpu.memory_space<vmem>>, %arg3: memref<256x1920xbf16, #tpu.memory_space<vmem>>, %arg4: memref<1920x1024xbf16, #tpu.memory_space<vmem>>, %arg5: memref<1x1024xf32, #tpu.memory_space<vmem>>, %arg6: memref<1x1024xf32, #tpu.memory_space<vmem>>, %arg7: memref<1024x512xbf16, #tpu.memory_space<vmem>>, %arg8: memref<1x512xf32, #tpu.memory_space<vmem>>, %arg9: memref<1x512xf32, #tpu.memory_space<vmem>>, %arg10: memref<512x128xbf16, #tpu.memory_space<vmem>>, %arg11: memref<1x128xf32, #tpu.memory_space<vmem>>, %arg12: memref<8x1xi32, #tpu.memory_space<vmem>>, %arg13: memref<8x128xf32, #tpu.memory_space<vmem>>, %arg14: memref<8x1xf32, #tpu.memory_space<vmem>>, %arg15: memref<8x1920xf32, #tpu.memory_space<vmem>>) attributes {dimension_semantics = [#tpu.dimension_semantics<parallel>, #tpu.dimension_semantics<arbitrary>], iteration_bounds = array<i64: 1, 3>, scalar_prefetch = 0 : i64, scratch_operands = 1 : i64, tpu.core_type = #tpu.core_type<tc>, window_params = [{transform_indices = @transform_0, window_bounds = array<i64: 8, 256>}, {transform_indices = @transform_1, window_bounds = array<i64: 256, 1920>}, {pipeline_mode = #tpu.pipeline_mode<synchronous>, transform_indices = @transform_2, window_bounds = array<i64: 1920, 1024>}, {pipeline_mode = #tpu.pipeline_mode<synchronous>, transform_indices = @transform_3, window_bounds = array<i64: 1, 1024>}, {pipeline_mode = #tpu.pipeline_mode<synchronous>, transform_indices = @transform_4, window_bounds = array<i64: 1, 1024>}, {pipeline_mode = #tpu.pipeline_mode<synchronous>, transform_indices = @transform_5, window_bounds = array<i64: 1024, 512>}, {pipeline_mode = #tpu.pipeline_mode<synchronous>, transform_indices = @transform_6, window_bounds = array<i64: 1, 512>}, {pipeline_mode = #tpu.pipeline_mode<synchronous>, transform_indices = @transform_7, window_bounds = array<i64: 1, 512>}, {pipeline_mode = #tpu.pipeline_mode<synchronous>, transform_indices = @transform_8, window_bounds = array<i64: 512, 128>}, {pipeline_mode = #tpu.pipeline_mode<synchronous>, transform_indices = @transform_9, window_bounds = array<i64: 1, 128>}, {transform_indices = @transform_10, window_bounds = array<i64: 8, 1>}, {transform_indices = @transform_11, window_bounds = array<i64: 8, 128>}, {transform_indices = @transform_12, window_bounds = array<i64: 8, 1>}]} {
    %c0_i32 = arith.constant 0 : i32
    %0 = arith.cmpi eq, %arg1, %c0_i32 : i32
    %1 = arith.extui %0 : i1 to i32
    %c0_i32_0 = arith.constant 0 : i32
    %2 = arith.cmpi ne, %1, %c0_i32_0 : i32
    scf.if %2 {
      %cst_9 = arith.constant 0.000000e+00 : f32
      %12 = vector.broadcast %cst_9 : f32 to vector<8x1920xf32>
      %c0_10 = arith.constant 0 : index
      %c0_11 = arith.constant 0 : index
      %13 = vector.load %arg15[%c0_10, %c0_11] : memref<8x1920xf32, #tpu.memory_space<vmem>>, vector<8x1920xf32>
      tpu.vector_store %arg15[%c0_10, %c0_11], %12 {strides = array<i32>} : memref<8x1920xf32, #tpu.memory_space<vmem>>, vector<8x1920xf32>,
    } else {
    }
    %c0 = arith.constant 0 : index
    %c0_1 = arith.constant 0 : index
    %3 = vector.load %arg15[%c0, %c0_1] : memref<8x1920xf32, #tpu.memory_space<vmem>>, vector<8x1920xf32>
    %c0_2 = arith.constant 0 : index
    %c0_3 = arith.constant 0 : index
    %4 = vector.load %arg2[%c0_2, %c0_3] : memref<8x256xbf16, #tpu.memory_space<vmem>>, vector<8x256xbf16>
    %c0_4 = arith.constant 0 : index
    %c0_5 = arith.constant 0 : index
    %5 = vector.load %arg3[%c0_4, %c0_5] : memref<256x1920xbf16, #tpu.memory_space<vmem>>, vector<256x1920xbf16>
    %cst = arith.constant dense<0.000000e+00> : vector<8x1920xf32>
    %6 = tpu.matmul %4, %5, %cst {dimension_numbers = #tpu.dot_dimension_numbers<[1], [0], [0], [1], [0, 0, 1, 1], [], []>} : vector<8x256xbf16>, vector<256x1920xbf16>, vector<8x1920xf32> -> vector<8x1920xf32>
    %7 = arith.addf %3, %6 : vector<8x1920xf32>
    %c0_6 = arith.constant 0 : index
    %c0_7 = arith.constant 0 : index
    %8 = vector.load %arg15[%c0_6, %c0_7] : memref<8x1920xf32, #tpu.memory_space<vmem>>, vector<8x1920xf32>
    tpu.vector_store %arg15[%c0_6, %c0_7], %7 {strides = array<i32>} : memref<8x1920xf32, #tpu.memory_space<vmem>>, vector<8x1920xf32>,
    %c2_i32 = arith.constant 2 : i32
    %9 = arith.cmpi eq, %arg1, %c2_i32 : i32
    %10 = arith.extui %9 : i1 to i32
    %c0_i32_8 = arith.constant 0 : i32
    %11 = arith.cmpi ne, %10, %c0_i32_8 : i32
    scf.if %11 {
      %c0_9 = arith.constant 0 : index
      %c0_10 = arith.constant 0 : index
      %12 = vector.load %arg15[%c0_9, %c0_10] : memref<8x1920xf32, #tpu.memory_space<vmem>>, vector<8x1920xf32>
      %cst_11 = arith.constant 0.000000e+00 : f32
      %13 = vector.broadcast %cst_11 : f32 to vector<8x1920xf32>
      %14 = arith.maximumf %12, %13 : vector<8x1920xf32>
      %15 = arith.truncf %14 : vector<8x1920xf32> to vector<8x1920xbf16>
      %c0_12 = arith.constant 0 : index
      %c0_13 = arith.constant 0 : index
      %16 = vector.load %arg4[%c0_12, %c0_13] : memref<1920x1024xbf16, #tpu.memory_space<vmem>>, vector<1920x1024xbf16>
      %cst_14 = arith.constant dense<0.000000e+00> : vector<8x1024xf32>
      %17 = tpu.matmul %15, %16, %cst_14 {dimension_numbers = #tpu.dot_dimension_numbers<[1], [0], [0], [1], [0, 0, 1, 1], [], []>} : vector<8x1920xbf16>, vector<1920x1024xbf16>, vector<8x1024xf32> -> vector<8x1024xf32>
      %c0_15 = arith.constant 0 : index
      %c0_16 = arith.constant 0 : index
      %18 = vector.load %arg5[%c0_15, %c0_16] : memref<1x1024xf32, #tpu.memory_space<vmem>>, vector<1x1024xf32>
      %19 = vector.broadcast %18 : vector<1x1024xf32> to vector<8x1024xf32>
      %20 = arith.mulf %17, %19 : vector<8x1024xf32>
      %c0_17 = arith.constant 0 : index
      %c0_18 = arith.constant 0 : index
      %21 = vector.load %arg6[%c0_17, %c0_18] : memref<1x1024xf32, #tpu.memory_space<vmem>>, vector<1x1024xf32>
      %22 = vector.broadcast %21 : vector<1x1024xf32> to vector<8x1024xf32>
      %23 = arith.addf %20, %22 : vector<8x1024xf32>
      %cst_19 = arith.constant 0.000000e+00 : f32
      %24 = vector.broadcast %cst_19 : f32 to vector<8x1024xf32>
      %25 = arith.maximumf %23, %24 : vector<8x1024xf32>
      %26 = arith.truncf %25 : vector<8x1024xf32> to vector<8x1024xbf16>
      %c0_20 = arith.constant 0 : index
      %c0_21 = arith.constant 0 : index
      %27 = vector.load %arg7[%c0_20, %c0_21] : memref<1024x512xbf16, #tpu.memory_space<vmem>>, vector<1024x512xbf16>
      %cst_22 = arith.constant dense<0.000000e+00> : vector<8x512xf32>
      %28 = tpu.matmul %26, %27, %cst_22 {dimension_numbers = #tpu.dot_dimension_numbers<[1], [0], [0], [1], [0, 0, 1, 1], [], []>} : vector<8x1024xbf16>, vector<1024x512xbf16>, vector<8x512xf32> -> vector<8x512xf32>
      %c0_23 = arith.constant 0 : index
      %c0_24 = arith.constant 0 : index
      %29 = vector.load %arg8[%c0_23, %c0_24] : memref<1x512xf32, #tpu.memory_space<vmem>>, vector<1x512xf32>
      %30 = vector.broadcast %29 : vector<1x512xf32> to vector<8x512xf32>
      %31 = arith.mulf %28, %30 : vector<8x512xf32>
      %c0_25 = arith.constant 0 : index
      %c0_26 = arith.constant 0 : index
      %32 = vector.load %arg9[%c0_25, %c0_26] : memref<1x512xf32, #tpu.memory_space<vmem>>, vector<1x512xf32>
      %33 = vector.broadcast %32 : vector<1x512xf32> to vector<8x512xf32>
      %34 = arith.addf %31, %33 : vector<8x512xf32>
      %cst_27 = arith.constant 0.000000e+00 : f32
      %35 = vector.broadcast %cst_27 : f32 to vector<8x512xf32>
      %36 = arith.maximumf %34, %35 : vector<8x512xf32>
      %37 = arith.truncf %36 : vector<8x512xf32> to vector<8x512xbf16>
      %c0_28 = arith.constant 0 : index
      %c0_29 = arith.constant 0 : index
      %38 = vector.load %arg10[%c0_28, %c0_29] : memref<512x128xbf16, #tpu.memory_space<vmem>>, vector<512x128xbf16>
      %cst_30 = arith.constant dense<0.000000e+00> : vector<8x128xf32>
      %39 = tpu.matmul %37, %38, %cst_30 {dimension_numbers = #tpu.dot_dimension_numbers<[1], [0], [0], [1], [0, 0, 1, 1], [], []>} : vector<8x512xbf16>, vector<512x128xbf16>, vector<8x128xf32> -> vector<8x128xf32>
      %c0_31 = arith.constant 0 : index
      %c0_32 = arith.constant 0 : index
      %40 = vector.load %arg11[%c0_31, %c0_32] : memref<1x128xf32, #tpu.memory_space<vmem>>, vector<1x128xf32>
      %41 = vector.broadcast %40 : vector<1x128xf32> to vector<8x128xf32>
      %42 = arith.addf %39, %41 : vector<8x128xf32>
      %c0_33 = arith.constant 0 : index
      %c0_34 = arith.constant 0 : index
      %43 = vector.load %arg13[%c0_33, %c0_34] : memref<8x128xf32, #tpu.memory_space<vmem>>, vector<8x128xf32>
      tpu.vector_store %arg13[%c0_33, %c0_34], %42 {strides = array<i32>} : memref<8x128xf32, #tpu.memory_space<vmem>>, vector<8x128xf32>,
      %44 = tpu.iota {dimensions = array<i32: 1>} : vector<8x128xi32>
      %c104_i32 = arith.constant 104 : i32
      %45 = vector.broadcast %c104_i32 : i32 to vector<8x128xi32>
      %46 = arith.cmpi slt, %44, %45 : vector<8x128xi32>
      %cst_35 = arith.constant -1.000000e+30 : f32
      %47 = vector.broadcast %cst_35 : f32 to vector<8x128xf32>
      %48 = arith.select %46, %42, %47 : vector<8x128xi1>, vector<8x128xf32>
      %cst_36 = arith.constant dense<0xFF800000> : vector<8xf32>
      %49 = vector.multi_reduction <maximumf>, %48, %cst_36 [1] : vector<8x128xf32> to vector<8xf32>
      %50 = vector.shape_cast %49 : vector<8xf32> to vector<8x1xf32>
      %51 = vector.broadcast %50 : vector<8x1xf32> to vector<8x128xf32>
      %52 = arith.subf %48, %51 : vector<8x128xf32>
      %53 = math.exp %52 : vector<8x128xf32>
      %cst_37 = arith.constant dense<0.000000e+00> : vector<8xf32>
      %54 = vector.multi_reduction <add>, %53, %cst_37 [1] : vector<8x128xf32> to vector<8xf32>
      %55 = vector.shape_cast %54 : vector<8xf32> to vector<8x1xf32>
      %56 = math.log %55 : vector<8x1xf32>
      %57 = arith.addf %50, %56 : vector<8x1xf32>
      %c0_38 = arith.constant 0 : index
      %c0_39 = arith.constant 0 : index
      %58 = vector.load %arg12[%c0_38, %c0_39] : memref<8x1xi32, #tpu.memory_space<vmem>>, vector<8x1xi32>
      %59 = vector.broadcast %58 : vector<8x1xi32> to vector<8x128xi32>
      %60 = arith.cmpi eq, %44, %59 : vector<8x128xi32>
      %cst_40 = arith.constant 0.000000e+00 : f32
      %61 = vector.broadcast %cst_40 : f32 to vector<8x128xf32>
      %62 = arith.select %60, %42, %61 : vector<8x128xi1>, vector<8x128xf32>
      %cst_41 = arith.constant dense<0.000000e+00> : vector<8xf32>
      %63 = vector.multi_reduction <add>, %62, %cst_41 [1] : vector<8x128xf32> to vector<8xf32>
      %64 = vector.shape_cast %63 : vector<8xf32> to vector<8x1xf32>
      %65 = tpu.iota {dimensions = array<i32: 0>} : vector<8x1xi32>
      %c8_i32 = arith.constant 8 : i32
      %66 = arith.muli %arg0, %c8_i32 : i32
      %67 = vector.broadcast %66 : i32 to vector<8x1xi32>
      %68 = arith.addi %65, %67 : vector<8x1xi32>
      %c2_i32_42 = arith.constant 2 : i32
      %69 = vector.broadcast %c2_i32_42 : i32 to vector<8x1xi32>
      %70 = arith.cmpi slt, %68, %69 : vector<8x1xi32>
      %71 = arith.subf %57, %64 : vector<8x1xf32>
      %cst_43 = arith.constant 0.000000e+00 : f32
      %72 = vector.broadcast %cst_43 : f32 to vector<8x1xf32>
      %73 = arith.select %70, %71, %72 : vector<8x1xi1>, vector<8x1xf32>
      %c0_44 = arith.constant 0 : index
      %c0_45 = arith.constant 0 : index
      %74 = vector.load %arg14[%c0_44, %c0_45] : memref<8x1xf32, #tpu.memory_space<vmem>>, vector<8x1xf32>
      tpu.vector_store %arg14[%c0_44, %c0_45], %73 {strides = array<i32>} : memref<8x1xf32, #tpu.memory_space<vmem>>, vector<8x1xf32>,
    } else {
    }
    return
  }
  func.func @transform_0(%arg0: i32, %arg1: i32) -> (i32, i32) {
    %c0_i32 = arith.constant 0 : i32
    return %arg0, %arg1 : i32, i32
  }
  func.func @transform_1(%arg0: i32, %arg1: i32) -> (i32, i32) {
    %c0_i32 = arith.constant 0 : i32
    %c0_i32_0 = arith.constant 0 : i32
    return %arg1, %c0_i32 : i32, i32
  }
  func.func @transform_2(%arg0: i32, %arg1: i32) -> (i32, i32) {
    %c0_i32 = arith.constant 0 : i32
    %c0_i32_0 = arith.constant 0 : i32
    %c0_i32_1 = arith.constant 0 : i32
    return %c0_i32, %c0_i32_0 : i32, i32
  }
  func.func @transform_3(%arg0: i32, %arg1: i32) -> (i32, i32) {
    %c0_i32 = arith.constant 0 : i32
    %c0_i32_0 = arith.constant 0 : i32
    %c0_i32_1 = arith.constant 0 : i32
    return %c0_i32, %c0_i32_0 : i32, i32
  }
  func.func @transform_4(%arg0: i32, %arg1: i32) -> (i32, i32) {
    %c0_i32 = arith.constant 0 : i32
    %c0_i32_0 = arith.constant 0 : i32
    %c0_i32_1 = arith.constant 0 : i32
    return %c0_i32, %c0_i32_0 : i32, i32
  }
  func.func @transform_5(%arg0: i32, %arg1: i32) -> (i32, i32) {
    %c0_i32 = arith.constant 0 : i32
    %c0_i32_0 = arith.constant 0 : i32
    %c0_i32_1 = arith.constant 0 : i32
    return %c0_i32, %c0_i32_0 : i32, i32
  }
  func.func @transform_6(%arg0: i32, %arg1: i32) -> (i32, i32) {
    %c0_i32 = arith.constant 0 : i32
    %c0_i32_0 = arith.constant 0 : i32
    %c0_i32_1 = arith.constant 0 : i32
    return %c0_i32, %c0_i32_0 : i32, i32
  }
  func.func @transform_7(%arg0: i32, %arg1: i32) -> (i32, i32) {
    %c0_i32 = arith.constant 0 : i32
    %c0_i32_0 = arith.constant 0 : i32
    %c0_i32_1 = arith.constant 0 : i32
    return %c0_i32, %c0_i32_0 : i32, i32
  }
  func.func @transform_8(%arg0: i32, %arg1: i32) -> (i32, i32) {
    %c0_i32 = arith.constant 0 : i32
    %c0_i32_0 = arith.constant 0 : i32
    %c0_i32_1 = arith.constant 0 : i32
    return %c0_i32, %c0_i32_0 : i32, i32
  }
  func.func @transform_9(%arg0: i32, %arg1: i32) -> (i32, i32) {
    %c0_i32 = arith.constant 0 : i32
    %c0_i32_0 = arith.constant 0 : i32
    %c0_i32_1 = arith.constant 0 : i32
    return %c0_i32, %c0_i32_0 : i32, i32
  }
  func.func @transform_10(%arg0: i32, %arg1: i32) -> (i32, i32) {
    %c0_i32 = arith.constant 0 : i32
    %c0_i32_0 = arith.constant 0 : i32
    return %arg0, %c0_i32 : i32, i32
  }
  func.func @transform_11(%arg0: i32, %arg1: i32) -> (i32, i32) {
    %c0_i32 = arith.constant 0 : i32
    %c0_i32_0 = arith.constant 0 : i32
    return %arg0, %c0_i32 : i32, i32
  }
  func.func @transform_12(%arg0: i32, %arg1: i32) -> (i32, i32) {
    %c0_i32 = arith.constant 0 : i32
    %c0_i32_0 = arith.constant 0 : i32
    return %arg0, %c0_i32 : i32, i32
  }
}

</mosaic_0001>

<llo_original>
// kernel: tpu_custom_call.1
$region0: #{tpu_custom_call.1}
  #allocation0 [shape = 'u32[]', space=smem, size = 0x4, offset = 0x4, fixed_abs, tag = 'smem constant byte address 0x4 - core index']
  #allocation1 [shape = 'u32[144,128]{1,0:T(1,128)}', space=vmem, size = 0x12000, scoped, tag = 'internal scratch']
  #allocation2 [shape = 'f32[8,1920]{1,0:T(8,128)}', space=vmem, size = 0xf000, scoped, tag = 'scratch operand']
  %s0 = inlined_call_operand.hbm [shape: bf16[8,768], index: 0, kind: input, shape index: {}]
  %s1 = inlined_call_operand.hbm [shape: bf16[768,1920], index: 1, kind: input, shape index: {}]
  %s2 = inlined_call_operand.hbm [shape: bf16[1920,1024], index: 2, kind: input, shape index: {}]
  %s3 = inlined_call_operand.hbm [shape: f32[1,1024], index: 3, kind: input, shape index: {}]
  %s4 = inlined_call_operand.hbm [shape: f32[1,1024], index: 4, kind: input, shape index: {}]
  %s5 = inlined_call_operand.hbm [shape: bf16[1024,512], index: 5, kind: input, shape index: {}]
  %s6 = inlined_call_operand.hbm [shape: f32[1,512], index: 6, kind: input, shape index: {}]
  %s7 = inlined_call_operand.hbm [shape: f32[1,512], index: 7, kind: input, shape index: {}]
  %s8 = inlined_call_operand.hbm [shape: bf16[512,128], index: 8, kind: input, shape index: {}]
  %s9 = inlined_call_operand.hbm [shape: f32[1,128], index: 9, kind: input, shape index: {}]
  %s10 = inlined_call_operand.vmem [shape: s32[8,1], index: 10, kind: input, shape index: {}]
  %s11 = inlined_call_operand.hbm [shape: f32[8,128], index: 11, kind: output, shape index: {0}]
  %s12 = inlined_call_operand.vmem [shape: f32[8,1], index: 12, kind: output, shape index: {1}]
  %13 = xla_tuple %s11, %s12
  %s14 = sld [smem:[#allocation0]]
  $region133: #{tpu_custom_call.1} parent=0
    _
  %s16 = ssub.s32 1, %s14
  %s17 = scalar_select 0, %s16, %s14
  $region1: #{tpu_custom_call.1} parent=0
    #allocation3 [shape = 'u8[8192]{0}', space=vmem, size = 0x2000, scoped, tag = 'input window, operand 0']
    #allocation4 [shape = 's32[2]{0}', space=sflag, size = 0x8, scoped, tag = 'scoped memory for tpu_custom_call.1']
    #allocation5 [shape = 's32[2]{0}', space=sflag, size = 0x8, scoped, tag = 'scoped memory for tpu_custom_call.1']
    #allocation6 [shape = 'u8[1966080]{0}', space=vmem, size = 0x1e0000, scoped, tag = 'input window, operand 1']
    #allocation7 [shape = 's32[2]{0}', space=sflag, size = 0x8, scoped, tag = 'scoped memory for tpu_custom_call.1']
    #allocation8 [shape = 'u8[3932160]{0}', space=vmem, size = 0x3c0000, scoped, tag = 'input window, operand 2, single buffered']
    #allocation9 [shape = 'u8[4096]{0}', space=vmem, size = 0x1000, scoped, tag = 'input window, operand 3, single buffered']
    #allocation10 [shape = 's32[1]{0}', space=sflag, size = 0x4, scoped, tag = 'scoped memory for tpu_custom_call.1']
    #allocation11 [shape = 'u8[4096]{0}', space=vmem, size = 0x1000, scoped, tag = 'input window, operand 4, single buffered']
    #allocation12 [shape = 'u8[1048576]{0}', space=vmem, size = 0x100000, scoped, tag = 'input window, operand 5, single buffered']
    #allocation13 [shape = 's32[1]{0}', space=sflag, size = 0x4, scoped, tag = 'scoped memory for tpu_custom_call.1']
    #allocation14 [shape = 'u8[2048]{0}', space=vmem, size = 0x800, scoped, tag = 'input window, operand 6, single buffered']
    #allocation15 [shape = 'u8[2048]{0}', space=vmem, size = 0x800, scoped, tag = 'input window, operand 7, single buffered']
    #allocation16 [shape = 's32[1]{0}', space=sflag, size = 0x4, scoped, tag = 'scoped memory for tpu_custom_call.1']
    #allocation17 [shape = 'u8[131072]{0}', space=vmem, size = 0x20000, scoped, tag = 'input window, operand 8, single buffered']
    #allocation18 [shape = 'u8[512]{0}', space=vmem, size = 0x400, scoped, tag = 'input window, operand 9, single buffered']
    #allocation19 [shape = 's32[1]{0}', space=sflag, size = 0x4, scoped, tag = 'scoped memory for tpu_custom_call.1']
    #allocation20 [shape = 'u8[4096]{0}', space=vmem, size = 0x1000, scoped, tag = 'output window, operand 0, single buffered']
    %18 = vsyncpa [#allocation4], 0
    %s19 = scalar_lea.sflag [#allocation4], 1
    %20 = vsyncpa %s19, 0
    %21 = vsyncpa [#allocation7], 0
    %s22 = scalar_lea.sflag [#allocation7], 1
    %23 = vsyncpa %s22, 0
    %24 = vsyncpa [#allocation10], 0
    %25 = vsyncpa [#allocation13], 0
    %26 = vsyncpa [#allocation16], 0
    %27 = vsyncpa [#allocation19], 0
    %28 = vsyncpa [#allocation5], 0
    loop: start=0, step=1, limit=5
    $region2: #{tpu_custom_call.1} parent=1 // loop_pre_header
      _
    $region3: #{tpu_custom_call.1} parent=1 // loop_header
      %s30 = sphi 0, %s34
      %p31 = scmp.ge.s32.totalorder %s30, 5
      %s37 = sphi 0, %s49
      %s38 = sphi 0, %s45
      %s39 = sphi 0, %s37
      %s40 = sphi 0, %s38
      %s41 = sphi 0, %s39
      %s42 = sphi 0, %s40
      %s54 = sphi 0, %s56
      %s57 = sphi 0, %s54
      %s58 = sphi 0, %s57
      %s74 = sphi 0, %s58
      %s80 = sphi 0, %s82
      %s83 = sphi 0, %s80
      %s84 = sphi 0, %s83
      %s100 = sphi 0, %s84
      %s104 = sphi 0, %s104
      %s106 = sphi 0, %s104
      %s107 = sphi 0, %s106
      %s121 = sphi 0, %s107
      %s125 = sphi 0, %s125
      %s127 = sphi 0, %s125
      %s128 = sphi 0, %s127
      %s142 = sphi 0, %s128
      %s146 = sphi 0, %s146
      %s148 = sphi 0, %s146
      %s149 = sphi 0, %s148
      %s163 = sphi 0, %s149
      %s167 = sphi 0, %s167
      %s169 = sphi 0, %s167
      %s170 = sphi 0, %s169
      %s184 = sphi 0, %s170
      %s188 = sphi 0, %s188
      %s190 = sphi 0, %s188
      %s191 = sphi 0, %s190
      %s205 = sphi 0, %s191
      %s209 = sphi 0, %s209
      %s211 = sphi 0, %s209
      %s212 = sphi 0, %s211
      %s226 = sphi 0, %s212
      %s230 = sphi 0, %s230
      %s232 = sphi 0, %s230
      %s233 = sphi 0, %s232
      %s247 = sphi 0, %s233
      %s251 = sphi 0, %s251
      %s253 = sphi 0, %s251
      %s254 = sphi 0, %s253
      %s268 = sphi 0, %s254
      %s274 = sphi 0, %s276
      %s277 = sphi 0, %s274
      %s278 = sphi 0, %s277
      %s294 = sphi 0, %s278
      %s300 = sphi 0, %s302
      %s303 = sphi 0, %s300
      %s304 = sphi 0, %s303
      %s320 = sphi 0, %s304
      %s326 = sphi 0, %s328
      %s329 = sphi 0, %s326
      %s330 = sphi 0, %s329
      %s346 = sphi 0, %s330
    $region4: #{tpu_custom_call.1} parent=1 // loop_header_branch
      %33 = sbr.rel (%p31) target = $region8
    $region5: #{tpu_custom_call.1} parent=1 // loop_body
      %s35 = ssub.s32 %s30, 1
      %s36 = ssub.s32 %s30, 2
      %s43 = sadd.s32 1, %s38
      %p44 = scmp.ge.s32.totalorder %s43, 3
      %s45 = scalar_select %p44, 0, %s43
      %s46 = sadd.s32 1, %s37
      %s47 = scalar_select %p44, %s46, %s37
      %p48 = scmp.ge.s32.totalorder %s47, 1
      %s49 = scalar_select %p48, 0, %s47
      %s50 = ssub.s32 %s37, %s49
      %s51 = ssub.s32 %s38, %s45
      %s52 = sor.u32 %s50, %s51
      %p53 = scmp.eq.s32.totalorder %s52, 0
      %s55 = sadd.s32 %s54, 1
      %s56 = scalar_select %p53, %s54, %s55
      %p59 = pneg %p53
      %p60 = scmp.eq.s32.totalorder %s30, 2
      %p61 = por %p59, %p60
      %p62 = scmp.ne.s32.totalorder %s54, %s57
      %p63 = scmp.eq.s32.totalorder %s30, 0
      %p64 = por %p62, %p63
      %p65 = scmp.ne.s32.totalorder %s54, %s57
      %p66 = scmp.eq.s32.totalorder %s35, 2
      %p67 = por %p65, %p66
      %p68 = scmp.ne.s32.totalorder %s57, %s58
      %p69 = scmp.eq.s32.totalorder %s35, 0
      %p70 = por %p68, %p69
      %p71 = scmp.ne.s32.totalorder %s57, %s58
      %p72 = scmp.eq.s32.totalorder %s36, 2
      %p73 = por %p71, %p72
      %p75 = scmp.ne.s32.totalorder %s58, %s74
      %p76 = scmp.eq.s32.totalorder %s36, 0
      %p77 = por %p75, %p76
      %s78 = ssub.s32 %s38, %s45
      %p79 = scmp.eq.s32.totalorder %s78, 0
      %s81 = sadd.s32 %s80, 1
      %s82 = scalar_select %p79, %s80, %s81
      %p85 = pneg %p79
      %p86 = scmp.eq.s32.totalorder %s30, 2
      %p87 = por %p85, %p86
      %p88 = scmp.ne.s32.totalorder %s80, %s83
      %p89 = scmp.eq.s32.totalorder %s30, 0
      %p90 = por %p88, %p89
      %p91 = scmp.ne.s32.totalorder %s80, %s83
      %p92 = scmp.eq.s32.totalorder %s35, 2
      %p93 = por %p91, %p92
      %p94 = scmp.ne.s32.totalorder %s83, %s84
      %p95 = scmp.eq.s32.totalorder %s35, 0
      %p96 = por %p94, %p95
      %p97 = scmp.ne.s32.totalorder %s83, %s84
      %p98 = scmp.eq.s32.totalorder %s36, 2
      %p99 = por %p97, %p98
      %p101 = scmp.ne.s32.totalorder %s84, %s100
      %p102 = scmp.eq.s32.totalorder %s36, 0
      %p103 = por %p101, %p102
      %s105 = sadd.s32 %s104, 1
      %p108 = scmp.eq.s32.totalorder %s30, 2
      %p109 = scmp.ne.s32.totalorder %s104, %s106
      %p110 = scmp.eq.s32.totalorder %s30, 0
      %p111 = por %p109, %p110
      %p112 = scmp.ne.s32.totalorder %s104, %s106
      %p113 = scmp.eq.s32.totalorder %s35, 2
      %p114 = por %p112, %p113
      %p115 = scmp.ne.s32.totalorder %s106, %s107
      %p116 = scmp.eq.s32.totalorder %s35, 0
      %p117 = por %p115, %p116
      %p118 = scmp.ne.s32.totalorder %s106, %s107
      %p119 = scmp.eq.s32.totalorder %s36, 2
      %p120 = por %p118, %p119
      %p122 = scmp.ne.s32.totalorder %s107, %s121
      %p123 = scmp.eq.s32.totalorder %s36, 0
      %p124 = por %p122, %p123
      %s126 = sadd.s32 %s125, 1
      %p129 = scmp.eq.s32.totalorder %s30, 2
      %p130 = scmp.ne.s32.totalorder %s125, %s127
      %p131 = scmp.eq.s32.totalorder %s30, 0
      %p132 = por %p130, %p131
      %p133 = scmp.ne.s32.totalorder %s125, %s127
      %p134 = scmp.eq.s32.totalorder %s35, 2
      %p135 = por %p133, %p134
      %p136 = scmp.ne.s32.totalorder %s127, %s128
      %p137 = scmp.eq.s32.totalorder %s35, 0
      %p138 = por %p136, %p137
      %p139 = scmp.ne.s32.totalorder %s127, %s128
      %p140 = scmp.eq.s32.totalorder %s36, 2
      %p141 = por %p139, %p140
      %p143 = scmp.ne.s32.totalorder %s128, %s142
      %p144 = scmp.eq.s32.totalorder %s36, 0
      %p145 = por %p143, %p144
      %s147 = sadd.s32 %s146, 1
      %p150 = scmp.eq.s32.totalorder %s30, 2
      %p151 = scmp.ne.s32.totalorder %s146, %s148
      %p152 = scmp.eq.s32.totalorder %s30, 0
      %p153 = por %p151, %p152
      %p154 = scmp.ne.s32.totalorder %s146, %s148
      %p155 = scmp.eq.s32.totalorder %s35, 2
      %p156 = por %p154, %p155
      %p157 = scmp.ne.s32.totalorder %s148, %s149
      %p158 = scmp.eq.s32.totalorder %s35, 0
      %p159 = por %p157, %p158
      %p160 = scmp.ne.s32.totalorder %s148, %s149
      %p161 = scmp.eq.s32.totalorder %s36, 2
      %p162 = por %p160, %p161
      %p164 = scmp.ne.s32.totalorder %s149, %s163
      %p165 = scmp.eq.s32.totalorder %s36, 0
      %p166 = por %p164, %p165
      %s168 = sadd.s32 %s167, 1
      %p171 = scmp.eq.s32.totalorder %s30, 2
      %p172 = scmp.ne.s32.totalorder %s167, %s169
      %p173 = scmp.eq.s32.totalorder %s30, 0
      %p174 = por %p172, %p173
      %p175 = scmp.ne.s32.totalorder %s167, %s169
      %p176 = scmp.eq.s32.totalorder %s35, 2
      %p177 = por %p175, %p176
      %p178 = scmp.ne.s32.totalorder %s169, %s170
      %p179 = scmp.eq.s32.totalorder %s35, 0
      %p180 = por %p178, %p179
      %p181 = scmp.ne.s32.totalorder %s169, %s170
      %p182 = scmp.eq.s32.totalorder %s36, 2
      %p183 = por %p181, %p182
      %p185 = scmp.ne.s32.totalorder %s170, %s184
      %p186 = scmp.eq.s32.totalorder %s36, 0
      %p187 = por %p185, %p186
      %s189 = sadd.s32 %s188, 1
      %p192 = scmp.eq.s32.totalorder %s30, 2
      %p193 = scmp.ne.s32.totalorder %s188, %s190
      %p194 = scmp.eq.s32.totalorder %s30, 0
      %p195 = por %p193, %p194
      %p196 = scmp.ne.s32.totalorder %s188, %s190
      %p197 = scmp.eq.s32.totalorder %s35, 2
      %p198 = por %p196, %p197
      %p199 = scmp.ne.s32.totalorder %s190, %s191
      %p200 = scmp.eq.s32.totalorder %s35, 0
      %p201 = por %p199, %p200
      %p202 = scmp.ne.s32.totalorder %s190, %s191
      %p203 = scmp.eq.s32.totalorder %s36, 2
      %p204 = por %p202, %p203
      %p206 = scmp.ne.s32.totalorder %s191, %s205
      %p207 = scmp.eq.s32.totalorder %s36, 0
      %p208 = por %p206, %p207
      %s210 = sadd.s32 %s209, 1
      %p213 = scmp.eq.s32.totalorder %s30, 2
      %p214 = scmp.ne.s32.totalorder %s209, %s211
      %p215 = scmp.eq.s32.totalorder %s30, 0
      %p216 = por %p214, %p215
      %p217 = scmp.ne.s32.totalorder %s209, %s211
      %p218 = scmp.eq.s32.totalorder %s35, 2
      %p219 = por %p217, %p218
      %p220 = scmp.ne.s32.totalorder %s211, %s212
      %p221 = scmp.eq.s32.totalorder %s35, 0
      %p222 = por %p220, %p221
      %p223 = scmp.ne.s32.totalorder %s211, %s212
      %p224 = scmp.eq.s32.totalorder %s36, 2
      %p225 = por %p223, %p224
      %p227 = scmp.ne.s32.totalorder %s212, %s226
      %p228 = scmp.eq.s32.totalorder %s36, 0
      %p229 = por %p227, %p228
      %s231 = sadd.s32 %s230, 1
      %p234 = scmp.eq.s32.totalorder %s30, 2
      %p235 = scmp.ne.s32.totalorder %s230, %s232
      %p236 = scmp.eq.s32.totalorder %s30, 0
      %p237 = por %p235, %p236
      %p238 = scmp.ne.s32.totalorder %s230, %s232
      %p239 = scmp.eq.s32.totalorder %s35, 2
      %p240 = por %p238, %p239
      %p241 = scmp.ne.s32.totalorder %s232, %s233
      %p242 = scmp.eq.s32.totalorder %s35, 0
      %p243 = por %p241, %p242
      %p244 = scmp.ne.s32.totalorder %s232, %s233
      %p245 = scmp.eq.s32.totalorder %s36, 2
      %p246 = por %p244, %p245
      %p248 = scmp.ne.s32.totalorder %s233, %s247
      %p249 = scmp.eq.s32.totalorder %s36, 0
      %p250 = por %p248, %p249
      %s252 = sadd.s32 %s251, 1
      %p255 = scmp.eq.s32.totalorder %s30, 2
      %p256 = scmp.ne.s32.totalorder %s251, %s253
      %p257 = scmp.eq.s32.totalorder %s30, 0
      %p258 = por %p256, %p257
      %p259 = scmp.ne.s32.totalorder %s251, %s253
      %p260 = scmp.eq.s32.totalorder %s35, 2
      %p261 = por %p259, %p260
      %p262 = scmp.ne.s32.totalorder %s253, %s254
      %p263 = scmp.eq.s32.totalorder %s35, 0
      %p264 = por %p262, %p263
      %p265 = scmp.ne.s32.totalorder %s253, %s254
      %p266 = scmp.eq.s32.totalorder %s36, 2
      %p267 = por %p265, %p266
      %p269 = scmp.ne.s32.totalorder %s254, %s268
      %p270 = scmp.eq.s32.totalorder %s36, 0
      %p271 = por %p269, %p270
      %s272 = ssub.s32 %s37, %s49
      %p273 = scmp.eq.s32.totalorder %s272, 0
      %s275 = sadd.s32 %s274, 1
      %s276 = scalar_select %p273, %s274, %s275
      %p279 = pneg %p273
      %p280 = scmp.eq.s32.totalorder %s30, 2
      %p281 = por %p279, %p280
      %p282 = scmp.ne.s32.totalorder %s274, %s277
      %p283 = scmp.eq.s32.totalorder %s30, 0
      %p284 = por %p282, %p283
      %p285 = scmp.ne.s32.totalorder %s274, %s277
      %p286 = scmp.eq.s32.totalorder %s35, 2
      %p287 = por %p285, %p286
      %p288 = scmp.ne.s32.totalorder %s277, %s278
      %p289 = scmp.eq.s32.totalorder %s35, 0
      %p290 = por %p288, %p289
      %p291 = scmp.ne.s32.totalorder %s277, %s278
      %p292 = scmp.eq.s32.totalorder %s36, 2
      %p293 = por %p291, %p292
      %p295 = scmp.ne.s32.totalorder %s278, %s294
      %p296 = scmp.eq.s32.totalorder %s36, 0
      %p297 = por %p295, %p296
      %s298 = ssub.s32 %s37, %s49
      %p299 = scmp.eq.s32.totalorder %s298, 0
      %s301 = sadd.s32 %s300, 1
      %s302 = scalar_select %p299, %s300, %s301
      %p305 = pneg %p299
      %p306 = scmp.eq.s32.totalorder %s30, 2
      %p307 = por %p305, %p306
      %p308 = scmp.ne.s32.totalorder %s300, %s303
      %p309 = scmp.eq.s32.totalorder %s30, 0
      %p310 = por %p308, %p309
      %p311 = scmp.ne.s32.totalorder %s300, %s303
      %p312 = scmp.eq.s32.totalorder %s35, 2
      %p313 = por %p311, %p312
      %p314 = scmp.ne.s32.totalorder %s303, %s304
      %p315 = scmp.eq.s32.totalorder %s35, 0
      %p316 = por %p314, %p315
      %p317 = scmp.ne.s32.totalorder %s303, %s304
      %p318 = scmp.eq.s32.totalorder %s36, 2
      %p319 = por %p317, %p318
      %p321 = scmp.ne.s32.totalorder %s304, %s320
      %p322 = scmp.eq.s32.totalorder %s36, 0
      %p323 = por %p321, %p322
      %s324 = ssub.s32 %s37, %s49
      %p325 = scmp.eq.s32.totalorder %s324, 0
      %s327 = sadd.s32 %s326, 1
      %s328 = scalar_select %p325, %s326, %s327
      %p331 = pneg %p325
      %p332 = scmp.eq.s32.totalorder %s30, 2
      %p333 = por %p331, %p332
      %p334 = scmp.ne.s32.totalorder %s326, %s329
      %p335 = scmp.eq.s32.totalorder %s30, 0
      %p336 = por %p334, %p335
      %p337 = scmp.ne.s32.totalorder %s326, %s329
      %p338 = scmp.eq.s32.totalorder %s35, 2
      %p339 = por %p337, %p338
      %p340 = scmp.ne.s32.totalorder %s329, %s330
      %p341 = scmp.eq.s32.totalorder %s35, 0
      %p342 = por %p340, %p341
      %p343 = scmp.ne.s32.totalorder %s329, %s330
      %p344 = scmp.eq.s32.totalorder %s36, 2
      %p345 = por %p343, %p344
      %p347 = scmp.ne.s32.totalorder %s330, %s346
      %p348 = scmp.eq.s32.totalorder %s36, 0
      %p349 = por %p347, %p348
      %p350 = scmp.le.s32.totalorder 1, %s30
      %p351 = scmp.lt.s32.totalorder %s30, 4
      %p352 = pnand %p350, %p351
      %p353 = pneg %p352
      // Predicated region
      $region9: #{tpu_custom_call.1} parent=5 // pred_check
        _
      $region10: #{tpu_custom_call.1} parent=5 // pred_check_branch
        %355 = sbr.rel (%p352) target = $region12
      $region11: #{tpu_custom_call.1} parent=5 // pred_region
        %s356 = ssub.s32 %s30, 1
        // Predicated region
        $region13: #{tpu_custom_call.1} parent=11 // pred_check
          %p357 = pneg %p117
        $region14: #{tpu_custom_call.1} parent=11 // pred_check_branch
          %359 = sbr.rel (%p357) target = $region16
        $region15: #{tpu_custom_call.1} parent=11 // pred_region
          %s361 = ssub.s32 122880, 122880
          %362 = vsyncadd [#allocation7], %s361
          %s363 = sshll.u32 [#allocation8], 4
          %s364 = int_to_ptr.vmem [resolvable:$true] %s363
          %369 = dma.hbm_to_vmem [thread:$0]  %s2, 122880, %s364, [#allocation7], 512, 512, 32
        $region16: #{tpu_custom_call.1} parent=11 // pred_fallthru
          _
        // Predicated region
        $region17: #{tpu_custom_call.1} parent=11 // pred_check
          %p370 = pneg %p138
        $region18: #{tpu_custom_call.1} parent=11 // pred_check_branch
          %372 = sbr.rel (%p370) target = $region20
        $region19: #{tpu_custom_call.1} parent=11 // pred_region
          %s374 = ssub.s32 128, 128
          %375 = vsyncadd [#allocation10], %s374
          %s377 = sshll.u32 [#allocation9], 4
          %s378 = int_to_ptr.vmem [resolvable:$true] %s377
          %380 = dma.hbm_to_vmem [thread:$0]  %s3, 128, %s378, [#allocation10]
        $region20: #{tpu_custom_call.1} parent=11 // pred_fallthru
          _
        // Predicated region
        $region21: #{tpu_custom_call.1} parent=11 // pred_check
          %p381 = pneg %p159
        $region22: #{tpu_custom_call.1} parent=11 // pred_check_branch
          %383 = sbr.rel (%p381) target = $region24
        $region23: #{tpu_custom_call.1} parent=11 // pred_region
          %s385 = ssub.s32 128, 128
          %386 = vsyncadd [#allocation10], %s385
          %s388 = sshll.u32 [#allocation11], 4
          %s389 = int_to_ptr.vmem [resolvable:$true] %s388
          %391 = dma.hbm_to_vmem [thread:$0]  %s4, 128, %s389, [#allocation10]
        $region24: #{tpu_custom_call.1} parent=11 // pred_fallthru
          _
        // Predicated region
        $region25: #{tpu_custom_call.1} parent=11 // pred_check
          %p392 = pneg %p180
        $region26: #{tpu_custom_call.1} parent=11 // pred_check_branch
          %394 = sbr.rel (%p392) target = $region28
        $region27: #{tpu_custom_call.1} parent=11 // pred_region
          %s396 = ssub.s32 32768, 32768
          %397 = vsyncadd [#allocation13], %s396
          %s398 = sshll.u32 [#allocation12], 4
          %s399 = int_to_ptr.vmem [resolvable:$true] %s398
          %404 = dma.hbm_to_vmem [thread:$0]  %s5, 32768, %s399, [#allocation13], 256, 256, 16
        $region28: #{tpu_custom_call.1} parent=11 // pred_fallthru
          _
        // Predicated region
        $region29: #{tpu_custom_call.1} parent=11 // pred_check
          %p405 = pneg %p201
        $region30: #{tpu_custom_call.1} parent=11 // pred_check_branch
          %407 = sbr.rel (%p405) target = $region32
        $region31: #{tpu_custom_call.1} parent=11 // pred_region
          %s409 = ssub.s32 64, 64
          %410 = vsyncadd [#allocation13], %s409
          %s412 = sshll.u32 [#allocation14], 4
          %s413 = int_to_ptr.vmem [resolvable:$true] %s412
          %415 = dma.hbm_to_vmem [thread:$0]  %s6, 64, %s413, [#allocation13]
        $region32: #{tpu_custom_call.1} parent=11 // pred_fallthru
          _
        // Predicated region
        $region33: #{tpu_custom_call.1} parent=11 // pred_check
          %p416 = pneg %p222
        $region34: #{tpu_custom_call.1} parent=11 // pred_check_branch
          %418 = sbr.rel (%p416) target = $region36
        $region35: #{tpu_custom_call.1} parent=11 // pred_region
          %s420 = ssub.s32 64, 64
          %421 = vsyncadd [#allocation16], %s420
          %s423 = sshll.u32 [#allocation15], 4
          %s424 = int_to_ptr.vmem [resolvable:$true] %s423
          %426 = dma.hbm_to_vmem [thread:$0]  %s7, 64, %s424, [#allocation16]
        $region36: #{tpu_custom_call.1} parent=11 // pred_fallthru
          _
        // Predicated region
        $region37: #{tpu_custom_call.1} parent=11 // pred_check
          %p427 = pneg %p243
        $region38: #{tpu_custom_call.1} parent=11 // pred_check_branch
          %429 = sbr.rel (%p427) target = $region40
        $region39: #{tpu_custom_call.1} parent=11 // pred_region
          %s431 = ssub.s32 4096, 4096
          %432 = vsyncadd [#allocation16], %s431
          %s433 = sshll.u32 [#allocation17], 4
          %s434 = int_to_ptr.vmem [resolvable:$true] %s433
          %439 = dma.hbm_to_vmem [thread:$0]  %s8, 4096, %s434, [#allocation16], 64, 64, 4
        $region40: #{tpu_custom_call.1} parent=11 // pred_fallthru
          _
        // Predicated region
        $region41: #{tpu_custom_call.1} parent=11 // pred_check
          %p440 = pneg %p264
        $region42: #{tpu_custom_call.1} parent=11 // pred_check_branch
          %442 = sbr.rel (%p440) target = $region44
        $region43: #{tpu_custom_call.1} parent=11 // pred_region
          %s444 = ssub.s32 16, 16
          %445 = vsyncadd [#allocation19], %s444
          %s447 = sshll.u32 [#allocation18], 4
          %s448 = int_to_ptr.vmem [resolvable:$true] %s447
          %450 = dma.hbm_to_vmem [thread:$0]  %s9, 16, %s448, [#allocation19]
        $region44: #{tpu_custom_call.1} parent=11 // pred_fallthru
          _
        // Predicated region
        $region45: #{tpu_custom_call.1} parent=11 // pred_check
          %p451 = pneg %p290
        $region46: #{tpu_custom_call.1} parent=11 // pred_check_branch
          %453 = sbr.rel (%p451) target = $region48
        $region47: #{tpu_custom_call.1} parent=11 // pred_region
          %p454 = scmp.lt.s32.totalorder %s39, 0
          %s455 = scalar_select %p454, %s39, 0
          %s456 = smul.addr %s455, 8
          %s457 = scalar_lea.vmem %s10, %s456
        $region48: #{tpu_custom_call.1} parent=11 // pred_fallthru
          _
      $region12: #{tpu_custom_call.1} parent=5 // pred_fallthru
        _
      %p458 = scmp.lt.s32.totalorder %s30, 3
      // Predicated region
      $region49: #{tpu_custom_call.1} parent=5 // pred_check
        %p459 = pneg %p458
      $region50: #{tpu_custom_call.1} parent=5 // pred_check_branch
        %461 = sbr.rel (%p459) target = $region52
      $region51: #{tpu_custom_call.1} parent=5 // pred_region
        // Predicated region
        $region53: #{tpu_custom_call.1} parent=51 // pred_check
          %p462 = pneg %p64
        $region54: #{tpu_custom_call.1} parent=51 // pred_check_branch
          %464 = sbr.rel (%p462) target = $region56
        $region55: #{tpu_custom_call.1} parent=51 // pred_region
          %s465 = sand.u32 %s54, 1
          %s466 = scalar_lea.sflag [#allocation4], %s465
          %s467 = sand.u32 %s54, 1
          %s468 = smul.addr %s467, 8
          %s469 = scalar_lea.vmem [#allocation3], %s468
          %s470 = smul.u32 2, %s38
          %s472 = ssub.s32 128, 128
          %473 = vsyncadd %s466, %s472
          %s474 = smul.addr %s37, 6
          %s475 = sadd.s32 %s470, %s474
          %s476 = smul.addr %s475, 64
          %s477 = scalar_lea.hbm %s0, %s476
          %s479 = sshll.u32 %s469, 4
          %s480 = int_to_ptr.vmem [resolvable:$true] %s479
          %482 = dma.hbm_to_vmem [thread:$0]  %s477, 128, %s480, %s466
        $region56: #{tpu_custom_call.1} parent=51 // pred_fallthru
          _
        // Predicated region
        $region57: #{tpu_custom_call.1} parent=51 // pred_check
          %p483 = pneg %p90
        $region58: #{tpu_custom_call.1} parent=51 // pred_check_branch
          %485 = sbr.rel (%p483) target = $region60
        $region59: #{tpu_custom_call.1} parent=51 // pred_region
          %s486 = sand.u32 %s30, 1
          %s487 = scalar_lea.sflag [#allocation7], %s486
          %s488 = sand.u32 %s80, 1
          %s489 = smul.addr %s488, 1920
          %s490 = scalar_lea.vmem [#allocation6], %s489
          %s491 = smul.u32 32, %s38
          %s493 = ssub.s32 30720, 30720
          %494 = vsyncadd %s487, %s493
          %s495 = smul.addr %s491, 15
          %s496 = smul.addr %s495, 64
          %s497 = scalar_lea.hbm %s1, %s496
          %s498 = sshll.u32 %s490, 4
          %s499 = int_to_ptr.vmem [resolvable:$true] %s498
          %504 = dma.hbm_to_vmem [thread:$0]  %s497, 30720, %s499, %s487, 960, 960, 60
        $region60: #{tpu_custom_call.1} parent=51 // pred_fallthru
          _
      $region52: #{tpu_custom_call.1} parent=5 // pred_fallthru
        _
      %p505 = scmp.le.s32.totalorder 1, %s30
      %p506 = scmp.lt.s32.totalorder %s30, 4
      %p507 = pnand %p505, %p506
      %p508 = pneg %p507
      // Predicated region
      $region61: #{tpu_custom_call.1} parent=5 // pred_check
        _
      $region62: #{tpu_custom_call.1} parent=5 // pred_check_branch
        %510 = sbr.rel (%p507) target = $region64
      $region63: #{tpu_custom_call.1} parent=5 // pred_region
        %s511 = ssub.s32 %s30, 1
        %s512 = sand.u32 %s57, 1
        %s513 = scalar_lea.sflag [#allocation4], %s512
        %s514 = sand.u32 %s57, 1
        %s515 = smul.addr %s514, 8
        %s516 = scalar_lea.vmem [#allocation3], %s515
        // Predicated region
        $region65: #{tpu_custom_call.1} parent=63 // pred_check
          %p517 = pneg %p70
        $region66: #{tpu_custom_call.1} parent=63 // pred_check_branch
          %519 = sbr.rel (%p517) target = $region68
        $region67: #{tpu_custom_call.1} parent=63 // pred_region
          %520 = dma.done %s513, 128
        $region68: #{tpu_custom_call.1} parent=63 // pred_fallthru
          _
        %s521 = sand.u32 %s35, 1
        %s522 = scalar_lea.sflag [#allocation7], %s521
        %s523 = sand.u32 %s83, 1
        %s524 = smul.addr %s523, 1920
        %s525 = scalar_lea.vmem [#allocation6], %s524
        // Predicated region
        $region69: #{tpu_custom_call.1} parent=63 // pred_check
          %p526 = pneg %p96
        $region70: #{tpu_custom_call.1} parent=63 // pred_check_branch
          %528 = sbr.rel (%p526) target = $region72
        $region71: #{tpu_custom_call.1} parent=63 // pred_region
          %529 = dma.done %s522, 30720
        $region72: #{tpu_custom_call.1} parent=63 // pred_fallthru
          _
        // Predicated region
        $region73: #{tpu_custom_call.1} parent=63 // pred_check
          %p530 = pneg %p117
        $region74: #{tpu_custom_call.1} parent=63 // pred_check_branch
          %532 = sbr.rel (%p530) target = $region76
        $region75: #{tpu_custom_call.1} parent=63 // pred_region
          %533 = dma.done [#allocation7], 122880
        $region76: #{tpu_custom_call.1} parent=63 // pred_fallthru
          _
        // Predicated region
        $region77: #{tpu_custom_call.1} parent=63 // pred_check
          %p534 = pneg %p138
        $region78: #{tpu_custom_call.1} parent=63 // pred_check_branch
          %536 = sbr.rel (%p534) target = $region80
        $region79: #{tpu_custom_call.1} parent=63 // pred_region
          %537 = dma.done [#allocation10], 128
        $region80: #{tpu_custom_call.1} parent=63 // pred_fallthru
          _
        // Predicated region
        $region81: #{tpu_custom_call.1} parent=63 // pred_check
          %p538 = pneg %p159
        $region82: #{tpu_custom_call.1} parent=63 // pred_check_branch
          %540 = sbr.rel (%p538) target = $region84
        $region83: #{tpu_custom_call.1} parent=63 // pred_region
          %541 = dma.done [#allocation10], 128
        $region84: #{tpu_custom_call.1} parent=63 // pred_fallthru
          _
        // Predicated region
        $region85: #{tpu_custom_call.1} parent=63 // pred_check
          %p542 = pneg %p180
        $region86: #{tpu_custom_call.1} parent=63 // pred_check_branch
          %544 = sbr.rel (%p542) target = $region88
        $region87: #{tpu_custom_call.1} parent=63 // pred_region
          %545 = dma.done [#allocation13], 32768
        $region88: #{tpu_custom_call.1} parent=63 // pred_fallthru
          _
        // Predicated region
        $region89: #{tpu_custom_call.1} parent=63 // pred_check
          %p546 = pneg %p201
        $region90: #{tpu_custom_call.1} parent=63 // pred_check_branch
          %548 = sbr.rel (%p546) target = $region92
        $region91: #{tpu_custom_call.1} parent=63 // pred_region
          %549 = dma.done [#allocation13], 64
        $region92: #{tpu_custom_call.1} parent=63 // pred_fallthru
          _
        // Predicated region
        $region93: #{tpu_custom_call.1} parent=63 // pred_check
          %p550 = pneg %p222
        $region94: #{tpu_custom_call.1} parent=63 // pred_check_branch
          %552 = sbr.rel (%p550) target = $region96
        $region95: #{tpu_custom_call.1} parent=63 // pred_region
          %553 = dma.done [#allocation16], 64
        $region96: #{tpu_custom_call.1} parent=63 // pred_fallthru
          _
        // Predicated region
        $region97: #{tpu_custom_call.1} parent=63 // pred_check
          %p554 = pneg %p243
        $region98: #{tpu_custom_call.1} parent=63 // pred_check_branch
          %556 = sbr.rel (%p554) target = $region100
        $region99: #{tpu_custom_call.1} parent=63 // pred_region
          %557 = dma.done [#allocation16], 4096
        $region100: #{tpu_custom_call.1} parent=63 // pred_fallthru
          _
        // Predicated region
        $region101: #{tpu_custom_call.1} parent=63 // pred_check
          %p558 = pneg %p264
        $region102: #{tpu_custom_call.1} parent=63 // pred_check_branch
          %560 = sbr.rel (%p558) target = $region104
        $region103: #{tpu_custom_call.1} parent=63 // pred_region
          %561 = dma.done [#allocation19], 16
        $region104: #{tpu_custom_call.1} parent=63 // pred_fallthru
          _
        %s562 = sand.u32 %s57, 1
        %s563 = scalar_lea.sflag [#allocation4], %s562
        %s564 = sand.u32 %s57, 1
        %s565 = smul.addr %s564, 8
        %s566 = scalar_lea.vmem [#allocation3], %s565
        %p567 = pneg %p70
        %p568 = pneg %p67
        %s569 = sand.u32 %s35, 1
        %s570 = scalar_lea.sflag [#allocation7], %s569
        %s571 = sand.u32 %s83, 1
        %s572 = smul.addr %s571, 1920
        %s573 = scalar_lea.vmem [#allocation6], %s572
        %p574 = pneg %p96
        %p575 = pneg %p93
        %p576 = pneg %p117
        %p577 = pneg %p114
        %p578 = pneg %p138
        %p579 = pneg %p135
        %p580 = pneg %p159
        %p581 = pneg %p156
        %p582 = pneg %p180
        %p583 = pneg %p177
        %p584 = pneg %p201
        %p585 = pneg %p198
        %p586 = pneg %p222
        %p587 = pneg %p219
        %p588 = pneg %p243
        %p589 = pneg %p240
        %p590 = pneg %p264
        %p591 = pneg %p261
        %p592 = scmp.lt.s32.totalorder %s39, 0
        %s593 = scalar_select %p592, %s39, 0
        %s594 = smul.addr %s593, 8
        %s595 = scalar_lea.vmem %s10, %s594
        %p596 = pneg %p290
        %p597 = pneg %p287
        %p598 = pneg %p316
        %p599 = pneg %p313
        %p600 = pneg %p342
        %p601 = pneg %p339
        %p602 = scmp.lt.s32.totalorder %s39, 0
        %s603 = scalar_select %p602, %s39, 0
        %s604 = smul.addr %s603, 8
        %s605 = scalar_lea.vmem %s12, %s604
        %s606 = smul.u32 2, %s40
        %s607 = smul.u32 32, %s40
        %p608 = scmp.lt.s32.totalorder %s39, 0
        %s609 = scalar_select %p608, %s39, 0
        %s610 = smul.addr %s609, 8
        %s611 = scalar_lea.vmem %s10, %s610
        %p612 = scmp.lt.s32.totalorder %s39, 0
        %s613 = scalar_select %p612, %s39, 0
        %s614 = smul.addr %s613, 8
        %s615 = scalar_lea.vmem %s12, %s614
        %p617 = scmp.eq.s32.totalorder %s40, 0
        // Predicated region
        $region105: #{tpu_custom_call.1} parent=63 // pred_check
          %p618 = pneg %p617
        $region106: #{tpu_custom_call.1} parent=63 // pred_check_branch
          %620 = sbr.rel (%p618) target = $region108
        $region107: #{tpu_custom_call.1} parent=63 // pred_region
          %621 = vst [vmem:[#allocation2] sm:$0xff] 0.0
          %622 = vst [vmem:[#allocation2 + $0x8] sm:$0xff] 0.0
          %623 = vst [vmem:[#allocation2 + $0x10] sm:$0xff] 0.0
          %624 = vst [vmem:[#allocation2 + $0x18] sm:$0xff] 0.0
          %625 = vst [vmem:[#allocation2 + $0x20] sm:$0xff] 0.0
          %626 = vst [vmem:[#allocation2 + $0x28] sm:$0xff] 0.0
          %627 = vst [vmem:[#allocation2 + $0x30] sm:$0xff] 0.0
          %628 = vst [vmem:[#allocation2 + $0x38] sm:$0xff] 0.0
          %629 = vst [vmem:[#allocation2 + $0x40] sm:$0xff] 0.0
          %630 = vst [vmem:[#allocation2 + $0x48] sm:$0xff] 0.0
          %631 = vst [vmem:[#allocation2 + $0x50] sm:$0xff] 0.0
          %632 = vst [vmem:[#allocation2 + $0x58] sm:$0xff] 0.0
          %633 = vst [vmem:[#allocation2 + $0x60] sm:$0xff] 0.0
          %634 = vst [vmem:[#allocation2 + $0x68] sm:$0xff] 0.0
          %635 = vst [vmem:[#allocation2 + $0x70] sm:$0xff] 0.0
        $region108: #{tpu_custom_call.1} parent=63 // pred_fallthru
          _
        %v636 = vld [vmem:[#allocation2] sm:$0xff]
        %v637 = vld [vmem:[#allocation2 + $0x8] sm:$0xff]
        %v638 = vld [vmem:[#allocation2 + $0x10] sm:$0xff]
        %v639 = vld [vmem:[#allocation2 + $0x18] sm:$0xff]
        %v640 = vld [vmem:[#allocation2 + $0x20] sm:$0xff]
        %v641 = vld [vmem:[#allocation2 + $0x28] sm:$0xff]
        %v642 = vld [vmem:[#allocation2 + $0x30] sm:$0xff]
        %v643 = vld [vmem:[#allocation2 + $0x38] sm:$0xff]
        %v644 = vld [vmem:[#allocation2 + $0x40] sm:$0xff]
        %v645 = vld [vmem:[#allocation2 + $0x48] sm:$0xff]
        %v646 = vld [vmem:[#allocation2 + $0x50] sm:$0xff]
        %v647 = vld [vmem:[#allocation2 + $0x58] sm:$0xff]
        %v648 = vld [vmem:[#allocation2 + $0x60] sm:$0xff]
        %v649 = vld [vmem:[#allocation2 + $0x68] sm:$0xff]
        %v650 = vld [vmem:[#allocation2 + $0x70] sm:$0xff]
        %v651 = vld [vmem:[%s516] sm:$0xff]
        %v652 = vld [vmem:[%s525] sm:$0xff]
        %v653 = vld [vmem:[%s525 + $0x8] sm:$0xff]
        %v654 = vld [vmem:[%s525 + $0x10] sm:$0xff]
        %v655 = vld [vmem:[%s525 + $0x18] sm:$0xff]
        %v656 = vld [vmem:[%s525 + $0x20] sm:$0xff]
        %v657 = vld [vmem:[%s525 + $0x28] sm:$0xff]
        %v658 = vld [vmem:[%s525 + $0x30] sm:$0xff]
        %v659 = vld [vmem:[%s525 + $0x38] sm:$0xf]
        %v660 = vld [vmem:[%s525 + $0x3c] sm:$0xff]
        %v661 = vld [vmem:[%s525 + $0x44] sm:$0xff]
        %v662 = vld [vmem:[%s525 + $0x4c] sm:$0xff]
        %v663 = vld [vmem:[%s525 + $0x54] sm:$0xff]
        %v664 = vld [vmem:[%s525 + $0x5c] sm:$0xff]
        %v665 = vld [vmem:[%s525 + $0x64] sm:$0xff]
        %v666 = vld [vmem:[%s525 + $0x6c] sm:$0xff]
        %v667 = vld [vmem:[%s525 + $0x74] sm:$0xf]
        %v668 = vld [vmem:[%s525 + $0x78] sm:$0xff]
        %v669 = vld [vmem:[%s525 + $0x80] sm:$0xff]
        %v670 = vld [vmem:[%s525 + $0x88] sm:$0xff]
        %v671 = vld [vmem:[%s525 + $0x90] sm:$0xff]
        %v672 = vld [vmem:[%s525 + $0x98] sm:$0xff]
        %v673 = vld [vmem:[%s525 + $0xa0] sm:$0xff]
        %v674 = vld [vmem:[%s525 + $0xa8] sm:$0xff]
        %v675 = vld [vmem:[%s525 + $0xb0] sm:$0xf]
        %v676 = vld [vmem:[%s525 + $0xb4] sm:$0xff]
        %v677 = vld [vmem:[%s525 + $0xbc] sm:$0xff]
        %v678 = vld [vmem:[%s525 + $0xc4] sm:$0xff]
        %v679 = vld [vmem:[%s525 + $0xcc] sm:$0xff]
        %v680 = vld [vmem:[%s525 + $0xd4] sm:$0xff]
        %v681 = vld [vmem:[%s525 + $0xdc] sm:$0xff]
        %v682 = vld [vmem:[%s525 + $0xe4] sm:$0xff]
        %v683 = vld [vmem:[%s525 + $0xec] sm:$0xf]
        %v684 = vld [vmem:[%s525 + $0xf0] sm:$0xff]
        %v685 = vld [vmem:[%s525 + $0xf8] sm:$0xff]
        %v686 = vld [vmem:[%s525 + $0x100] sm:$0xff]
        %v687 = vld [vmem:[%s525 + $0x108] sm:$0xff]
        %v688 = vld [vmem:[%s525 + $0x110] sm:$0xff]
        %v689 = vld [vmem:[%s525 + $0x118] sm:$0xff]
        %v690 = vld [vmem:[%s525 + $0x120] sm:$0xff]
        %v691 = vld [vmem:[%s525 + $0x128] sm:$0xf]
        %v692 = vld [vmem:[%s525 + $0x12c] sm:$0xff]
        %v693 = vld [vmem:[%s525 + $0x134] sm:$0xff]
        %v694 = vld [vmem:[%s525 + $0x13c] sm:$0xff]
        %v695 = vld [vmem:[%s525 + $0x144] sm:$0xff]
        %v696 = vld [vmem:[%s525 + $0x14c] sm:$0xff]
        %v697 = vld [vmem:[%s525 + $0x154] sm:$0xff]
        %v698 = vld [vmem:[%s525 + $0x15c] sm:$0xff]
        %v699 = vld [vmem:[%s525 + $0x164] sm:$0xf]
        %v700 = vld [vmem:[%s525 + $0x168] sm:$0xff]
        %v701 = vld [vmem:[%s525 + $0x170] sm:$0xff]
        %v702 = vld [vmem:[%s525 + $0x178] sm:$0xff]
        %v703 = vld [vmem:[%s525 + $0x180] sm:$0xff]
        %v704 = vld [vmem:[%s525 + $0x188] sm:$0xff]
        %v705 = vld [vmem:[%s525 + $0x190] sm:$0xff]
        %v706 = vld [vmem:[%s525 + $0x198] sm:$0xff]
        %v707 = vld [vmem:[%s525 + $0x1a0] sm:$0xf]
        %v708 = vld [vmem:[%s525 + $0x1a4] sm:$0xff]
        %v709 = vld [vmem:[%s525 + $0x1ac] sm:$0xff]
        %v710 = vld [vmem:[%s525 + $0x1b4] sm:$0xff]
        %v711 = vld [vmem:[%s525 + $0x1bc] sm:$0xff]
        %v712 = vld [vmem:[%s525 + $0x1c4] sm:$0xff]
        %v713 = vld [vmem:[%s525 + $0x1cc] sm:$0xff]
        %v714 = vld [vmem:[%s525 + $0x1d4] sm:$0xff]
        %v715 = vld [vmem:[%s525 + $0x1dc] sm:$0xf]
        %v716 = vld [vmem:[%s525 + $0x1e0] sm:$0xff]
        %v717 = vld [vmem:[%s525 + $0x1e8] sm:$0xff]
        %v718 = vld [vmem:[%s525 + $0x1f0] sm:$0xff]
        %v719 = vld [vmem:[%s525 + $0x1f8] sm:$0xff]
        %v720 = vld [vmem:[%s525 + $0x200] sm:$0xff]
        %v721 = vld [vmem:[%s525 + $0x208] sm:$0xff]
        %v722 = vld [vmem:[%s525 + $0x210] sm:$0xff]
        %v723 = vld [vmem:[%s525 + $0x218] sm:$0xf]
        %v724 = vld [vmem:[%s525 + $0x21c] sm:$0xff]
        %v725 = vld [vmem:[%s525 + $0x224] sm:$0xff]
        %v726 = vld [vmem:[%s525 + $0x22c] sm:$0xff]
        %v727 = vld [vmem:[%s525 + $0x234] sm:$0xff]
        %v728 = vld [vmem:[%s525 + $0x23c] sm:$0xff]
        %v729 = vld [vmem:[%s525 + $0x244] sm:$0xff]
        %v730 = vld [vmem:[%s525 + $0x24c] sm:$0xff]
        %v731 = vld [vmem:[%s525 + $0x254] sm:$0xf]
        %v732 = vld [vmem:[%s525 + $0x258] sm:$0xff]
        %v733 = vld [vmem:[%s525 + $0x260] sm:$0xff]
        %v734 = vld [vmem:[%s525 + $0x268] sm:$0xff]
        %v735 = vld [vmem:[%s525 + $0x270] sm:$0xff]
        %v736 = vld [vmem:[%s525 + $0x278] sm:$0xff]
        %v737 = vld [vmem:[%s525 + $0x280] sm:$0xff]
        %v738 = vld [vmem:[%s525 + $0x288] sm:$0xff]
        %v739 = vld [vmem:[%s525 + $0x290] sm:$0xf]
        %v740 = vld [vmem:[%s525 + $0x294] sm:$0xff]
        %v741 = vld [vmem:[%s525 + $0x29c] sm:$0xff]
        %v742 = vld [vmem:[%s525 + $0x2a4] sm:$0xff]
        %v743 = vld [vmem:[%s525 + $0x2ac] sm:$0xff]
        %v744 = vld [vmem:[%s525 + $0x2b4] sm:$0xff]
        %v745 = vld [vmem:[%s525 + $0x2bc] sm:$0xff]
        %v746 = vld [vmem:[%s525 + $0x2c4] sm:$0xff]
        %v747 = vld [vmem:[%s525 + $0x2cc] sm:$0xf]
        %v748 = vld [vmem:[%s525 + $0x2d0] sm:$0xff]
        %v749 = vld [vmem:[%s525 + $0x2d8] sm:$0xff]
        %v750 = vld [vmem:[%s525 + $0x2e0] sm:$0xff]
        %v751 = vld [vmem:[%s525 + $0x2e8] sm:$0xff]
        %v752 = vld [vmem:[%s525 + $0x2f0] sm:$0xff]
        %v753 = vld [vmem:[%s525 + $0x2f8] sm:$0xff]
        %v754 = vld [vmem:[%s525 + $0x300] sm:$0xff]
        %v755 = vld [vmem:[%s525 + $0x308] sm:$0xf]
        %v756 = vld [vmem:[%s525 + $0x30c] sm:$0xff]
        %v757 = vld [vmem:[%s525 + $0x314] sm:$0xff]
        %v758 = vld [vmem:[%s525 + $0x31c] sm:$0xff]
        %v759 = vld [vmem:[%s525 + $0x324] sm:$0xff]
        %v760 = vld [vmem:[%s525 + $0x32c] sm:$0xff]
        %v761 = vld [vmem:[%s525 + $0x334] sm:$0xff]
        %v762 = vld [vmem:[%s525 + $0x33c] sm:$0xff]
        %v763 = vld [vmem:[%s525 + $0x344] sm:$0xf]
        %v764 = vld [vmem:[%s525 + $0x348] sm:$0xff]
        %v765 = vld [vmem:[%s525 + $0x350] sm:$0xff]
        %v766 = vld [vmem:[%s525 + $0x358] sm:$0xff]
        %v767 = vld [vmem:[%s525 + $0x360] sm:$0xff]
        %v768 = vld [vmem:[%s525 + $0x368] sm:$0xff]
        %v769 = vld [vmem:[%s525 + $0x370] sm:$0xff]
        %v770 = vld [vmem:[%s525 + $0x378] sm:$0xff]
        %v771 = vld [vmem:[%s525 + $0x380] sm:$0xf]
        %v772 = vld [vmem:[%s525 + $0x384] sm:$0xff]
        %v773 = vld [vmem:[%s525 + $0x38c] sm:$0xff]
        %v774 = vld [vmem:[%s525 + $0x394] sm:$0xff]
        %v775 = vld [vmem:[%s525 + $0x39c] sm:$0xff]
        %v776 = vld [vmem:[%s525 + $0x3a4] sm:$0xff]
        %v777 = vld [vmem:[%s525 + $0x3ac] sm:$0xff]
        %v778 = vld [vmem:[%s525 + $0x3b4] sm:$0xff]
        %v779 = vld [vmem:[%s525 + $0x3bc] sm:$0xf]
        %v780 = vld [vmem:[%s525 + $0x3c0] sm:$0xff]
        %v781 = vld [vmem:[%s525 + $0x3c8] sm:$0xff]
        %v782 = vld [vmem:[%s525 + $0x3d0] sm:$0xff]
        %v783 = vld [vmem:[%s525 + $0x3d8] sm:$0xff]
        %v784 = vld [vmem:[%s525 + $0x3e0] sm:$0xff]
        %v785 = vld [vmem:[%s525 + $0x3e8] sm:$0xff]
        %v786 = vld [vmem:[%s525 + $0x3f0] sm:$0xff]
        %v787 = vld [vmem:[%s525 + $0x3f8] sm:$0xf]
        %v788 = vld [vmem:[%s525 + $0x3fc] sm:$0xff]
        %v789 = vld [vmem:[%s525 + $0x404] sm:$0xff]
        %v790 = vld [vmem:[%s525 + $0x40c] sm:$0xff]
        %v791 = vld [vmem:[%s525 + $0x414] sm:$0xff]
        %v792 = vld [vmem:[%s525 + $0x41c] sm:$0xff]
        %v793 = vld [vmem:[%s525 + $0x424] sm:$0xff]
        %v794 = vld [vmem:[%s525 + $0x42c] sm:$0xff]
        %v795 = vld [vmem:[%s525 + $0x434] sm:$0xf]
        %v796 = vld [vmem:[%s525 + $0x438] sm:$0xff]
        %v797 = vld [vmem:[%s525 + $0x440] sm:$0xff]
        %v798 = vld [vmem:[%s525 + $0x448] sm:$0xff]
        %v799 = vld [vmem:[%s525 + $0x450] sm:$0xff]
        %v800 = vld [vmem:[%s525 + $0x458] sm:$0xff]
        %v801 = vld [vmem:[%s525 + $0x460] sm:$0xff]
        %v802 = vld [vmem:[%s525 + $0x468] sm:$0xff]
        %v803 = vld [vmem:[%s525 + $0x470] sm:$0xf]
        %v804 = vld [vmem:[%s525 + $0x474] sm:$0xff]
        %v805 = vld [vmem:[%s525 + $0x47c] sm:$0xff]
        %v806 = vld [vmem:[%s525 + $0x484] sm:$0xff]
        %v807 = vld [vmem:[%s525 + $0x48c] sm:$0xff]
        %v808 = vld [vmem:[%s525 + $0x494] sm:$0xff]
        %v809 = vld [vmem:[%s525 + $0x49c] sm:$0xff]
        %v810 = vld [vmem:[%s525 + $0x4a4] sm:$0xff]
        %v811 = vld [vmem:[%s525 + $0x4ac] sm:$0xf]
        %v812 = vld [vmem:[%s525 + $0x4b0] sm:$0xff]
        %v813 = vld [vmem:[%s525 + $0x4b8] sm:$0xff]
        %v814 = vld [vmem:[%s525 + $0x4c0] sm:$0xff]
        %v815 = vld [vmem:[%s525 + $0x4c8] sm:$0xff]
        %v816 = vld [vmem:[%s525 + $0x4d0] sm:$0xff]
        %v817 = vld [vmem:[%s525 + $0x4d8] sm:$0xff]
        %v818 = vld [vmem:[%s525 + $0x4e0] sm:$0xff]
        %v819 = vld [vmem:[%s525 + $0x4e8] sm:$0xf]
        %v820 = vld [vmem:[%s525 + $0x4ec] sm:$0xff]
        %v821 = vld [vmem:[%s525 + $0x4f4] sm:$0xff]
        %v822 = vld [vmem:[%s525 + $0x4fc] sm:$0xff]
        %v823 = vld [vmem:[%s525 + $0x504] sm:$0xff]
        %v824 = vld [vmem:[%s525 + $0x50c] sm:$0xff]
        %v825 = vld [vmem:[%s525 + $0x514] sm:$0xff]
        %v826 = vld [vmem:[%s525 + $0x51c] sm:$0xff]
        %v827 = vld [vmem:[%s525 + $0x524] sm:$0xf]
        %v828 = vld [vmem:[%s525 + $0x528] sm:$0xff]
        %v829 = vld [vmem:[%s525 + $0x530] sm:$0xff]
        %v830 = vld [vmem:[%s525 + $0x538] sm:$0xff]
        %v831 = vld [vmem:[%s525 + $0x540] sm:$0xff]
        %v832 = vld [vmem:[%s525 + $0x548] sm:$0xff]
        %v833 = vld [vmem:[%s525 + $0x550] sm:$0xff]
        %v834 = vld [vmem:[%s525 + $0x558] sm:$0xff]
        %v835 = vld [vmem:[%s525 + $0x560] sm:$0xf]
        %v836 = vld [vmem:[%s525 + $0x564] sm:$0xff]
        %v837 = vld [vmem:[%s525 + $0x56c] sm:$0xff]
        %v838 = vld [vmem:[%s525 + $0x574] sm:$0xff]
        %v839 = vld [vmem:[%s525 + $0x57c] sm:$0xff]
        %v840 = vld [vmem:[%s525 + $0x584] sm:$0xff]
        %v841 = vld [vmem:[%s525 + $0x58c] sm:$0xff]
        %v842 = vld [vmem:[%s525 + $0x594] sm:$0xff]
        %v843 = vld [vmem:[%s525 + $0x59c] sm:$0xf]
        %v844 = vld [vmem:[%s525 + $0x5a0] sm:$0xff]
        %v845 = vld [vmem:[%s525 + $0x5a8] sm:$0xff]
        %v846 = vld [vmem:[%s525 + $0x5b0] sm:$0xff]
        %v847 = vld [vmem:[%s525 + $0x5b8] sm:$0xff]
        %v848 = vld [vmem:[%s525 + $0x5c0] sm:$0xff]
        %v849 = vld [vmem:[%s525 + $0x5c8] sm:$0xff]
        %v850 = vld [vmem:[%s525 + $0x5d0] sm:$0xff]
        %v851 = vld [vmem:[%s525 + $0x5d8] sm:$0xf]
        %v852 = vld [vmem:[%s525 + $0x5dc] sm:$0xff]
        %v853 = vld [vmem:[%s525 + $0x5e4] sm:$0xff]
        %v854 = vld [vmem:[%s525 + $0x5ec] sm:$0xff]
        %v855 = vld [vmem:[%s525 + $0x5f4] sm:$0xff]
        %v856 = vld [vmem:[%s525 + $0x5fc] sm:$0xff]
        %v857 = vld [vmem:[%s525 + $0x604] sm:$0xff]
        %v858 = vld [vmem:[%s525 + $0x60c] sm:$0xff]
        %v859 = vld [vmem:[%s525 + $0x614] sm:$0xf]
        %v860 = vld [vmem:[%s525 + $0x618] sm:$0xff]
        %v861 = vld [vmem:[%s525 + $0x620] sm:$0xff]
        %v862 = vld [vmem:[%s525 + $0x628] sm:$0xff]
        %v863 = vld [vmem:[%s525 + $0x630] sm:$0xff]
        %v864 = vld [vmem:[%s525 + $0x638] sm:$0xff]
        %v865 = vld [vmem:[%s525 + $0x640] sm:$0xff]
        %v866 = vld [vmem:[%s525 + $0x648] sm:$0xff]
        %v867 = vld [vmem:[%s525 + $0x650] sm:$0xf]
        %v868 = vld [vmem:[%s525 + $0x654] sm:$0xff]
        %v869 = vld [vmem:[%s525 + $0x65c] sm:$0xff]
        %v870 = vld [vmem:[%s525 + $0x664] sm:$0xff]
        %v871 = vld [vmem:[%s525 + $0x66c] sm:$0xff]
        %v872 = vld [vmem:[%s525 + $0x674] sm:$0xff]
        %v873 = vld [vmem:[%s525 + $0x67c] sm:$0xff]
        %v874 = vld [vmem:[%s525 + $0x684] sm:$0xff]
        %v875 = vld [vmem:[%s525 + $0x68c] sm:$0xf]
        %v876 = vld [vmem:[%s525 + $0x690] sm:$0xff]
        %v877 = vld [vmem:[%s525 + $0x698] sm:$0xff]
        %v878 = vld [vmem:[%s525 + $0x6a0] sm:$0xff]
        %v879 = vld [vmem:[%s525 + $0x6a8] sm:$0xff]
        %v880 = vld [vmem:[%s525 + $0x6b0] sm:$0xff]
        %v881 = vld [vmem:[%s525 + $0x6b8] sm:$0xff]
        %v882 = vld [vmem:[%s525 + $0x6c0] sm:$0xff]
        %v883 = vld [vmem:[%s525 + $0x6c8] sm:$0xf]
        %v884 = vld [vmem:[%s525 + $0x6cc] sm:$0xff]
        %v885 = vld [vmem:[%s525 + $0x6d4] sm:$0xff]
        %v886 = vld [vmem:[%s525 + $0x6dc] sm:$0xff]
        %v887 = vld [vmem:[%s525 + $0x6e4] sm:$0xff]
        %v888 = vld [vmem:[%s525 + $0x6ec] sm:$0xff]
        %v889 = vld [vmem:[%s525 + $0x6f4] sm:$0xff]
        %v890 = vld [vmem:[%s525 + $0x6fc] sm:$0xff]
        %v891 = vld [vmem:[%s525 + $0x704] sm:$0xf]
        %v892 = vld [vmem:[%s525 + $0x708] sm:$0xff]
        %v893 = vld [vmem:[%s525 + $0x710] sm:$0xff]
        %v894 = vld [vmem:[%s525 + $0x718] sm:$0xff]
        %v895 = vld [vmem:[%s525 + $0x720] sm:$0xff]
        %v896 = vld [vmem:[%s525 + $0x728] sm:$0xff]
        %v897 = vld [vmem:[%s525 + $0x730] sm:$0xff]
        %v898 = vld [vmem:[%s525 + $0x738] sm:$0xff]
        %v899 = vld [vmem:[%s525 + $0x740] sm:$0xf]
        %v900 = vld [vmem:[%s525 + $0x744] sm:$0xff]
        %v901 = vld [vmem:[%s525 + $0x74c] sm:$0xff]
        %v902 = vld [vmem:[%s525 + $0x754] sm:$0xff]
        %v903 = vld [vmem:[%s525 + $0x75c] sm:$0xff]
        %v904 = vld [vmem:[%s525 + $0x764] sm:$0xff]
        %v905 = vld [vmem:[%s525 + $0x76c] sm:$0xff]
        %v906 = vld [vmem:[%s525 + $0x774] sm:$0xff]
        %v907 = vld [vmem:[%s525 + $0x77c] sm:$0xf]
        %v909 = vunpack.c.l.b16 %v651
        %v910 = vunpack.c.h.b16 %v651
        %v911 = vpack.c.b16 %v909, %v909
        %v912 = vpack.c.b16 %v910, %v910
        %v1171 = vunpack.c.l.b16 %v652
        %v1172 = vunpack.c.h.b16 %v652
        %v1173 = vunpack.c.l.b16 %v653
        %v1174 = vunpack.c.h.b16 %v653
        %v1175 = vunpack.c.l.b16 %v654
        %v1176 = vunpack.c.h.b16 %v654
        %v1177 = vunpack.c.l.b16 %v655
        %v1178 = vunpack.c.h.b16 %v655
        %v1179 = vunpack.c.l.b16 %v656
        %v1180 = vunpack.c.h.b16 %v656
        %v1181 = vunpack.c.l.b16 %v657
        %v1182 = vunpack.c.h.b16 %v657
        %v1183 = vunpack.c.l.b16 %v658
        %v1184 = vunpack.c.h.b16 %v658
        %v1185 = vunpack.c.l.b16 %v659
        %v1186 = vunpack.c.l.b16 %v660
        %v1187 = vunpack.c.h.b16 %v660
        %v1188 = vunpack.c.l.b16 %v661
        %v1189 = vunpack.c.h.b16 %v661
        %v1190 = vunpack.c.l.b16 %v662
        %v1191 = vunpack.c.h.b16 %v662
        %v1192 = vunpack.c.l.b16 %v663
        %v1193 = vunpack.c.h.b16 %v663
        %v1194 = vunpack.c.l.b16 %v664
        %v1195 = vunpack.c.h.b16 %v664
        %v1196 = vunpack.c.l.b16 %v665
        %v1197 = vunpack.c.h.b16 %v665
        %v1198 = vunpack.c.l.b16 %v666
        %v1199 = vunpack.c.h.b16 %v666
        %v1200 = vunpack.c.l.b16 %v667
        %v1201 = vunpack.c.l.b16 %v668
        %v1202 = vunpack.c.h.b16 %v668
        %v1203 = vunpack.c.l.b16 %v669
        %v1204 = vunpack.c.h.b16 %v669
        %v1205 = vunpack.c.l.b16 %v670
        %v1206 = vunpack.c.h.b16 %v670
        %v1207 = vunpack.c.l.b16 %v671
        %v1208 = vunpack.c.h.b16 %v671
        %v1209 = vunpack.c.l.b16 %v672
        %v1210 = vunpack.c.h.b16 %v672
        %v1211 = vunpack.c.l.b16 %v673
        %v1212 = vunpack.c.h.b16 %v673
        %v1213 = vunpack.c.l.b16 %v674
        %v1214 = vunpack.c.h.b16 %v674
        %v1215 = vunpack.c.l.b16 %v675
        %v1216 = vunpack.c.l.b16 %v676
        %v1217 = vunpack.c.h.b16 %v676
        %v1218 = vunpack.c.l.b16 %v677
        %v1219 = vunpack.c.h.b16 %v677
        %v1220 = vunpack.c.l.b16 %v678
        %v1221 = vunpack.c.h.b16 %v678
        %v1222 = vunpack.c.l.b16 %v679
        %v1223 = vunpack.c.h.b16 %v679
        %v1224 = vunpack.c.l.b16 %v680
        %v1225 = vunpack.c.h.b16 %v680
        %v1226 = vunpack.c.l.b16 %v681
        %v1227 = vunpack.c.h.b16 %v681
        %v1228 = vunpack.c.l.b16 %v682
        %v1229 = vunpack.c.h.b16 %v682
        %v1230 = vunpack.c.l.b16 %v683
        %v1231 = vunpack.c.l.b16 %v684
        %v1232 = vunpack.c.h.b16 %v684
        %v1233 = vunpack.c.l.b16 %v685
        %v1234 = vunpack.c.h.b16 %v685
        %v1235 = vunpack.c.l.b16 %v686
        %v1236 = vunpack.c.h.b16 %v686
        %v1237 = vunpack.c.l.b16 %v687
        %v1238 = vunpack.c.h.b16 %v687
        %v1239 = vunpack.c.l.b16 %v688
        %v1240 = vunpack.c.h.b16 %v688
        %v1241 = vunpack.c.l.b16 %v689
        %v1242 = vunpack.c.h.b16 %v689
        %v1243 = vunpack.c.l.b16 %v690
        %v1244 = vunpack.c.h.b16 %v690
        %v1245 = vunpack.c.l.b16 %v691
        %v1246 = vunpack.c.l.b16 %v692
        %v1247 = vunpack.c.h.b16 %v692
        %v1248 = vunpack.c.l.b16 %v693
        %v1249 = vunpack.c.h.b16 %v693
        %v1250 = vunpack.c.l.b16 %v694
        %v1251 = vunpack.c.h.b16 %v694
        %v1252 = vunpack.c.l.b16 %v695
        %v1253 = vunpack.c.h.b16 %v695
        %v1254 = vunpack.c.l.b16 %v696
        %v1255 = vunpack.c.h.b16 %v696
        %v1256 = vunpack.c.l.b16 %v697
        %v1257 = vunpack.c.h.b16 %v697
        %v1258 = vunpack.c.l.b16 %v698
        %v1259 = vunpack.c.h.b16 %v698
        %v1260 = vunpack.c.l.b16 %v699
        %v1261 = vunpack.c.l.b16 %v700
        %v1262 = vunpack.c.h.b16 %v700
        %v1263 = vunpack.c.l.b16 %v701
        %v1264 = vunpack.c.h.b16 %v701
        %v1265 = vunpack.c.l.b16 %v702
        %v1266 = vunpack.c.h.b16 %v702
        %v1267 = vunpack.c.l.b16 %v703
        %v1268 = vunpack.c.h.b16 %v703
        %v1269 = vunpack.c.l.b16 %v704
        %v1270 = vunpack.c.h.b16 %v704
        %v1271 = vunpack.c.l.b16 %v705
        %v1272 = vunpack.c.h.b16 %v705
        %v1273 = vunpack.c.l.b16 %v706
        %v1274 = vunpack.c.h.b16 %v706
        %v1275 = vunpack.c.l.b16 %v707
        %v1276 = vunpack.c.l.b16 %v708
        %v1277 = vunpack.c.h.b16 %v708
        %v1278 = vunpack.c.l.b16 %v709
        %v1279 = vunpack.c.h.b16 %v709
        %v1280 = vunpack.c.l.b16 %v710
        %v1281 = vunpack.c.h.b16 %v710
        %v1282 = vunpack.c.l.b16 %v711
        %v1283 = vunpack.c.h.b16 %v711
        %v1284 = vunpack.c.l.b16 %v712
        %v1285 = vunpack.c.h.b16 %v712
        %v1286 = vunpack.c.l.b16 %v713
        %v1287 = vunpack.c.h.b16 %v713
        %v1288 = vunpack.c.l.b16 %v714
        %v1289 = vunpack.c.h.b16 %v714
        %v1290 = vunpack.c.l.b16 %v715
        %v1291 = vunpack.c.l.b16 %v716
        %v1292 = vunpack.c.h.b16 %v716
        %v1293 = vunpack.c.l.b16 %v717
        %v1294 = vunpack.c.h.b16 %v717
        %v1295 = vunpack.c.l.b16 %v718
        %v1296 = vunpack.c.h.b16 %v718
        %v1297 = vunpack.c.l.b16 %v719
        %v1298 = vunpack.c.h.b16 %v719
        %v1299 = vunpack.c.l.b16 %v720
        %v1300 = vunpack.c.h.b16 %v720
        %v1301 = vunpack.c.l.b16 %v721
        %v1302 = vunpack.c.h.b16 %v721
        %v1303 = vunpack.c.l.b16 %v722
        %v1304 = vunpack.c.h.b16 %v722
        %v1305 = vunpack.c.l.b16 %v723
        %v1306 = vunpack.c.l.b16 %v724
        %v1307 = vunpack.c.h.b16 %v724
        %v1308 = vunpack.c.l.b16 %v725
        %v1309 = vunpack.c.h.b16 %v725
        %v1310 = vunpack.c.l.b16 %v726
        %v1311 = vunpack.c.h.b16 %v726
        %v1312 = vunpack.c.l.b16 %v727
        %v1313 = vunpack.c.h.b16 %v727
        %v1314 = vunpack.c.l.b16 %v728
        %v1315 = vunpack.c.h.b16 %v728
        %v1316 = vunpack.c.l.b16 %v729
        %v1317 = vunpack.c.h.b16 %v729
        %v1318 = vunpack.c.l.b16 %v730
        %v1319 = vunpack.c.h.b16 %v730
        %v1320 = vunpack.c.l.b16 %v731
        %v1321 = vunpack.c.l.b16 %v732
        %v1322 = vunpack.c.h.b16 %v732
        %v1323 = vunpack.c.l.b16 %v733
        %v1324 = vunpack.c.h.b16 %v733
        %v1325 = vunpack.c.l.b16 %v734
        %v1326 = vunpack.c.h.b16 %v734
        %v1327 = vunpack.c.l.b16 %v735
        %v1328 = vunpack.c.h.b16 %v735
        %v1329 = vunpack.c.l.b16 %v736
        %v1330 = vunpack.c.h.b16 %v736
        %v1331 = vunpack.c.l.b16 %v737
        %v1332 = vunpack.c.h.b16 %v737
        %v1333 = vunpack.c.l.b16 %v738
        %v1334 = vunpack.c.h.b16 %v738
        %v1335 = vunpack.c.l.b16 %v739
        %v1336 = vunpack.c.l.b16 %v740
        %v1337 = vunpack.c.h.b16 %v740
        %v1338 = vunpack.c.l.b16 %v741
        %v1339 = vunpack.c.h.b16 %v741
        %v1340 = vunpack.c.l.b16 %v742
        %v1341 = vunpack.c.h.b16 %v742
        %v1342 = vunpack.c.l.b16 %v743
        %v1343 = vunpack.c.h.b16 %v743
        %v1344 = vunpack.c.l.b16 %v744
        %v1345 = vunpack.c.h.b16 %v744
        %v1346 = vunpack.c.l.b16 %v745
        %v1347 = vunpack.c.h.b16 %v745
        %v1348 = vunpack.c.l.b16 %v746
        %v1349 = vunpack.c.h.b16 %v746
        %v1350 = vunpack.c.l.b16 %v747
        %v1351 = vunpack.c.l.b16 %v748
        %v1352 = vunpack.c.h.b16 %v748
        %v1353 = vunpack.c.l.b16 %v749
        %v1354 = vunpack.c.h.b16 %v749
        %v1355 = vunpack.c.l.b16 %v750
        %v1356 = vunpack.c.h.b16 %v750
        %v1357 = vunpack.c.l.b16 %v751
        %v1358 = vunpack.c.h.b16 %v751
        %v1359 = vunpack.c.l.b16 %v752
        %v1360 = vunpack.c.h.b16 %v752
        %v1361 = vunpack.c.l.b16 %v753
        %v1362 = vunpack.c.h.b16 %v753
        %v1363 = vunpack.c.l.b16 %v754
        %v1364 = vunpack.c.h.b16 %v754
        %v1365 = vunpack.c.l.b16 %v755
        %v1366 = vunpack.c.l.b16 %v756
        %v1367 = vunpack.c.h.b16 %v756
        %v1368 = vunpack.c.l.b16 %v757
        %v1369 = vunpack.c.h.b16 %v757
        %v1370 = vunpack.c.l.b16 %v758
        %v1371 = vunpack.c.h.b16 %v758
        %v1372 = vunpack.c.l.b16 %v759
        %v1373 = vunpack.c.h.b16 %v759
        %v1374 = vunpack.c.l.b16 %v760
        %v1375 = vunpack.c.h.b16 %v760
        %v1376 = vunpack.c.l.b16 %v761
        %v1377 = vunpack.c.h.b16 %v761
        %v1378 = vunpack.c.l.b16 %v762
        %v1379 = vunpack.c.h.b16 %v762
        %v1380 = vunpack.c.l.b16 %v763
        %v1381 = vunpack.c.l.b16 %v764
        %v1382 = vunpack.c.h.b16 %v764
        %v1383 = vunpack.c.l.b16 %v765
        %v1384 = vunpack.c.h.b16 %v765
        %v1385 = vunpack.c.l.b16 %v766
        %v1386 = vunpack.c.h.b16 %v766
        %v1387 = vunpack.c.l.b16 %v767
        %v1388 = vunpack.c.h.b16 %v767
        %v1389 = vunpack.c.l.b16 %v768
        %v1390 = vunpack.c.h.b16 %v768
        %v1391 = vunpack.c.l.b16 %v769
        %v1392 = vunpack.c.h.b16 %v769
        %v1393 = vunpack.c.l.b16 %v770
        %v1394 = vunpack.c.h.b16 %v770
        %v1395 = vunpack.c.l.b16 %v771
        %v1396 = vunpack.c.l.b16 %v772
        %v1397 = vunpack.c.h.b16 %v772
        %v1398 = vunpack.c.l.b16 %v773
        %v1399 = vunpack.c.h.b16 %v773
        %v1400 = vunpack.c.l.b16 %v774
        %v1401 = vunpack.c.h.b16 %v774
        %v1402 = vunpack.c.l.b16 %v775
        %v1403 = vunpack.c.h.b16 %v775
        %v1404 = vunpack.c.l.b16 %v776
        %v1405 = vunpack.c.h.b16 %v776
        %v1406 = vunpack.c.l.b16 %v777
        %v1407 = vunpack.c.h.b16 %v777
        %v1408 = vunpack.c.l.b16 %v778
        %v1409 = vunpack.c.h.b16 %v778
        %v1410 = vunpack.c.l.b16 %v779
        %v1411 = vunpack.c.l.b16 %v780
        %v1412 = vunpack.c.h.b16 %v780
        %v1413 = vunpack.c.l.b16 %v781
        %v1414 = vunpack.c.h.b16 %v781
        %v1415 = vunpack.c.l.b16 %v782
        %v1416 = vunpack.c.h.b16 %v782
        %v1417 = vunpack.c.l.b16 %v783
        %v1418 = vunpack.c.h.b16 %v783
        %v1419 = vunpack.c.l.b16 %v784
        %v1420 = vunpack.c.h.b16 %v784
        %v1421 = vunpack.c.l.b16 %v785
        %v1422 = vunpack.c.h.b16 %v785
        %v1423 = vunpack.c.l.b16 %v786
        %v1424 = vunpack.c.h.b16 %v786
        %v1425 = vunpack.c.l.b16 %v787
        %v1426 = vunpack.c.l.b16 %v788
        %v1427 = vunpack.c.h.b16 %v788
        %v1428 = vunpack.c.l.b16 %v789
        %v1429 = vunpack.c.h.b16 %v789
        %v1430 = vunpack.c.l.b16 %v790
        %v1431 = vunpack.c.h.b16 %v790
        %v1432 = vunpack.c.l.b16 %v791
        %v1433 = vunpack.c.h.b16 %v791
        %v1434 = vunpack.c.l.b16 %v792
        %v1435 = vunpack.c.h.b16 %v792
        %v1436 = vunpack.c.l.b16 %v793
        %v1437 = vunpack.c.h.b16 %v793
        %v1438 = vunpack.c.l.b16 %v794
        %v1439 = vunpack.c.h.b16 %v794
        %v1440 = vunpack.c.l.b16 %v795
        %v1441 = vunpack.c.l.b16 %v796
        %v1442 = vunpack.c.h.b16 %v796
        %v1443 = vunpack.c.l.b16 %v797
        %v1444 = vunpack.c.h.b16 %v797
        %v1445 = vunpack.c.l.b16 %v798
        %v1446 = vunpack.c.h.b16 %v798
        %v1447 = vunpack.c.l.b16 %v799
        %v1448 = vunpack.c.h.b16 %v799
        %v1449 = vunpack.c.l.b16 %v800
        %v1450 = vunpack.c.h.b16 %v800
        %v1451 = vunpack.c.l.b16 %v801
        %v1452 = vunpack.c.h.b16 %v801
        %v1453 = vunpack.c.l.b16 %v802
        %v1454 = vunpack.c.h.b16 %v802
        %v1455 = vunpack.c.l.b16 %v803
        %v1456 = vunpack.c.l.b16 %v804
        %v1457 = vunpack.c.h.b16 %v804
        %v1458 = vunpack.c.l.b16 %v805
        %v1459 = vunpack.c.h.b16 %v805
        %v1460 = vunpack.c.l.b16 %v806
        %v1461 = vunpack.c.h.b16 %v806
        %v1462 = vunpack.c.l.b16 %v807
        %v1463 = vunpack.c.h.b16 %v807
        %v1464 = vunpack.c.l.b16 %v808
        %v1465 = vunpack.c.h.b16 %v808
        %v1466 = vunpack.c.l.b16 %v809
        %v1467 = vunpack.c.h.b16 %v809
        %v1468 = vunpack.c.l.b16 %v810
        %v1469 = vunpack.c.h.b16 %v810
        %v1470 = vunpack.c.l.b16 %v811
        %v1471 = vunpack.c.l.b16 %v812
        %v1472 = vunpack.c.h.b16 %v812
        %v1473 = vunpack.c.l.b16 %v813
        %v1474 = vunpack.c.h.b16 %v813
        %v1475 = vunpack.c.l.b16 %v814
        %v1476 = vunpack.c.h.b16 %v814
        %v1477 = vunpack.c.l.b16 %v815
        %v1478 = vunpack.c.h.b16 %v815
        %v1479 = vunpack.c.l.b16 %v816
        %v1480 = vunpack.c.h.b16 %v816
        %v1481 = vunpack.c.l.b16 %v817
        %v1482 = vunpack.c.h.b16 %v817
        %v1483 = vunpack.c.l.b16 %v818
        %v1484 = vunpack.c.h.b16 %v818
        %v1485 = vunpack.c.l.b16 %v819
        %v1486 = vunpack.c.l.b16 %v820
        %v1487 = vunpack.c.h.b16 %v820
        %v1488 = vunpack.c.l.b16 %v821
        %v1489 = vunpack.c.h.b16 %v821
        %v1490 = vunpack.c.l.b16 %v822
        %v1491 = vunpack.c.h.b16 %v822
        %v1492 = vunpack.c.l.b16 %v823
        %v1493 = vunpack.c.h.b16 %v823
        %v1494 = vunpack.c.l.b16 %v824
        %v1495 = vunpack.c.h.b16 %v824
        %v1496 = vunpack.c.l.b16 %v825
        %v1497 = vunpack.c.h.b16 %v825
        %v1498 = vunpack.c.l.b16 %v826
        %v1499 = vunpack.c.h.b16 %v826
        %v1500 = vunpack.c.l.b16 %v827
        %v1501 = vunpack.c.l.b16 %v828
        %v1502 = vunpack.c.h.b16 %v828
        %v1503 = vunpack.c.l.b16 %v829
        %v1504 = vunpack.c.h.b16 %v829
        %v1505 = vunpack.c.l.b16 %v830
        %v1506 = vunpack.c.h.b16 %v830
        %v1507 = vunpack.c.l.b16 %v831
        %v1508 = vunpack.c.h.b16 %v831
        %v1509 = vunpack.c.l.b16 %v832
        %v1510 = vunpack.c.h.b16 %v832
        %v1511 = vunpack.c.l.b16 %v833
        %v1512 = vunpack.c.h.b16 %v833
        %v1513 = vunpack.c.l.b16 %v834
        %v1514 = vunpack.c.h.b16 %v834
        %v1515 = vunpack.c.l.b16 %v835
        %v1516 = vunpack.c.l.b16 %v836
        %v1517 = vunpack.c.h.b16 %v836
        %v1518 = vunpack.c.l.b16 %v837
        %v1519 = vunpack.c.h.b16 %v837
        %v1520 = vunpack.c.l.b16 %v838
        %v1521 = vunpack.c.h.b16 %v838
        %v1522 = vunpack.c.l.b16 %v839
        %v1523 = vunpack.c.h.b16 %v839
        %v1524 = vunpack.c.l.b16 %v840
        %v1525 = vunpack.c.h.b16 %v840
        %v1526 = vunpack.c.l.b16 %v841
        %v1527 = vunpack.c.h.b16 %v841
        %v1528 = vunpack.c.l.b16 %v842
        %v1529 = vunpack.c.h.b16 %v842
        %v1530 = vunpack.c.l.b16 %v843
        %v1531 = vunpack.c.l.b16 %v844
        %v1532 = vunpack.c.h.b16 %v844
        %v1533 = vunpack.c.l.b16 %v845
        %v1534 = vunpack.c.h.b16 %v845
        %v1535 = vunpack.c.l.b16 %v846
        %v1536 = vunpack.c.h.b16 %v846
        %v1537 = vunpack.c.l.b16 %v847
        %v1538 = vunpack.c.h.b16 %v847
        %v1539 = vunpack.c.l.b16 %v848
        %v1540 = vunpack.c.h.b16 %v848
        %v1541 = vunpack.c.l.b16 %v849
        %v1542 = vunpack.c.h.b16 %v849
        %v1543 = vunpack.c.l.b16 %v850
        %v1544 = vunpack.c.h.b16 %v850
        %v1545 = vunpack.c.l.b16 %v851
        %v1546 = vunpack.c.l.b16 %v852
        %v1547 = vunpack.c.h.b16 %v852
        %v1548 = vunpack.c.l.b16 %v853
        %v1549 = vunpack.c.h.b16 %v853
        %v1550 = vunpack.c.l.b16 %v854
        %v1551 = vunpack.c.h.b16 %v854
        %v1552 = vunpack.c.l.b16 %v855
        %v1553 = vunpack.c.h.b16 %v855
        %v1554 = vunpack.c.l.b16 %v856
        %v1555 = vunpack.c.h.b16 %v856
        %v1556 = vunpack.c.l.b16 %v857
        %v1557 = vunpack.c.h.b16 %v857
        %v1558 = vunpack.c.l.b16 %v858
        %v1559 = vunpack.c.h.b16 %v858
        %v1560 = vunpack.c.l.b16 %v859
        %v1561 = vunpack.c.l.b16 %v860
        %v1562 = vunpack.c.h.b16 %v860
        %v1563 = vunpack.c.l.b16 %v861
        %v1564 = vunpack.c.h.b16 %v861
        %v1565 = vunpack.c.l.b16 %v862
        %v1566 = vunpack.c.h.b16 %v862
        %v1567 = vunpack.c.l.b16 %v863
        %v1568 = vunpack.c.h.b16 %v863
        %v1569 = vunpack.c.l.b16 %v864
        %v1570 = vunpack.c.h.b16 %v864
        %v1571 = vunpack.c.l.b16 %v865
        %v1572 = vunpack.c.h.b16 %v865
        %v1573 = vunpack.c.l.b16 %v866
        %v1574 = vunpack.c.h.b16 %v866
        %v1575 = vunpack.c.l.b16 %v867
        %v1576 = vunpack.c.l.b16 %v868
        %v1577 = vunpack.c.h.b16 %v868
        %v1578 = vunpack.c.l.b16 %v869
        %v1579 = vunpack.c.h.b16 %v869
        %v1580 = vunpack.c.l.b16 %v870
        %v1581 = vunpack.c.h.b16 %v870
        %v1582 = vunpack.c.l.b16 %v871
        %v1583 = vunpack.c.h.b16 %v871
        %v1584 = vunpack.c.l.b16 %v872
        %v1585 = vunpack.c.h.b16 %v872
        %v1586 = vunpack.c.l.b16 %v873
        %v1587 = vunpack.c.h.b16 %v873
        %v1588 = vunpack.c.l.b16 %v874
        %v1589 = vunpack.c.h.b16 %v874
        %v1590 = vunpack.c.l.b16 %v875
        %v1591 = vunpack.c.l.b16 %v876
        %v1592 = vunpack.c.h.b16 %v876
        %v1593 = vunpack.c.l.b16 %v877
        %v1594 = vunpack.c.h.b16 %v877
        %v1595 = vunpack.c.l.b16 %v878
        %v1596 = vunpack.c.h.b16 %v878
        %v1597 = vunpack.c.l.b16 %v879
        %v1598 = vunpack.c.h.b16 %v879
        %v1599 = vunpack.c.l.b16 %v880
        %v1600 = vunpack.c.h.b16 %v880
        %v1601 = vunpack.c.l.b16 %v881
        %v1602 = vunpack.c.h.b16 %v881
        %v1603 = vunpack.c.l.b16 %v882
        %v1604 = vunpack.c.h.b16 %v882
        %v1605 = vunpack.c.l.b16 %v883
        %v1606 = vunpack.c.l.b16 %v884
        %v1607 = vunpack.c.h.b16 %v884
        %v1608 = vunpack.c.l.b16 %v885
        %v1609 = vunpack.c.h.b16 %v885
        %v1610 = vunpack.c.l.b16 %v886
        %v1611 = vunpack.c.h.b16 %v886
        %v1612 = vunpack.c.l.b16 %v887
        %v1613 = vunpack.c.h.b16 %v887
        %v1614 = vunpack.c.l.b16 %v888
        %v1615 = vunpack.c.h.b16 %v888
        %v1616 = vunpack.c.l.b16 %v889
        %v1617 = vunpack.c.h.b16 %v889
        %v1618 = vunpack.c.l.b16 %v890
        %v1619 = vunpack.c.h.b16 %v890
        %v1620 = vunpack.c.l.b16 %v891
        %v1621 = vunpack.c.l.b16 %v892
        %v1622 = vunpack.c.h.b16 %v892
        %v1623 = vunpack.c.l.b16 %v893
        %v1624 = vunpack.c.h.b16 %v893
        %v1625 = vunpack.c.l.b16 %v894
        %v1626 = vunpack.c.h.b16 %v894
        %v1627 = vunpack.c.l.b16 %v895
        %v1628 = vunpack.c.h.b16 %v895
        %v1629 = vunpack.c.l.b16 %v896
        %v1630 = vunpack.c.h.b16 %v896
        %v1631 = vunpack.c.l.b16 %v897
        %v1632 = vunpack.c.h.b16 %v897
        %v1633 = vunpack.c.l.b16 %v898
        %v1634 = vunpack.c.h.b16 %v898
        %v1635 = vunpack.c.l.b16 %v899
        %v1636 = vunpack.c.l.b16 %v900
        %v1637 = vunpack.c.h.b16 %v900
        %v1638 = vunpack.c.l.b16 %v901
        %v1639 = vunpack.c.h.b16 %v901
        %v1640 = vunpack.c.l.b16 %v902
        %v1641 = vunpack.c.h.b16 %v902
        %v1642 = vunpack.c.l.b16 %v903
        %v1643 = vunpack.c.h.b16 %v903
        %v1644 = vunpack.c.l.b16 %v904
        %v1645 = vunpack.c.h.b16 %v904
        %v1646 = vunpack.c.l.b16 %v905
        %v1647 = vunpack.c.h.b16 %v905
        %v1648 = vunpack.c.l.b16 %v906
        %v1649 = vunpack.c.h.b16 %v906
        %v1650 = vunpack.c.l.b16 %v907
        %v1651 = vpack.c.b16 %v1186, %v1171
        %v1652 = vpack.c.b16 %v1187, %v1172
        %v1653 = vpack.c.b16 %v1188, %v1173
        %v1654 = vpack.c.b16 %v1189, %v1174
        %v1655 = vpack.c.b16 %v1190, %v1175
        %v1656 = vpack.c.b16 %v1191, %v1176
        %v1657 = vpack.c.b16 %v1192, %v1177
        %v1658 = vpack.c.b16 %v1193, %v1178
        %v1659 = vpack.c.b16 %v1194, %v1179
        %v1660 = vpack.c.b16 %v1195, %v1180
        %v1661 = vpack.c.b16 %v1196, %v1181
        %v1662 = vpack.c.b16 %v1197, %v1182
        %v1663 = vpack.c.b16 %v1198, %v1183
        %v1664 = vpack.c.b16 %v1199, %v1184
        %v1665 = vpack.c.b16 %v1200, %v1185
        %v1666 = vpack.c.b16 %v1216, %v1201
        %v1667 = vpack.c.b16 %v1217, %v1202
        %v1668 = vpack.c.b16 %v1218, %v1203
        %v1669 = vpack.c.b16 %v1219, %v1204
        %v1670 = vpack.c.b16 %v1220, %v1205
        %v1671 = vpack.c.b16 %v1221, %v1206
        %v1672 = vpack.c.b16 %v1222, %v1207
        %v1673 = vpack.c.b16 %v1223, %v1208
        %v1674 = vpack.c.b16 %v1224, %v1209
        %v1675 = vpack.c.b16 %v1225, %v1210
        %v1676 = vpack.c.b16 %v1226, %v1211
        %v1677 = vpack.c.b16 %v1227, %v1212
        %v1678 = vpack.c.b16 %v1228, %v1213
        %v1679 = vpack.c.b16 %v1229, %v1214
        %v1680 = vpack.c.b16 %v1230, %v1215
        %v1681 = vpack.c.b16 %v1246, %v1231
        %v1682 = vpack.c.b16 %v1247, %v1232
        %v1683 = vpack.c.b16 %v1248, %v1233
        %v1684 = vpack.c.b16 %v1249, %v1234
        %v1685 = vpack.c.b16 %v1250, %v1235
        %v1686 = vpack.c.b16 %v1251, %v1236
        %v1687 = vpack.c.b16 %v1252, %v1237
        %v1688 = vpack.c.b16 %v1253, %v1238
        %v1689 = vpack.c.b16 %v1254, %v1239
        %v1690 = vpack.c.b16 %v1255, %v1240
        %v1691 = vpack.c.b16 %v1256, %v1241
        %v1692 = vpack.c.b16 %v1257, %v1242
        %v1693 = vpack.c.b16 %v1258, %v1243
        %v1694 = vpack.c.b16 %v1259, %v1244
        %v1695 = vpack.c.b16 %v1260, %v1245
        %v1696 = vpack.c.b16 %v1276, %v1261
        %v1697 = vpack.c.b16 %v1277, %v1262
        %v1698 = vpack.c.b16 %v1278, %v1263
        %v1699 = vpack.c.b16 %v1279, %v1264
        %v1700 = vpack.c.b16 %v1280, %v1265
        %v1701 = vpack.c.b16 %v1281, %v1266
        %v1702 = vpack.c.b16 %v1282, %v1267
        %v1703 = vpack.c.b16 %v1283, %v1268
        %v1704 = vpack.c.b16 %v1284, %v1269
        %v1705 = vpack.c.b16 %v1285, %v1270
        %v1706 = vpack.c.b16 %v1286, %v1271
        %v1707 = vpack.c.b16 %v1287, %v1272
        %v1708 = vpack.c.b16 %v1288, %v1273
        %v1709 = vpack.c.b16 %v1289, %v1274
        %v1710 = vpack.c.b16 %v1290, %v1275
        %v1711 = vpack.c.b16 %v1306, %v1291
        %v1712 = vpack.c.b16 %v1307, %v1292
        %v1713 = vpack.c.b16 %v1308, %v1293
        %v1714 = vpack.c.b16 %v1309, %v1294
        %v1715 = vpack.c.b16 %v1310, %v1295
        %v1716 = vpack.c.b16 %v1311, %v1296
        %v1717 = vpack.c.b16 %v1312, %v1297
        %v1718 = vpack.c.b16 %v1313, %v1298
        %v1719 = vpack.c.b16 %v1314, %v1299
        %v1720 = vpack.c.b16 %v1315, %v1300
        %v1721 = vpack.c.b16 %v1316, %v1301
        %v1722 = vpack.c.b16 %v1317, %v1302
        %v1723 = vpack.c.b16 %v1318, %v1303
        %v1724 = vpack.c.b16 %v1319, %v1304
        %v1725 = vpack.c.b16 %v1320, %v1305
        %v1726 = vpack.c.b16 %v1336, %v1321
        %v1727 = vpack.c.b16 %v1337, %v1322
        %v1728 = vpack.c.b16 %v1338, %v1323
        %v1729 = vpack.c.b16 %v1339, %v1324
        %v1730 = vpack.c.b16 %v1340, %v1325
        %v1731 = vpack.c.b16 %v1341, %v1326
        %v1732 = vpack.c.b16 %v1342, %v1327
        %v1733 = vpack.c.b16 %v1343, %v1328
        %v1734 = vpack.c.b16 %v1344, %v1329
        %v1735 = vpack.c.b16 %v1345, %v1330
        %v1736 = vpack.c.b16 %v1346, %v1331
        %v1737 = vpack.c.b16 %v1347, %v1332
        %v1738 = vpack.c.b16 %v1348, %v1333
        %v1739 = vpack.c.b16 %v1349, %v1334
        %v1740 = vpack.c.b16 %v1350, %v1335
        %v1741 = vpack.c.b16 %v1366, %v1351
        %v1742 = vpack.c.b16 %v1367, %v1352
        %v1743 = vpack.c.b16 %v1368, %v1353
        %v1744 = vpack.c.b16 %v1369, %v1354
        %v1745 = vpack.c.b16 %v1370, %v1355
        %v1746 = vpack.c.b16 %v1371, %v1356
        %v1747 = vpack.c.b16 %v1372, %v1357
        %v1748 = vpack.c.b16 %v1373, %v1358
        %v1749 = vpack.c.b16 %v1374, %v1359
        %v1750 = vpack.c.b16 %v1375, %v1360
        %v1751 = vpack.c.b16 %v1376, %v1361
        %v1752 = vpack.c.b16 %v1377, %v1362
        %v1753 = vpack.c.b16 %v1378, %v1363
        %v1754 = vpack.c.b16 %v1379, %v1364
        %v1755 = vpack.c.b16 %v1380, %v1365
        %v1756 = vpack.c.b16 %v1396, %v1381
        %v1757 = vpack.c.b16 %v1397, %v1382
        %v1758 = vpack.c.b16 %v1398, %v1383
        %v1759 = vpack.c.b16 %v1399, %v1384
        %v1760 = vpack.c.b16 %v1400, %v1385
        %v1761 = vpack.c.b16 %v1401, %v1386
        %v1762 = vpack.c.b16 %v1402, %v1387
        %v1763 = vpack.c.b16 %v1403, %v1388
        %v1764 = vpack.c.b16 %v1404, %v1389
        %v1765 = vpack.c.b16 %v1405, %v1390
        %v1766 = vpack.c.b16 %v1406, %v1391
        %v1767 = vpack.c.b16 %v1407, %v1392
        %v1768 = vpack.c.b16 %v1408, %v1393
        %v1769 = vpack.c.b16 %v1409, %v1394
        %v1770 = vpack.c.b16 %v1410, %v1395
        %v1771 = vpack.c.b16 %v1426, %v1411
        %v1772 = vpack.c.b16 %v1427, %v1412
        %v1773 = vpack.c.b16 %v1428, %v1413
        %v1774 = vpack.c.b16 %v1429, %v1414
        %v1775 = vpack.c.b16 %v1430, %v1415
        %v1776 = vpack.c.b16 %v1431, %v1416
        %v1777 = vpack.c.b16 %v1432, %v1417
        %v1778 = vpack.c.b16 %v1433, %v1418
        %v1779 = vpack.c.b16 %v1434, %v1419
        %v1780 = vpack.c.b16 %v1435, %v1420
        %v1781 = vpack.c.b16 %v1436, %v1421
        %v1782 = vpack.c.b16 %v1437, %v1422
        %v1783 = vpack.c.b16 %v1438, %v1423
        %v1784 = vpack.c.b16 %v1439, %v1424
        %v1785 = vpack.c.b16 %v1440, %v1425
        %v1786 = vpack.c.b16 %v1456, %v1441
        %v1787 = vpack.c.b16 %v1457, %v1442
        %v1788 = vpack.c.b16 %v1458, %v1443
        %v1789 = vpack.c.b16 %v1459, %v1444
        %v1790 = vpack.c.b16 %v1460, %v1445
        %v1791 = vpack.c.b16 %v1461, %v1446
        %v1792 = vpack.c.b16 %v1462, %v1447
        %v1793 = vpack.c.b16 %v1463, %v1448
        %v1794 = vpack.c.b16 %v1464, %v1449
        %v1795 = vpack.c.b16 %v1465, %v1450
        %v1796 = vpack.c.b16 %v1466, %v1451
        %v1797 = vpack.c.b16 %v1467, %v1452
        %v1798 = vpack.c.b16 %v1468, %v1453
        %v1799 = vpack.c.b16 %v1469, %v1454
        %v1800 = vpack.c.b16 %v1470, %v1455
        %v1801 = vpack.c.b16 %v1486, %v1471
        %v1802 = vpack.c.b16 %v1487, %v1472
        %v1803 = vpack.c.b16 %v1488, %v1473
        %v1804 = vpack.c.b16 %v1489, %v1474
        %v1805 = vpack.c.b16 %v1490, %v1475
        %v1806 = vpack.c.b16 %v1491, %v1476
        %v1807 = vpack.c.b16 %v1492, %v1477
        %v1808 = vpack.c.b16 %v1493, %v1478
        %v1809 = vpack.c.b16 %v1494, %v1479
        %v1810 = vpack.c.b16 %v1495, %v1480
        %v1811 = vpack.c.b16 %v1496, %v1481
        %v1812 = vpack.c.b16 %v1497, %v1482
        %v1813 = vpack.c.b16 %v1498, %v1483
        %v1814 = vpack.c.b16 %v1499, %v1484
        %v1815 = vpack.c.b16 %v1500, %v1485
        %v1816 = vpack.c.b16 %v1516, %v1501
        %v1817 = vpack.c.b16 %v1517, %v1502
        %v1818 = vpack.c.b16 %v1518, %v1503
        %v1819 = vpack.c.b16 %v1519, %v1504
        %v1820 = vpack.c.b16 %v1520, %v1505
        %v1821 = vpack.c.b16 %v1521, %v1506
        %v1822 = vpack.c.b16 %v1522, %v1507
        %v1823 = vpack.c.b16 %v1523, %v1508
        %v1824 = vpack.c.b16 %v1524, %v1509
        %v1825 = vpack.c.b16 %v1525, %v1510
        %v1826 = vpack.c.b16 %v1526, %v1511
        %v1827 = vpack.c.b16 %v1527, %v1512
        %v1828 = vpack.c.b16 %v1528, %v1513
        %v1829 = vpack.c.b16 %v1529, %v1514
        %v1830 = vpack.c.b16 %v1530, %v1515
        %v1831 = vpack.c.b16 %v1546, %v1531
        %v1832 = vpack.c.b16 %v1547, %v1532
        %v1833 = vpack.c.b16 %v1548, %v1533
        %v1834 = vpack.c.b16 %v1549, %v1534
        %v1835 = vpack.c.b16 %v1550, %v1535
        %v1836 = vpack.c.b16 %v1551, %v1536
        %v1837 = vpack.c.b16 %v1552, %v1537
        %v1838 = vpack.c.b16 %v1553, %v1538
        %v1839 = vpack.c.b16 %v1554, %v1539
        %v1840 = vpack.c.b16 %v1555, %v1540
        %v1841 = vpack.c.b16 %v1556, %v1541
        %v1842 = vpack.c.b16 %v1557, %v1542
        %v1843 = vpack.c.b16 %v1558, %v1543
        %v1844 = vpack.c.b16 %v1559, %v1544
        %v1845 = vpack.c.b16 %v1560, %v1545
        %v1846 = vpack.c.b16 %v1576, %v1561
        %v1847 = vpack.c.b16 %v1577, %v1562
        %v1848 = vpack.c.b16 %v1578, %v1563
        %v1849 = vpack.c.b16 %v1579, %v1564
        %v1850 = vpack.c.b16 %v1580, %v1565
        %v1851 = vpack.c.b16 %v1581, %v1566
        %v1852 = vpack.c.b16 %v1582, %v1567
        %v1853 = vpack.c.b16 %v1583, %v1568
        %v1854 = vpack.c.b16 %v1584, %v1569
        %v1855 = vpack.c.b16 %v1585, %v1570
        %v1856 = vpack.c.b16 %v1586, %v1571
        %v1857 = vpack.c.b16 %v1587, %v1572
        %v1858 = vpack.c.b16 %v1588, %v1573
        %v1859 = vpack.c.b16 %v1589, %v1574
        %v1860 = vpack.c.b16 %v1590, %v1575
        %v1861 = vpack.c.b16 %v1606, %v1591
        %v1862 = vpack.c.b16 %v1607, %v1592
        %v1863 = vpack.c.b16 %v1608, %v1593
        %v1864 = vpack.c.b16 %v1609, %v1594
        %v1865 = vpack.c.b16 %v1610, %v1595
        %v1866 = vpack.c.b16 %v1611, %v1596
        %v1867 = vpack.c.b16 %v1612, %v1597
        %v1868 = vpack.c.b16 %v1613, %v1598
        %v1869 = vpack.c.b16 %v1614, %v1599
        %v1870 = vpack.c.b16 %v1615, %v1600
        %v1871 = vpack.c.b16 %v1616, %v1601
        %v1872 = vpack.c.b16 %v1617, %v1602
        %v1873 = vpack.c.b16 %v1618, %v1603
        %v1874 = vpack.c.b16 %v1619, %v1604
        %v1875 = vpack.c.b16 %v1620, %v1605
        %v1876 = vpack.c.b16 %v1636, %v1621
        %v1877 = vpack.c.b16 %v1637, %v1622
        %v1878 = vpack.c.b16 %v1638, %v1623
        %v1879 = vpack.c.b16 %v1639, %v1624
        %v1880 = vpack.c.b16 %v1640, %v1625
        %v1881 = vpack.c.b16 %v1641, %v1626
        %v1882 = vpack.c.b16 %v1642, %v1627
        %v1883 = vpack.c.b16 %v1643, %v1628
        %v1884 = vpack.c.b16 %v1644, %v1629
        %v1885 = vpack.c.b16 %v1645, %v1630
        %v1886 = vpack.c.b16 %v1646, %v1631
        %v1887 = vpack.c.b16 %v1647, %v1632
        %v1888 = vpack.c.b16 %v1648, %v1633
        %v1889 = vpack.c.b16 %v1649, %v1634
        %v1890 = vpack.c.b16 %v1650, %v1635
        %2131 = vmatprep.subr.bf16.mxu0 %v1652
        %2132 = vmatpush1.bf16.msra.mxu0 %v1651
        %2133 = vmatprep.subr.bf16.mxu0 %v1667
        %2134 = vmatpush1.bf16.msra.mxu0 %v1666
        %2135 = vmatprep.subr.bf16.mxu0 %v1682
        %2136 = vmatpush1.bf16.msra.mxu0 %v1681
        %2137 = vmatprep.subr.bf16.mxu0 %v1697
        %2138 = vmatpush1.bf16.msra.mxu0 %v1696
        %2139 = vmatprep.subr.bf16.mxu0 %v1712
        %2140 = vmatpush1.bf16.msra.mxu0 %v1711
        %2141 = vmatprep.subr.bf16.mxu0 %v1727
        %2142 = vmatpush1.bf16.msra.mxu0 %v1726
        %2143 = vmatprep.subr.bf16.mxu0 %v1742
        %2144 = vmatpush1.bf16.msra.mxu0 %v1741
        %2145 = vmatprep.subr.bf16.mxu0 %v1757
        %2146 = vmatpush1.bf16.msra.mxu0 %v1756
        %2147 = vmatprep.subr.bf16.mxu0 %v1772
        %2148 = vmatpush1.bf16.msra.mxu0 %v1771
        %2149 = vmatprep.subr.bf16.mxu0 %v1787
        %2150 = vmatpush1.bf16.msra.mxu0 %v1786
        %2151 = vmatprep.subr.bf16.mxu0 %v1802
        %2152 = vmatpush1.bf16.msra.mxu0 %v1801
        %2153 = vmatprep.subr.bf16.mxu0 %v1817
        %2154 = vmatpush1.bf16.msra.mxu0 %v1816
        %2155 = vmatprep.subr.bf16.mxu0 %v1832
        %2156 = vmatpush1.bf16.msra.mxu0 %v1831
        %2157 = vmatprep.subr.bf16.mxu0 %v1847
        %2158 = vmatpush1.bf16.msra.mxu0 %v1846
        %2159 = vmatprep.subr.bf16.mxu0 %v1862
        %2160 = vmatpush1.bf16.msra.mxu0 %v1861
        %2161 = vmatprep.subr.bf16.mxu0 %v1877
        %2162 = vmatpush1.bf16.msra.mxu0 %v1876
        %2163 = vmatprep.mubr.bf16.mxu0 %v912
        %2164 = vmatmul.mubr.bf16.gmra.mrb[0].mxu0 %v911
        %v2165 = vpop.f32.mrb[0].mxu0
        %v2166 = vadd.f32 0.0, %v2165
        %v2167 = vpop.f32.mrb[0].mxu0
        %v2168 = vadd.f32 0.0, %v2167
        %v2169 = vpop.f32.mrb[0].mxu0
        %v2170 = vpop.f32.mrb[0].mxu0
        %2171 = vdwg.mxu0
        %2172 = vmatprep.subr.bf16.mxu0 %v1654
        %2173 = vmatpush1.bf16.msra.mxu0 %v1653
        %2174 = vmatprep.subr.bf16.mxu0 %v1669
        %2175 = vmatpush1.bf16.msra.mxu0 %v1668
        %2176 = vmatprep.subr.bf16.mxu0 %v1684
        %2177 = vmatpush1.bf16.msra.mxu0 %v1683
        %2178 = vmatprep.subr.bf16.mxu0 %v1699
        %2179 = vmatpush1.bf16.msra.mxu0 %v1698
        %2180 = vmatprep.subr.bf16.mxu0 %v1714
        %2181 = vmatpush1.bf16.msra.mxu0 %v1713
        %2182 = vmatprep.subr.bf16.mxu0 %v1729
        %2183 = vmatpush1.bf16.msra.mxu0 %v1728
        %2184 = vmatprep.subr.bf16.mxu0 %v1744
        %2185 = vmatpush1.bf16.msra.mxu0 %v1743
        %2186 = vmatprep.subr.bf16.mxu0 %v1759
        %2187 = vmatpush1.bf16.msra.mxu0 %v1758
        %2188 = vmatprep.subr.bf16.mxu0 %v1774
        %2189 = vmatpush1.bf16.msra.mxu0 %v1773
        %2190 = vmatprep.subr.bf16.mxu0 %v1789
        %2191 = vmatpush1.bf16.msra.mxu0 %v1788
        %2192 = vmatprep.subr.bf16.mxu0 %v1804
        %2193 = vmatpush1.bf16.msra.mxu0 %v1803
        %2194 = vmatprep.subr.bf16.mxu0 %v1819
        %2195 = vmatpush1.bf16.msra.mxu0 %v1818
        %2196 = vmatprep.subr.bf16.mxu0 %v1834
        %2197 = vmatpush1.bf16.msra.mxu0 %v1833
        %2198 = vmatprep.subr.bf16.mxu0 %v1849
        %2199 = vmatpush1.bf16.msra.mxu0 %v1848
        %2200 = vmatprep.subr.bf16.mxu0 %v1864
        %2201 = vmatpush1.bf16.msra.mxu0 %v1863
        %2202 = vmatprep.subr.bf16.mxu0 %v1879
        %2203 = vmatpush1.bf16.msra.mxu0 %v1878
        %2204 = vmatprep.mubr.bf16.mxu0 %v912
        %2205 = vmatmul.mubr.bf16.gmra.mrb[0].mxu0 %v911
        %v2206 = vpop.f32.mrb[0].mxu0
        %v2207 = vadd.f32 0.0, %v2206
        %v2208 = vpop.f32.mrb[0].mxu0
        %v2209 = vadd.f32 0.0, %v2208
        %v2210 = vpop.f32.mrb[0].mxu0
        %v2211 = vpop.f32.mrb[0].mxu0
        %2212 = vdwg.mxu0
        %2213 = vmatprep.subr.bf16.mxu0 %v1656
        %2214 = vmatpush1.bf16.msra.mxu0 %v1655
        %2215 = vmatprep.subr.bf16.mxu0 %v1671
        %2216 = vmatpush1.bf16.msra.mxu0 %v1670
        %2217 = vmatprep.subr.bf16.mxu0 %v1686
        %2218 = vmatpush1.bf16.msra.mxu0 %v1685
        %2219 = vmatprep.subr.bf16.mxu0 %v1701
        %2220 = vmatpush1.bf16.msra.mxu0 %v1700
        %2221 = vmatprep.subr.bf16.mxu0 %v1716
        %2222 = vmatpush1.bf16.msra.mxu0 %v1715
        %2223 = vmatprep.subr.bf16.mxu0 %v1731
        %2224 = vmatpush1.bf16.msra.mxu0 %v1730
        %2225 = vmatprep.subr.bf16.mxu0 %v1746
        %2226 = vmatpush1.bf16.msra.mxu0 %v1745
        %2227 = vmatprep.subr.bf16.mxu0 %v1761
        %2228 = vmatpush1.bf16.msra.mxu0 %v1760
        %2229 = vmatprep.subr.bf16.mxu0 %v1776
        %2230 = vmatpush1.bf16.msra.mxu0 %v1775
        %2231 = vmatprep.subr.bf16.mxu0 %v1791
        %2232 = vmatpush1.bf16.msra.mxu0 %v1790
        %2233 = vmatprep.subr.bf16.mxu0 %v1806
        %2234 = vmatpush1.bf16.msra.mxu0 %v1805
        %2235 = vmatprep.subr.bf16.mxu0 %v1821
        %2236 = vmatpush1.bf16.msra.mxu0 %v1820
        %2237 = vmatprep.subr.bf16.mxu0 %v1836
        %2238 = vmatpush1.bf16.msra.mxu0 %v1835
        %2239 = vmatprep.subr.bf16.mxu0 %v1851
        %2240 = vmatpush1.bf16.msra.mxu0 %v1850
        %2241 = vmatprep.subr.bf16.mxu0 %v1866
        %2242 = vmatpush1.bf16.msra.mxu0 %v1865
        %2243 = vmatprep.subr.bf16.mxu0 %v1881
        %2244 = vmatpush1.bf16.msra.mxu0 %v1880
        %2245 = vmatprep.mubr.bf16.mxu0 %v912
        %2246 = vmatmul.mubr.bf16.gmra.mrb[0].mxu0 %v911
        %v2247 = vpop.f32.mrb[0].mxu0
        %v2248 = vadd.f32 0.0, %v2247
        %v2249 = vpop.f32.mrb[0].mxu0
        %v2250 = vadd.f32 0.0, %v2249
        %v2251 = vpop.f32.mrb[0].mxu0
        %v2252 = vpop.f32.mrb[0].mxu0
        %2253 = vdwg.mxu0
        %2254 = vmatprep.subr.bf16.mxu0 %v1658
        %2255 = vmatpush1.bf16.msra.mxu0 %v1657
        %2256 = vmatprep.subr.bf16.mxu0 %v1673
        %2257 = vmatpush1.bf16.msra.mxu0 %v1672
        %2258 = vmatprep.subr.bf16.mxu0 %v1688
        %2259 = vmatpush1.bf16.msra.mxu0 %v1687
        %2260 = vmatprep.subr.bf16.mxu0 %v1703
        %2261 = vmatpush1.bf16.msra.mxu0 %v1702
        %2262 = vmatprep.subr.bf16.mxu0 %v1718
        %2263 = vmatpush1.bf16.msra.mxu0 %v1717
        %2264 = vmatprep.subr.bf16.mxu0 %v1733
        %2265 = vmatpush1.bf16.msra.mxu0 %v1732
        %2266 = vmatprep.subr.bf16.mxu0 %v1748
        %2267 = vmatpush1.bf16.msra.mxu0 %v1747
        %2268 = vmatprep.subr.bf16.mxu0 %v1763
        %2269 = vmatpush1.bf16.msra.mxu0 %v1762
        %2270 = vmatprep.subr.bf16.mxu0 %v1778
        %2271 = vmatpush1.bf16.msra.mxu0 %v1777
        %2272 = vmatprep.subr.bf16.mxu0 %v1793
        %2273 = vmatpush1.bf16.msra.mxu0 %v1792
        %2274 = vmatprep.subr.bf16.mxu0 %v1808
        %2275 = vmatpush1.bf16.msra.mxu0 %v1807
        %2276 = vmatprep.subr.bf16.mxu0 %v1823
        %2277 = vmatpush1.bf16.msra.mxu0 %v1822
        %2278 = vmatprep.subr.bf16.mxu0 %v1838
        %2279 = vmatpush1.bf16.msra.mxu0 %v1837
        %2280 = vmatprep.subr.bf16.mxu0 %v1853
        %2281 = vmatpush1.bf16.msra.mxu0 %v1852
        %2282 = vmatprep.subr.bf16.mxu0 %v1868
        %2283 = vmatpush1.bf16.msra.mxu0 %v1867
        %2284 = vmatprep.subr.bf16.mxu0 %v1883
        %2285 = vmatpush1.bf16.msra.mxu0 %v1882
        %2286 = vmatprep.mubr.bf16.mxu0 %v912
        %2287 = vmatmul.mubr.bf16.gmra.mrb[0].mxu0 %v911
        %v2288 = vpop.f32.mrb[0].mxu0
        %v2289 = vadd.f32 0.0, %v2288
        %v2290 = vpop.f32.mrb[0].mxu0
        %v2291 = vadd.f32 0.0, %v2290
        %v2292 = vpop.f32.mrb[0].mxu0
        %v2293 = vpop.f32.mrb[0].mxu0
        %2294 = vdwg.mxu0
        %2295 = vmatprep.subr.bf16.mxu0 %v1660
        %2296 = vmatpush1.bf16.msra.mxu0 %v1659
        %2297 = vmatprep.subr.bf16.mxu0 %v1675
        %2298 = vmatpush1.bf16.msra.mxu0 %v1674
        %2299 = vmatprep.subr.bf16.mxu0 %v1690
        %2300 = vmatpush1.bf16.msra.mxu0 %v1689
        %2301 = vmatprep.subr.bf16.mxu0 %v1705
        %2302 = vmatpush1.bf16.msra.mxu0 %v1704
        %2303 = vmatprep.subr.bf16.mxu0 %v1720
        %2304 = vmatpush1.bf16.msra.mxu0 %v1719
        %2305 = vmatprep.subr.bf16.mxu0 %v1735
        %2306 = vmatpush1.bf16.msra.mxu0 %v1734
        %2307 = vmatprep.subr.bf16.mxu0 %v1750
        %2308 = vmatpush1.bf16.msra.mxu0 %v1749
        %2309 = vmatprep.subr.bf16.mxu0 %v1765
        %2310 = vmatpush1.bf16.msra.mxu0 %v1764
        %2311 = vmatprep.subr.bf16.mxu0 %v1780
        %2312 = vmatpush1.bf16.msra.mxu0 %v1779
        %2313 = vmatprep.subr.bf16.mxu0 %v1795
        %2314 = vmatpush1.bf16.msra.mxu0 %v1794
        %2315 = vmatprep.subr.bf16.mxu0 %v1810
        %2316 = vmatpush1.bf16.msra.mxu0 %v1809
        %2317 = vmatprep.subr.bf16.mxu0 %v1825
        %2318 = vmatpush1.bf16.msra.mxu0 %v1824
        %2319 = vmatprep.subr.bf16.mxu0 %v1840
        %2320 = vmatpush1.bf16.msra.mxu0 %v1839
        %2321 = vmatprep.subr.bf16.mxu0 %v1855
        %2322 = vmatpush1.bf16.msra.mxu0 %v1854
        %2323 = vmatprep.subr.bf16.mxu0 %v1870
        %2324 = vmatpush1.bf16.msra.mxu0 %v1869
        %2325 = vmatprep.subr.bf16.mxu0 %v1885
        %2326 = vmatpush1.bf16.msra.mxu0 %v1884
        %2327 = vmatprep.mubr.bf16.mxu0 %v912
        %2328 = vmatmul.mubr.bf16.gmra.mrb[0].mxu0 %v911
        %v2329 = vpop.f32.mrb[0].mxu0
        %v2330 = vadd.f32 0.0, %v2329
        %v2331 = vpop.f32.mrb[0].mxu0
        %v2332 = vadd.f32 0.0, %v2331
        %v2333 = vpop.f32.mrb[0].mxu0
        %v2334 = vpop.f32.mrb[0].mxu0
        %2335 = vdwg.mxu0
        %2336 = vmatprep.subr.bf16.mxu0 %v1662
        %2337 = vmatpush1.bf16.msra.mxu0 %v1661
        %2338 = vmatprep.subr.bf16.mxu0 %v1677
        %2339 = vmatpush1.bf16.msra.mxu0 %v1676
        %2340 = vmatprep.subr.bf16.mxu0 %v1692
        %2341 = vmatpush1.bf16.msra.mxu0 %v1691
        %2342 = vmatprep.subr.bf16.mxu0 %v1707
        %2343 = vmatpush1.bf16.msra.mxu0 %v1706
        %2344 = vmatprep.subr.bf16.mxu0 %v1722
        %2345 = vmatpush1.bf16.msra.mxu0 %v1721
        %2346 = vmatprep.subr.bf16.mxu0 %v1737
        %2347 = vmatpush1.bf16.msra.mxu0 %v1736
        %2348 = vmatprep.subr.bf16.mxu0 %v1752
        %2349 = vmatpush1.bf16.msra.mxu0 %v1751
        %2350 = vmatprep.subr.bf16.mxu0 %v1767
        %2351 = vmatpush1.bf16.msra.mxu0 %v1766
        %2352 = vmatprep.subr.bf16.mxu0 %v1782
        %2353 = vmatpush1.bf16.msra.mxu0 %v1781
        %2354 = vmatprep.subr.bf16.mxu0 %v1797
        %2355 = vmatpush1.bf16.msra.mxu0 %v1796
        %2356 = vmatprep.subr.bf16.mxu0 %v1812
        %2357 = vmatpush1.bf16.msra.mxu0 %v1811
        %2358 = vmatprep.subr.bf16.mxu0 %v1827
        %2359 = vmatpush1.bf16.msra.mxu0 %v1826
        %2360 = vmatprep.subr.bf16.mxu0 %v1842
        %2361 = vmatpush1.bf16.msra.mxu0 %v1841
        %2362 = vmatprep.subr.bf16.mxu0 %v1857
        %2363 = vmatpush1.bf16.msra.mxu0 %v1856
        %2364 = vmatprep.subr.bf16.mxu0 %v1872
        %2365 = vmatpush1.bf16.msra.mxu0 %v1871
        %2366 = vmatprep.subr.bf16.mxu0 %v1887
        %2367 = vmatpush1.bf16.msra.mxu0 %v1886
        %2368 = vmatprep.mubr.bf16.mxu0 %v912
        %2369 = vmatmul.mubr.bf16.gmra.mrb[0].mxu0 %v911
        %v2370 = vpop.f32.mrb[0].mxu0
        %v2371 = vadd.f32 0.0, %v2370
        %v2372 = vpop.f32.mrb[0].mxu0
        %v2373 = vadd.f32 0.0, %v2372
        %v2374 = vpop.f32.mrb[0].mxu0
        %v2375 = vpop.f32.mrb[0].mxu0
        %2376 = vdwg.mxu0
        %2377 = vmatprep.subr.bf16.mxu0 %v1664
        %2378 = vmatpush1.bf16.msra.mxu0 %v1663
        %2379 = vmatprep.subr.bf16.mxu0 %v1679
        %2380 = vmatpush1.bf16.msra.mxu0 %v1678
        %2381 = vmatprep.subr.bf16.mxu0 %v1694
        %2382 = vmatpush1.bf16.msra.mxu0 %v1693
        %2383 = vmatprep.subr.bf16.mxu0 %v1709
        %2384 = vmatpush1.bf16.msra.mxu0 %v1708
        %2385 = vmatprep.subr.bf16.mxu0 %v1724
        %2386 = vmatpush1.bf16.msra.mxu0 %v1723
        %2387 = vmatprep.subr.bf16.mxu0 %v1739
        %2388 = vmatpush1.bf16.msra.mxu0 %v1738
        %2389 = vmatprep.subr.bf16.mxu0 %v1754
        %2390 = vmatpush1.bf16.msra.mxu0 %v1753
        %2391 = vmatprep.subr.bf16.mxu0 %v1769
        %2392 = vmatpush1.bf16.msra.mxu0 %v1768
        %2393 = vmatprep.subr.bf16.mxu0 %v1784
        %2394 = vmatpush1.bf16.msra.mxu0 %v1783
        %2395 = vmatprep.subr.bf16.mxu0 %v1799
        %2396 = vmatpush1.bf16.msra.mxu0 %v1798
        %2397 = vmatprep.subr.bf16.mxu0 %v1814
        %2398 = vmatpush1.bf16.msra.mxu0 %v1813
        %2399 = vmatprep.subr.bf16.mxu0 %v1829
        %2400 = vmatpush1.bf16.msra.mxu0 %v1828
        %2401 = vmatprep.subr.bf16.mxu0 %v1844
        %2402 = vmatpush1.bf16.msra.mxu0 %v1843
        %2403 = vmatprep.subr.bf16.mxu0 %v1859
        %2404 = vmatpush1.bf16.msra.mxu0 %v1858
        %2405 = vmatprep.subr.bf16.mxu0 %v1874
        %2406 = vmatpush1.bf16.msra.mxu0 %v1873
        %2407 = vmatprep.subr.bf16.mxu0 %v1889
        %2408 = vmatpush1.bf16.msra.mxu0 %v1888
        %2409 = vmatprep.mubr.bf16.mxu0 %v912
        %2410 = vmatmul.mubr.bf16.gmra.mrb[0].mxu0 %v911
        %v2411 = vpop.f32.mrb[0].mxu0
        %v2412 = vadd.f32 0.0, %v2411
        %v2413 = vpop.f32.mrb[0].mxu0
        %v2414 = vadd.f32 0.0, %v2413
        %v2415 = vpop.f32.mrb[0].mxu0
        %v2416 = vpop.f32.mrb[0].mxu0
        %2417 = vdwg.mxu0
        %2418 = vmatprep.subr.bf16.mxu0 0
        %2419 = vmatpush1.bf16.msra.mxu0 %v1665
        %2420 = vmatprep.subr.bf16.mxu0 0
        %2421 = vmatpush1.bf16.msra.mxu0 %v1680
        %2422 = vmatprep.subr.bf16.mxu0 0
        %2423 = vmatpush1.bf16.msra.mxu0 %v1695
        %2424 = vmatprep.subr.bf16.mxu0 0
        %2425 = vmatpush1.bf16.msra.mxu0 %v1710
        %2426 = vmatprep.subr.bf16.mxu0 0
        %2427 = vmatpush1.bf16.msra.mxu0 %v1725
        %2428 = vmatprep.subr.bf16.mxu0 0
        %2429 = vmatpush1.bf16.msra.mxu0 %v1740
        %2430 = vmatprep.subr.bf16.mxu0 0
        %2431 = vmatpush1.bf16.msra.mxu0 %v1755
        %2432 = vmatprep.subr.bf16.mxu0 0
        %2433 = vmatpush1.bf16.msra.mxu0 %v1770
        %2434 = vmatprep.subr.bf16.mxu0 0
        %2435 = vmatpush1.bf16.msra.mxu0 %v1785
        %2436 = vmatprep.subr.bf16.mxu0 0
        %2437 = vmatpush1.bf16.msra.mxu0 %v1800
        %2438 = vmatprep.subr.bf16.mxu0 0
        %2439 = vmatpush1.bf16.msra.mxu0 %v1815
        %2440 = vmatprep.subr.bf16.mxu0 0
        %2441 = vmatpush1.bf16.msra.mxu0 %v1830
        %2442 = vmatprep.subr.bf16.mxu0 0
        %2443 = vmatpush1.bf16.msra.mxu0 %v1845
        %2444 = vmatprep.subr.bf16.mxu0 0
        %2445 = vmatpush1.bf16.msra.mxu0 %v1860
        %2446 = vmatprep.subr.bf16.mxu0 0
        %2447 = vmatpush1.bf16.msra.mxu0 %v1875
        %2448 = vmatprep.subr.bf16.mxu0 0
        %2449 = vmatpush1.bf16.msra.mxu0 %v1890
        %2450 = vmatprep.mubr.bf16.mxu0 %v912
        %2451 = vmatmul.mubr.bf16.gmra.mrb[0].mxu0 %v911
        %v2452 = vpop.f32.mrb[0].mxu0
        %v2453 = vadd.f32 0.0, %v2452
        %v2454 = vpop.f32.mrb[0].mxu0
        %v2455 = vpop.f32.mrb[0].mxu0
        %v2456 = vpop.f32.mrb[0].mxu0
        %2457 = vdwg.mxu0
        %v2458 = vadd.f32 %v636, %v2166
        %v2459 = vadd.f32 %v637, %v2168
        %v2460 = vadd.f32 %v638, %v2207
        %v2461 = vadd.f32 %v639, %v2209
        %v2462 = vadd.f32 %v640, %v2248
        %v2463 = vadd.f32 %v641, %v2250
        %v2464 = vadd.f32 %v642, %v2289
        %v2465 = vadd.f32 %v643, %v2291
        %v2466 = vadd.f32 %v644, %v2330
        %v2467 = vadd.f32 %v645, %v2332
        %v2468 = vadd.f32 %v646, %v2371
        %v2469 = vadd.f32 %v647, %v2373
        %v2470 = vadd.f32 %v648, %v2412
        %v2471 = vadd.f32 %v649, %v2414
        %v2472 = vadd.f32 %v650, %v2453
        %2473 = vst [vmem:[#allocation2] sm:$0xff] %v2458
        %2474 = vst [vmem:[#allocation2 + $0x8] sm:$0xff] %v2459
        %2475 = vst [vmem:[#allocation2 + $0x10] sm:$0xff] %v2460
        %2476 = vst [vmem:[#allocation2 + $0x18] sm:$0xff] %v2461
        %2477 = vst [vmem:[#allocation2 + $0x20] sm:$0xff] %v2462
        %2478 = vst [vmem:[#allocation2 + $0x28] sm:$0xff] %v2463
        %2479 = vst [vmem:[#allocation2 + $0x30] sm:$0xff] %v2464
        %2480 = vst [vmem:[#allocation2 + $0x38] sm:$0xff] %v2465
        %2481 = vst [vmem:[#allocation2 + $0x40] sm:$0xff] %v2466
        %2482 = vst [vmem:[#allocation2 + $0x48] sm:$0xff] %v2467
        %2483 = vst [vmem:[#allocation2 + $0x50] sm:$0xff] %v2468
        %2484 = vst [vmem:[#allocation2 + $0x58] sm:$0xff] %v2469
        %2485 = vst [vmem:[#allocation2 + $0x60] sm:$0xff] %v2470
        %2486 = vst [vmem:[#allocation2 + $0x68] sm:$0xff] %v2471
        %2487 = vst [vmem:[#allocation2 + $0x70] sm:$0xff] %v2472
        %p2488 = scmp.eq.s32.totalorder %s40, 2
        // Predicated region
        $region109: #{tpu_custom_call.1} parent=63 // pred_check
          %p2489 = pneg %p2488
        $region110: #{tpu_custom_call.1} parent=63 // pred_check_branch
          %2491 = sbr.rel (%p2489) target = $region112
        $region111: #{tpu_custom_call.1} parent=63 // pred_region
          %v2492 = vld [vmem:[#allocation2] sm:$0xff]
          %v2493 = vld [vmem:[#allocation2 + $0x8] sm:$0xff]
          %v2494 = vld [vmem:[#allocation2 + $0x10] sm:$0xff]
          %v2495 = vld [vmem:[#allocation2 + $0x18] sm:$0xff]
          %v2496 = vld [vmem:[#allocation2 + $0x20] sm:$0xff]
          %v2497 = vld [vmem:[#allocation2 + $0x28] sm:$0xff]
          %v2498 = vld [vmem:[#allocation2 + $0x30] sm:$0xff]
          %v2499 = vld [vmem:[#allocation2 + $0x38] sm:$0xff]
          %v2500 = vld [vmem:[#allocation2 + $0x40] sm:$0xff]
          %v2501 = vld [vmem:[#allocation2 + $0x48] sm:$0xff]
          %v2502 = vld [vmem:[#allocation2 + $0x50] sm:$0xff]
          %v2503 = vld [vmem:[#allocation2 + $0x58] sm:$0xff]
          %v2504 = vld [vmem:[#allocation2 + $0x60] sm:$0xff]
          %v2505 = vld [vmem:[#allocation2 + $0x68] sm:$0xff]
          %v2506 = vld [vmem:[#allocation2 + $0x70] sm:$0xff]
          %v2507 = vmax.f32 %v2492, 0.0
          %v2508 = vmax.f32 %v2493, 0.0
          %v2509 = vmax.f32 %v2494, 0.0
          %v2510 = vmax.f32 %v2495, 0.0
          %v2511 = vmax.f32 %v2496, 0.0
          %v2512 = vmax.f32 %v2497, 0.0
          %v2513 = vmax.f32 %v2498, 0.0
          %v2514 = vmax.f32 %v2499, 0.0
          %v2515 = vmax.f32 %v2500, 0.0
          %v2516 = vmax.f32 %v2501, 0.0
          %v2517 = vmax.f32 %v2502, 0.0
          %v2518 = vmax.f32 %v2503, 0.0
          %v2519 = vmax.f32 %v2504, 0.0
          %v2520 = vmax.f32 %v2505, 0.0
          %v2521 = vmax.f32 %v2506, 0.0
          %v2522 = vpack.c.bf16 %v2507, %v2507
          %v2523 = vpack.c.bf16 %v2508, %v2508
          %v2524 = vpack.c.bf16 %v2509, %v2509
          %v2525 = vpack.c.bf16 %v2510, %v2510
          %v2526 = vpack.c.bf16 %v2511, %v2511
          %v2527 = vpack.c.bf16 %v2512, %v2512
          %v2528 = vpack.c.bf16 %v2513, %v2513
          %v2529 = vpack.c.bf16 %v2514, %v2514
          %v2530 = vpack.c.bf16 %v2515, %v2515
          %v2531 = vpack.c.bf16 %v2516, %v2516
          %v2532 = vpack.c.bf16 %v2517, %v2517
          %v2533 = vpack.c.bf16 %v2518, %v2518
          %v2534 = vpack.c.bf16 %v2519, %v2519
          %v2535 = vpack.c.bf16 %v2520, %v2520
          %v2536 = vpack.c.bf16 %v2521, %v2521
          %v2537 = vld [vmem:[#allocation8] sm:$0xff]
          %v2538 = vld [vmem:[#allocation8 + $0x8] sm:$0xff]
          %v2539 = vld [vmem:[#allocation8 + $0x10] sm:$0xff]
          %v2540 = vld [vmem:[#allocation8 + $0x18] sm:$0xff]
          %v2541 = vld [vmem:[#allocation8 + $0x20] sm:$0xff]
          %v2542 = vld [vmem:[#allocation8 + $0x28] sm:$0xff]
          %v2543 = vld [vmem:[#allocation8 + $0x30] sm:$0xff]
          %v2544 = vld [vmem:[#allocation8 + $0x38] sm:$0xff]
          %v2545 = vld [vmem:[#allocation8 + $0x40] sm:$0xff]
          %v2546 = vld [vmem:[#allocation8 + $0x48] sm:$0xff]
          %v2547 = vld [vmem:[#allocation8 + $0x50] sm:$0xff]
          %v2548 = vld [vmem:[#allocation8 + $0x58] sm:$0xff]
          %v2549 = vld [vmem:[#allocation8 + $0x60] sm:$0xff]
          %v2550 = vld [vmem:[#allocation8 + $0x68] sm:$0xff]
          %v2551 = vld [vmem:[#allocation8 + $0x70] sm:$0xff]
          %v2552 = vld [vmem:[#allocation8 + $0x78] sm:$0xff]
          %v2553 = vld [vmem:[#allocation8 + $0x80] sm:$0xff]
          %v2554 = vld [vmem:[#allocation8 + $0x88] sm:$0xff]
          %v2555 = vld [vmem:[#allocation8 + $0x90] sm:$0xff]
          %v2556 = vld [vmem:[#allocation8 + $0x98] sm:$0xff]
          %v2557 = vld [vmem:[#allocation8 + $0xa0] sm:$0xff]
          %v2558 = vld [vmem:[#allocation8 + $0xa8] sm:$0xff]
          %v2559 = vld [vmem:[#allocation8 + $0xb0] sm:$0xff]
          %v2560 = vld [vmem:[#allocation8 + $0xb8] sm:$0xff]
          %v2561 = vld [vmem:[#allocation8 + $0xc0] sm:$0xff]
          %v2562 = vld [vmem:[#allocation8 + $0xc8] sm:$0xff]
          %v2563 = vld [vmem:[#allocation8 + $0xd0] sm:$0xff]
          %v2564 = vld [vmem:[#allocation8 + $0xd8] sm:$0xff]
          %v2565 = vld [vmem:[#allocation8 + $0xe0] sm:$0xff]
          %v2566 = vld [vmem:[#allocation8 + $0xe8] sm:$0xff]
          %v2567 = vld [vmem:[#allocation8 + $0xf0] sm:$0xff]
          %v2568 = vld [vmem:[#allocation8 + $0xf8] sm:$0xff]
          %v2569 = vld [vmem:[#allocation8 + $0x100] sm:$0xff]
          %v2570 = vld [vmem:[#allocation8 + $0x108] sm:$0xff]
          %v2571 = vld [vmem:[#allocation8 + $0x110] sm:$0xff]
          %v2572 = vld [vmem:[#allocation8 + $0x118] sm:$0xff]
          %v2573 = vld [vmem:[#allocation8 + $0x120] sm:$0xff]
          %v2574 = vld [vmem:[#allocation8 + $0x128] sm:$0xff]
          %v2575 = vld [vmem:[#allocation8 + $0x130] sm:$0xff]
          %v2576 = vld [vmem:[#allocation8 + $0x138] sm:$0xff]
          %v2577 = vld [vmem:[#allocation8 + $0x140] sm:$0xff]
          %v2578 = vld [vmem:[#allocation8 + $0x148] sm:$0xff]
          %v2579 = vld [vmem:[#allocation8 + $0x150] sm:$0xff]
          %v2580 = vld [vmem:[#allocation8 + $0x158] sm:$0xff]
          %v2581 = vld [vmem:[#allocation8 + $0x160] sm:$0xff]
          %v2582 = vld [vmem:[#allocation8 + $0x168] sm:$0xff]
          %v2583 = vld [vmem:[#allocation8 + $0x170] sm:$0xff]
          %v2584 = vld [vmem:[#allocation8 + $0x178] sm:$0xff]
          %v2585 = vld [vmem:[#allocation8 + $0x180] sm:$0xff]
          %v2586 = vld [vmem:[#allocation8 + $0x188] sm:$0xff]
          %v2587 = vld [vmem:[#allocation8 + $0x190] sm:$0xff]
          %v2588 = vld [vmem:[#allocation8 + $0x198] sm:$0xff]
          %v2589 = vld [vmem:[#allocation8 + $0x1a0] sm:$0xff]
          %v2590 = vld [vmem:[#allocation8 + $0x1a8] sm:$0xff]
          %v2591 = vld [vmem:[#allocation8 + $0x1b0] sm:$0xff]
          %v2592 = vld [vmem:[#allocation8 + $0x1b8] sm:$0xff]
          %v2593 = vld [vmem:[#allocation8 + $0x1c0] sm:$0xff]
          %v2594 = vld [vmem:[#allocation8 + $0x1c8] sm:$0xff]
          %v2595 = vld [vmem:[#allocation8 + $0x1d0] sm:$0xff]
          %v2596 = vld [vmem:[#allocation8 + $0x1d8] sm:$0xff]
          %v2597 = vld [vmem:[#allocation8 + $0x1e0] sm:$0xff]
          %v2598 = vld [vmem:[#allocation8 + $0x1e8] sm:$0xff]
          %v2599 = vld [vmem:[#allocation8 + $0x1f0] sm:$0xff]
          %v2600 = vld [vmem:[#allocation8 + $0x1f8] sm:$0xff]
          %v2601 = vld [vmem:[#allocation8 + $0x200] sm:$0xff]
          %v2602 = vld [vmem:[#allocation8 + $0x208] sm:$0xff]
          %v2603 = vld [vmem:[#allocation8 + $0x210] sm:$0xff]
          %v2604 = vld [vmem:[#allocation8 + $0x218] sm:$0xff]
          %v2605 = vld [vmem:[#allocation8 + $0x220] sm:$0xff]
          %v2606 = vld [vmem:[#allocation8 + $0x228] sm:$0xff]
          %v2607 = vld [vmem:[#allocation8 + $0x230] sm:$0xff]
          %v2608 = vld [vmem:[#allocation8 + $0x238] sm:$0xff]
          %v2609 = vld [vmem:[#allocation8 + $0x240] sm:$0xff]
          %v2610 = vld [vmem:[#allocation8 + $0x248] sm:$0xff]
          %v2611 = vld [vmem:[#allocation8 + $0x250] sm:$0xff]
          %v2612 = vld [vmem:[#allocation8 + $0x258] sm:$0xff]
          %v2613 = vld [vmem:[#allocation8 + $0x260] sm:$0xff]
          %v2614 = vld [vmem:[#allocation8 + $0x268] sm:$0xff]
          %v2615 = vld [vmem:[#allocation8 + $0x270] sm:$0xff]
          %v2616 = vld [vmem:[#allocation8 + $0x278] sm:$0xff]
          %v2617 = vld [vmem:[#allocation8 + $0x280] sm:$0xff]
          %v2618 = vld [vmem:[#allocation8 + $0x288] sm:$0xff]
          %v2619 = vld [vmem:[#allocation8 + $0x290] sm:$0xff]
          %v2620 = vld [vmem:[#allocation8 + $0x298] sm:$0xff]
          %v2621 = vld [vmem:[#allocation8 + $0x2a0] sm:$0xff]
          %v2622 = vld [vmem:[#allocation8 + $0x2a8] sm:$0xff]
          %v2623 = vld [vmem:[#allocation8 + $0x2b0] sm:$0xff]
          %v2624 = vld [vmem:[#allocation8 + $0x2b8] sm:$0xff]
          %v2625 = vld [vmem:[#allocation8 + $0x2c0] sm:$0xff]
          %v2626 = vld [vmem:[#allocation8 + $0x2c8] sm:$0xff]
          %v2627 = vld [vmem:[#allocation8 + $0x2d0] sm:$0xff]
          %v2628 = vld [vmem:[#allocation8 + $0x2d8] sm:$0xff]
          %v2629 = vld [vmem:[#allocation8 + $0x2e0] sm:$0xff]
          %v2630 = vld [vmem:[#allocation8 + $0x2e8] sm:$0xff]
          %v2631 = vld [vmem:[#allocation8 + $0x2f0] sm:$0xff]
          %v2632 = vld [vmem:[#allocation8 + $0x2f8] sm:$0xff]
          %v2633 = vld [vmem:[#allocation8 + $0x300] sm:$0xff]
          %v2634 = vld [vmem:[#allocation8 + $0x308] sm:$0xff]
          %v2635 = vld [vmem:[#allocation8 + $0x310] sm:$0xff]
          %v2636 = vld [vmem:[#allocation8 + $0x318] sm:$0xff]
          %v2637 = vld [vmem:[#allocation8 + $0x320] sm:$0xff]
          %v2638 = vld [vmem:[#allocation8 + $0x328] sm:$0xff]
          %v2639 = vld [vmem:[#allocation8 + $0x330] sm:$0xff]
          %v2640 = vld [vmem:[#allocation8 + $0x338] sm:$0xff]
          %v2641 = vld [vmem:[#allocation8 + $0x340] sm:$0xff]
          %v2642 = vld [vmem:[#allocation8 + $0x348] sm:$0xff]
          %v2643 = vld [vmem:[#allocation8 + $0x350] sm:$0xff]
          %v2644 = vld [vmem:[#allocation8 + $0x358] sm:$0xff]
          %v2645 = vld [vmem:[#allocation8 + $0x360] sm:$0xff]
          %v2646 = vld [vmem:[#allocation8 + $0x368] sm:$0xff]
          %v2647 = vld [vmem:[#allocation8 + $0x370] sm:$0xff]
          %v2648 = vld [vmem:[#allocation8 + $0x378] sm:$0xff]
          %v2649 = vld [vmem:[#allocation8 + $0x380] sm:$0xff]
          %v2650 = vld [vmem:[#allocation8 + $0x388] sm:$0xff]
          %v2651 = vld [vmem:[#allocation8 + $0x390] sm:$0xff]
          %v2652 = vld [vmem:[#allocation8 + $0x398] sm:$0xff]
          %v2653 = vld [vmem:[#allocation8 + $0x3a0] sm:$0xff]
          %v2654 = vld [vmem:[#allocation8 + $0x3a8] sm:$0xff]
          %v2655 = vld [vmem:[#allocation8 + $0x3b0] sm:$0xff]
          %v2656 = vld [vmem:[#allocation8 + $0x3b8] sm:$0xff]
          %v2657 = vld [vmem:[#allocation8 + $0x3c0] sm:$0xff]
          %v2658 = vld [vmem:[#allocation8 + $0x3c8] sm:$0xff]
          %v2659 = vld [vmem:[#allocation8 + $0x3d0] sm:$0xff]
          %v2660 = vld [vmem:[#allocation8 + $0x3d8] sm:$0xff]
          %v2661 = vld [vmem:[#allocation8 + $0x3e0] sm:$0xff]
          %v2662 = vld [vmem:[#allocation8 + $0x3e8] sm:$0xff]
          %v2663 = vld [vmem:[#allocation8 + $0x3f0] sm:$0xff]
          %v2664 = vld [vmem:[#allocation8 + $0x3f8] sm:$0xff]
          %v2665 = vld [vmem:[#allocation8 + $0x400] sm:$0xff]
          %v2666 = vld [vmem:[#allocation8 + $0x408] sm:$0xff]
          %v2667 = vld [vmem:[#allocation8 + $0x410] sm:$0xff]
          %v2668 = vld [vmem:[#allocation8 + $0x418] sm:$0xff]
          %v2669 = vld [vmem:[#allocation8 + $0x420] sm:$0xff]
          %v2670 = vld [vmem:[#allocation8 + $0x428] sm:$0xff]
          %v2671 = vld [vmem:[#allocation8 + $0x430] sm:$0xff]
          %v2672 = vld [vmem:[#allocation8 + $0x438] sm:$0xff]
          %v2673 = vld [vmem:[#allocation8 + $0x440] sm:$0xff]
          %v2674 = vld [vmem:[#allocation8 + $0x448] sm:$0xff]
          %v2675 = vld [vmem:[#allocation8 + $0x450] sm:$0xff]
          %v2676 = vld [vmem:[#allocation8 + $0x458] sm:$0xff]
          %v2677 = vld [vmem:[#allocation8 + $0x460] sm:$0xff]
          %v2678 = vld [vmem:[#allocation8 + $0x468] sm:$0xff]
          %v2679 = vld [vmem:[#allocation8 + $0x470] sm:$0xff]
          %v2680 = vld [vmem:[#allocation8 + $0x478] sm:$0xff]
          %v2681 = vld [vmem:[#allocation8 + $0x480] sm:$0xff]
          %v2682 = vld [vmem:[#allocation8 + $0x488] sm:$0xff]
          %v2683 = vld [vmem:[#allocation8 + $0x490] sm:$0xff]
          %v2684 = vld [vmem:[#allocation8 + $0x498] sm:$0xff]
          %v2685 = vld [vmem:[#allocation8 + $0x4a0] sm:$0xff]
          %v2686 = vld [vmem:[#allocation8 + $0x4a8] sm:$0xff]
          %v2687 = vld [vmem:[#allocation8 + $0x4b0] sm:$0xff]
          %v2688 = vld [vmem:[#allocation8 + $0x4b8] sm:$0xff]
          %v2689 = vld [vmem:[#allocation8 + $0x4c0] sm:$0xff]
          %v2690 = vld [vmem:[#allocation8 + $0x4c8] sm:$0xff]
          %v2691 = vld [vmem:[#allocation8 + $0x4d0] sm:$0xff]
          %v2692 = vld [vmem:[#allocation8 + $0x4d8] sm:$0xff]
          %v2693 = vld [vmem:[#allocation8 + $0x4e0] sm:$0xff]
          %v2694 = vld [vmem:[#allocation8 + $0x4e8] sm:$0xff]
          %v2695 = vld [vmem:[#allocation8 + $0x4f0] sm:$0xff]
          %v2696 = vld [vmem:[#allocation8 + $0x4f8] sm:$0xff]
          %v2697 = vld [vmem:[#allocation8 + $0x500] sm:$0xff]
          %v2698 = vld [vmem:[#allocation8 + $0x508] sm:$0xff]
          %v2699 = vld [vmem:[#allocation8 + $0x510] sm:$0xff]
          %v2700 = vld [vmem:[#allocation8 + $0x518] sm:$0xff]
          %v2701 = vld [vmem:[#allocation8 + $0x520] sm:$0xff]
          %v2702 = vld [vmem:[#allocation8 + $0x528] sm:$0xff]
          %v2703 = vld [vmem:[#allocation8 + $0x530] sm:$0xff]
          %v2704 = vld [vmem:[#allocation8 + $0x538] sm:$0xff]
          %v2705 = vld [vmem:[#allocation8 + $0x540] sm:$0xff]
          %v2706 = vld [vmem:[#allocation8 + $0x548] sm:$0xff]
          %v2707 = vld [vmem:[#allocation8 + $0x550] sm:$0xff]
          %v2708 = vld [vmem:[#allocation8 + $0x558] sm:$0xff]
          %v2709 = vld [vmem:[#allocation8 + $0x560] sm:$0xff]
          %v2710 = vld [vmem:[#allocation8 + $0x568] sm:$0xff]
          %v2711 = vld [vmem:[#allocation8 + $0x570] sm:$0xff]
          %v2712 = vld [vmem:[#allocation8 + $0x578] sm:$0xff]
          %v2713 = vld [vmem:[#allocation8 + $0x580] sm:$0xff]
          %v2714 = vld [vmem:[#allocation8 + $0x588] sm:$0xff]
          %v2715 = vld [vmem:[#allocation8 + $0x590] sm:$0xff]
          %v2716 = vld [vmem:[#allocation8 + $0x598] sm:$0xff]
          %v2717 = vld [vmem:[#allocation8 + $0x5a0] sm:$0xff]
          %v2718 = vld [vmem:[#allocation8 + $0x5a8] sm:$0xff]
          %v2719 = vld [vmem:[#allocation8 + $0x5b0] sm:$0xff]
          %v2720 = vld [vmem:[#allocation8 + $0x5b8] sm:$0xff]
          %v2721 = vld [vmem:[#allocation8 + $0x5c0] sm:$0xff]
          %v2722 = vld [vmem:[#allocation8 + $0x5c8] sm:$0xff]
          %v2723 = vld [vmem:[#allocation8 + $0x5d0] sm:$0xff]
          %v2724 = vld [vmem:[#allocation8 + $0x5d8] sm:$0xff]
          %v2725 = vld [vmem:[#allocation8 + $0x5e0] sm:$0xff]
          %v2726 = vld [vmem:[#allocation8 + $0x5e8] sm:$0xff]
          %v2727 = vld [vmem:[#allocation8 + $0x5f0] sm:$0xff]
          %v2728 = vld [vmem:[#allocation8 + $0x5f8] sm:$0xff]
          %v2729 = vld [vmem:[#allocation8 + $0x600] sm:$0xff]
          %v2730 = vld [vmem:[#allocation8 + $0x608] sm:$0xff]
          %v2731 = vld [vmem:[#allocation8 + $0x610] sm:$0xff]
          %v2732 = vld [vmem:[#allocation8 + $0x618] sm:$0xff]
          %v2733 = vld [vmem:[#allocation8 + $0x620] sm:$0xff]
          %v2734 = vld [vmem:[#allocation8 + $0x628] sm:$0xff]
          %v2735 = vld [vmem:[#allocation8 + $0x630] sm:$0xff]
          %v2736 = vld [vmem:[#allocation8 + $0x638] sm:$0xff]
          %v2737 = vld [vmem:[#allocation8 + $0x640] sm:$0xff]
          %v2738 = vld [vmem:[#allocation8 + $0x648] sm:$0xff]
          %v2739 = vld [vmem:[#allocation8 + $0x650] sm:$0xff]
          %v2740 = vld [vmem:[#allocation8 + $0x658] sm:$0xff]
          %v2741 = vld [vmem:[#allocation8 + $0x660] sm:$0xff]
          %v2742 = vld [vmem:[#allocation8 + $0x668] sm:$0xff]
          %v2743 = vld [vmem:[#allocation8 + $0x670] sm:$0xff]
          %v2744 = vld [vmem:[#allocation8 + $0x678] sm:$0xff]
          %v2745 = vld [vmem:[#allocation8 + $0x680] sm:$0xff]
          %v2746 = vld [vmem:[#allocation8 + $0x688] sm:$0xff]
          %v2747 = vld [vmem:[#allocation8 + $0x690] sm:$0xff]
          %v2748 = vld [vmem:[#allocation8 + $0x698] sm:$0xff]
          %v2749 = vld [vmem:[#allocation8 + $0x6a0] sm:$0xff]
          %v2750 = vld [vmem:[#allocation8 + $0x6a8] sm:$0xff]
          %v2751 = vld [vmem:[#allocation8 + $0x6b0] sm:$0xff]
          %v2752 = vld [vmem:[#allocation8 + $0x6b8] sm:$0xff]
          %v2753 = vld [vmem:[#allocation8 + $0x6c0] sm:$0xff]
          %v2754 = vld [vmem:[#allocation8 + $0x6c8] sm:$0xff]
          %v2755 = vld [vmem:[#allocation8 + $0x6d0] sm:$0xff]
          %v2756 = vld [vmem:[#allocation8 + $0x6d8] sm:$0xff]
          %v2757 = vld [vmem:[#allocation8 + $0x6e0] sm:$0xff]
          %v2758 = vld [vmem:[#allocation8 + $0x6e8] sm:$0xff]
          %v2759 = vld [vmem:[#allocation8 + $0x6f0] sm:$0xff]
          %v2760 = vld [vmem:[#allocation8 + $0x6f8] sm:$0xff]
          %v2761 = vld [vmem:[#allocation8 + $0x700] sm:$0xff]
          %v2762 = vld [vmem:[#allocation8 + $0x708] sm:$0xff]
          %v2763 = vld [vmem:[#allocation8 + $0x710] sm:$0xff]
          %v2764 = vld [vmem:[#allocation8 + $0x718] sm:$0xff]
          %v2765 = vld [vmem:[#allocation8 + $0x720] sm:$0xff]
          %v2766 = vld [vmem:[#allocation8 + $0x728] sm:$0xff]
          %v2767 = vld [vmem:[#allocation8 + $0x730] sm:$0xff]
          %v2768 = vld [vmem:[#allocation8 + $0x738] sm:$0xff]
          %v2769 = vld [vmem:[#allocation8 + $0x740] sm:$0xff]
          %v2770 = vld [vmem:[#allocation8 + $0x748] sm:$0xff]
          %v2771 = vld [vmem:[#allocation8 + $0x750] sm:$0xff]
          %v2772 = vld [vmem:[#allocation8 + $0x758] sm:$0xff]
          %v2773 = vld [vmem:[#allocation8 + $0x760] sm:$0xff]
          %v2774 = vld [vmem:[#allocation8 + $0x768] sm:$0xff]
          %v2775 = vld [vmem:[#allocation8 + $0x770] sm:$0xff]
          %v2776 = vld [vmem:[#allocation8 + $0x778] sm:$0xff]
          %v2777 = vld [vmem:[#allocation8 + $0x780] sm:$0xff]
          %v2778 = vld [vmem:[#allocation8 + $0x788] sm:$0xff]
          %v2779 = vld [vmem:[#allocation8 + $0x790] sm:$0xff]
          %v2780 = vld [vmem:[#allocation8 + $0x798] sm:$0xff]
          %v2781 = vld [vmem:[#allocation8 + $0x7a0] sm:$0xff]
          %v2782 = vld [vmem:[#allocation8 + $0x7a8] sm:$0xff]
          %v2783 = vld [vmem:[#allocation8 + $0x7b0] sm:$0xff]
          %v2784 = vld [vmem:[#allocation8 + $0x7b8] sm:$0xff]
          %v2785 = vld [vmem:[#allocation8 + $0x7c0] sm:$0xff]
          %v2786 = vld [vmem:[#allocation8 + $0x7c8] sm:$0xff]
          %v2787 = vld [vmem:[#allocation8 + $0x7d0] sm:$0xff]
          %v2788 = vld [vmem:[#allocation8 + $0x7d8] sm:$0xff]
          %v2789 = vld [vmem:[#allocation8 + $0x7e0] sm:$0xff]
          %v2790 = vld [vmem:[#allocation8 + $0x7e8] sm:$0xff]
          %v2791 = vld [vmem:[#allocation8 + $0x7f0] sm:$0xff]
          %v2792 = vld [vmem:[#allocation8 + $0x7f8] sm:$0xff]
          %v2793 = vld [vmem:[#allocation8 + $0x800] sm:$0xff]
          %v2794 = vld [vmem:[#allocation8 + $0x808] sm:$0xff]
          %v2795 = vld [vmem:[#allocation8 + $0x810] sm:$0xff]
          %v2796 = vld [vmem:[#allocation8 + $0x818] sm:$0xff]
          %v2797 = vld [vmem:[#allocation8 + $0x820] sm:$0xff]
          %v2798 = vld [vmem:[#allocation8 + $0x828] sm:$0xff]
          %v2799 = vld [vmem:[#allocation8 + $0x830] sm:$0xff]
          %v2800 = vld [vmem:[#allocation8 + $0x838] sm:$0xff]
          %v2801 = vld [vmem:[#allocation8 + $0x840] sm:$0xff]
          %v2802 = vld [vmem:[#allocation8 + $0x848] sm:$0xff]
          %v2803 = vld [vmem:[#allocation8 + $0x850] sm:$0xff]
          %v2804 = vld [vmem:[#allocation8 + $0x858] sm:$0xff]
          %v2805 = vld [vmem:[#allocation8 + $0x860] sm:$0xff]
          %v2806 = vld [vmem:[#allocation8 + $0x868] sm:$0xff]
          %v2807 = vld [vmem:[#allocation8 + $0x870] sm:$0xff]
          %v2808 = vld [vmem:[#allocation8 + $0x878] sm:$0xff]
          %v2809 = vld [vmem:[#allocation8 + $0x880] sm:$0xff]
          %v2810 = vld [vmem:[#allocation8 + $0x888] sm:$0xff]
          %v2811 = vld [vmem:[#allocation8 + $0x890] sm:$0xff]
          %v2812 = vld [vmem:[#allocation8 + $0x898] sm:$0xff]
          %v2813 = vld [vmem:[#allocation8 + $0x8a0] sm:$0xff]
          %v2814 = vld [vmem:[#allocation8 + $0x8a8] sm:$0xff]
          %v2815 = vld [vmem:[#allocation8 + $0x8b0] sm:$0xff]
          %v2816 = vld [vmem:[#allocation8 + $0x8b8] sm:$0xff]
          %v2817 = vld [vmem:[#allocation8 + $0x8c0] sm:$0xff]
          %v2818 = vld [vmem:[#allocation8 + $0x8c8] sm:$0xff]
          %v2819 = vld [vmem:[#allocation8 + $0x8d0] sm:$0xff]
          %v2820 = vld [vmem:[#allocation8 + $0x8d8] sm:$0xff]
          %v2821 = vld [vmem:[#allocation8 + $0x8e0] sm:$0xff]
          %v2822 = vld [vmem:[#allocation8 + $0x8e8] sm:$0xff]
          %v2823 = vld [vmem:[#allocation8 + $0x8f0] sm:$0xff]
          %v2824 = vld [vmem:[#allocation8 + $0x8f8] sm:$0xff]
          %v2825 = vld [vmem:[#allocation8 + $0x900] sm:$0xff]
          %v2826 = vld [vmem:[#allocation8 + $0x908] sm:$0xff]
          %v2827 = vld [vmem:[#allocation8 + $0x910] sm:$0xff]
          %v2828 = vld [vmem:[#allocation8 + $0x918] sm:$0xff]
          %v2829 = vld [vmem:[#allocation8 + $0x920] sm:$0xff]
          %v2830 = vld [vmem:[#allocation8 + $0x928] sm:$0xff]
          %v2831 = vld [vmem:[#allocation8 + $0x930] sm:$0xff]
          %v2832 = vld [vmem:[#allocation8 + $0x938] sm:$0xff]
          %v2833 = vld [vmem:[#allocation8 + $0x940] sm:$0xff]
          %v2834 = vld [vmem:[#allocation8 + $0x948] sm:$0xff]
          %v2835 = vld [vmem:[#allocation8 + $0x950] sm:$0xff]
          %v2836 = vld [vmem:[#allocation8 + $0x958] sm:$0xff]
          %v2837 = vld [vmem:[#allocation8 + $0x960] sm:$0xff]
          %v2838 = vld [vmem:[#allocation8 + $0x968] sm:$0xff]
          %v2839 = vld [vmem:[#allocation8 + $0x970] sm:$0xff]
          %v2840 = vld [vmem:[#allocation8 + $0x978] sm:$0xff]
          %v2841 = vld [vmem:[#allocation8 + $0x980] sm:$0xff]
          %v2842 = vld [vmem:[#allocation8 + $0x988] sm:$0xff]
          %v2843 = vld [vmem:[#allocation8 + $0x990] sm:$0xff]
          %v2844 = vld [vmem:[#allocation8 + $0x998] sm:$0xff]
          %v2845 = vld [vmem:[#allocation8 + $0x9a0] sm:$0xff]
          %v2846 = vld [vmem:[#allocation8 + $0x9a8] sm:$0xff]
          %v2847 = vld [vmem:[#allocation8 + $0x9b0] sm:$0xff]
          %v2848 = vld [vmem:[#allocation8 + $0x9b8] sm:$0xff]
          %v2849 = vld [vmem:[#allocation8 + $0x9c0] sm:$0xff]
          %v2850 = vld [vmem:[#allocation8 + $0x9c8] sm:$0xff]
          %v2851 = vld [vmem:[#allocation8 + $0x9d0] sm:$0xff]
          %v2852 = vld [vmem:[#allocation8 + $0x9d8] sm:$0xff]
          %v2853 = vld [vmem:[#allocation8 + $0x9e0] sm:$0xff]
          %v2854 = vld [vmem:[#allocation8 + $0x9e8] sm:$0xff]
          %v2855 = vld [vmem:[#allocation8 + $0x9f0] sm:$0xff]
          %v2856 = vld [vmem:[#allocation8 + $0x9f8] sm:$0xff]
          %v2857 = vld [vmem:[#allocation8 + $0xa00] sm:$0xff]
          %v2858 = vld [vmem:[#allocation8 + $0xa08] sm:$0xff]
          %v2859 = vld [vmem:[#allocation8 + $0xa10] sm:$0xff]
          %v2860 = vld [vmem:[#allocation8 + $0xa18] sm:$0xff]
          %v2861 = vld [vmem:[#allocation8 + $0xa20] sm:$0xff]
          %v2862 = vld [vmem:[#allocation8 + $0xa28] sm:$0xff]
          %v2863 = vld [vmem:[#allocation8 + $0xa30] sm:$0xff]
          %v2864 = vld [vmem:[#allocation8 + $0xa38] sm:$0xff]
          %v2865 = vld [vmem:[#allocation8 + $0xa40] sm:$0xff]
          %v2866 = vld [vmem:[#allocation8 + $0xa48] sm:$0xff]
          %v2867 = vld [vmem:[#allocation8 + $0xa50] sm:$0xff]
          %v2868 = vld [vmem:[#allocation8 + $0xa58] sm:$0xff]
          %v2869 = vld [vmem:[#allocation8 + $0xa60] sm:$0xff]
          %v2870 = vld [vmem:[#allocation8 + $0xa68] sm:$0xff]
          %v2871 = vld [vmem:[#allocation8 + $0xa70] sm:$0xff]
          %v2872 = vld [vmem:[#allocation8 + $0xa78] sm:$0xff]
          %v2873 = vld [vmem:[#allocation8 + $0xa80] sm:$0xff]
          %v2874 = vld [vmem:[#allocation8 + $0xa88] sm:$0xff]
          %v2875 = vld [vmem:[#allocation8 + $0xa90] sm:$0xff]
          %v2876 = vld [vmem:[#allocation8 + $0xa98] sm:$0xff]
          %v2877 = vld [vmem:[#allocation8 + $0xaa0] sm:$0xff]
          %v2878 = vld [vmem:[#allocation8 + $0xaa8] sm:$0xff]
          %v2879 = vld [vmem:[#allocation8 + $0xab0] sm:$0xff]
          %v2880 = vld [vmem:[#allocation8 + $0xab8] sm:$0xff]
          %v2881 = vld [vmem:[#allocation8 + $0xac0] sm:$0xff]
          %v2882 = vld [vmem:[#allocation8 + $0xac8] sm:$0xff]
          %v2883 = vld [vmem:[#allocation8 + $0xad0] sm:$0xff]
          %v2884 = vld [vmem:[#allocation8 + $0xad8] sm:$0xff]
          %v2885 = vld [vmem:[#allocation8 + $0xae0] sm:$0xff]
          %v2886 = vld [vmem:[#allocation8 + $0xae8] sm:$0xff]
          %v2887 = vld [vmem:[#allocation8 + $0xaf0] sm:$0xff]
          %v2888 = vld [vmem:[#allocation8 + $0xaf8] sm:$0xff]
          %v2889 = vld [vmem:[#allocation8 + $0xb00] sm:$0xff]
          %v2890 = vld [vmem:[#allocation8 + $0xb08] sm:$0xff]
          %v2891 = vld [vmem:[#allocation8 + $0xb10] sm:$0xff]
          %v2892 = vld [vmem:[#allocation8 + $0xb18] sm:$0xff]
          %v2893 = vld [vmem:[#allocation8 + $0xb20] sm:$0xff]
          %v2894 = vld [vmem:[#allocation8 + $0xb28] sm:$0xff]
          %v2895 = vld [vmem:[#allocation8 + $0xb30] sm:$0xff]
          %v2896 = vld [vmem:[#allocation8 + $0xb38] sm:$0xff]
          %v2897 = vld [vmem:[#allocation8 + $0xb40] sm:$0xff]
          %v2898 = vld [vmem:[#allocation8 + $0xb48] sm:$0xff]
          %v2899 = vld [vmem:[#allocation8 + $0xb50] sm:$0xff]
          %v2900 = vld [vmem:[#allocation8 + $0xb58] sm:$0xff]
          %v2901 = vld [vmem:[#allocation8 + $0xb60] sm:$0xff]
          %v2902 = vld [vmem:[#allocation8 + $0xb68] sm:$0xff]
          %v2903 = vld [vmem:[#allocation8 + $0xb70] sm:$0xff]
          %v2904 = vld [vmem:[#allocation8 + $0xb78] sm:$0xff]
          %v2905 = vld [vmem:[#allocation8 + $0xb80] sm:$0xff]
          %v2906 = vld [vmem:[#allocation8 + $0xb88] sm:$0xff]
          %v2907 = vld [vmem:[#allocation8 + $0xb90] sm:$0xff]
          %v2908 = vld [vmem:[#allocation8 + $0xb98] sm:$0xff]
          %v2909 = vld [vmem:[#allocation8 + $0xba0] sm:$0xff]
          %v2910 = vld [vmem:[#allocation8 + $0xba8] sm:$0xff]
          %v2911 = vld [vmem:[#allocation8 + $0xbb0] sm:$0xff]
          %v2912 = vld [vmem:[#allocation8 + $0xbb8] sm:$0xff]
          %v2913 = vld [vmem:[#allocation8 + $0xbc0] sm:$0xff]
          %v2914 = vld [vmem:[#allocation8 + $0xbc8] sm:$0xff]
          %v2915 = vld [vmem:[#allocation8 + $0xbd0] sm:$0xff]
          %v2916 = vld [vmem:[#allocation8 + $0xbd8] sm:$0xff]
          %v2917 = vld [vmem:[#allocation8 + $0xbe0] sm:$0xff]
          %v2918 = vld [vmem:[#allocation8 + $0xbe8] sm:$0xff]
          %v2919 = vld [vmem:[#allocation8 + $0xbf0] sm:$0xff]
          %v2920 = vld [vmem:[#allocation8 + $0xbf8] sm:$0xff]
          %v2921 = vld [vmem:[#allocation8 + $0xc00] sm:$0xff]
          %v2922 = vld [vmem:[#allocation8 + $0xc08] sm:$0xff]
          %v2923 = vld [vmem:[#allocation8 + $0xc10] sm:$0xff]
          %v2924 = vld [vmem:[#allocation8 + $0xc18] sm:$0xff]
          %v2925 = vld [vmem:[#allocation8 + $0xc20] sm:$0xff]
          %v2926 = vld [vmem:[#allocation8 + $0xc28] sm:$0xff]
          %v2927 = vld [vmem:[#allocation8 + $0xc30] sm:$0xff]
          %v2928 = vld [vmem:[#allocation8 + $0xc38] sm:$0xff]
          %v2929 = vld [vmem:[#allocation8 + $0xc40] sm:$0xff]
          %v2930 = vld [vmem:[#allocation8 + $0xc48] sm:$0xff]
          %v2931 = vld [vmem:[#allocation8 + $0xc50] sm:$0xff]
          %v2932 = vld [vmem:[#allocation8 + $0xc58] sm:$0xff]
          %v2933 = vld [vmem:[#allocation8 + $0xc60] sm:$0xff]
          %v2934 = vld [vmem:[#allocation8 + $0xc68] sm:$0xff]
          %v2935 = vld [vmem:[#allocation8 + $0xc70] sm:$0xff]
          %v2936 = vld [vmem:[#allocation8 + $0xc78] sm:$0xff]
          %v2937 = vld [vmem:[#allocation8 + $0xc80] sm:$0xff]
          %v2938 = vld [vmem:[#allocation8 + $0xc88] sm:$0xff]
          %v2939 = vld [vmem:[#allocation8 + $0xc90] sm:$0xff]
          %v2940 = vld [vmem:[#allocation8 + $0xc98] sm:$0xff]
          %v2941 = vld [vmem:[#allocation8 + $0xca0] sm:$0xff]
          %v2942 = vld [vmem:[#allocation8 + $0xca8] sm:$0xff]
          %v2943 = vld [vmem:[#allocation8 + $0xcb0] sm:$0xff]
          %v2944 = vld [vmem:[#allocation8 + $0xcb8] sm:$0xff]
          %v2945 = vld [vmem:[#allocation8 + $0xcc0] sm:$0xff]
          %v2946 = vld [vmem:[#allocation8 + $0xcc8] sm:$0xff]
          %v2947 = vld [vmem:[#allocation8 + $0xcd0] sm:$0xff]
          %v2948 = vld [vmem:[#allocation8 + $0xcd8] sm:$0xff]
          %v2949 = vld [vmem:[#allocation8 + $0xce0] sm:$0xff]
          %v2950 = vld [vmem:[#allocation8 + $0xce8] sm:$0xff]
          %v2951 = vld [vmem:[#allocation8 + $0xcf0] sm:$0xff]
          %v2952 = vld [vmem:[#allocation8 + $0xcf8] sm:$0xff]
          %v2953 = vld [vmem:[#allocation8 + $0xd00] sm:$0xff]
          %v2954 = vld [vmem:[#allocation8 + $0xd08] sm:$0xff]
          %v2955 = vld [vmem:[#allocation8 + $0xd10] sm:$0xff]
          %v2956 = vld [vmem:[#allocation8 + $0xd18] sm:$0xff]
          %v2957 = vld [vmem:[#allocation8 + $0xd20] sm:$0xff]
          %v2958 = vld [vmem:[#allocation8 + $0xd28] sm:$0xff]
          %v2959 = vld [vmem:[#allocation8 + $0xd30] sm:$0xff]
          %v2960 = vld [vmem:[#allocation8 + $0xd38] sm:$0xff]
          %v2961 = vld [vmem:[#allocation8 + $0xd40] sm:$0xff]
          %v2962 = vld [vmem:[#allocation8 + $0xd48] sm:$0xff]
          %v2963 = vld [vmem:[#allocation8 + $0xd50] sm:$0xff]
          %v2964 = vld [vmem:[#allocation8 + $0xd58] sm:$0xff]
          %v2965 = vld [vmem:[#allocation8 + $0xd60] sm:$0xff]
          %v2966 = vld [vmem:[#allocation8 + $0xd68] sm:$0xff]
          %v2967 = vld [vmem:[#allocation8 + $0xd70] sm:$0xff]
          %v2968 = vld [vmem:[#allocation8 + $0xd78] sm:$0xff]
          %v2969 = vld [vmem:[#allocation8 + $0xd80] sm:$0xff]
          %v2970 = vld [vmem:[#allocation8 + $0xd88] sm:$0xff]
          %v2971 = vld [vmem:[#allocation8 + $0xd90] sm:$0xff]
          %v2972 = vld [vmem:[#allocation8 + $0xd98] sm:$0xff]
          %v2973 = vld [vmem:[#allocation8 + $0xda0] sm:$0xff]
          %v2974 = vld [vmem:[#allocation8 + $0xda8] sm:$0xff]
          %v2975 = vld [vmem:[#allocation8 + $0xdb0] sm:$0xff]
          %v2976 = vld [vmem:[#allocation8 + $0xdb8] sm:$0xff]
          %v2977 = vld [vmem:[#allocation8 + $0xdc0] sm:$0xff]
          %v2978 = vld [vmem:[#allocation8 + $0xdc8] sm:$0xff]
          %v2979 = vld [vmem:[#allocation8 + $0xdd0] sm:$0xff]
          %v2980 = vld [vmem:[#allocation8 + $0xdd8] sm:$0xff]
          %v2981 = vld [vmem:[#allocation8 + $0xde0] sm:$0xff]
          %v2982 = vld [vmem:[#allocation8 + $0xde8] sm:$0xff]
          %v2983 = vld [vmem:[#allocation8 + $0xdf0] sm:$0xff]
          %v2984 = vld [vmem:[#allocation8 + $0xdf8] sm:$0xff]
          %v2985 = vld [vmem:[#allocation8 + $0xe00] sm:$0xff]
          %v2986 = vld [vmem:[#allocation8 + $0xe08] sm:$0xff]
          %v2987 = vld [vmem:[#allocation8 + $0xe10] sm:$0xff]
          %v2988 = vld [vmem:[#allocation8 + $0xe18] sm:$0xff]
          %v2989 = vld [vmem:[#allocation8 + $0xe20] sm:$0xff]
          %v2990 = vld [vmem:[#allocation8 + $0xe28] sm:$0xff]
          %v2991 = vld [vmem:[#allocation8 + $0xe30] sm:$0xff]
          %v2992 = vld [vmem:[#allocation8 + $0xe38] sm:$0xff]
          %v2993 = vld [vmem:[#allocation8 + $0xe40] sm:$0xff]
          %v2994 = vld [vmem:[#allocation8 + $0xe48] sm:$0xff]
          %v2995 = vld [vmem:[#allocation8 + $0xe50] sm:$0xff]
          %v2996 = vld [vmem:[#allocation8 + $0xe58] sm:$0xff]
          %v2997 = vld [vmem:[#allocation8 + $0xe60] sm:$0xff]
          %v2998 = vld [vmem:[#allocation8 + $0xe68] sm:$0xff]
          %v2999 = vld [vmem:[#allocation8 + $0xe70] sm:$0xff]
          %v3000 = vld [vmem:[#allocation8 + $0xe78] sm:$0xff]
          %v3001 = vld [vmem:[#allocation8 + $0xe80] sm:$0xff]
          %v3002 = vld [vmem:[#allocation8 + $0xe88] sm:$0xff]
          %v3003 = vld [vmem:[#allocation8 + $0xe90] sm:$0xff]
          %v3004 = vld [vmem:[#allocation8 + $0xe98] sm:$0xff]
          %v3005 = vld [vmem:[#allocation8 + $0xea0] sm:$0xff]
          %v3006 = vld [vmem:[#allocation8 + $0xea8] sm:$0xff]
          %v3007 = vld [vmem:[#allocation8 + $0xeb0] sm:$0xff]
          %v3008 = vld [vmem:[#allocation8 + $0xeb8] sm:$0xff]
          %v3009 = vld [vmem:[#allocation8 + $0xec0] sm:$0xff]
          %v3010 = vld [vmem:[#allocation8 + $0xec8] sm:$0xff]
          %v3011 = vld [vmem:[#allocation8 + $0xed0] sm:$0xff]
          %v3012 = vld [vmem:[#allocation8 + $0xed8] sm:$0xff]
          %v3013 = vld [vmem:[#allocation8 + $0xee0] sm:$0xff]
          %v3014 = vld [vmem:[#allocation8 + $0xee8] sm:$0xff]
          %v3015 = vld [vmem:[#allocation8 + $0xef0] sm:$0xff]
          %v3016 = vld [vmem:[#allocation8 + $0xef8] sm:$0xff]
          %v3017 = vld [vmem:[#allocation8 + $0xf00] sm:$0xff]
          %v3018 = vld [vmem:[#allocation8 + $0xf08] sm:$0xff]
          %v3019 = vld [vmem:[#allocation8 + $0xf10] sm:$0xff]
          %v3020 = vld [vmem:[#allocation8 + $0xf18] sm:$0xff]
          %v3021 = vld [vmem:[#allocation8 + $0xf20] sm:$0xff]
          %v3022 = vld [vmem:[#allocation8 + $0xf28] sm:$0xff]
          %v3023 = vld [vmem:[#allocation8 + $0xf30] sm:$0xff]
          %v3024 = vld [vmem:[#allocation8 + $0xf38] sm:$0xff]
          %v3025 = vld [vmem:[#allocation8 + $0xf40] sm:$0xff]
          %v3026 = vld [vmem:[#allocation8 + $0xf48] sm:$0xff]
          %v3027 = vld [vmem:[#allocation8 + $0xf50] sm:$0xff]
          %v3028 = vld [vmem:[#allocation8 + $0xf58] sm:$0xff]
          %v3029 = vld [vmem:[#allocation8 + $0xf60] sm:$0xff]
          %v3030 = vld [vmem:[#allocation8 + $0xf68] sm:$0xff]
          %v3031 = vld [vmem:[#allocation8 + $0xf70] sm:$0xff]
          %v3032 = vld [vmem:[#allocation8 + $0xf78] sm:$0xff]
          %v3033 = vld [vmem:[#allocation8 + $0xf80] sm:$0xff]
          %v3034 = vld [vmem:[#allocation8 + $0xf88] sm:$0xff]
          %v3035 = vld [vmem:[#allocation8 + $0xf90] sm:$0xff]
          %v3036 = vld [vmem:[#allocation8 + $0xf98] sm:$0xff]
          %v3037 = vld [vmem:[#allocation8 + $0xfa0] sm:$0xff]
          %v3038 = vld [vmem:[#allocation8 + $0xfa8] sm:$0xff]
          %v3039 = vld [vmem:[#allocation8 + $0xfb0] sm:$0xff]
          %v3040 = vld [vmem:[#allocation8 + $0xfb8] sm:$0xff]
          %v3041 = vld [vmem:[#allocation8 + $0xfc0] sm:$0xff]
          %v3042 = vld [vmem:[#allocation8 + $0xfc8] sm:$0xff]
          %v3043 = vld [vmem:[#allocation8 + $0xfd0] sm:$0xff]
          %v3044 = vld [vmem:[#allocation8 + $0xfd8] sm:$0xff]
          %v3045 = vld [vmem:[#allocation8 + $0xfe0] sm:$0xff]
          %v3046 = vld [vmem:[#allocation8 + $0xfe8] sm:$0xff]
          %v3047 = vld [vmem:[#allocation8 + $0xff0] sm:$0xff]
          %v3048 = vld [vmem:[#allocation8 + $0xff8] sm:$0xff]
          %v3049 = vld [vmem:[#allocation8 + $0x1000] sm:$0xff]
          %v3050 = vld [vmem:[#allocation8 + $0x1008] sm:$0xff]
          %v3051 = vld [vmem:[#allocation8 + $0x1010] sm:$0xff]
          %v3052 = vld [vmem:[#allocation8 + $0x1018] sm:$0xff]
          %v3053 = vld [vmem:[#allocation8 + $0x1020] sm:$0xff]
          %v3054 = vld [vmem:[#allocation8 + $0x1028] sm:$0xff]
          %v3055 = vld [vmem:[#allocation8 + $0x1030] sm:$0xff]
          %v3056 = vld [vmem:[#allocation8 + $0x1038] sm:$0xff]
          %v3057 = vld [vmem:[#allocation8 + $0x1040] sm:$0xff]
          %v3058 = vld [vmem:[#allocation8 + $0x1048] sm:$0xff]
          %v3059 = vld [vmem:[#allocation8 + $0x1050] sm:$0xff]
          %v3060 = vld [vmem:[#allocation8 + $0x1058] sm:$0xff]
          %v3061 = vld [vmem:[#allocation8 + $0x1060] sm:$0xff]
          %v3062 = vld [vmem:[#allocation8 + $0x1068] sm:$0xff]
          %v3063 = vld [vmem:[#allocation8 + $0x1070] sm:$0xff]
          %v3064 = vld [vmem:[#allocation8 + $0x1078] sm:$0xff]
          %v3065 = vld [vmem:[#allocation8 + $0x1080] sm:$0xff]
          %v3066 = vld [vmem:[#allocation8 + $0x1088] sm:$0xff]
          %v3067 = vld [vmem:[#allocation8 + $0x1090] sm:$0xff]
          %v3068 = vld [vmem:[#allocation8 + $0x1098] sm:$0xff]
          %v3069 = vld [vmem:[#allocation8 + $0x10a0] sm:$0xff]
          %v3070 = vld [vmem:[#allocation8 + $0x10a8] sm:$0xff]
          %v3071 = vld [vmem:[#allocation8 + $0x10b0] sm:$0xff]
          %v3072 = vld [vmem:[#allocation8 + $0x10b8] sm:$0xff]
          %v3073 = vld [vmem:[#allocation8 + $0x10c0] sm:$0xff]
          %v3074 = vld [vmem:[#allocation8 + $0x10c8] sm:$0xff]
          %v3075 = vld [vmem:[#allocation8 + $0x10d0] sm:$0xff]
          %v3076 = vld [vmem:[#allocation8 + $0x10d8] sm:$0xff]
          %v3077 = vld [vmem:[#allocation8 + $0x10e0] sm:$0xff]
          %v3078 = vld [vmem:[#allocation8 + $0x10e8] sm:$0xff]
          %v3079 = vld [vmem:[#allocation8 + $0x10f0] sm:$0xff]
          %v3080 = vld [vmem:[#allocation8 + $0x10f8] sm:$0xff]
          %v3081 = vld [vmem:[#allocation8 + $0x1100] sm:$0xff]
          %v3082 = vld [vmem:[#allocation8 + $0x1108] sm:$0xff]
          %v3083 = vld [vmem:[#allocation8 + $0x1110] sm:$0xff]
          %v3084 = vld [vmem:[#allocation8 + $0x1118] sm:$0xff]
          %v3085 = vld [vmem:[#allocation8 + $0x1120] sm:$0xff]
          %v3086 = vld [vmem:[#allocation8 + $0x1128] sm:$0xff]
          %v3087 = vld [vmem:[#allocation8 + $0x1130] sm:$0xff]
          %v3088 = vld [vmem:[#allocation8 + $0x1138] sm:$0xff]
          %v3089 = vld [vmem:[#allocation8 + $0x1140] sm:$0xff]
          %v3090 = vld [vmem:[#allocation8 + $0x1148] sm:$0xff]
          %v3091 = vld [vmem:[#allocation8 + $0x1150] sm:$0xff]
          %v3092 = vld [vmem:[#allocation8 + $0x1158] sm:$0xff]
          %v3093 = vld [vmem:[#allocation8 + $0x1160] sm:$0xff]
          %v3094 = vld [vmem:[#allocation8 + $0x1168] sm:$0xff]
          %v3095 = vld [vmem:[#allocation8 + $0x1170] sm:$0xff]
          %v3096 = vld [vmem:[#allocation8 + $0x1178] sm:$0xff]
          %v3097 = vld [vmem:[#allocation8 + $0x1180] sm:$0xff]
          %v3098 = vld [vmem:[#allocation8 + $0x1188] sm:$0xff]
          %v3099 = vld [vmem:[#allocation8 + $0x1190] sm:$0xff]
          %v3100 = vld [vmem:[#allocation8 + $0x1198] sm:$0xff]
          %v3101 = vld [vmem:[#allocation8 + $0x11a0] sm:$0xff]
          %v3102 = vld [vmem:[#allocation8 + $0x11a8] sm:$0xff]
          %v3103 = vld [vmem:[#allocation8 + $0x11b0] sm:$0xff]
          %v3104 = vld [vmem:[#allocation8 + $0x11b8] sm:$0xff]
          %v3105 = vld [vmem:[#allocation8 + $0x11c0] sm:$0xff]
          %v3106 = vld [vmem:[#allocation8 + $0x11c8] sm:$0xff]
          %v3107 = vld [vmem:[#allocation8 + $0x11d0] sm:$0xff]
          %v3108 = vld [vmem:[#allocation8 + $0x11d8] sm:$0xff]
          %v3109 = vld [vmem:[#allocation8 + $0x11e0] sm:$0xff]
          %v3110 = vld [vmem:[#allocation8 + $0x11e8] sm:$0xff]
          %v3111 = vld [vmem:[#allocation8 + $0x11f0] sm:$0xff]
          %v3112 = vld [vmem:[#allocation8 + $0x11f8] sm:$0xff]
          %v3113 = vld [vmem:[#allocation8 + $0x1200] sm:$0xff]
          %v3114 = vld [vmem:[#allocation8 + $0x1208] sm:$0xff]
          %v3115 = vld [vmem:[#allocation8 + $0x1210] sm:$0xff]
          %v3116 = vld [vmem:[#allocation8 + $0x1218] sm:$0xff]
          %v3117 = vld [vmem:[#allocation8 + $0x1220] sm:$0xff]
          %v3118 = vld [vmem:[#allocation8 + $0x1228] sm:$0xff]
          %v3119 = vld [vmem:[#allocation8 + $0x1230] sm:$0xff]
          %v3120 = vld [vmem:[#allocation8 + $0x1238] sm:$0xff]
          %v3121 = vld [vmem:[#allocation8 + $0x1240] sm:$0xff]
          %v3122 = vld [vmem:[#allocation8 + $0x1248] sm:$0xff]
          %v3123 = vld [vmem:[#allocation8 + $0x1250] sm:$0xff]
          %v3124 = vld [vmem:[#allocation8 + $0x1258] sm:$0xff]
          %v3125 = vld [vmem:[#allocation8 + $0x1260] sm:$0xff]
          %v3126 = vld [vmem:[#allocation8 + $0x1268] sm:$0xff]
          %v3127 = vld [vmem:[#allocation8 + $0x1270] sm:$0xff]
          %v3128 = vld [vmem:[#allocation8 + $0x1278] sm:$0xff]
          %v3129 = vld [vmem:[#allocation8 + $0x1280] sm:$0xff]
          %v3130 = vld [vmem:[#allocation8 + $0x1288] sm:$0xff]
          %v3131 = vld [vmem:[#allocation8 + $0x1290] sm:$0xff]
          %v3132 = vld [vmem:[#allocation8 + $0x1298] sm:$0xff]
          %v3133 = vld [vmem:[#allocation8 + $0x12a0] sm:$0xff]
          %v3134 = vld [vmem:[#allocation8 + $0x12a8] sm:$0xff]
          %v3135 = vld [vmem:[#allocation8 + $0x12b0] sm:$0xff]
          %v3136 = vld [vmem:[#allocation8 + $0x12b8] sm:$0xff]
          %v3137 = vld [vmem:[#allocation8 + $0x12c0] sm:$0xff]
          %v3138 = vld [vmem:[#allocation8 + $0x12c8] sm:$0xff]
          %v3139 = vld [vmem:[#allocation8 + $0x12d0] sm:$0xff]
          %v3140 = vld [vmem:[#allocation8 + $0x12d8] sm:$0xff]
          %v3141 = vld [vmem:[#allocation8 + $0x12e0] sm:$0xff]
          %v3142 = vld [vmem:[#allocation8 + $0x12e8] sm:$0xff]
          %v3143 = vld [vmem:[#allocation8 + $0x12f0] sm:$0xff]
          %v3144 = vld [vmem:[#allocation8 + $0x12f8] sm:$0xff]
          %v3145 = vld [vmem:[#allocation8 + $0x1300] sm:$0xff]
          %v3146 = vld [vmem:[#allocation8 + $0x1308] sm:$0xff]
          %v3147 = vld [vmem:[#allocation8 + $0x1310] sm:$0xff]
          %v3148 = vld [vmem:[#allocation8 + $0x1318] sm:$0xff]
          %v3149 = vld [vmem:[#allocation8 + $0x1320] sm:$0xff]
          %v3150 = vld [vmem:[#allocation8 + $0x1328] sm:$0xff]
          %v3151 = vld [vmem:[#allocation8 + $0x1330] sm:$0xff]
          %v3152 = vld [vmem:[#allocation8 + $0x1338] sm:$0xff]
          %v3153 = vld [vmem:[#allocation8 + $0x1340] sm:$0xff]
          %v3154 = vld [vmem:[#allocation8 + $0x1348] sm:$0xff]
          %v3155 = vld [vmem:[#allocation8 + $0x1350] sm:$0xff]
          %v3156 = vld [vmem:[#allocation8 + $0x1358] sm:$0xff]
          %v3157 = vld [vmem:[#allocation8 + $0x1360] sm:$0xff]
          %v3158 = vld [vmem:[#allocation8 + $0x1368] sm:$0xff]
          %v3159 = vld [vmem:[#allocation8 + $0x1370] sm:$0xff]
          %v3160 = vld [vmem:[#allocation8 + $0x1378] sm:$0xff]
          %v3161 = vld [vmem:[#allocation8 + $0x1380] sm:$0xff]
          %v3162 = vld [vmem:[#allocation8 + $0x1388] sm:$0xff]
          %v3163 = vld [vmem:[#allocation8 + $0x1390] sm:$0xff]
          %v3164 = vld [vmem:[#allocation8 + $0x1398] sm:$0xff]
          %v3165 = vld [vmem:[#allocation8 + $0x13a0] sm:$0xff]
          %v3166 = vld [vmem:[#allocation8 + $0x13a8] sm:$0xff]
          %v3167 = vld [vmem:[#allocation8 + $0x13b0] sm:$0xff]
          %v3168 = vld [vmem:[#allocation8 + $0x13b8] sm:$0xff]
          %v3169 = vld [vmem:[#allocation8 + $0x13c0] sm:$0xff]
          %v3170 = vld [vmem:[#allocation8 + $0x13c8] sm:$0xff]
          %v3171 = vld [vmem:[#allocation8 + $0x13d0] sm:$0xff]
          %v3172 = vld [vmem:[#allocation8 + $0x13d8] sm:$0xff]
          %v3173 = vld [vmem:[#allocation8 + $0x13e0] sm:$0xff]
          %v3174 = vld [vmem:[#allocation8 + $0x13e8] sm:$0xff]
          %v3175 = vld [vmem:[#allocation8 + $0x13f0] sm:$0xff]
          %v3176 = vld [vmem:[#allocation8 + $0x13f8] sm:$0xff]
          %v3177 = vld [vmem:[#allocation8 + $0x1400] sm:$0xff]
          %v3178 = vld [vmem:[#allocation8 + $0x1408] sm:$0xff]
          %v3179 = vld [vmem:[#allocation8 + $0x1410] sm:$0xff]
          %v3180 = vld [vmem:[#allocation8 + $0x1418] sm:$0xff]
          %v3181 = vld [vmem:[#allocation8 + $0x1420] sm:$0xff]
          %v3182 = vld [vmem:[#allocation8 + $0x1428] sm:$0xff]
          %v3183 = vld [vmem:[#allocation8 + $0x1430] sm:$0xff]
          %v3184 = vld [vmem:[#allocation8 + $0x1438] sm:$0xff]
          %v3185 = vld [vmem:[#allocation8 + $0x1440] sm:$0xff]
          %v3186 = vld [vmem:[#allocation8 + $0x1448] sm:$0xff]
          %v3187 = vld [vmem:[#allocation8 + $0x1450] sm:$0xff]
          %v3188 = vld [vmem:[#allocation8 + $0x1458] sm:$0xff]
          %v3189 = vld [vmem:[#allocation8 + $0x1460] sm:$0xff]
          %v3190 = vld [vmem:[#allocation8 + $0x1468] sm:$0xff]
          %v3191 = vld [vmem:[#allocation8 + $0x1470] sm:$0xff]
          %v3192 = vld [vmem:[#allocation8 + $0x1478] sm:$0xff]
          %v3193 = vld [vmem:[#allocation8 + $0x1480] sm:$0xff]
          %v3194 = vld [vmem:[#allocation8 + $0x1488] sm:$0xff]
          %v3195 = vld [vmem:[#allocation8 + $0x1490] sm:$0xff]
          %v3196 = vld [vmem:[#allocation8 + $0x1498] sm:$0xff]
          %v3197 = vld [vmem:[#allocation8 + $0x14a0] sm:$0xff]
          %v3198 = vld [vmem:[#allocation8 + $0x14a8] sm:$0xff]
          %v3199 = vld [vmem:[#allocation8 + $0x14b0] sm:$0xff]
          %v3200 = vld [vmem:[#allocation8 + $0x14b8] sm:$0xff]
          %v3201 = vld [vmem:[#allocation8 + $0x14c0] sm:$0xff]
          %v3202 = vld [vmem:[#allocation8 + $0x14c8] sm:$0xff]
          %v3203 = vld [vmem:[#allocation8 + $0x14d0] sm:$0xff]
          %v3204 = vld [vmem:[#allocation8 + $0x14d8] sm:$0xff]
          %v3205 = vld [vmem:[#allocation8 + $0x14e0] sm:$0xff]
          %v3206 = vld [vmem:[#allocation8 + $0x14e8] sm:$0xff]
          %v3207 = vld [vmem:[#allocation8 + $0x14f0] sm:$0xff]
          %v3208 = vld [vmem:[#allocation8 + $0x14f8] sm:$0xff]
          %v3209 = vld [vmem:[#allocation8 + $0x1500] sm:$0xff]
          %v3210 = vld [vmem:[#allocation8 + $0x1508] sm:$0xff]
          %v3211 = vld [vmem:[#allocation8 + $0x1510] sm:$0xff]
          %v3212 = vld [vmem:[#allocation8 + $0x1518] sm:$0xff]
          %v3213 = vld [vmem:[#allocation8 + $0x1520] sm:$0xff]
          %v3214 = vld [vmem:[#allocation8 + $0x1528] sm:$0xff]
          %v3215 = vld [vmem:[#allocation8 + $0x1530] sm:$0xff]
          %v3216 = vld [vmem:[#allocation8 + $0x1538] sm:$0xff]
          %v3217 = vld [vmem:[#allocation8 + $0x1540] sm:$0xff]
          %v3218 = vld [vmem:[#allocation8 + $0x1548] sm:$0xff]
          %v3219 = vld [vmem:[#allocation8 + $0x1550] sm:$0xff]
          %v3220 = vld [vmem:[#allocation8 + $0x1558] sm:$0xff]
          %v3221 = vld [vmem:[#allocation8 + $0x1560] sm:$0xff]
          %v3222 = vld [vmem:[#allocation8 + $0x1568] sm:$0xff]
          %v3223 = vld [vmem:[#allocation8 + $0x1570] sm:$0xff]
          %v3224 = vld [vmem:[#allocation8 + $0x1578] sm:$0xff]
          %v3225 = vld [vmem:[#allocation8 + $0x1580] sm:$0xff]
          %v3226 = vld [vmem:[#allocation8 + $0x1588] sm:$0xff]
          %v3227 = vld [vmem:[#allocation8 + $0x1590] sm:$0xff]
          %v3228 = vld [vmem:[#allocation8 + $0x1598] sm:$0xff]
          %v3229 = vld [vmem:[#allocation8 + $0x15a0] sm:$0xff]
          %v3230 = vld [vmem:[#allocation8 + $0x15a8] sm:$0xff]
          %v3231 = vld [vmem:[#allocation8 + $0x15b0] sm:$0xff]
          %v3232 = vld [vmem:[#allocation8 + $0x15b8] sm:$0xff]
          %v3233 = vld [vmem:[#allocation8 + $0x15c0] sm:$0xff]
          %v3234 = vld [vmem:[#allocation8 + $0x15c8] sm:$0xff]
          %v3235 = vld [vmem:[#allocation8 + $0x15d0] sm:$0xff]
          %v3236 = vld [vmem:[#allocation8 + $0x15d8] sm:$0xff]
          %v3237 = vld [vmem:[#allocation8 + $0x15e0] sm:$0xff]
          %v3238 = vld [vmem:[#allocation8 + $0x15e8] sm:$0xff]
          %v3239 = vld [vmem:[#allocation8 + $0x15f0] sm:$0xff]
          %v3240 = vld [vmem:[#allocation8 + $0x15f8] sm:$0xff]
          %v3241 = vld [vmem:[#allocation8 + $0x1600] sm:$0xff]
          %v3242 = vld [vmem:[#allocation8 + $0x1608] sm:$0xff]
          %v3243 = vld [vmem:[#allocation8 + $0x1610] sm:$0xff]
          %v3244 = vld [vmem:[#allocation8 + $0x1618] sm:$0xff]
          %v3245 = vld [vmem:[#allocation8 + $0x1620] sm:$0xff]
          %v3246 = vld [vmem:[#allocation8 + $0x1628] sm:$0xff]
          %v3247 = vld [vmem:[#allocation8 + $0x1630] sm:$0xff]
          %v3248 = vld [vmem:[#allocation8 + $0x1638] sm:$0xff]
          %v3249 = vld [vmem:[#allocation8 + $0x1640] sm:$0xff]
          %v3250 = vld [vmem:[#allocation8 + $0x1648] sm:$0xff]
          %v3251 = vld [vmem:[#allocation8 + $0x1650] sm:$0xff]
          %v3252 = vld [vmem:[#allocation8 + $0x1658] sm:$0xff]
          %v3253 = vld [vmem:[#allocation8 + $0x1660] sm:$0xff]
          %v3254 = vld [vmem:[#allocation8 + $0x1668] sm:$0xff]
          %v3255 = vld [vmem:[#allocation8 + $0x1670] sm:$0xff]
          %v3256 = vld [vmem:[#allocation8 + $0x1678] sm:$0xff]
          %v3257 = vld [vmem:[#allocation8 + $0x1680] sm:$0xff]
          %v3258 = vld [vmem:[#allocation8 + $0x1688] sm:$0xff]
          %v3259 = vld [vmem:[#allocation8 + $0x1690] sm:$0xff]
          %v3260 = vld [vmem:[#allocation8 + $0x1698] sm:$0xff]
          %v3261 = vld [vmem:[#allocation8 + $0x16a0] sm:$0xff]
          %v3262 = vld [vmem:[#allocation8 + $0x16a8] sm:$0xff]
          %v3263 = vld [vmem:[#allocation8 + $0x16b0] sm:$0xff]
          %v3264 = vld [vmem:[#allocation8 + $0x16b8] sm:$0xff]
          %v3265 = vld [vmem:[#allocation8 + $0x16c0] sm:$0xff]
          %v3266 = vld [vmem:[#allocation8 + $0x16c8] sm:$0xff]
          %v3267 = vld [vmem:[#allocation8 + $0x16d0] sm:$0xff]
          %v3268 = vld [vmem:[#allocation8 + $0x16d8] sm:$0xff]
          %v3269 = vld [vmem:[#allocation8 + $0x16e0] sm:$0xff]
          %v3270 = vld [vmem:[#allocation8 + $0x16e8] sm:$0xff]
          %v3271 = vld [vmem:[#allocation8 + $0x16f0] sm:$0xff]
          %v3272 = vld [vmem:[#allocation8 + $0x16f8] sm:$0xff]
          %v3273 = vld [vmem:[#allocation8 + $0x1700] sm:$0xff]
          %v3274 = vld [vmem:[#allocation8 + $0x1708] sm:$0xff]
          %v3275 = vld [vmem:[#allocation8 + $0x1710] sm:$0xff]
          %v3276 = vld [vmem:[#allocation8 + $0x1718] sm:$0xff]
          %v3277 = vld [vmem:[#allocation8 + $0x1720] sm:$0xff]
          %v3278 = vld [vmem:[#allocation8 + $0x1728] sm:$0xff]
          %v3279 = vld [vmem:[#allocation8 + $0x1730] sm:$0xff]
          %v3280 = vld [vmem:[#allocation8 + $0x1738] sm:$0xff]
          %v3281 = vld [vmem:[#allocation8 + $0x1740] sm:$0xff]
          %v3282 = vld [vmem:[#allocation8 + $0x1748] sm:$0xff]
          %v3283 = vld [vmem:[#allocation8 + $0x1750] sm:$0xff]
          %v3284 = vld [vmem:[#allocation8 + $0x1758] sm:$0xff]
          %v3285 = vld [vmem:[#allocation8 + $0x1760] sm:$0xff]
          %v3286 = vld [vmem:[#allocation8 + $0x1768] sm:$0xff]
          %v3287 = vld [vmem:[#allocation8 + $0x1770] sm:$0xff]
          %v3288 = vld [vmem:[#allocation8 + $0x1778] sm:$0xff]
          %v3289 = vld [vmem:[#allocation8 + $0x1780] sm:$0xff]
          %v3290 = vld [vmem:[#allocation8 + $0x1788] sm:$0xff]
          %v3291 = vld [vmem:[#allocation8 + $0x1790] sm:$0xff]
          %v3292 = vld [vmem:[#allocation8 + $0x1798] sm:$0xff]
          %v3293 = vld [vmem:[#allocation8 + $0x17a0] sm:$0xff]
          %v3294 = vld [vmem:[#allocation8 + $0x17a8] sm:$0xff]
          %v3295 = vld [vmem:[#allocation8 + $0x17b0] sm:$0xff]
          %v3296 = vld [vmem:[#allocation8 + $0x17b8] sm:$0xff]
          %v3297 = vld [vmem:[#allocation8 + $0x17c0] sm:$0xff]
          %v3298 = vld [vmem:[#allocation8 + $0x17c8] sm:$0xff]
          %v3299 = vld [vmem:[#allocation8 + $0x17d0] sm:$0xff]
          %v3300 = vld [vmem:[#allocation8 + $0x17d8] sm:$0xff]
          %v3301 = vld [vmem:[#allocation8 + $0x17e0] sm:$0xff]
          %v3302 = vld [vmem:[#allocation8 + $0x17e8] sm:$0xff]
          %v3303 = vld [vmem:[#allocation8 + $0x17f0] sm:$0xff]
          %v3304 = vld [vmem:[#allocation8 + $0x17f8] sm:$0xff]
          %v3305 = vld [vmem:[#allocation8 + $0x1800] sm:$0xff]
          %v3306 = vld [vmem:[#allocation8 + $0x1808] sm:$0xff]
          %v3307 = vld [vmem:[#allocation8 + $0x1810] sm:$0xff]
          %v3308 = vld [vmem:[#allocation8 + $0x1818] sm:$0xff]
          %v3309 = vld [vmem:[#allocation8 + $0x1820] sm:$0xff]
          %v3310 = vld [vmem:[#allocation8 + $0x1828] sm:$0xff]
          %v3311 = vld [vmem:[#allocation8 + $0x1830] sm:$0xff]
          %v3312 = vld [vmem:[#allocation8 + $0x1838] sm:$0xff]
          %v3313 = vld [vmem:[#allocation8 + $0x1840] sm:$0xff]
          %v3314 = vld [vmem:[#allocation8 + $0x1848] sm:$0xff]
          %v3315 = vld [vmem:[#allocation8 + $0x1850] sm:$0xff]
          %v3316 = vld [vmem:[#allocation8 + $0x1858] sm:$0xff]
          %v3317 = vld [vmem:[#allocation8 + $0x1860] sm:$0xff]
          %v3318 = vld [vmem:[#allocation8 + $0x1868] sm:$0xff]
          %v3319 = vld [vmem:[#allocation8 + $0x1870] sm:$0xff]
          %v3320 = vld [vmem:[#allocation8 + $0x1878] sm:$0xff]
          %v3321 = vld [vmem:[#allocation8 + $0x1880] sm:$0xff]
          %v3322 = vld [vmem:[#allocation8 + $0x1888] sm:$0xff]
          %v3323 = vld [vmem:[#allocation8 + $0x1890] sm:$0xff]
          %v3324 = vld [vmem:[#allocation8 + $0x1898] sm:$0xff]
          %v3325 = vld [vmem:[#allocation8 + $0x18a0] sm:$0xff]
          %v3326 = vld [vmem:[#allocation8 + $0x18a8] sm:$0xff]
          %v3327 = vld [vmem:[#allocation8 + $0x18b0] sm:$0xff]
          %v3328 = vld [vmem:[#allocation8 + $0x18b8] sm:$0xff]
          %v3329 = vld [vmem:[#allocation8 + $0x18c0] sm:$0xff]
          %v3330 = vld [vmem:[#allocation8 + $0x18c8] sm:$0xff]
          %v3331 = vld [vmem:[#allocation8 + $0x18d0] sm:$0xff]
          %v3332 = vld [vmem:[#allocation8 + $0x18d8] sm:$0xff]
          %v3333 = vld [vmem:[#allocation8 + $0x18e0] sm:$0xff]
          %v3334 = vld [vmem:[#allocation8 + $0x18e8] sm:$0xff]
          %v3335 = vld [vmem:[#allocation8 + $0x18f0] sm:$0xff]
          %v3336 = vld [vmem:[#allocation8 + $0x18f8] sm:$0xff]
          %v3337 = vld [vmem:[#allocation8 + $0x1900] sm:$0xff]
          %v3338 = vld [vmem:[#allocation8 + $0x1908] sm:$0xff]
          %v3339 = vld [vmem:[#allocation8 + $0x1910] sm:$0xff]
          %v3340 = vld [vmem:[#allocation8 + $0x1918] sm:$0xff]
          %v3341 = vld [vmem:[#allocation8 + $0x1920] sm:$0xff]
          %v3342 = vld [vmem:[#allocation8 + $0x1928] sm:$0xff]
          %v3343 = vld [vmem:[#allocation8 + $0x1930] sm:$0xff]
          %v3344 = vld [vmem:[#allocation8 + $0x1938] sm:$0xff]
          %v3345 = vld [vmem:[#allocation8 + $0x1940] sm:$0xff]
          %v3346 = vld [vmem:[#allocation8 + $0x1948] sm:$0xff]
          %v3347 = vld [vmem:[#allocation8 + $0x1950] sm:$0xff]
          %v3348 = vld [vmem:[#allocation8 + $0x1958] sm:$0xff]
          %v3349 = vld [vmem:[#allocation8 + $0x1960] sm:$0xff]
          %v3350 = vld [vmem:[#allocation8 + $0x1968] sm:$0xff]
          %v3351 = vld [vmem:[#allocation8 + $0x1970] sm:$0xff]
          %v3352 = vld [vmem:[#allocation8 + $0x1978] sm:$0xff]
          %v3353 = vld [vmem:[#allocation8 + $0x1980] sm:$0xff]
          %v3354 = vld [vmem:[#allocation8 + $0x1988] sm:$0xff]
          %v3355 = vld [vmem:[#allocation8 + $0x1990] sm:$0xff]
          %v3356 = vld [vmem:[#allocation8 + $0x1998] sm:$0xff]
          %v3357 = vld [vmem:[#allocation8 + $0x19a0] sm:$0xff]
          %v3358 = vld [vmem:[#allocation8 + $0x19a8] sm:$0xff]
          %v3359 = vld [vmem:[#allocation8 + $0x19b0] sm:$0xff]
          %v3360 = vld [vmem:[#allocation8 + $0x19b8] sm:$0xff]
          %v3361 = vld [vmem:[#allocation8 + $0x19c0] sm:$0xff]
          %v3362 = vld [vmem:[#allocation8 + $0x19c8] sm:$0xff]
          %v3363 = vld [vmem:[#allocation8 + $0x19d0] sm:$0xff]
          %v3364 = vld [vmem:[#allocation8 + $0x19d8] sm:$0xff]
          %v3365 = vld [vmem:[#allocation8 + $0x19e0] sm:$0xff]
          %v3366 = vld [vmem:[#allocation8 + $0x19e8] sm:$0xff]
          %v3367 = vld [vmem:[#allocation8 + $0x19f0] sm:$0xff]
          %v3368 = vld [vmem:[#allocation8 + $0x19f8] sm:$0xff]
          %v3369 = vld [vmem:[#allocation8 + $0x1a00] sm:$0xff]
          %v3370 = vld [vmem:[#allocation8 + $0x1a08] sm:$0xff]
          %v3371 = vld [vmem:[#allocation8 + $0x1a10] sm:$0xff]
          %v3372 = vld [vmem:[#allocation8 + $0x1a18] sm:$0xff]
          %v3373 = vld [vmem:[#allocation8 + $0x1a20] sm:$0xff]
          %v3374 = vld [vmem:[#allocation8 + $0x1a28] sm:$0xff]
          %v3375 = vld [vmem:[#allocation8 + $0x1a30] sm:$0xff]
          %v3376 = vld [vmem:[#allocation8 + $0x1a38] sm:$0xff]
          %v3377 = vld [vmem:[#allocation8 + $0x1a40] sm:$0xff]
          %v3378 = vld [vmem:[#allocation8 + $0x1a48] sm:$0xff]
          %v3379 = vld [vmem:[#allocation8 + $0x1a50] sm:$0xff]
          %v3380 = vld [vmem:[#allocation8 + $0x1a58] sm:$0xff]
          %v3381 = vld [vmem:[#allocation8 + $0x1a60] sm:$0xff]
          %v3382 = vld [vmem:[#allocation8 + $0x1a68] sm:$0xff]
          %v3383 = vld [vmem:[#allocation8 + $0x1a70] sm:$0xff]
          %v3384 = vld [vmem:[#allocation8 + $0x1a78] sm:$0xff]
          %v3385 = vld [vmem:[#allocation8 + $0x1a80] sm:$0xff]
          %v3386 = vld [vmem:[#allocation8 + $0x1a88] sm:$0xff]
          %v3387 = vld [vmem:[#allocation8 + $0x1a90] sm:$0xff]
          %v3388 = vld [vmem:[#allocation8 + $0x1a98] sm:$0xff]
          %v3389 = vld [vmem:[#allocation8 + $0x1aa0] sm:$0xff]
          %v3390 = vld [vmem:[#allocation8 + $0x1aa8] sm:$0xff]
          %v3391 = vld [vmem:[#allocation8 + $0x1ab0] sm:$0xff]
          %v3392 = vld [vmem:[#allocation8 + $0x1ab8] sm:$0xff]
          %v3393 = vld [vmem:[#allocation8 + $0x1ac0] sm:$0xff]
          %v3394 = vld [vmem:[#allocation8 + $0x1ac8] sm:$0xff]
          %v3395 = vld [vmem:[#allocation8 + $0x1ad0] sm:$0xff]
          %v3396 = vld [vmem:[#allocation8 + $0x1ad8] sm:$0xff]
          %v3397 = vld [vmem:[#allocation8 + $0x1ae0] sm:$0xff]
          %v3398 = vld [vmem:[#allocation8 + $0x1ae8] sm:$0xff]
          %v3399 = vld [vmem:[#allocation8 + $0x1af0] sm:$0xff]
          %v3400 = vld [vmem:[#allocation8 + $0x1af8] sm:$0xff]
          %v3401 = vld [vmem:[#allocation8 + $0x1b00] sm:$0xff]
          %v3402 = vld [vmem:[#allocation8 + $0x1b08] sm:$0xff]
          %v3403 = vld [vmem:[#allocation8 + $0x1b10] sm:$0xff]
          %v3404 = vld [vmem:[#allocation8 + $0x1b18] sm:$0xff]
          %v3405 = vld [vmem:[#allocation8 + $0x1b20] sm:$0xff]
          %v3406 = vld [vmem:[#allocation8 + $0x1b28] sm:$0xff]
          %v3407 = vld [vmem:[#allocation8 + $0x1b30] sm:$0xff]
          %v3408 = vld [vmem:[#allocation8 + $0x1b38] sm:$0xff]
          %v3409 = vld [vmem:[#allocation8 + $0x1b40] sm:$0xff]
          %v3410 = vld [vmem:[#allocation8 + $0x1b48] sm:$0xff]
          %v3411 = vld [vmem:[#allocation8 + $0x1b50] sm:$0xff]
          %v3412 = vld [vmem:[#allocation8 + $0x1b58] sm:$0xff]
          %v3413 = vld [vmem:[#allocation8 + $0x1b60] sm:$0xff]
          %v3414 = vld [vmem:[#allocation8 + $0x1b68] sm:$0xff]
          %v3415 = vld [vmem:[#allocation8 + $0x1b70] sm:$0xff]
          %v3416 = vld [vmem:[#allocation8 + $0x1b78] sm:$0xff]
          %v3417 = vld [vmem:[#allocation8 + $0x1b80] sm:$0xff]
          %v3418 = vld [vmem:[#allocation8 + $0x1b88] sm:$0xff]
          %v3419 = vld [vmem:[#allocation8 + $0x1b90] sm:$0xff]
          %v3420 = vld [vmem:[#allocation8 + $0x1b98] sm:$0xff]
          %v3421 = vld [vmem:[#allocation8 + $0x1ba0] sm:$0xff]
          %v3422 = vld [vmem:[#allocation8 + $0x1ba8] sm:$0xff]
          %v3423 = vld [vmem:[#allocation8 + $0x1bb0] sm:$0xff]
          %v3424 = vld [vmem:[#allocation8 + $0x1bb8] sm:$0xff]
          %v3425 = vld [vmem:[#allocation8 + $0x1bc0] sm:$0xff]
          %v3426 = vld [vmem:[#allocation8 + $0x1bc8] sm:$0xff]
          %v3427 = vld [vmem:[#allocation8 + $0x1bd0] sm:$0xff]
          %v3428 = vld [vmem:[#allocation8 + $0x1bd8] sm:$0xff]
          %v3429 = vld [vmem:[#allocation8 + $0x1be0] sm:$0xff]
          %v3430 = vld [vmem:[#allocation8 + $0x1be8] sm:$0xff]
          %v3431 = vld [vmem:[#allocation8 + $0x1bf0] sm:$0xff]
          %v3432 = vld [vmem:[#allocation8 + $0x1bf8] sm:$0xff]
          %v3433 = vld [vmem:[#allocation8 + $0x1c00] sm:$0xff]
          %v3434 = vld [vmem:[#allocation8 + $0x1c08] sm:$0xff]
          %v3435 = vld [vmem:[#allocation8 + $0x1c10] sm:$0xff]
          %v3436 = vld [vmem:[#allocation8 + $0x1c18] sm:$0xff]
          %v3437 = vld [vmem:[#allocation8 + $0x1c20] sm:$0xff]
          %v3438 = vld [vmem:[#allocation8 + $0x1c28] sm:$0xff]
          %v3439 = vld [vmem:[#allocation8 + $0x1c30] sm:$0xff]
          %v3440 = vld [vmem:[#allocation8 + $0x1c38] sm:$0xff]
          %v3441 = vld [vmem:[#allocation8 + $0x1c40] sm:$0xff]
          %v3442 = vld [vmem:[#allocation8 + $0x1c48] sm:$0xff]
          %v3443 = vld [vmem:[#allocation8 + $0x1c50] sm:$0xff]
          %v3444 = vld [vmem:[#allocation8 + $0x1c58] sm:$0xff]
          %v3445 = vld [vmem:[#allocation8 + $0x1c60] sm:$0xff]
          %v3446 = vld [vmem:[#allocation8 + $0x1c68] sm:$0xff]
          %v3447 = vld [vmem:[#allocation8 + $0x1c70] sm:$0xff]
          %v3448 = vld [vmem:[#allocation8 + $0x1c78] sm:$0xff]
          %v3449 = vld [vmem:[#allocation8 + $0x1c80] sm:$0xff]
          %v3450 = vld [vmem:[#allocation8 + $0x1c88] sm:$0xff]
          %v3451 = vld [vmem:[#allocation8 + $0x1c90] sm:$0xff]
          %v3452 = vld [vmem:[#allocation8 + $0x1c98] sm:$0xff]
          %v3453 = vld [vmem:[#allocation8 + $0x1ca0] sm:$0xff]
          %v3454 = vld [vmem:[#allocation8 + $0x1ca8] sm:$0xff]
          %v3455 = vld [vmem:[#allocation8 + $0x1cb0] sm:$0xff]
          %v3456 = vld [vmem:[#allocation8 + $0x1cb8] sm:$0xff]
          %v3457 = vld [vmem:[#allocation8 + $0x1cc0] sm:$0xff]
          %v3458 = vld [vmem:[#allocation8 + $0x1cc8] sm:$0xff]
          %v3459 = vld [vmem:[#allocation8 + $0x1cd0] sm:$0xff]
          %v3460 = vld [vmem:[#allocation8 + $0x1cd8] sm:$0xff]
          %v3461 = vld [vmem:[#allocation8 + $0x1ce0] sm:$0xff]
          %v3462 = vld [vmem:[#allocation8 + $0x1ce8] sm:$0xff]
          %v3463 = vld [vmem:[#allocation8 + $0x1cf0] sm:$0xff]
          %v3464 = vld [vmem:[#allocation8 + $0x1cf8] sm:$0xff]
          %v3465 = vld [vmem:[#allocation8 + $0x1d00] sm:$0xff]
          %v3466 = vld [vmem:[#allocation8 + $0x1d08] sm:$0xff]
          %v3467 = vld [vmem:[#allocation8 + $0x1d10] sm:$0xff]
          %v3468 = vld [vmem:[#allocation8 + $0x1d18] sm:$0xff]
          %v3469 = vld [vmem:[#allocation8 + $0x1d20] sm:$0xff]
          %v3470 = vld [vmem:[#allocation8 + $0x1d28] sm:$0xff]
          %v3471 = vld [vmem:[#allocation8 + $0x1d30] sm:$0xff]
          %v3472 = vld [vmem:[#allocation8 + $0x1d38] sm:$0xff]
          %v3473 = vld [vmem:[#allocation8 + $0x1d40] sm:$0xff]
          %v3474 = vld [vmem:[#allocation8 + $0x1d48] sm:$0xff]
          %v3475 = vld [vmem:[#allocation8 + $0x1d50] sm:$0xff]
          %v3476 = vld [vmem:[#allocation8 + $0x1d58] sm:$0xff]
          %v3477 = vld [vmem:[#allocation8 + $0x1d60] sm:$0xff]
          %v3478 = vld [vmem:[#allocation8 + $0x1d68] sm:$0xff]
          %v3479 = vld [vmem:[#allocation8 + $0x1d70] sm:$0xff]
          %v3480 = vld [vmem:[#allocation8 + $0x1d78] sm:$0xff]
          %v3481 = vld [vmem:[#allocation8 + $0x1d80] sm:$0xff]
          %v3482 = vld [vmem:[#allocation8 + $0x1d88] sm:$0xff]
          %v3483 = vld [vmem:[#allocation8 + $0x1d90] sm:$0xff]
          %v3484 = vld [vmem:[#allocation8 + $0x1d98] sm:$0xff]
          %v3485 = vld [vmem:[#allocation8 + $0x1da0] sm:$0xff]
          %v3486 = vld [vmem:[#allocation8 + $0x1da8] sm:$0xff]
          %v3487 = vld [vmem:[#allocation8 + $0x1db0] sm:$0xff]
          %v3488 = vld [vmem:[#allocation8 + $0x1db8] sm:$0xff]
          %v3489 = vld [vmem:[#allocation8 + $0x1dc0] sm:$0xff]
          %v3490 = vld [vmem:[#allocation8 + $0x1dc8] sm:$0xff]
          %v3491 = vld [vmem:[#allocation8 + $0x1dd0] sm:$0xff]
          %v3492 = vld [vmem:[#allocation8 + $0x1dd8] sm:$0xff]
          %v3493 = vld [vmem:[#allocation8 + $0x1de0] sm:$0xff]
          %v3494 = vld [vmem:[#allocation8 + $0x1de8] sm:$0xff]
          %v3495 = vld [vmem:[#allocation8 + $0x1df0] sm:$0xff]
          %v3496 = vld [vmem:[#allocation8 + $0x1df8] sm:$0xff]
          %v4457 = vunpack.c.l.b16 %v2537
          %v4458 = vunpack.c.h.b16 %v2537
          %v4459 = vunpack.c.l.b16 %v2538
          %v4460 = vunpack.c.h.b16 %v2538
          %v4461 = vunpack.c.l.b16 %v2539
          %v4462 = vunpack.c.h.b16 %v2539
          %v4463 = vunpack.c.l.b16 %v2540
          %v4464 = vunpack.c.h.b16 %v2540
          %v4465 = vunpack.c.l.b16 %v2541
          %v4466 = vunpack.c.h.b16 %v2541
          %v4467 = vunpack.c.l.b16 %v2542
          %v4468 = vunpack.c.h.b16 %v2542
          %v4469 = vunpack.c.l.b16 %v2543
          %v4470 = vunpack.c.h.b16 %v2543
          %v4471 = vunpack.c.l.b16 %v2544
          %v4472 = vunpack.c.h.b16 %v2544
          %v4473 = vunpack.c.l.b16 %v2545
          %v4474 = vunpack.c.h.b16 %v2545
          %v4475 = vunpack.c.l.b16 %v2546
          %v4476 = vunpack.c.h.b16 %v2546
          %v4477 = vunpack.c.l.b16 %v2547
          %v4478 = vunpack.c.h.b16 %v2547
          %v4479 = vunpack.c.l.b16 %v2548
          %v4480 = vunpack.c.h.b16 %v2548
          %v4481 = vunpack.c.l.b16 %v2549
          %v4482 = vunpack.c.h.b16 %v2549
          %v4483 = vunpack.c.l.b16 %v2550
          %v4484 = vunpack.c.h.b16 %v2550
          %v4485 = vunpack.c.l.b16 %v2551
          %v4486 = vunpack.c.h.b16 %v2551
          %v4487 = vunpack.c.l.b16 %v2552
          %v4488 = vunpack.c.h.b16 %v2552
          %v4489 = vunpack.c.l.b16 %v2553
          %v4490 = vunpack.c.h.b16 %v2553
          %v4491 = vunpack.c.l.b16 %v2554
          %v4492 = vunpack.c.h.b16 %v2554
          %v4493 = vunpack.c.l.b16 %v2555
          %v4494 = vunpack.c.h.b16 %v2555
          %v4495 = vunpack.c.l.b16 %v2556
          %v4496 = vunpack.c.h.b16 %v2556
          %v4497 = vunpack.c.l.b16 %v2557
          %v4498 = vunpack.c.h.b16 %v2557
          %v4499 = vunpack.c.l.b16 %v2558
          %v4500 = vunpack.c.h.b16 %v2558
          %v4501 = vunpack.c.l.b16 %v2559
          %v4502 = vunpack.c.h.b16 %v2559
          %v4503 = vunpack.c.l.b16 %v2560
          %v4504 = vunpack.c.h.b16 %v2560
          %v4505 = vunpack.c.l.b16 %v2561
          %v4506 = vunpack.c.h.b16 %v2561
          %v4507 = vunpack.c.l.b16 %v2562
          %v4508 = vunpack.c.h.b16 %v2562
          %v4509 = vunpack.c.l.b16 %v2563
          %v4510 = vunpack.c.h.b16 %v2563
          %v4511 = vunpack.c.l.b16 %v2564
          %v4512 = vunpack.c.h.b16 %v2564
          %v4513 = vunpack.c.l.b16 %v2565
          %v4514 = vunpack.c.h.b16 %v2565
          %v4515 = vunpack.c.l.b16 %v2566
          %v4516 = vunpack.c.h.b16 %v2566
          %v4517 = vunpack.c.l.b16 %v2567
          %v4518 = vunpack.c.h.b16 %v2567
          %v4519 = vunpack.c.l.b16 %v2568
          %v4520 = vunpack.c.h.b16 %v2568
          %v4521 = vunpack.c.l.b16 %v2569
          %v4522 = vunpack.c.h.b16 %v2569
          %v4523 = vunpack.c.l.b16 %v2570
          %v4524 = vunpack.c.h.b16 %v2570
          %v4525 = vunpack.c.l.b16 %v2571
          %v4526 = vunpack.c.h.b16 %v2571
          %v4527 = vunpack.c.l.b16 %v2572
          %v4528 = vunpack.c.h.b16 %v2572
          %v4529 = vunpack.c.l.b16 %v2573
          %v4530 = vunpack.c.h.b16 %v2573
          %v4531 = vunpack.c.l.b16 %v2574
          %v4532 = vunpack.c.h.b16 %v2574
          %v4533 = vunpack.c.l.b16 %v2575
          %v4534 = vunpack.c.h.b16 %v2575
          %v4535 = vunpack.c.l.b16 %v2576
          %v4536 = vunpack.c.h.b16 %v2576
          %v4537 = vunpack.c.l.b16 %v2577
          %v4538 = vunpack.c.h.b16 %v2577
          %v4539 = vunpack.c.l.b16 %v2578
          %v4540 = vunpack.c.h.b16 %v2578
          %v4541 = vunpack.c.l.b16 %v2579
          %v4542 = vunpack.c.h.b16 %v2579
          %v4543 = vunpack.c.l.b16 %v2580
          %v4544 = vunpack.c.h.b16 %v2580
          %v4545 = vunpack.c.l.b16 %v2581
          %v4546 = vunpack.c.h.b16 %v2581
          %v4547 = vunpack.c.l.b16 %v2582
          %v4548 = vunpack.c.h.b16 %v2582
          %v4549 = vunpack.c.l.b16 %v2583
          %v4550 = vunpack.c.h.b16 %v2583
          %v4551 = vunpack.c.l.b16 %v2584
          %v4552 = vunpack.c.h.b16 %v2584
          %v4553 = vunpack.c.l.b16 %v2585
          %v4554 = vunpack.c.h.b16 %v2585
          %v4555 = vunpack.c.l.b16 %v2586
          %v4556 = vunpack.c.h.b16 %v2586
          %v4557 = vunpack.c.l.b16 %v2587
          %v4558 = vunpack.c.h.b16 %v2587
          %v4559 = vunpack.c.l.b16 %v2588
          %v4560 = vunpack.c.h.b16 %v2588
          %v4561 = vunpack.c.l.b16 %v2589
          %v4562 = vunpack.c.h.b16 %v2589
          %v4563 = vunpack.c.l.b16 %v2590
          %v4564 = vunpack.c.h.b16 %v2590
          %v4565 = vunpack.c.l.b16 %v2591
          %v4566 = vunpack.c.h.b16 %v2591
          %v4567 = vunpack.c.l.b16 %v2592
          %v4568 = vunpack.c.h.b16 %v2592
          %v4569 = vunpack.c.l.b16 %v2593
          %v4570 = vunpack.c.h.b16 %v2593
          %v4571 = vunpack.c.l.b16 %v2594
          %v4572 = vunpack.c.h.b16 %v2594
          %v4573 = vunpack.c.l.b16 %v2595
          %v4574 = vunpack.c.h.b16 %v2595
          %v4575 = vunpack.c.l.b16 %v2596
          %v4576 = vunpack.c.h.b16 %v2596
          %v4577 = vunpack.c.l.b16 %v2597
          %v4578 = vunpack.c.h.b16 %v2597
          %v4579 = vunpack.c.l.b16 %v2598
          %v4580 = vunpack.c.h.b16 %v2598
          %v4581 = vunpack.c.l.b16 %v2599
          %v4582 = vunpack.c.h.b16 %v2599
          %v4583 = vunpack.c.l.b16 %v2600
          %v4584 = vunpack.c.h.b16 %v2600
          %v4585 = vunpack.c.l.b16 %v2601
          %v4586 = vunpack.c.h.b16 %v2601
          %v4587 = vunpack.c.l.b16 %v2602
          %v4588 = vunpack.c.h.b16 %v2602
          %v4589 = vunpack.c.l.b16 %v2603
          %v4590 = vunpack.c.h.b16 %v2603
          %v4591 = vunpack.c.l.b16 %v2604
          %v4592 = vunpack.c.h.b16 %v2604
          %v4593 = vunpack.c.l.b16 %v2605
          %v4594 = vunpack.c.h.b16 %v2605
          %v4595 = vunpack.c.l.b16 %v2606
          %v4596 = vunpack.c.h.b16 %v2606
          %v4597 = vunpack.c.l.b16 %v2607
          %v4598 = vunpack.c.h.b16 %v2607
          %v4599 = vunpack.c.l.b16 %v2608
          %v4600 = vunpack.c.h.b16 %v2608
          %v4601 = vunpack.c.l.b16 %v2609
          %v4602 = vunpack.c.h.b16 %v2609
          %v4603 = vunpack.c.l.b16 %v2610
          %v4604 = vunpack.c.h.b16 %v2610
          %v4605 = vunpack.c.l.b16 %v2611
          %v4606 = vunpack.c.h.b16 %v2611
          %v4607 = vunpack.c.l.b16 %v2612
          %v4608 = vunpack.c.h.b16 %v2612
          %v4609 = vunpack.c.l.b16 %v2613
          %v4610 = vunpack.c.h.b16 %v2613
          %v4611 = vunpack.c.l.b16 %v2614
          %v4612 = vunpack.c.h.b16 %v2614
          %v4613 = vunpack.c.l.b16 %v2615
          %v4614 = vunpack.c.h.b16 %v2615
          %v4615 = vunpack.c.l.b16 %v2616
          %v4616 = vunpack.c.h.b16 %v2616
          %v4617 = vunpack.c.l.b16 %v2617
          %v4618 = vunpack.c.h.b16 %v2617
          %v4619 = vunpack.c.l.b16 %v2618
          %v4620 = vunpack.c.h.b16 %v2618
          %v4621 = vunpack.c.l.b16 %v2619
          %v4622 = vunpack.c.h.b16 %v2619
          %v4623 = vunpack.c.l.b16 %v2620
          %v4624 = vunpack.c.h.b16 %v2620
          %v4625 = vunpack.c.l.b16 %v2621
          %v4626 = vunpack.c.h.b16 %v2621
          %v4627 = vunpack.c.l.b16 %v2622
          %v4628 = vunpack.c.h.b16 %v2622
          %v4629 = vunpack.c.l.b16 %v2623
          %v4630 = vunpack.c.h.b16 %v2623
          %v4631 = vunpack.c.l.b16 %v2624
          %v4632 = vunpack.c.h.b16 %v2624
          %v4633 = vunpack.c.l.b16 %v2625
          %v4634 = vunpack.c.h.b16 %v2625
          %v4635 = vunpack.c.l.b16 %v2626
          %v4636 = vunpack.c.h.b16 %v2626
          %v4637 = vunpack.c.l.b16 %v2627
          %v4638 = vunpack.c.h.b16 %v2627
          %v4639 = vunpack.c.l.b16 %v2628
          %v4640 = vunpack.c.h.b16 %v2628
          %v4641 = vunpack.c.l.b16 %v2629
          %v4642 = vunpack.c.h.b16 %v2629
          %v4643 = vunpack.c.l.b16 %v2630
          %v4644 = vunpack.c.h.b16 %v2630
          %v4645 = vunpack.c.l.b16 %v2631
          %v4646 = vunpack.c.h.b16 %v2631
          %v4647 = vunpack.c.l.b16 %v2632
          %v4648 = vunpack.c.h.b16 %v2632
          %v4649 = vunpack.c.l.b16 %v2633
          %v4650 = vunpack.c.h.b16 %v2633
          %v4651 = vunpack.c.l.b16 %v2634
          %v4652 = vunpack.c.h.b16 %v2634
          %v4653 = vunpack.c.l.b16 %v2635
          %v4654 = vunpack.c.h.b16 %v2635
          %v4655 = vunpack.c.l.b16 %v2636
          %v4656 = vunpack.c.h.b16 %v2636
          %v4657 = vunpack.c.l.b16 %v2637
          %v4658 = vunpack.c.h.b16 %v2637
          %v4659 = vunpack.c.l.b16 %v2638
          %v4660 = vunpack.c.h.b16 %v2638
          %v4661 = vunpack.c.l.b16 %v2639
          %v4662 = vunpack.c.h.b16 %v2639
          %v4663 = vunpack.c.l.b16 %v2640
          %v4664 = vunpack.c.h.b16 %v2640
          %v4665 = vunpack.c.l.b16 %v2641
          %v4666 = vunpack.c.h.b16 %v2641
          %v4667 = vunpack.c.l.b16 %v2642
          %v4668 = vunpack.c.h.b16 %v2642
          %v4669 = vunpack.c.l.b16 %v2643
          %v4670 = vunpack.c.h.b16 %v2643
          %v4671 = vunpack.c.l.b16 %v2644
          %v4672 = vunpack.c.h.b16 %v2644
          %v4673 = vunpack.c.l.b16 %v2645
          %v4674 = vunpack.c.h.b16 %v2645
          %v4675 = vunpack.c.l.b16 %v2646
          %v4676 = vunpack.c.h.b16 %v2646
          %v4677 = vunpack.c.l.b16 %v2647
          %v4678 = vunpack.c.h.b16 %v2647
          %v4679 = vunpack.c.l.b16 %v2648
          %v4680 = vunpack.c.h.b16 %v2648
          %v4681 = vunpack.c.l.b16 %v2649
          %v4682 = vunpack.c.h.b16 %v2649
          %v4683 = vunpack.c.l.b16 %v2650
          %v4684 = vunpack.c.h.b16 %v2650
          %v4685 = vunpack.c.l.b16 %v2651
          %v4686 = vunpack.c.h.b16 %v2651
          %v4687 = vunpack.c.l.b16 %v2652
          %v4688 = vunpack.c.h.b16 %v2652
          %v4689 = vunpack.c.l.b16 %v2653
          %v4690 = vunpack.c.h.b16 %v2653
          %v4691 = vunpack.c.l.b16 %v2654
          %v4692 = vunpack.c.h.b16 %v2654
          %v4693 = vunpack.c.l.b16 %v2655
          %v4694 = vunpack.c.h.b16 %v2655
          %v4695 = vunpack.c.l.b16 %v2656
          %v4696 = vunpack.c.h.b16 %v2656
          %v4697 = vunpack.c.l.b16 %v2657
          %v4698 = vunpack.c.h.b16 %v2657
          %v4699 = vunpack.c.l.b16 %v2658
          %v4700 = vunpack.c.h.b16 %v2658
          %v4701 = vunpack.c.l.b16 %v2659
          %v4702 = vunpack.c.h.b16 %v2659
          %v4703 = vunpack.c.l.b16 %v2660
          %v4704 = vunpack.c.h.b16 %v2660
          %v4705 = vunpack.c.l.b16 %v2661
          %v4706 = vunpack.c.h.b16 %v2661
          %v4707 = vunpack.c.l.b16 %v2662
          %v4708 = vunpack.c.h.b16 %v2662
          %v4709 = vunpack.c.l.b16 %v2663
          %v4710 = vunpack.c.h.b16 %v2663
          %v4711 = vunpack.c.l.b16 %v2664
          %v4712 = vunpack.c.h.b16 %v2664
          %v4713 = vunpack.c.l.b16 %v2665
          %v4714 = vunpack.c.h.b16 %v2665
          %v4715 = vunpack.c.l.b16 %v2666
          %v4716 = vunpack.c.h.b16 %v2666
          %v4717 = vunpack.c.l.b16 %v2667
          %v4718 = vunpack.c.h.b16 %v2667
          %v4719 = vunpack.c.l.b16 %v2668
          %v4720 = vunpack.c.h.b16 %v2668
          %v4721 = vunpack.c.l.b16 %v2669
          %v4722 = vunpack.c.h.b16 %v2669
          %v4723 = vunpack.c.l.b16 %v2670
          %v4724 = vunpack.c.h.b16 %v2670
          %v4725 = vunpack.c.l.b16 %v2671
          %v4726 = vunpack.c.h.b16 %v2671
          %v4727 = vunpack.c.l.b16 %v2672
          %v4728 = vunpack.c.h.b16 %v2672
          %v4729 = vunpack.c.l.b16 %v2673
          %v4730 = vunpack.c.h.b16 %v2673
          %v4731 = vunpack.c.l.b16 %v2674
          %v4732 = vunpack.c.h.b16 %v2674
          %v4733 = vunpack.c.l.b16 %v2675
          %v4734 = vunpack.c.h.b16 %v2675
          %v4735 = vunpack.c.l.b16 %v2676
          %v4736 = vunpack.c.h.b16 %v2676
          %v4737 = vunpack.c.l.b16 %v2677
          %v4738 = vunpack.c.h.b16 %v2677
          %v4739 = vunpack.c.l.b16 %v2678
          %v4740 = vunpack.c.h.b16 %v2678
          %v4741 = vunpack.c.l.b16 %v2679
          %v4742 = vunpack.c.h.b16 %v2679
          %v4743 = vunpack.c.l.b16 %v2680
          %v4744 = vunpack.c.h.b16 %v2680
          %v4745 = vunpack.c.l.b16 %v2681
          %v4746 = vunpack.c.h.b16 %v2681
          %v4747 = vunpack.c.l.b16 %v2682
          %v4748 = vunpack.c.h.b16 %v2682
          %v4749 = vunpack.c.l.b16 %v2683
          %v4750 = vunpack.c.h.b16 %v2683
          %v4751 = vunpack.c.l.b16 %v2684
          %v4752 = vunpack.c.h.b16 %v2684
          %v4753 = vunpack.c.l.b16 %v2685
          %v4754 = vunpack.c.h.b16 %v2685
          %v4755 = vunpack.c.l.b16 %v2686
          %v4756 = vunpack.c.h.b16 %v2686
          %v4757 = vunpack.c.l.b16 %v2687
          %v4758 = vunpack.c.h.b16 %v2687
          %v4759 = vunpack.c.l.b16 %v2688
          %v4760 = vunpack.c.h.b16 %v2688
          %v4761 = vunpack.c.l.b16 %v2689
          %v4762 = vunpack.c.h.b16 %v2689
          %v4763 = vunpack.c.l.b16 %v2690
          %v4764 = vunpack.c.h.b16 %v2690
          %v4765 = vunpack.c.l.b16 %v2691
          %v4766 = vunpack.c.h.b16 %v2691
          %v4767 = vunpack.c.l.b16 %v2692
          %v4768 = vunpack.c.h.b16 %v2692
          %v4769 = vunpack.c.l.b16 %v2693
          %v4770 = vunpack.c.h.b16 %v2693
          %v4771 = vunpack.c.l.b16 %v2694
          %v4772 = vunpack.c.h.b16 %v2694
          %v4773 = vunpack.c.l.b16 %v2695
          %v4774 = vunpack.c.h.b16 %v2695
          %v4775 = vunpack.c.l.b16 %v2696
          %v4776 = vunpack.c.h.b16 %v2696
          %v4777 = vunpack.c.l.b16 %v2697
          %v4778 = vunpack.c.h.b16 %v2697
          %v4779 = vunpack.c.l.b16 %v2698
          %v4780 = vunpack.c.h.b16 %v2698
          %v4781 = vunpack.c.l.b16 %v2699
          %v4782 = vunpack.c.h.b16 %v2699
          %v4783 = vunpack.c.l.b16 %v2700
          %v4784 = vunpack.c.h.b16 %v2700
          %v4785 = vunpack.c.l.b16 %v2701
          %v4786 = vunpack.c.h.b16 %v2701
          %v4787 = vunpack.c.l.b16 %v2702
          %v4788 = vunpack.c.h.b16 %v2702
          %v4789 = vunpack.c.l.b16 %v2703
          %v4790 = vunpack.c.h.b16 %v2703
          %v4791 = vunpack.c.l.b16 %v2704
          %v4792 = vunpack.c.h.b16 %v2704
          %v4793 = vunpack.c.l.b16 %v2705
          %v4794 = vunpack.c.h.b16 %v2705
          %v4795 = vunpack.c.l.b16 %v2706
          %v4796 = vunpack.c.h.b16 %v2706
          %v4797 = vunpack.c.l.b16 %v2707
          %v4798 = vunpack.c.h.b16 %v2707
          %v4799 = vunpack.c.l.b16 %v2708
          %v4800 = vunpack.c.h.b16 %v2708
          %v4801 = vunpack.c.l.b16 %v2709
          %v4802 = vunpack.c.h.b16 %v2709
          %v4803 = vunpack.c.l.b16 %v2710
          %v4804 = vunpack.c.h.b16 %v2710
          %v4805 = vunpack.c.l.b16 %v2711
          %v4806 = vunpack.c.h.b16 %v2711
          %v4807 = vunpack.c.l.b16 %v2712
          %v4808 = vunpack.c.h.b16 %v2712
          %v4809 = vunpack.c.l.b16 %v2713
          %v4810 = vunpack.c.h.b16 %v2713
          %v4811 = vunpack.c.l.b16 %v2714
          %v4812 = vunpack.c.h.b16 %v2714
          %v4813 = vunpack.c.l.b16 %v2715
          %v4814 = vunpack.c.h.b16 %v2715
          %v4815 = vunpack.c.l.b16 %v2716
          %v4816 = vunpack.c.h.b16 %v2716
          %v4817 = vunpack.c.l.b16 %v2717
          %v4818 = vunpack.c.h.b16 %v2717
          %v4819 = vunpack.c.l.b16 %v2718
          %v4820 = vunpack.c.h.b16 %v2718
          %v4821 = vunpack.c.l.b16 %v2719
          %v4822 = vunpack.c.h.b16 %v2719
          %v4823 = vunpack.c.l.b16 %v2720
          %v4824 = vunpack.c.h.b16 %v2720
          %v4825 = vunpack.c.l.b16 %v2721
          %v4826 = vunpack.c.h.b16 %v2721
          %v4827 = vunpack.c.l.b16 %v2722
          %v4828 = vunpack.c.h.b16 %v2722
          %v4829 = vunpack.c.l.b16 %v2723
          %v4830 = vunpack.c.h.b16 %v2723
          %v4831 = vunpack.c.l.b16 %v2724
          %v4832 = vunpack.c.h.b16 %v2724
          %v4833 = vunpack.c.l.b16 %v2725
          %v4834 = vunpack.c.h.b16 %v2725
          %v4835 = vunpack.c.l.b16 %v2726
          %v4836 = vunpack.c.h.b16 %v2726
          %v4837 = vunpack.c.l.b16 %v2727
          %v4838 = vunpack.c.h.b16 %v2727
          %v4839 = vunpack.c.l.b16 %v2728
          %v4840 = vunpack.c.h.b16 %v2728
          %v4841 = vunpack.c.l.b16 %v2729
          %v4842 = vunpack.c.h.b16 %v2729
          %v4843 = vunpack.c.l.b16 %v2730
          %v4844 = vunpack.c.h.b16 %v2730
          %v4845 = vunpack.c.l.b16 %v2731
          %v4846 = vunpack.c.h.b16 %v2731
          %v4847 = vunpack.c.l.b16 %v2732
          %v4848 = vunpack.c.h.b16 %v2732
          %v4849 = vunpack.c.l.b16 %v2733
          %v4850 = vunpack.c.h.b16 %v2733
          %v4851 = vunpack.c.l.b16 %v2734
          %v4852 = vunpack.c.h.b16 %v2734
          %v4853 = vunpack.c.l.b16 %v2735
          %v4854 = vunpack.c.h.b16 %v2735
          %v4855 = vunpack.c.l.b16 %v2736
          %v4856 = vunpack.c.h.b16 %v2736
          %v4857 = vunpack.c.l.b16 %v2737
          %v4858 = vunpack.c.h.b16 %v2737
          %v4859 = vunpack.c.l.b16 %v2738
          %v4860 = vunpack.c.h.b16 %v2738
          %v4861 = vunpack.c.l.b16 %v2739
          %v4862 = vunpack.c.h.b16 %v2739
          %v4863 = vunpack.c.l.b16 %v2740
          %v4864 = vunpack.c.h.b16 %v2740
          %v4865 = vunpack.c.l.b16 %v2741
          %v4866 = vunpack.c.h.b16 %v2741
          %v4867 = vunpack.c.l.b16 %v2742
          %v4868 = vunpack.c.h.b16 %v2742
          %v4869 = vunpack.c.l.b16 %v2743
          %v4870 = vunpack.c.h.b16 %v2743
          %v4871 = vunpack.c.l.b16 %v2744
          %v4872 = vunpack.c.h.b16 %v2744
          %v4873 = vunpack.c.l.b16 %v2745
          %v4874 = vunpack.c.h.b16 %v2745
          %v4875 = vunpack.c.l.b16 %v2746
          %v4876 = vunpack.c.h.b16 %v2746
          %v4877 = vunpack.c.l.b16 %v2747
          %v4878 = vunpack.c.h.b16 %v2747
          %v4879 = vunpack.c.l.b16 %v2748
          %v4880 = vunpack.c.h.b16 %v2748
          %v4881 = vunpack.c.l.b16 %v2749
          %v4882 = vunpack.c.h.b16 %v2749
          %v4883 = vunpack.c.l.b16 %v2750
          %v4884 = vunpack.c.h.b16 %v2750
          %v4885 = vunpack.c.l.b16 %v2751
          %v4886 = vunpack.c.h.b16 %v2751
          %v4887 = vunpack.c.l.b16 %v2752
          %v4888 = vunpack.c.h.b16 %v2752
          %v4889 = vunpack.c.l.b16 %v2753
          %v4890 = vunpack.c.h.b16 %v2753
          %v4891 = vunpack.c.l.b16 %v2754
          %v4892 = vunpack.c.h.b16 %v2754
          %v4893 = vunpack.c.l.b16 %v2755
          %v4894 = vunpack.c.h.b16 %v2755
          %v4895 = vunpack.c.l.b16 %v2756
          %v4896 = vunpack.c.h.b16 %v2756
          %v4897 = vunpack.c.l.b16 %v2757
          %v4898 = vunpack.c.h.b16 %v2757
          %v4899 = vunpack.c.l.b16 %v2758
          %v4900 = vunpack.c.h.b16 %v2758
          %v4901 = vunpack.c.l.b16 %v2759
          %v4902 = vunpack.c.h.b16 %v2759
          %v4903 = vunpack.c.l.b16 %v2760
          %v4904 = vunpack.c.h.b16 %v2760
          %v4905 = vunpack.c.l.b16 %v2761
          %v4906 = vunpack.c.h.b16 %v2761
          %v4907 = vunpack.c.l.b16 %v2762
          %v4908 = vunpack.c.h.b16 %v2762
          %v4909 = vunpack.c.l.b16 %v2763
          %v4910 = vunpack.c.h.b16 %v2763
          %v4911 = vunpack.c.l.b16 %v2764
          %v4912 = vunpack.c.h.b16 %v2764
          %v4913 = vunpack.c.l.b16 %v2765
          %v4914 = vunpack.c.h.b16 %v2765
          %v4915 = vunpack.c.l.b16 %v2766
          %v4916 = vunpack.c.h.b16 %v2766
          %v4917 = vunpack.c.l.b16 %v2767
          %v4918 = vunpack.c.h.b16 %v2767
          %v4919 = vunpack.c.l.b16 %v2768
          %v4920 = vunpack.c.h.b16 %v2768
          %v4921 = vunpack.c.l.b16 %v2769
          %v4922 = vunpack.c.h.b16 %v2769
          %v4923 = vunpack.c.l.b16 %v2770
          %v4924 = vunpack.c.h.b16 %v2770
          %v4925 = vunpack.c.l.b16 %v2771
          %v4926 = vunpack.c.h.b16 %v2771
          %v4927 = vunpack.c.l.b16 %v2772
          %v4928 = vunpack.c.h.b16 %v2772
          %v4929 = vunpack.c.l.b16 %v2773
          %v4930 = vunpack.c.h.b16 %v2773
          %v4931 = vunpack.c.l.b16 %v2774
          %v4932 = vunpack.c.h.b16 %v2774
          %v4933 = vunpack.c.l.b16 %v2775
          %v4934 = vunpack.c.h.b16 %v2775
          %v4935 = vunpack.c.l.b16 %v2776
          %v4936 = vunpack.c.h.b16 %v2776
          %v4937 = vunpack.c.l.b16 %v2777
          %v4938 = vunpack.c.h.b16 %v2777
          %v4939 = vunpack.c.l.b16 %v2778
          %v4940 = vunpack.c.h.b16 %v2778
          %v4941 = vunpack.c.l.b16 %v2779
          %v4942 = vunpack.c.h.b16 %v2779
          %v4943 = vunpack.c.l.b16 %v2780
          %v4944 = vunpack.c.h.b16 %v2780
          %v4945 = vunpack.c.l.b16 %v2781
          %v4946 = vunpack.c.h.b16 %v2781
          %v4947 = vunpack.c.l.b16 %v2782
          %v4948 = vunpack.c.h.b16 %v2782
          %v4949 = vunpack.c.l.b16 %v2783
          %v4950 = vunpack.c.h.b16 %v2783
          %v4951 = vunpack.c.l.b16 %v2784
          %v4952 = vunpack.c.h.b16 %v2784
          %v4953 = vunpack.c.l.b16 %v2785
          %v4954 = vunpack.c.h.b16 %v2785
          %v4955 = vunpack.c.l.b16 %v2786
          %v4956 = vunpack.c.h.b16 %v2786
          %v4957 = vunpack.c.l.b16 %v2787
          %v4958 = vunpack.c.h.b16 %v2787
          %v4959 = vunpack.c.l.b16 %v2788
          %v4960 = vunpack.c.h.b16 %v2788
          %v4961 = vunpack.c.l.b16 %v2789
          %v4962 = vunpack.c.h.b16 %v2789
          %v4963 = vunpack.c.l.b16 %v2790
          %v4964 = vunpack.c.h.b16 %v2790
          %v4965 = vunpack.c.l.b16 %v2791
          %v4966 = vunpack.c.h.b16 %v2791
          %v4967 = vunpack.c.l.b16 %v2792
          %v4968 = vunpack.c.h.b16 %v2792
          %v4969 = vunpack.c.l.b16 %v2793
          %v4970 = vunpack.c.h.b16 %v2793
          %v4971 = vunpack.c.l.b16 %v2794
          %v4972 = vunpack.c.h.b16 %v2794
          %v4973 = vunpack.c.l.b16 %v2795
          %v4974 = vunpack.c.h.b16 %v2795
          %v4975 = vunpack.c.l.b16 %v2796
          %v4976 = vunpack.c.h.b16 %v2796
          %v4977 = vunpack.c.l.b16 %v2797
          %v4978 = vunpack.c.h.b16 %v2797
          %v4979 = vunpack.c.l.b16 %v2798
          %v4980 = vunpack.c.h.b16 %v2798
          %v4981 = vunpack.c.l.b16 %v2799
          %v4982 = vunpack.c.h.b16 %v2799
          %v4983 = vunpack.c.l.b16 %v2800
          %v4984 = vunpack.c.h.b16 %v2800
          %v4985 = vunpack.c.l.b16 %v2801
          %v4986 = vunpack.c.h.b16 %v2801
          %v4987 = vunpack.c.l.b16 %v2802
          %v4988 = vunpack.c.h.b16 %v2802
          %v4989 = vunpack.c.l.b16 %v2803
          %v4990 = vunpack.c.h.b16 %v2803
          %v4991 = vunpack.c.l.b16 %v2804
          %v4992 = vunpack.c.h.b16 %v2804
          %v4993 = vunpack.c.l.b16 %v2805
          %v4994 = vunpack.c.h.b16 %v2805
          %v4995 = vunpack.c.l.b16 %v2806
          %v4996 = vunpack.c.h.b16 %v2806
          %v4997 = vunpack.c.l.b16 %v2807
          %v4998 = vunpack.c.h.b16 %v2807
          %v4999 = vunpack.c.l.b16 %v2808
          %v5000 = vunpack.c.h.b16 %v2808
          %v5001 = vunpack.c.l.b16 %v2809
          %v5002 = vunpack.c.h.b16 %v2809
          %v5003 = vunpack.c.l.b16 %v2810
          %v5004 = vunpack.c.h.b16 %v2810
          %v5005 = vunpack.c.l.b16 %v2811
          %v5006 = vunpack.c.h.b16 %v2811
          %v5007 = vunpack.c.l.b16 %v2812
          %v5008 = vunpack.c.h.b16 %v2812
          %v5009 = vunpack.c.l.b16 %v2813
          %v5010 = vunpack.c.h.b16 %v2813
          %v5011 = vunpack.c.l.b16 %v2814
          %v5012 = vunpack.c.h.b16 %v2814
          %v5013 = vunpack.c.l.b16 %v2815
          %v5014 = vunpack.c.h.b16 %v2815
          %v5015 = vunpack.c.l.b16 %v2816
          %v5016 = vunpack.c.h.b16 %v2816
          %v5017 = vunpack.c.l.b16 %v2817
          %v5018 = vunpack.c.h.b16 %v2817
          %v5019 = vunpack.c.l.b16 %v2818
          %v5020 = vunpack.c.h.b16 %v2818
          %v5021 = vunpack.c.l.b16 %v2819
          %v5022 = vunpack.c.h.b16 %v2819
          %v5023 = vunpack.c.l.b16 %v2820
          %v5024 = vunpack.c.h.b16 %v2820
          %v5025 = vunpack.c.l.b16 %v2821
          %v5026 = vunpack.c.h.b16 %v2821
          %v5027 = vunpack.c.l.b16 %v2822
          %v5028 = vunpack.c.h.b16 %v2822
          %v5029 = vunpack.c.l.b16 %v2823
          %v5030 = vunpack.c.h.b16 %v2823
          %v5031 = vunpack.c.l.b16 %v2824
          %v5032 = vunpack.c.h.b16 %v2824
          %v5033 = vunpack.c.l.b16 %v2825
          %v5034 = vunpack.c.h.b16 %v2825
          %v5035 = vunpack.c.l.b16 %v2826
          %v5036 = vunpack.c.h.b16 %v2826
          %v5037 = vunpack.c.l.b16 %v2827
          %v5038 = vunpack.c.h.b16 %v2827
          %v5039 = vunpack.c.l.b16 %v2828
          %v5040 = vunpack.c.h.b16 %v2828
          %v5041 = vunpack.c.l.b16 %v2829
          %v5042 = vunpack.c.h.b16 %v2829
          %v5043 = vunpack.c.l.b16 %v2830
          %v5044 = vunpack.c.h.b16 %v2830
          %v5045 = vunpack.c.l.b16 %v2831
          %v5046 = vunpack.c.h.b16 %v2831
          %v5047 = vunpack.c.l.b16 %v2832
          %v5048 = vunpack.c.h.b16 %v2832
          %v5049 = vunpack.c.l.b16 %v2833
          %v5050 = vunpack.c.h.b16 %v2833
          %v5051 = vunpack.c.l.b16 %v2834
          %v5052 = vunpack.c.h.b16 %v2834
          %v5053 = vunpack.c.l.b16 %v2835
          %v5054 = vunpack.c.h.b16 %v2835
          %v5055 = vunpack.c.l.b16 %v2836
          %v5056 = vunpack.c.h.b16 %v2836
          %v5057 = vunpack.c.l.b16 %v2837
          %v5058 = vunpack.c.h.b16 %v2837
          %v5059 = vunpack.c.l.b16 %v2838
          %v5060 = vunpack.c.h.b16 %v2838
          %v5061 = vunpack.c.l.b16 %v2839
          %v5062 = vunpack.c.h.b16 %v2839
          %v5063 = vunpack.c.l.b16 %v2840
          %v5064 = vunpack.c.h.b16 %v2840
          %v5065 = vunpack.c.l.b16 %v2841
          %v5066 = vunpack.c.h.b16 %v2841
          %v5067 = vunpack.c.l.b16 %v2842
          %v5068 = vunpack.c.h.b16 %v2842
          %v5069 = vunpack.c.l.b16 %v2843
          %v5070 = vunpack.c.h.b16 %v2843
          %v5071 = vunpack.c.l.b16 %v2844
          %v5072 = vunpack.c.h.b16 %v2844
          %v5073 = vunpack.c.l.b16 %v2845
          %v5074 = vunpack.c.h.b16 %v2845
          %v5075 = vunpack.c.l.b16 %v2846
          %v5076 = vunpack.c.h.b16 %v2846
          %v5077 = vunpack.c.l.b16 %v2847
          %v5078 = vunpack.c.h.b16 %v2847
          %v5079 = vunpack.c.l.b16 %v2848
          %v5080 = vunpack.c.h.b16 %v2848
          %v5081 = vunpack.c.l.b16 %v2849
          %v5082 = vunpack.c.h.b16 %v2849
          %v5083 = vunpack.c.l.b16 %v2850
          %v5084 = vunpack.c.h.b16 %v2850
          %v5085 = vunpack.c.l.b16 %v2851
          %v5086 = vunpack.c.h.b16 %v2851
          %v5087 = vunpack.c.l.b16 %v2852
          %v5088 = vunpack.c.h.b16 %v2852
          %v5089 = vunpack.c.l.b16 %v2853
          %v5090 = vunpack.c.h.b16 %v2853
          %v5091 = vunpack.c.l.b16 %v2854
          %v5092 = vunpack.c.h.b16 %v2854
          %v5093 = vunpack.c.l.b16 %v2855
          %v5094 = vunpack.c.h.b16 %v2855
          %v5095 = vunpack.c.l.b16 %v2856
          %v5096 = vunpack.c.h.b16 %v2856
          %v5097 = vunpack.c.l.b16 %v2857
          %v5098 = vunpack.c.h.b16 %v2857
          %v5099 = vunpack.c.l.b16 %v2858
          %v5100 = vunpack.c.h.b16 %v2858
          %v5101 = vunpack.c.l.b16 %v2859
          %v5102 = vunpack.c.h.b16 %v2859
          %v5103 = vunpack.c.l.b16 %v2860
          %v5104 = vunpack.c.h.b16 %v2860
          %v5105 = vunpack.c.l.b16 %v2861
          %v5106 = vunpack.c.h.b16 %v2861
          %v5107 = vunpack.c.l.b16 %v2862
          %v5108 = vunpack.c.h.b16 %v2862
          %v5109 = vunpack.c.l.b16 %v2863
          %v5110 = vunpack.c.h.b16 %v2863
          %v5111 = vunpack.c.l.b16 %v2864
          %v5112 = vunpack.c.h.b16 %v2864
          %v5113 = vunpack.c.l.b16 %v2865
          %v5114 = vunpack.c.h.b16 %v2865
          %v5115 = vunpack.c.l.b16 %v2866
          %v5116 = vunpack.c.h.b16 %v2866
          %v5117 = vunpack.c.l.b16 %v2867
          %v5118 = vunpack.c.h.b16 %v2867
          %v5119 = vunpack.c.l.b16 %v2868
          %v5120 = vunpack.c.h.b16 %v2868
          %v5121 = vunpack.c.l.b16 %v2869
          %v5122 = vunpack.c.h.b16 %v2869
          %v5123 = vunpack.c.l.b16 %v2870
          %v5124 = vunpack.c.h.b16 %v2870
          %v5125 = vunpack.c.l.b16 %v2871
          %v5126 = vunpack.c.h.b16 %v2871
          %v5127 = vunpack.c.l.b16 %v2872
          %v5128 = vunpack.c.h.b16 %v2872
          %v5129 = vunpack.c.l.b16 %v2873
          %v5130 = vunpack.c.h.b16 %v2873
          %v5131 = vunpack.c.l.b16 %v2874
          %v5132 = vunpack.c.h.b16 %v2874
          %v5133 = vunpack.c.l.b16 %v2875
          %v5134 = vunpack.c.h.b16 %v2875
          %v5135 = vunpack.c.l.b16 %v2876
          %v5136 = vunpack.c.h.b16 %v2876
          %v5137 = vunpack.c.l.b16 %v2877
          %v5138 = vunpack.c.h.b16 %v2877
          %v5139 = vunpack.c.l.b16 %v2878
          %v5140 = vunpack.c.h.b16 %v2878
          %v5141 = vunpack.c.l.b16 %v2879
          %v5142 = vunpack.c.h.b16 %v2879
          %v5143 = vunpack.c.l.b16 %v2880
          %v5144 = vunpack.c.h.b16 %v2880
          %v5145 = vunpack.c.l.b16 %v2881
          %v5146 = vunpack.c.h.b16 %v2881
          %v5147 = vunpack.c.l.b16 %v2882
          %v5148 = vunpack.c.h.b16 %v2882
          %v5149 = vunpack.c.l.b16 %v2883
          %v5150 = vunpack.c.h.b16 %v2883
          %v5151 = vunpack.c.l.b16 %v2884
          %v5152 = vunpack.c.h.b16 %v2884
          %v5153 = vunpack.c.l.b16 %v2885
          %v5154 = vunpack.c.h.b16 %v2885
          %v5155 = vunpack.c.l.b16 %v2886
          %v5156 = vunpack.c.h.b16 %v2886
          %v5157 = vunpack.c.l.b16 %v2887
          %v5158 = vunpack.c.h.b16 %v2887
          %v5159 = vunpack.c.l.b16 %v2888
          %v5160 = vunpack.c.h.b16 %v2888
          %v5161 = vunpack.c.l.b16 %v2889
          %v5162 = vunpack.c.h.b16 %v2889
          %v5163 = vunpack.c.l.b16 %v2890
          %v5164 = vunpack.c.h.b16 %v2890
          %v5165 = vunpack.c.l.b16 %v2891
          %v5166 = vunpack.c.h.b16 %v2891
          %v5167 = vunpack.c.l.b16 %v2892
          %v5168 = vunpack.c.h.b16 %v2892
          %v5169 = vunpack.c.l.b16 %v2893
          %v5170 = vunpack.c.h.b16 %v2893
          %v5171 = vunpack.c.l.b16 %v2894
          %v5172 = vunpack.c.h.b16 %v2894
          %v5173 = vunpack.c.l.b16 %v2895
          %v5174 = vunpack.c.h.b16 %v2895
          %v5175 = vunpack.c.l.b16 %v2896
          %v5176 = vunpack.c.h.b16 %v2896
          %v5177 = vunpack.c.l.b16 %v2897
          %v5178 = vunpack.c.h.b16 %v2897
          %v5179 = vunpack.c.l.b16 %v2898
          %v5180 = vunpack.c.h.b16 %v2898
          %v5181 = vunpack.c.l.b16 %v2899
          %v5182 = vunpack.c.h.b16 %v2899
          %v5183 = vunpack.c.l.b16 %v2900
          %v5184 = vunpack.c.h.b16 %v2900
          %v5185 = vunpack.c.l.b16 %v2901
          %v5186 = vunpack.c.h.b16 %v2901
          %v5187 = vunpack.c.l.b16 %v2902
          %v5188 = vunpack.c.h.b16 %v2902
          %v5189 = vunpack.c.l.b16 %v2903
          %v5190 = vunpack.c.h.b16 %v2903
          %v5191 = vunpack.c.l.b16 %v2904
          %v5192 = vunpack.c.h.b16 %v2904
          %v5193 = vunpack.c.l.b16 %v2905
          %v5194 = vunpack.c.h.b16 %v2905
          %v5195 = vunpack.c.l.b16 %v2906
          %v5196 = vunpack.c.h.b16 %v2906
          %v5197 = vunpack.c.l.b16 %v2907
          %v5198 = vunpack.c.h.b16 %v2907
          %v5199 = vunpack.c.l.b16 %v2908
          %v5200 = vunpack.c.h.b16 %v2908
          %v5201 = vunpack.c.l.b16 %v2909
          %v5202 = vunpack.c.h.b16 %v2909
          %v5203 = vunpack.c.l.b16 %v2910
          %v5204 = vunpack.c.h.b16 %v2910
          %v5205 = vunpack.c.l.b16 %v2911
          %v5206 = vunpack.c.h.b16 %v2911
          %v5207 = vunpack.c.l.b16 %v2912
          %v5208 = vunpack.c.h.b16 %v2912
          %v5209 = vunpack.c.l.b16 %v2913
          %v5210 = vunpack.c.h.b16 %v2913
          %v5211 = vunpack.c.l.b16 %v2914
          %v5212 = vunpack.c.h.b16 %v2914
          %v5213 = vunpack.c.l.b16 %v2915
          %v5214 = vunpack.c.h.b16 %v2915
          %v5215 = vunpack.c.l.b16 %v2916
          %v5216 = vunpack.c.h.b16 %v2916
          %v5217 = vunpack.c.l.b16 %v2917
          %v5218 = vunpack.c.h.b16 %v2917
          %v5219 = vunpack.c.l.b16 %v2918
          %v5220 = vunpack.c.h.b16 %v2918
          %v5221 = vunpack.c.l.b16 %v2919
          %v5222 = vunpack.c.h.b16 %v2919
          %v5223 = vunpack.c.l.b16 %v2920
          %v5224 = vunpack.c.h.b16 %v2920
          %v5225 = vunpack.c.l.b16 %v2921
          %v5226 = vunpack.c.h.b16 %v2921
          %v5227 = vunpack.c.l.b16 %v2922
          %v5228 = vunpack.c.h.b16 %v2922
          %v5229 = vunpack.c.l.b16 %v2923
          %v5230 = vunpack.c.h.b16 %v2923
          %v5231 = vunpack.c.l.b16 %v2924
          %v5232 = vunpack.c.h.b16 %v2924
          %v5233 = vunpack.c.l.b16 %v2925
          %v5234 = vunpack.c.h.b16 %v2925
          %v5235 = vunpack.c.l.b16 %v2926
          %v5236 = vunpack.c.h.b16 %v2926
          %v5237 = vunpack.c.l.b16 %v2927
          %v5238 = vunpack.c.h.b16 %v2927
          %v5239 = vunpack.c.l.b16 %v2928
          %v5240 = vunpack.c.h.b16 %v2928
          %v5241 = vunpack.c.l.b16 %v2929
          %v5242 = vunpack.c.h.b16 %v2929
          %v5243 = vunpack.c.l.b16 %v2930
          %v5244 = vunpack.c.h.b16 %v2930
          %v5245 = vunpack.c.l.b16 %v2931
          %v5246 = vunpack.c.h.b16 %v2931
          %v5247 = vunpack.c.l.b16 %v2932
          %v5248 = vunpack.c.h.b16 %v2932
          %v5249 = vunpack.c.l.b16 %v2933
          %v5250 = vunpack.c.h.b16 %v2933
          %v5251 = vunpack.c.l.b16 %v2934
          %v5252 = vunpack.c.h.b16 %v2934
          %v5253 = vunpack.c.l.b16 %v2935
          %v5254 = vunpack.c.h.b16 %v2935
          %v5255 = vunpack.c.l.b16 %v2936
          %v5256 = vunpack.c.h.b16 %v2936
          %v5257 = vunpack.c.l.b16 %v2937
          %v5258 = vunpack.c.h.b16 %v2937
          %v5259 = vunpack.c.l.b16 %v2938
          %v5260 = vunpack.c.h.b16 %v2938
          %v5261 = vunpack.c.l.b16 %v2939
          %v5262 = vunpack.c.h.b16 %v2939
          %v5263 = vunpack.c.l.b16 %v2940
          %v5264 = vunpack.c.h.b16 %v2940
          %v5265 = vunpack.c.l.b16 %v2941
          %v5266 = vunpack.c.h.b16 %v2941
          %v5267 = vunpack.c.l.b16 %v2942
          %v5268 = vunpack.c.h.b16 %v2942
          %v5269 = vunpack.c.l.b16 %v2943
          %v5270 = vunpack.c.h.b16 %v2943
          %v5271 = vunpack.c.l.b16 %v2944
          %v5272 = vunpack.c.h.b16 %v2944
          %v5273 = vunpack.c.l.b16 %v2945
          %v5274 = vunpack.c.h.b16 %v2945
          %v5275 = vunpack.c.l.b16 %v2946
          %v5276 = vunpack.c.h.b16 %v2946
          %v5277 = vunpack.c.l.b16 %v2947
          %v5278 = vunpack.c.h.b16 %v2947
          %v5279 = vunpack.c.l.b16 %v2948
          %v5280 = vunpack.c.h.b16 %v2948
          %v5281 = vunpack.c.l.b16 %v2949
          %v5282 = vunpack.c.h.b16 %v2949
          %v5283 = vunpack.c.l.b16 %v2950
          %v5284 = vunpack.c.h.b16 %v2950
          %v5285 = vunpack.c.l.b16 %v2951
          %v5286 = vunpack.c.h.b16 %v2951
          %v5287 = vunpack.c.l.b16 %v2952
          %v5288 = vunpack.c.h.b16 %v2952
          %v5289 = vunpack.c.l.b16 %v2953
          %v5290 = vunpack.c.h.b16 %v2953
          %v5291 = vunpack.c.l.b16 %v2954
          %v5292 = vunpack.c.h.b16 %v2954
          %v5293 = vunpack.c.l.b16 %v2955
          %v5294 = vunpack.c.h.b16 %v2955
          %v5295 = vunpack.c.l.b16 %v2956
          %v5296 = vunpack.c.h.b16 %v2956
          %v5297 = vunpack.c.l.b16 %v2957
          %v5298 = vunpack.c.h.b16 %v2957
          %v5299 = vunpack.c.l.b16 %v2958
          %v5300 = vunpack.c.h.b16 %v2958
          %v5301 = vunpack.c.l.b16 %v2959
          %v5302 = vunpack.c.h.b16 %v2959
          %v5303 = vunpack.c.l.b16 %v2960
          %v5304 = vunpack.c.h.b16 %v2960
          %v5305 = vunpack.c.l.b16 %v2961
          %v5306 = vunpack.c.h.b16 %v2961
          %v5307 = vunpack.c.l.b16 %v2962
          %v5308 = vunpack.c.h.b16 %v2962
          %v5309 = vunpack.c.l.b16 %v2963
          %v5310 = vunpack.c.h.b16 %v2963
          %v5311 = vunpack.c.l.b16 %v2964
          %v5312 = vunpack.c.h.b16 %v2964
          %v5313 = vunpack.c.l.b16 %v2965
          %v5314 = vunpack.c.h.b16 %v2965
          %v5315 = vunpack.c.l.b16 %v2966
          %v5316 = vunpack.c.h.b16 %v2966
          %v5317 = vunpack.c.l.b16 %v2967
          %v5318 = vunpack.c.h.b16 %v2967
          %v5319 = vunpack.c.l.b16 %v2968
          %v5320 = vunpack.c.h.b16 %v2968
          %v5321 = vunpack.c.l.b16 %v2969
          %v5322 = vunpack.c.h.b16 %v2969
          %v5323 = vunpack.c.l.b16 %v2970
          %v5324 = vunpack.c.h.b16 %v2970
          %v5325 = vunpack.c.l.b16 %v2971
          %v5326 = vunpack.c.h.b16 %v2971
          %v5327 = vunpack.c.l.b16 %v2972
          %v5328 = vunpack.c.h.b16 %v2972
          %v5329 = vunpack.c.l.b16 %v2973
          %v5330 = vunpack.c.h.b16 %v2973
          %v5331 = vunpack.c.l.b16 %v2974
          %v5332 = vunpack.c.h.b16 %v2974
          %v5333 = vunpack.c.l.b16 %v2975
          %v5334 = vunpack.c.h.b16 %v2975
          %v5335 = vunpack.c.l.b16 %v2976
          %v5336 = vunpack.c.h.b16 %v2976
          %v5337 = vunpack.c.l.b16 %v2977
          %v5338 = vunpack.c.h.b16 %v2977
          %v5339 = vunpack.c.l.b16 %v2978
          %v5340 = vunpack.c.h.b16 %v2978
          %v5341 = vunpack.c.l.b16 %v2979
          %v5342 = vunpack.c.h.b16 %v2979
          %v5343 = vunpack.c.l.b16 %v2980
          %v5344 = vunpack.c.h.b16 %v2980
          %v5345 = vunpack.c.l.b16 %v2981
          %v5346 = vunpack.c.h.b16 %v2981
          %v5347 = vunpack.c.l.b16 %v2982
          %v5348 = vunpack.c.h.b16 %v2982
          %v5349 = vunpack.c.l.b16 %v2983
          %v5350 = vunpack.c.h.b16 %v2983
          %v5351 = vunpack.c.l.b16 %v2984
          %v5352 = vunpack.c.h.b16 %v2984
          %v5353 = vunpack.c.l.b16 %v2985
          %v5354 = vunpack.c.h.b16 %v2985
          %v5355 = vunpack.c.l.b16 %v2986
          %v5356 = vunpack.c.h.b16 %v2986
          %v5357 = vunpack.c.l.b16 %v2987
          %v5358 = vunpack.c.h.b16 %v2987
          %v5359 = vunpack.c.l.b16 %v2988
          %v5360 = vunpack.c.h.b16 %v2988
          %v5361 = vunpack.c.l.b16 %v2989
          %v5362 = vunpack.c.h.b16 %v2989
          %v5363 = vunpack.c.l.b16 %v2990
          %v5364 = vunpack.c.h.b16 %v2990
          %v5365 = vunpack.c.l.b16 %v2991
          %v5366 = vunpack.c.h.b16 %v2991
          %v5367 = vunpack.c.l.b16 %v2992
          %v5368 = vunpack.c.h.b16 %v2992
          %v5369 = vunpack.c.l.b16 %v2993
          %v5370 = vunpack.c.h.b16 %v2993
          %v5371 = vunpack.c.l.b16 %v2994
          %v5372 = vunpack.c.h.b16 %v2994
          %v5373 = vunpack.c.l.b16 %v2995
          %v5374 = vunpack.c.h.b16 %v2995
          %v5375 = vunpack.c.l.b16 %v2996
          %v5376 = vunpack.c.h.b16 %v2996
          %v5377 = vunpack.c.l.b16 %v2997
          %v5378 = vunpack.c.h.b16 %v2997
          %v5379 = vunpack.c.l.b16 %v2998
          %v5380 = vunpack.c.h.b16 %v2998
          %v5381 = vunpack.c.l.b16 %v2999
          %v5382 = vunpack.c.h.b16 %v2999
          %v5383 = vunpack.c.l.b16 %v3000
          %v5384 = vunpack.c.h.b16 %v3000
          %v5385 = vunpack.c.l.b16 %v3001
          %v5386 = vunpack.c.h.b16 %v3001
          %v5387 = vunpack.c.l.b16 %v3002
          %v5388 = vunpack.c.h.b16 %v3002
          %v5389 = vunpack.c.l.b16 %v3003
          %v5390 = vunpack.c.h.b16 %v3003
          %v5391 = vunpack.c.l.b16 %v3004
          %v5392 = vunpack.c.h.b16 %v3004
          %v5393 = vunpack.c.l.b16 %v3005
          %v5394 = vunpack.c.h.b16 %v3005
          %v5395 = vunpack.c.l.b16 %v3006
          %v5396 = vunpack.c.h.b16 %v3006
          %v5397 = vunpack.c.l.b16 %v3007
          %v5398 = vunpack.c.h.b16 %v3007
          %v5399 = vunpack.c.l.b16 %v3008
          %v5400 = vunpack.c.h.b16 %v3008
          %v5401 = vunpack.c.l.b16 %v3009
          %v5402 = vunpack.c.h.b16 %v3009
          %v5403 = vunpack.c.l.b16 %v3010
          %v5404 = vunpack.c.h.b16 %v3010
          %v5405 = vunpack.c.l.b16 %v3011
          %v5406 = vunpack.c.h.b16 %v3011
          %v5407 = vunpack.c.l.b16 %v3012
          %v5408 = vunpack.c.h.b16 %v3012
          %v5409 = vunpack.c.l.b16 %v3013
          %v5410 = vunpack.c.h.b16 %v3013
          %v5411 = vunpack.c.l.b16 %v3014
          %v5412 = vunpack.c.h.b16 %v3014
          %v5413 = vunpack.c.l.b16 %v3015
          %v5414 = vunpack.c.h.b16 %v3015
          %v5415 = vunpack.c.l.b16 %v3016
          %v5416 = vunpack.c.h.b16 %v3016
          %v5417 = vunpack.c.l.b16 %v3017
          %v5418 = vunpack.c.h.b16 %v3017
          %v5419 = vunpack.c.l.b16 %v3018
          %v5420 = vunpack.c.h.b16 %v3018
          %v5421 = vunpack.c.l.b16 %v3019
          %v5422 = vunpack.c.h.b16 %v3019
          %v5423 = vunpack.c.l.b16 %v3020
          %v5424 = vunpack.c.h.b16 %v3020
          %v5425 = vunpack.c.l.b16 %v3021
          %v5426 = vunpack.c.h.b16 %v3021
          %v5427 = vunpack.c.l.b16 %v3022
          %v5428 = vunpack.c.h.b16 %v3022
          %v5429 = vunpack.c.l.b16 %v3023
          %v5430 = vunpack.c.h.b16 %v3023
          %v5431 = vunpack.c.l.b16 %v3024
          %v5432 = vunpack.c.h.b16 %v3024
          %v5433 = vunpack.c.l.b16 %v3025
          %v5434 = vunpack.c.h.b16 %v3025
          %v5435 = vunpack.c.l.b16 %v3026
          %v5436 = vunpack.c.h.b16 %v3026
          %v5437 = vunpack.c.l.b16 %v3027
          %v5438 = vunpack.c.h.b16 %v3027
          %v5439 = vunpack.c.l.b16 %v3028
          %v5440 = vunpack.c.h.b16 %v3028
          %v5441 = vunpack.c.l.b16 %v3029
          %v5442 = vunpack.c.h.b16 %v3029
          %v5443 = vunpack.c.l.b16 %v3030
          %v5444 = vunpack.c.h.b16 %v3030
          %v5445 = vunpack.c.l.b16 %v3031
          %v5446 = vunpack.c.h.b16 %v3031
          %v5447 = vunpack.c.l.b16 %v3032
          %v5448 = vunpack.c.h.b16 %v3032
          %v5449 = vunpack.c.l.b16 %v3033
          %v5450 = vunpack.c.h.b16 %v3033
          %v5451 = vunpack.c.l.b16 %v3034
          %v5452 = vunpack.c.h.b16 %v3034
          %v5453 = vunpack.c.l.b16 %v3035
          %v5454 = vunpack.c.h.b16 %v3035
          %v5455 = vunpack.c.l.b16 %v3036
          %v5456 = vunpack.c.h.b16 %v3036
          %v5457 = vunpack.c.l.b16 %v3037
          %v5458 = vunpack.c.h.b16 %v3037
          %v5459 = vunpack.c.l.b16 %v3038
          %v5460 = vunpack.c.h.b16 %v3038
          %v5461 = vunpack.c.l.b16 %v3039
          %v5462 = vunpack.c.h.b16 %v3039
          %v5463 = vunpack.c.l.b16 %v3040
          %v5464 = vunpack.c.h.b16 %v3040
          %v5465 = vunpack.c.l.b16 %v3041
          %v5466 = vunpack.c.h.b16 %v3041
          %v5467 = vunpack.c.l.b16 %v3042
          %v5468 = vunpack.c.h.b16 %v3042
          %v5469 = vunpack.c.l.b16 %v3043
          %v5470 = vunpack.c.h.b16 %v3043
          %v5471 = vunpack.c.l.b16 %v3044
          %v5472 = vunpack.c.h.b16 %v3044
          %v5473 = vunpack.c.l.b16 %v3045
          %v5474 = vunpack.c.h.b16 %v3045
          %v5475 = vunpack.c.l.b16 %v3046
          %v5476 = vunpack.c.h.b16 %v3046
          %v5477 = vunpack.c.l.b16 %v3047
          %v5478 = vunpack.c.h.b16 %v3047
          %v5479 = vunpack.c.l.b16 %v3048
          %v5480 = vunpack.c.h.b16 %v3048
          %v5481 = vunpack.c.l.b16 %v3049
          %v5482 = vunpack.c.h.b16 %v3049
          %v5483 = vunpack.c.l.b16 %v3050
          %v5484 = vunpack.c.h.b16 %v3050
          %v5485 = vunpack.c.l.b16 %v3051
          %v5486 = vunpack.c.h.b16 %v3051
          %v5487 = vunpack.c.l.b16 %v3052
          %v5488 = vunpack.c.h.b16 %v3052
          %v5489 = vunpack.c.l.b16 %v3053
          %v5490 = vunpack.c.h.b16 %v3053
          %v5491 = vunpack.c.l.b16 %v3054
          %v5492 = vunpack.c.h.b16 %v3054
          %v5493 = vunpack.c.l.b16 %v3055
          %v5494 = vunpack.c.h.b16 %v3055
          %v5495 = vunpack.c.l.b16 %v3056
          %v5496 = vunpack.c.h.b16 %v3056
          %v5497 = vunpack.c.l.b16 %v3057
          %v5498 = vunpack.c.h.b16 %v3057
          %v5499 = vunpack.c.l.b16 %v3058
          %v5500 = vunpack.c.h.b16 %v3058
          %v5501 = vunpack.c.l.b16 %v3059
          %v5502 = vunpack.c.h.b16 %v3059
          %v5503 = vunpack.c.l.b16 %v3060
          %v5504 = vunpack.c.h.b16 %v3060
          %v5505 = vunpack.c.l.b16 %v3061
          %v5506 = vunpack.c.h.b16 %v3061
          %v5507 = vunpack.c.l.b16 %v3062
          %v5508 = vunpack.c.h.b16 %v3062
          %v5509 = vunpack.c.l.b16 %v3063
          %v5510 = vunpack.c.h.b16 %v3063
          %v5511 = vunpack.c.l.b16 %v3064
          %v5512 = vunpack.c.h.b16 %v3064
          %v5513 = vunpack.c.l.b16 %v3065
          %v5514 = vunpack.c.h.b16 %v3065
          %v5515 = vunpack.c.l.b16 %v3066
          %v5516 = vunpack.c.h.b16 %v3066
          %v5517 = vunpack.c.l.b16 %v3067
          %v5518 = vunpack.c.h.b16 %v3067
          %v5519 = vunpack.c.l.b16 %v3068
          %v5520 = vunpack.c.h.b16 %v3068
          %v5521 = vunpack.c.l.b16 %v3069
          %v5522 = vunpack.c.h.b16 %v3069
          %v5523 = vunpack.c.l.b16 %v3070
          %v5524 = vunpack.c.h.b16 %v3070
          %v5525 = vunpack.c.l.b16 %v3071
          %v5526 = vunpack.c.h.b16 %v3071
          %v5527 = vunpack.c.l.b16 %v3072
          %v5528 = vunpack.c.h.b16 %v3072
          %v5529 = vunpack.c.l.b16 %v3073
          %v5530 = vunpack.c.h.b16 %v3073
          %v5531 = vunpack.c.l.b16 %v3074
          %v5532 = vunpack.c.h.b16 %v3074
          %v5533 = vunpack.c.l.b16 %v3075
          %v5534 = vunpack.c.h.b16 %v3075
          %v5535 = vunpack.c.l.b16 %v3076
          %v5536 = vunpack.c.h.b16 %v3076
          %v5537 = vunpack.c.l.b16 %v3077
          %v5538 = vunpack.c.h.b16 %v3077
          %v5539 = vunpack.c.l.b16 %v3078
          %v5540 = vunpack.c.h.b16 %v3078
          %v5541 = vunpack.c.l.b16 %v3079
          %v5542 = vunpack.c.h.b16 %v3079
          %v5543 = vunpack.c.l.b16 %v3080
          %v5544 = vunpack.c.h.b16 %v3080
          %v5545 = vunpack.c.l.b16 %v3081
          %v5546 = vunpack.c.h.b16 %v3081
          %v5547 = vunpack.c.l.b16 %v3082
          %v5548 = vunpack.c.h.b16 %v3082
          %v5549 = vunpack.c.l.b16 %v3083
          %v5550 = vunpack.c.h.b16 %v3083
          %v5551 = vunpack.c.l.b16 %v3084
          %v5552 = vunpack.c.h.b16 %v3084
          %v5553 = vunpack.c.l.b16 %v3085
          %v5554 = vunpack.c.h.b16 %v3085
          %v5555 = vunpack.c.l.b16 %v3086
          %v5556 = vunpack.c.h.b16 %v3086
          %v5557 = vunpack.c.l.b16 %v3087
          %v5558 = vunpack.c.h.b16 %v3087
          %v5559 = vunpack.c.l.b16 %v3088
          %v5560 = vunpack.c.h.b16 %v3088
          %v5561 = vunpack.c.l.b16 %v3089
          %v5562 = vunpack.c.h.b16 %v3089
          %v5563 = vunpack.c.l.b16 %v3090
          %v5564 = vunpack.c.h.b16 %v3090
          %v5565 = vunpack.c.l.b16 %v3091
          %v5566 = vunpack.c.h.b16 %v3091
          %v5567 = vunpack.c.l.b16 %v3092
          %v5568 = vunpack.c.h.b16 %v3092
          %v5569 = vunpack.c.l.b16 %v3093
          %v5570 = vunpack.c.h.b16 %v3093
          %v5571 = vunpack.c.l.b16 %v3094
          %v5572 = vunpack.c.h.b16 %v3094
          %v5573 = vunpack.c.l.b16 %v3095
          %v5574 = vunpack.c.h.b16 %v3095
          %v5575 = vunpack.c.l.b16 %v3096
          %v5576 = vunpack.c.h.b16 %v3096
          %v5577 = vunpack.c.l.b16 %v3097
          %v5578 = vunpack.c.h.b16 %v3097
          %v5579 = vunpack.c.l.b16 %v3098
          %v5580 = vunpack.c.h.b16 %v3098
          %v5581 = vunpack.c.l.b16 %v3099
          %v5582 = vunpack.c.h.b16 %v3099
          %v5583 = vunpack.c.l.b16 %v3100
          %v5584 = vunpack.c.h.b16 %v3100
          %v5585 = vunpack.c.l.b16 %v3101
          %v5586 = vunpack.c.h.b16 %v3101
          %v5587 = vunpack.c.l.b16 %v3102
          %v5588 = vunpack.c.h.b16 %v3102
          %v5589 = vunpack.c.l.b16 %v3103
          %v5590 = vunpack.c.h.b16 %v3103
          %v5591 = vunpack.c.l.b16 %v3104
          %v5592 = vunpack.c.h.b16 %v3104
          %v5593 = vunpack.c.l.b16 %v3105
          %v5594 = vunpack.c.h.b16 %v3105
          %v5595 = vunpack.c.l.b16 %v3106
          %v5596 = vunpack.c.h.b16 %v3106
          %v5597 = vunpack.c.l.b16 %v3107
          %v5598 = vunpack.c.h.b16 %v3107
          %v5599 = vunpack.c.l.b16 %v3108
          %v5600 = vunpack.c.h.b16 %v3108
          %v5601 = vunpack.c.l.b16 %v3109
          %v5602 = vunpack.c.h.b16 %v3109
          %v5603 = vunpack.c.l.b16 %v3110
          %v5604 = vunpack.c.h.b16 %v3110
          %v5605 = vunpack.c.l.b16 %v3111
          %v5606 = vunpack.c.h.b16 %v3111
          %v5607 = vunpack.c.l.b16 %v3112
          %v5608 = vunpack.c.h.b16 %v3112
          %v5609 = vunpack.c.l.b16 %v3113
          %v5610 = vunpack.c.h.b16 %v3113
          %v5611 = vunpack.c.l.b16 %v3114
          %v5612 = vunpack.c.h.b16 %v3114
          %v5613 = vunpack.c.l.b16 %v3115
          %v5614 = vunpack.c.h.b16 %v3115
          %v5615 = vunpack.c.l.b16 %v3116
          %v5616 = vunpack.c.h.b16 %v3116
          %v5617 = vunpack.c.l.b16 %v3117
          %v5618 = vunpack.c.h.b16 %v3117
          %v5619 = vunpack.c.l.b16 %v3118
          %v5620 = vunpack.c.h.b16 %v3118
          %v5621 = vunpack.c.l.b16 %v3119
          %v5622 = vunpack.c.h.b16 %v3119
          %v5623 = vunpack.c.l.b16 %v3120
          %v5624 = vunpack.c.h.b16 %v3120
          %v5625 = vunpack.c.l.b16 %v3121
          %v5626 = vunpack.c.h.b16 %v3121
          %v5627 = vunpack.c.l.b16 %v3122
          %v5628 = vunpack.c.h.b16 %v3122
          %v5629 = vunpack.c.l.b16 %v3123
          %v5630 = vunpack.c.h.b16 %v3123
          %v5631 = vunpack.c.l.b16 %v3124
          %v5632 = vunpack.c.h.b16 %v3124
          %v5633 = vunpack.c.l.b16 %v3125
          %v5634 = vunpack.c.h.b16 %v3125
          %v5635 = vunpack.c.l.b16 %v3126
          %v5636 = vunpack.c.h.b16 %v3126
          %v5637 = vunpack.c.l.b16 %v3127
          %v5638 = vunpack.c.h.b16 %v3127
          %v5639 = vunpack.c.l.b16 %v3128
          %v5640 = vunpack.c.h.b16 %v3128
          %v5641 = vunpack.c.l.b16 %v3129
          %v5642 = vunpack.c.h.b16 %v3129
          %v5643 = vunpack.c.l.b16 %v3130
          %v5644 = vunpack.c.h.b16 %v3130
          %v5645 = vunpack.c.l.b16 %v3131
          %v5646 = vunpack.c.h.b16 %v3131
          %v5647 = vunpack.c.l.b16 %v3132
          %v5648 = vunpack.c.h.b16 %v3132
          %v5649 = vunpack.c.l.b16 %v3133
          %v5650 = vunpack.c.h.b16 %v3133
          %v5651 = vunpack.c.l.b16 %v3134
          %v5652 = vunpack.c.h.b16 %v3134
          %v5653 = vunpack.c.l.b16 %v3135
          %v5654 = vunpack.c.h.b16 %v3135
          %v5655 = vunpack.c.l.b16 %v3136
          %v5656 = vunpack.c.h.b16 %v3136
          %v5657 = vunpack.c.l.b16 %v3137
          %v5658 = vunpack.c.h.b16 %v3137
          %v5659 = vunpack.c.l.b16 %v3138
          %v5660 = vunpack.c.h.b16 %v3138
          %v5661 = vunpack.c.l.b16 %v3139
          %v5662 = vunpack.c.h.b16 %v3139
          %v5663 = vunpack.c.l.b16 %v3140
          %v5664 = vunpack.c.h.b16 %v3140
          %v5665 = vunpack.c.l.b16 %v3141
          %v5666 = vunpack.c.h.b16 %v3141
          %v5667 = vunpack.c.l.b16 %v3142
          %v5668 = vunpack.c.h.b16 %v3142
          %v5669 = vunpack.c.l.b16 %v3143
          %v5670 = vunpack.c.h.b16 %v3143
          %v5671 = vunpack.c.l.b16 %v3144
          %v5672 = vunpack.c.h.b16 %v3144
          %v5673 = vunpack.c.l.b16 %v3145
          %v5674 = vunpack.c.h.b16 %v3145
          %v5675 = vunpack.c.l.b16 %v3146
          %v5676 = vunpack.c.h.b16 %v3146
          %v5677 = vunpack.c.l.b16 %v3147
          %v5678 = vunpack.c.h.b16 %v3147
          %v5679 = vunpack.c.l.b16 %v3148
          %v5680 = vunpack.c.h.b16 %v3148
          %v5681 = vunpack.c.l.b16 %v3149
          %v5682 = vunpack.c.h.b16 %v3149
          %v5683 = vunpack.c.l.b16 %v3150
          %v5684 = vunpack.c.h.b16 %v3150
          %v5685 = vunpack.c.l.b16 %v3151
          %v5686 = vunpack.c.h.b16 %v3151
          %v5687 = vunpack.c.l.b16 %v3152
          %v5688 = vunpack.c.h.b16 %v3152
          %v5689 = vunpack.c.l.b16 %v3153
          %v5690 = vunpack.c.h.b16 %v3153
          %v5691 = vunpack.c.l.b16 %v3154
          %v5692 = vunpack.c.h.b16 %v3154
          %v5693 = vunpack.c.l.b16 %v3155
          %v5694 = vunpack.c.h.b16 %v3155
          %v5695 = vunpack.c.l.b16 %v3156
          %v5696 = vunpack.c.h.b16 %v3156
          %v5697 = vunpack.c.l.b16 %v3157
          %v5698 = vunpack.c.h.b16 %v3157
          %v5699 = vunpack.c.l.b16 %v3158
          %v5700 = vunpack.c.h.b16 %v3158
          %v5701 = vunpack.c.l.b16 %v3159
          %v5702 = vunpack.c.h.b16 %v3159
          %v5703 = vunpack.c.l.b16 %v3160
          %v5704 = vunpack.c.h.b16 %v3160
          %v5705 = vunpack.c.l.b16 %v3161
          %v5706 = vunpack.c.h.b16 %v3161
          %v5707 = vunpack.c.l.b16 %v3162
          %v5708 = vunpack.c.h.b16 %v3162
          %v5709 = vunpack.c.l.b16 %v3163
          %v5710 = vunpack.c.h.b16 %v3163
          %v5711 = vunpack.c.l.b16 %v3164
          %v5712 = vunpack.c.h.b16 %v3164
          %v5713 = vunpack.c.l.b16 %v3165
          %v5714 = vunpack.c.h.b16 %v3165
          %v5715 = vunpack.c.l.b16 %v3166
          %v5716 = vunpack.c.h.b16 %v3166
          %v5717 = vunpack.c.l.b16 %v3167
          %v5718 = vunpack.c.h.b16 %v3167
          %v5719 = vunpack.c.l.b16 %v3168
          %v5720 = vunpack.c.h.b16 %v3168
          %v5721 = vunpack.c.l.b16 %v3169
          %v5722 = vunpack.c.h.b16 %v3169
          %v5723 = vunpack.c.l.b16 %v3170
          %v5724 = vunpack.c.h.b16 %v3170
          %v5725 = vunpack.c.l.b16 %v3171
          %v5726 = vunpack.c.h.b16 %v3171
          %v5727 = vunpack.c.l.b16 %v3172
          %v5728 = vunpack.c.h.b16 %v3172
          %v5729 = vunpack.c.l.b16 %v3173
          %v5730 = vunpack.c.h.b16 %v3173
          %v5731 = vunpack.c.l.b16 %v3174
          %v5732 = vunpack.c.h.b16 %v3174
          %v5733 = vunpack.c.l.b16 %v3175
          %v5734 = vunpack.c.h.b16 %v3175
          %v5735 = vunpack.c.l.b16 %v3176
          %v5736 = vunpack.c.h.b16 %v3176
          %v5737 = vunpack.c.l.b16 %v3177
          %v5738 = vunpack.c.h.b16 %v3177
          %v5739 = vunpack.c.l.b16 %v3178
          %v5740 = vunpack.c.h.b16 %v3178
          %v5741 = vunpack.c.l.b16 %v3179
          %v5742 = vunpack.c.h.b16 %v3179
          %v5743 = vunpack.c.l.b16 %v3180
          %v5744 = vunpack.c.h.b16 %v3180
          %v5745 = vunpack.c.l.b16 %v3181
          %v5746 = vunpack.c.h.b16 %v3181
          %v5747 = vunpack.c.l.b16 %v3182
          %v5748 = vunpack.c.h.b16 %v3182
          %v5749 = vunpack.c.l.b16 %v3183
          %v5750 = vunpack.c.h.b16 %v3183
          %v5751 = vunpack.c.l.b16 %v3184
          %v5752 = vunpack.c.h.b16 %v3184
          %v5753 = vunpack.c.l.b16 %v3185
          %v5754 = vunpack.c.h.b16 %v3185
          %v5755 = vunpack.c.l.b16 %v3186
          %v5756 = vunpack.c.h.b16 %v3186
          %v5757 = vunpack.c.l.b16 %v3187
          %v5758 = vunpack.c.h.b16 %v3187
          %v5759 = vunpack.c.l.b16 %v3188
          %v5760 = vunpack.c.h.b16 %v3188
          %v5761 = vunpack.c.l.b16 %v3189
          %v5762 = vunpack.c.h.b16 %v3189
          %v5763 = vunpack.c.l.b16 %v3190
          %v5764 = vunpack.c.h.b16 %v3190
          %v5765 = vunpack.c.l.b16 %v3191
          %v5766 = vunpack.c.h.b16 %v3191
          %v5767 = vunpack.c.l.b16 %v3192
          %v5768 = vunpack.c.h.b16 %v3192
          %v5769 = vunpack.c.l.b16 %v3193
          %v5770 = vunpack.c.h.b16 %v3193
          %v5771 = vunpack.c.l.b16 %v3194
          %v5772 = vunpack.c.h.b16 %v3194
          %v5773 = vunpack.c.l.b16 %v3195
          %v5774 = vunpack.c.h.b16 %v3195
          %v5775 = vunpack.c.l.b16 %v3196
          %v5776 = vunpack.c.h.b16 %v3196
          %v5777 = vunpack.c.l.b16 %v3197
          %v5778 = vunpack.c.h.b16 %v3197
          %v5779 = vunpack.c.l.b16 %v3198
          %v5780 = vunpack.c.h.b16 %v3198
          %v5781 = vunpack.c.l.b16 %v3199
          %v5782 = vunpack.c.h.b16 %v3199
          %v5783 = vunpack.c.l.b16 %v3200
          %v5784 = vunpack.c.h.b16 %v3200
          %v5785 = vunpack.c.l.b16 %v3201
          %v5786 = vunpack.c.h.b16 %v3201
          %v5787 = vunpack.c.l.b16 %v3202
          %v5788 = vunpack.c.h.b16 %v3202
          %v5789 = vunpack.c.l.b16 %v3203
          %v5790 = vunpack.c.h.b16 %v3203
          %v5791 = vunpack.c.l.b16 %v3204
          %v5792 = vunpack.c.h.b16 %v3204
          %v5793 = vunpack.c.l.b16 %v3205
          %v5794 = vunpack.c.h.b16 %v3205
          %v5795 = vunpack.c.l.b16 %v3206
          %v5796 = vunpack.c.h.b16 %v3206
          %v5797 = vunpack.c.l.b16 %v3207
          %v5798 = vunpack.c.h.b16 %v3207
          %v5799 = vunpack.c.l.b16 %v3208
          %v5800 = vunpack.c.h.b16 %v3208
          %v5801 = vunpack.c.l.b16 %v3209
          %v5802 = vunpack.c.h.b16 %v3209
          %v5803 = vunpack.c.l.b16 %v3210
          %v5804 = vunpack.c.h.b16 %v3210
          %v5805 = vunpack.c.l.b16 %v3211
          %v5806 = vunpack.c.h.b16 %v3211
          %v5807 = vunpack.c.l.b16 %v3212
          %v5808 = vunpack.c.h.b16 %v3212
          %v5809 = vunpack.c.l.b16 %v3213
          %v5810 = vunpack.c.h.b16 %v3213
          %v5811 = vunpack.c.l.b16 %v3214
          %v5812 = vunpack.c.h.b16 %v3214
          %v5813 = vunpack.c.l.b16 %v3215
          %v5814 = vunpack.c.h.b16 %v3215
          %v5815 = vunpack.c.l.b16 %v3216
          %v5816 = vunpack.c.h.b16 %v3216
          %v5817 = vunpack.c.l.b16 %v3217
          %v5818 = vunpack.c.h.b16 %v3217
          %v5819 = vunpack.c.l.b16 %v3218
          %v5820 = vunpack.c.h.b16 %v3218
          %v5821 = vunpack.c.l.b16 %v3219
          %v5822 = vunpack.c.h.b16 %v3219
          %v5823 = vunpack.c.l.b16 %v3220
          %v5824 = vunpack.c.h.b16 %v3220
          %v5825 = vunpack.c.l.b16 %v3221
          %v5826 = vunpack.c.h.b16 %v3221
          %v5827 = vunpack.c.l.b16 %v3222
          %v5828 = vunpack.c.h.b16 %v3222
          %v5829 = vunpack.c.l.b16 %v3223
          %v5830 = vunpack.c.h.b16 %v3223
          %v5831 = vunpack.c.l.b16 %v3224
          %v5832 = vunpack.c.h.b16 %v3224
          %v5833 = vunpack.c.l.b16 %v3225
          %v5834 = vunpack.c.h.b16 %v3225
          %v5835 = vunpack.c.l.b16 %v3226
          %v5836 = vunpack.c.h.b16 %v3226
          %v5837 = vunpack.c.l.b16 %v3227
          %v5838 = vunpack.c.h.b16 %v3227
          %v5839 = vunpack.c.l.b16 %v3228
          %v5840 = vunpack.c.h.b16 %v3228
          %v5841 = vunpack.c.l.b16 %v3229
          %v5842 = vunpack.c.h.b16 %v3229
          %v5843 = vunpack.c.l.b16 %v3230
          %v5844 = vunpack.c.h.b16 %v3230
          %v5845 = vunpack.c.l.b16 %v3231
          %v5846 = vunpack.c.h.b16 %v3231
          %v5847 = vunpack.c.l.b16 %v3232
          %v5848 = vunpack.c.h.b16 %v3232
          %v5849 = vunpack.c.l.b16 %v3233
          %v5850 = vunpack.c.h.b16 %v3233
          %v5851 = vunpack.c.l.b16 %v3234
          %v5852 = vunpack.c.h.b16 %v3234
          %v5853 = vunpack.c.l.b16 %v3235
          %v5854 = vunpack.c.h.b16 %v3235
          %v5855 = vunpack.c.l.b16 %v3236
          %v5856 = vunpack.c.h.b16 %v3236
          %v5857 = vunpack.c.l.b16 %v3237
          %v5858 = vunpack.c.h.b16 %v3237
          %v5859 = vunpack.c.l.b16 %v3238
          %v5860 = vunpack.c.h.b16 %v3238
          %v5861 = vunpack.c.l.b16 %v3239
          %v5862 = vunpack.c.h.b16 %v3239
          %v5863 = vunpack.c.l.b16 %v3240
          %v5864 = vunpack.c.h.b16 %v3240
          %v5865 = vunpack.c.l.b16 %v3241
          %v5866 = vunpack.c.h.b16 %v3241
          %v5867 = vunpack.c.l.b16 %v3242
          %v5868 = vunpack.c.h.b16 %v3242
          %v5869 = vunpack.c.l.b16 %v3243
          %v5870 = vunpack.c.h.b16 %v3243
          %v5871 = vunpack.c.l.b16 %v3244
          %v5872 = vunpack.c.h.b16 %v3244
          %v5873 = vunpack.c.l.b16 %v3245
          %v5874 = vunpack.c.h.b16 %v3245
          %v5875 = vunpack.c.l.b16 %v3246
          %v5876 = vunpack.c.h.b16 %v3246
          %v5877 = vunpack.c.l.b16 %v3247
          %v5878 = vunpack.c.h.b16 %v3247
          %v5879 = vunpack.c.l.b16 %v3248
          %v5880 = vunpack.c.h.b16 %v3248
          %v5881 = vunpack.c.l.b16 %v3249
          %v5882 = vunpack.c.h.b16 %v3249
          %v5883 = vunpack.c.l.b16 %v3250
          %v5884 = vunpack.c.h.b16 %v3250
          %v5885 = vunpack.c.l.b16 %v3251
          %v5886 = vunpack.c.h.b16 %v3251
          %v5887 = vunpack.c.l.b16 %v3252
          %v5888 = vunpack.c.h.b16 %v3252
          %v5889 = vunpack.c.l.b16 %v3253
          %v5890 = vunpack.c.h.b16 %v3253
          %v5891 = vunpack.c.l.b16 %v3254
          %v5892 = vunpack.c.h.b16 %v3254
          %v5893 = vunpack.c.l.b16 %v3255
          %v5894 = vunpack.c.h.b16 %v3255
          %v5895 = vunpack.c.l.b16 %v3256
          %v5896 = vunpack.c.h.b16 %v3256
          %v5897 = vunpack.c.l.b16 %v3257
          %v5898 = vunpack.c.h.b16 %v3257
          %v5899 = vunpack.c.l.b16 %v3258
          %v5900 = vunpack.c.h.b16 %v3258
          %v5901 = vunpack.c.l.b16 %v3259
          %v5902 = vunpack.c.h.b16 %v3259
          %v5903 = vunpack.c.l.b16 %v3260
          %v5904 = vunpack.c.h.b16 %v3260
          %v5905 = vunpack.c.l.b16 %v3261
          %v5906 = vunpack.c.h.b16 %v3261
          %v5907 = vunpack.c.l.b16 %v3262
          %v5908 = vunpack.c.h.b16 %v3262
          %v5909 = vunpack.c.l.b16 %v3263
          %v5910 = vunpack.c.h.b16 %v3263
          %v5911 = vunpack.c.l.b16 %v3264
          %v5912 = vunpack.c.h.b16 %v3264
          %v5913 = vunpack.c.l.b16 %v3265
          %v5914 = vunpack.c.h.b16 %v3265
          %v5915 = vunpack.c.l.b16 %v3266
          %v5916 = vunpack.c.h.b16 %v3266
          %v5917 = vunpack.c.l.b16 %v3267
          %v5918 = vunpack.c.h.b16 %v3267
          %v5919 = vunpack.c.l.b16 %v3268
          %v5920 = vunpack.c.h.b16 %v3268
          %v5921 = vunpack.c.l.b16 %v3269
          %v5922 = vunpack.c.h.b16 %v3269
          %v5923 = vunpack.c.l.b16 %v3270
          %v5924 = vunpack.c.h.b16 %v3270
          %v5925 = vunpack.c.l.b16 %v3271
          %v5926 = vunpack.c.h.b16 %v3271
          %v5927 = vunpack.c.l.b16 %v3272
          %v5928 = vunpack.c.h.b16 %v3272
          %v5929 = vunpack.c.l.b16 %v3273
          %v5930 = vunpack.c.h.b16 %v3273
          %v5931 = vunpack.c.l.b16 %v3274
          %v5932 = vunpack.c.h.b16 %v3274
          %v5933 = vunpack.c.l.b16 %v3275
          %v5934 = vunpack.c.h.b16 %v3275
          %v5935 = vunpack.c.l.b16 %v3276
          %v5936 = vunpack.c.h.b16 %v3276
          %v5937 = vunpack.c.l.b16 %v3277
          %v5938 = vunpack.c.h.b16 %v3277
          %v5939 = vunpack.c.l.b16 %v3278
          %v5940 = vunpack.c.h.b16 %v3278
          %v5941 = vunpack.c.l.b16 %v3279
          %v5942 = vunpack.c.h.b16 %v3279
          %v5943 = vunpack.c.l.b16 %v3280
          %v5944 = vunpack.c.h.b16 %v3280
          %v5945 = vunpack.c.l.b16 %v3281
          %v5946 = vunpack.c.h.b16 %v3281
          %v5947 = vunpack.c.l.b16 %v3282
          %v5948 = vunpack.c.h.b16 %v3282
          %v5949 = vunpack.c.l.b16 %v3283
          %v5950 = vunpack.c.h.b16 %v3283
          %v5951 = vunpack.c.l.b16 %v3284
          %v5952 = vunpack.c.h.b16 %v3284
          %v5953 = vunpack.c.l.b16 %v3285
          %v5954 = vunpack.c.h.b16 %v3285
          %v5955 = vunpack.c.l.b16 %v3286
          %v5956 = vunpack.c.h.b16 %v3286
          %v5957 = vunpack.c.l.b16 %v3287
          %v5958 = vunpack.c.h.b16 %v3287
          %v5959 = vunpack.c.l.b16 %v3288
          %v5960 = vunpack.c.h.b16 %v3288
          %v5961 = vunpack.c.l.b16 %v3289
          %v5962 = vunpack.c.h.b16 %v3289
          %v5963 = vunpack.c.l.b16 %v3290
          %v5964 = vunpack.c.h.b16 %v3290
          %v5965 = vunpack.c.l.b16 %v3291
          %v5966 = vunpack.c.h.b16 %v3291
          %v5967 = vunpack.c.l.b16 %v3292
          %v5968 = vunpack.c.h.b16 %v3292
          %v5969 = vunpack.c.l.b16 %v3293
          %v5970 = vunpack.c.h.b16 %v3293
          %v5971 = vunpack.c.l.b16 %v3294
          %v5972 = vunpack.c.h.b16 %v3294
          %v5973 = vunpack.c.l.b16 %v3295
          %v5974 = vunpack.c.h.b16 %v3295
          %v5975 = vunpack.c.l.b16 %v3296
          %v5976 = vunpack.c.h.b16 %v3296
          %v5977 = vunpack.c.l.b16 %v3297
          %v5978 = vunpack.c.h.b16 %v3297
          %v5979 = vunpack.c.l.b16 %v3298
          %v5980 = vunpack.c.h.b16 %v3298
          %v5981 = vunpack.c.l.b16 %v3299
          %v5982 = vunpack.c.h.b16 %v3299
          %v5983 = vunpack.c.l.b16 %v3300
          %v5984 = vunpack.c.h.b16 %v3300
          %v5985 = vunpack.c.l.b16 %v3301
          %v5986 = vunpack.c.h.b16 %v3301
          %v5987 = vunpack.c.l.b16 %v3302
          %v5988 = vunpack.c.h.b16 %v3302
          %v5989 = vunpack.c.l.b16 %v3303
          %v5990 = vunpack.c.h.b16 %v3303
          %v5991 = vunpack.c.l.b16 %v3304
          %v5992 = vunpack.c.h.b16 %v3304
          %v5993 = vunpack.c.l.b16 %v3305
          %v5994 = vunpack.c.h.b16 %v3305
          %v5995 = vunpack.c.l.b16 %v3306
          %v5996 = vunpack.c.h.b16 %v3306
          %v5997 = vunpack.c.l.b16 %v3307
          %v5998 = vunpack.c.h.b16 %v3307
          %v5999 = vunpack.c.l.b16 %v3308
          %v6000 = vunpack.c.h.b16 %v3308
          %v6001 = vunpack.c.l.b16 %v3309
          %v6002 = vunpack.c.h.b16 %v3309
          %v6003 = vunpack.c.l.b16 %v3310
          %v6004 = vunpack.c.h.b16 %v3310
          %v6005 = vunpack.c.l.b16 %v3311
          %v6006 = vunpack.c.h.b16 %v3311
          %v6007 = vunpack.c.l.b16 %v3312
          %v6008 = vunpack.c.h.b16 %v3312
          %v6009 = vunpack.c.l.b16 %v3313
          %v6010 = vunpack.c.h.b16 %v3313
          %v6011 = vunpack.c.l.b16 %v3314
          %v6012 = vunpack.c.h.b16 %v3314
          %v6013 = vunpack.c.l.b16 %v3315
          %v6014 = vunpack.c.h.b16 %v3315
          %v6015 = vunpack.c.l.b16 %v3316
          %v6016 = vunpack.c.h.b16 %v3316
          %v6017 = vunpack.c.l.b16 %v3317
          %v6018 = vunpack.c.h.b16 %v3317
          %v6019 = vunpack.c.l.b16 %v3318
          %v6020 = vunpack.c.h.b16 %v3318
          %v6021 = vunpack.c.l.b16 %v3319
          %v6022 = vunpack.c.h.b16 %v3319
          %v6023 = vunpack.c.l.b16 %v3320
          %v6024 = vunpack.c.h.b16 %v3320
          %v6025 = vunpack.c.l.b16 %v3321
          %v6026 = vunpack.c.h.b16 %v3321
          %v6027 = vunpack.c.l.b16 %v3322
          %v6028 = vunpack.c.h.b16 %v3322
          %v6029 = vunpack.c.l.b16 %v3323
          %v6030 = vunpack.c.h.b16 %v3323
          %v6031 = vunpack.c.l.b16 %v3324
          %v6032 = vunpack.c.h.b16 %v3324
          %v6033 = vunpack.c.l.b16 %v3325
          %v6034 = vunpack.c.h.b16 %v3325
          %v6035 = vunpack.c.l.b16 %v3326
          %v6036 = vunpack.c.h.b16 %v3326
          %v6037 = vunpack.c.l.b16 %v3327
          %v6038 = vunpack.c.h.b16 %v3327
          %v6039 = vunpack.c.l.b16 %v3328
          %v6040 = vunpack.c.h.b16 %v3328
          %v6041 = vunpack.c.l.b16 %v3329
          %v6042 = vunpack.c.h.b16 %v3329
          %v6043 = vunpack.c.l.b16 %v3330
          %v6044 = vunpack.c.h.b16 %v3330
          %v6045 = vunpack.c.l.b16 %v3331
          %v6046 = vunpack.c.h.b16 %v3331
          %v6047 = vunpack.c.l.b16 %v3332
          %v6048 = vunpack.c.h.b16 %v3332
          %v6049 = vunpack.c.l.b16 %v3333
          %v6050 = vunpack.c.h.b16 %v3333
          %v6051 = vunpack.c.l.b16 %v3334
          %v6052 = vunpack.c.h.b16 %v3334
          %v6053 = vunpack.c.l.b16 %v3335
          %v6054 = vunpack.c.h.b16 %v3335
          %v6055 = vunpack.c.l.b16 %v3336
          %v6056 = vunpack.c.h.b16 %v3336
          %v6057 = vunpack.c.l.b16 %v3337
          %v6058 = vunpack.c.h.b16 %v3337
          %v6059 = vunpack.c.l.b16 %v3338
          %v6060 = vunpack.c.h.b16 %v3338
          %v6061 = vunpack.c.l.b16 %v3339
          %v6062 = vunpack.c.h.b16 %v3339
          %v6063 = vunpack.c.l.b16 %v3340
          %v6064 = vunpack.c.h.b16 %v3340
          %v6065 = vunpack.c.l.b16 %v3341
          %v6066 = vunpack.c.h.b16 %v3341
          %v6067 = vunpack.c.l.b16 %v3342
          %v6068 = vunpack.c.h.b16 %v3342
          %v6069 = vunpack.c.l.b16 %v3343
          %v6070 = vunpack.c.h.b16 %v3343
          %v6071 = vunpack.c.l.b16 %v3344
          %v6072 = vunpack.c.h.b16 %v3344
          %v6073 = vunpack.c.l.b16 %v3345
          %v6074 = vunpack.c.h.b16 %v3345
          %v6075 = vunpack.c.l.b16 %v3346
          %v6076 = vunpack.c.h.b16 %v3346
          %v6077 = vunpack.c.l.b16 %v3347
          %v6078 = vunpack.c.h.b16 %v3347
          %v6079 = vunpack.c.l.b16 %v3348
          %v6080 = vunpack.c.h.b16 %v3348
          %v6081 = vunpack.c.l.b16 %v3349
          %v6082 = vunpack.c.h.b16 %v3349
          %v6083 = vunpack.c.l.b16 %v3350
          %v6084 = vunpack.c.h.b16 %v3350
          %v6085 = vunpack.c.l.b16 %v3351
          %v6086 = vunpack.c.h.b16 %v3351
          %v6087 = vunpack.c.l.b16 %v3352
          %v6088 = vunpack.c.h.b16 %v3352
          %v6089 = vunpack.c.l.b16 %v3353
          %v6090 = vunpack.c.h.b16 %v3353
          %v6091 = vunpack.c.l.b16 %v3354
          %v6092 = vunpack.c.h.b16 %v3354
          %v6093 = vunpack.c.l.b16 %v3355
          %v6094 = vunpack.c.h.b16 %v3355
          %v6095 = vunpack.c.l.b16 %v3356
          %v6096 = vunpack.c.h.b16 %v3356
          %v6097 = vunpack.c.l.b16 %v3357
          %v6098 = vunpack.c.h.b16 %v3357
          %v6099 = vunpack.c.l.b16 %v3358
          %v6100 = vunpack.c.h.b16 %v3358
          %v6101 = vunpack.c.l.b16 %v3359
          %v6102 = vunpack.c.h.b16 %v3359
          %v6103 = vunpack.c.l.b16 %v3360
          %v6104 = vunpack.c.h.b16 %v3360
          %v6105 = vunpack.c.l.b16 %v3361
          %v6106 = vunpack.c.h.b16 %v3361
          %v6107 = vunpack.c.l.b16 %v3362
          %v6108 = vunpack.c.h.b16 %v3362
          %v6109 = vunpack.c.l.b16 %v3363
          %v6110 = vunpack.c.h.b16 %v3363
          %v6111 = vunpack.c.l.b16 %v3364
          %v6112 = vunpack.c.h.b16 %v3364
          %v6113 = vunpack.c.l.b16 %v3365
          %v6114 = vunpack.c.h.b16 %v3365
          %v6115 = vunpack.c.l.b16 %v3366
          %v6116 = vunpack.c.h.b16 %v3366
          %v6117 = vunpack.c.l.b16 %v3367
          %v6118 = vunpack.c.h.b16 %v3367
          %v6119 = vunpack.c.l.b16 %v3368
          %v6120 = vunpack.c.h.b16 %v3368
          %v6121 = vunpack.c.l.b16 %v3369
          %v6122 = vunpack.c.h.b16 %v3369
          %v6123 = vunpack.c.l.b16 %v3370
          %v6124 = vunpack.c.h.b16 %v3370
          %v6125 = vunpack.c.l.b16 %v3371
          %v6126 = vunpack.c.h.b16 %v3371
          %v6127 = vunpack.c.l.b16 %v3372
          %v6128 = vunpack.c.h.b16 %v3372
          %v6129 = vunpack.c.l.b16 %v3373
          %v6130 = vunpack.c.h.b16 %v3373
          %v6131 = vunpack.c.l.b16 %v3374
          %v6132 = vunpack.c.h.b16 %v3374
          %v6133 = vunpack.c.l.b16 %v3375
          %v6134 = vunpack.c.h.b16 %v3375
          %v6135 = vunpack.c.l.b16 %v3376
          %v6136 = vunpack.c.h.b16 %v3376
          %v6137 = vunpack.c.l.b16 %v3377
          %v6138 = vunpack.c.h.b16 %v3377
          %v6139 = vunpack.c.l.b16 %v3378
          %v6140 = vunpack.c.h.b16 %v3378
          %v6141 = vunpack.c.l.b16 %v3379
          %v6142 = vunpack.c.h.b16 %v3379
          %v6143 = vunpack.c.l.b16 %v3380
          %v6144 = vunpack.c.h.b16 %v3380
          %v6145 = vunpack.c.l.b16 %v3381
          %v6146 = vunpack.c.h.b16 %v3381
          %v6147 = vunpack.c.l.b16 %v3382
          %v6148 = vunpack.c.h.b16 %v3382
          %v6149 = vunpack.c.l.b16 %v3383
          %v6150 = vunpack.c.h.b16 %v3383
          %v6151 = vunpack.c.l.b16 %v3384
          %v6152 = vunpack.c.h.b16 %v3384
          %v6153 = vunpack.c.l.b16 %v3385
          %v6154 = vunpack.c.h.b16 %v3385
          %v6155 = vunpack.c.l.b16 %v3386
          %v6156 = vunpack.c.h.b16 %v3386
          %v6157 = vunpack.c.l.b16 %v3387
          %v6158 = vunpack.c.h.b16 %v3387
          %v6159 = vunpack.c.l.b16 %v3388
          %v6160 = vunpack.c.h.b16 %v3388
          %v6161 = vunpack.c.l.b16 %v3389
          %v6162 = vunpack.c.h.b16 %v3389
          %v6163 = vunpack.c.l.b16 %v3390
          %v6164 = vunpack.c.h.b16 %v3390
          %v6165 = vunpack.c.l.b16 %v3391
          %v6166 = vunpack.c.h.b16 %v3391
          %v6167 = vunpack.c.l.b16 %v3392
          %v6168 = vunpack.c.h.b16 %v3392
          %v6169 = vunpack.c.l.b16 %v3393
          %v6170 = vunpack.c.h.b16 %v3393
          %v6171 = vunpack.c.l.b16 %v3394
          %v6172 = vunpack.c.h.b16 %v3394
          %v6173 = vunpack.c.l.b16 %v3395
          %v6174 = vunpack.c.h.b16 %v3395
          %v6175 = vunpack.c.l.b16 %v3396
          %v6176 = vunpack.c.h.b16 %v3396
          %v6177 = vunpack.c.l.b16 %v3397
          %v6178 = vunpack.c.h.b16 %v3397
          %v6179 = vunpack.c.l.b16 %v3398
          %v6180 = vunpack.c.h.b16 %v3398
          %v6181 = vunpack.c.l.b16 %v3399
          %v6182 = vunpack.c.h.b16 %v3399
          %v6183 = vunpack.c.l.b16 %v3400
          %v6184 = vunpack.c.h.b16 %v3400
          %v6185 = vunpack.c.l.b16 %v3401
          %v6186 = vunpack.c.h.b16 %v3401
          %v6187 = vunpack.c.l.b16 %v3402
          %v6188 = vunpack.c.h.b16 %v3402
          %v6189 = vunpack.c.l.b16 %v3403
          %v6190 = vunpack.c.h.b16 %v3403
          %v6191 = vunpack.c.l.b16 %v3404
          %v6192 = vunpack.c.h.b16 %v3404
          %v6193 = vunpack.c.l.b16 %v3405
          %v6194 = vunpack.c.h.b16 %v3405
          %v6195 = vunpack.c.l.b16 %v3406
          %v6196 = vunpack.c.h.b16 %v3406
          %v6197 = vunpack.c.l.b16 %v3407
          %v6198 = vunpack.c.h.b16 %v3407
          %v6199 = vunpack.c.l.b16 %v3408
          %v6200 = vunpack.c.h.b16 %v3408
          %v6201 = vunpack.c.l.b16 %v3409
          %v6202 = vunpack.c.h.b16 %v3409
          %v6203 = vunpack.c.l.b16 %v3410
          %v6204 = vunpack.c.h.b16 %v3410
          %v6205 = vunpack.c.l.b16 %v3411
          %v6206 = vunpack.c.h.b16 %v3411
          %v6207 = vunpack.c.l.b16 %v3412
          %v6208 = vunpack.c.h.b16 %v3412
          %v6209 = vunpack.c.l.b16 %v3413
          %v6210 = vunpack.c.h.b16 %v3413
          %v6211 = vunpack.c.l.b16 %v3414
          %v6212 = vunpack.c.h.b16 %v3414
          %v6213 = vunpack.c.l.b16 %v3415
          %v6214 = vunpack.c.h.b16 %v3415
          %v6215 = vunpack.c.l.b16 %v3416
          %v6216 = vunpack.c.h.b16 %v3416
          %v6217 = vunpack.c.l.b16 %v3417
          %v6218 = vunpack.c.h.b16 %v3417
          %v6219 = vunpack.c.l.b16 %v3418
          %v6220 = vunpack.c.h.b16 %v3418
          %v6221 = vunpack.c.l.b16 %v3419
          %v6222 = vunpack.c.h.b16 %v3419
          %v6223 = vunpack.c.l.b16 %v3420
          %v6224 = vunpack.c.h.b16 %v3420
          %v6225 = vunpack.c.l.b16 %v3421
          %v6226 = vunpack.c.h.b16 %v3421
          %v6227 = vunpack.c.l.b16 %v3422
          %v6228 = vunpack.c.h.b16 %v3422
          %v6229 = vunpack.c.l.b16 %v3423
          %v6230 = vunpack.c.h.b16 %v3423
          %v6231 = vunpack.c.l.b16 %v3424
          %v6232 = vunpack.c.h.b16 %v3424
          %v6233 = vunpack.c.l.b16 %v3425
          %v6234 = vunpack.c.h.b16 %v3425
          %v6235 = vunpack.c.l.b16 %v3426
          %v6236 = vunpack.c.h.b16 %v3426
          %v6237 = vunpack.c.l.b16 %v3427
          %v6238 = vunpack.c.h.b16 %v3427
          %v6239 = vunpack.c.l.b16 %v3428
          %v6240 = vunpack.c.h.b16 %v3428
          %v6241 = vunpack.c.l.b16 %v3429
          %v6242 = vunpack.c.h.b16 %v3429
          %v6243 = vunpack.c.l.b16 %v3430
          %v6244 = vunpack.c.h.b16 %v3430
          %v6245 = vunpack.c.l.b16 %v3431
          %v6246 = vunpack.c.h.b16 %v3431
          %v6247 = vunpack.c.l.b16 %v3432
          %v6248 = vunpack.c.h.b16 %v3432
          %v6249 = vunpack.c.l.b16 %v3433
          %v6250 = vunpack.c.h.b16 %v3433
          %v6251 = vunpack.c.l.b16 %v3434
          %v6252 = vunpack.c.h.b16 %v3434
          %v6253 = vunpack.c.l.b16 %v3435
          %v6254 = vunpack.c.h.b16 %v3435
          %v6255 = vunpack.c.l.b16 %v3436
          %v6256 = vunpack.c.h.b16 %v3436
          %v6257 = vunpack.c.l.b16 %v3437
          %v6258 = vunpack.c.h.b16 %v3437
          %v6259 = vunpack.c.l.b16 %v3438
          %v6260 = vunpack.c.h.b16 %v3438
          %v6261 = vunpack.c.l.b16 %v3439
          %v6262 = vunpack.c.h.b16 %v3439
          %v6263 = vunpack.c.l.b16 %v3440
          %v6264 = vunpack.c.h.b16 %v3440
          %v6265 = vunpack.c.l.b16 %v3441
          %v6266 = vunpack.c.h.b16 %v3441
          %v6267 = vunpack.c.l.b16 %v3442
          %v6268 = vunpack.c.h.b16 %v3442
          %v6269 = vunpack.c.l.b16 %v3443
          %v6270 = vunpack.c.h.b16 %v3443
          %v6271 = vunpack.c.l.b16 %v3444
          %v6272 = vunpack.c.h.b16 %v3444
          %v6273 = vunpack.c.l.b16 %v3445
          %v6274 = vunpack.c.h.b16 %v3445
          %v6275 = vunpack.c.l.b16 %v3446
          %v6276 = vunpack.c.h.b16 %v3446
          %v6277 = vunpack.c.l.b16 %v3447
          %v6278 = vunpack.c.h.b16 %v3447
          %v6279 = vunpack.c.l.b16 %v3448
          %v6280 = vunpack.c.h.b16 %v3448
          %v6281 = vunpack.c.l.b16 %v3449
          %v6282 = vunpack.c.h.b16 %v3449
          %v6283 = vunpack.c.l.b16 %v3450
          %v6284 = vunpack.c.h.b16 %v3450
          %v6285 = vunpack.c.l.b16 %v3451
          %v6286 = vunpack.c.h.b16 %v3451
          %v6287 = vunpack.c.l.b16 %v3452
          %v6288 = vunpack.c.h.b16 %v3452
          %v6289 = vunpack.c.l.b16 %v3453
          %v6290 = vunpack.c.h.b16 %v3453
          %v6291 = vunpack.c.l.b16 %v3454
          %v6292 = vunpack.c.h.b16 %v3454
          %v6293 = vunpack.c.l.b16 %v3455
          %v6294 = vunpack.c.h.b16 %v3455
          %v6295 = vunpack.c.l.b16 %v3456
          %v6296 = vunpack.c.h.b16 %v3456
          %v6297 = vunpack.c.l.b16 %v3457
          %v6298 = vunpack.c.h.b16 %v3457
          %v6299 = vunpack.c.l.b16 %v3458
          %v6300 = vunpack.c.h.b16 %v3458
          %v6301 = vunpack.c.l.b16 %v3459
          %v6302 = vunpack.c.h.b16 %v3459
          %v6303 = vunpack.c.l.b16 %v3460
          %v6304 = vunpack.c.h.b16 %v3460
          %v6305 = vunpack.c.l.b16 %v3461
          %v6306 = vunpack.c.h.b16 %v3461
          %v6307 = vunpack.c.l.b16 %v3462
          %v6308 = vunpack.c.h.b16 %v3462
          %v6309 = vunpack.c.l.b16 %v3463
          %v6310 = vunpack.c.h.b16 %v3463
          %v6311 = vunpack.c.l.b16 %v3464
          %v6312 = vunpack.c.h.b16 %v3464
          %v6313 = vunpack.c.l.b16 %v3465
          %v6314 = vunpack.c.h.b16 %v3465
          %v6315 = vunpack.c.l.b16 %v3466
          %v6316 = vunpack.c.h.b16 %v3466
          %v6317 = vunpack.c.l.b16 %v3467
          %v6318 = vunpack.c.h.b16 %v3467
          %v6319 = vunpack.c.l.b16 %v3468
          %v6320 = vunpack.c.h.b16 %v3468
          %v6321 = vunpack.c.l.b16 %v3469
          %v6322 = vunpack.c.h.b16 %v3469
          %v6323 = vunpack.c.l.b16 %v3470
          %v6324 = vunpack.c.h.b16 %v3470
          %v6325 = vunpack.c.l.b16 %v3471
          %v6326 = vunpack.c.h.b16 %v3471
          %v6327 = vunpack.c.l.b16 %v3472
          %v6328 = vunpack.c.h.b16 %v3472
          %v6329 = vunpack.c.l.b16 %v3473
          %v6330 = vunpack.c.h.b16 %v3473
          %v6331 = vunpack.c.l.b16 %v3474
          %v6332 = vunpack.c.h.b16 %v3474
          %v6333 = vunpack.c.l.b16 %v3475
          %v6334 = vunpack.c.h.b16 %v3475
          %v6335 = vunpack.c.l.b16 %v3476
          %v6336 = vunpack.c.h.b16 %v3476
          %v6337 = vunpack.c.l.b16 %v3477
          %v6338 = vunpack.c.h.b16 %v3477
          %v6339 = vunpack.c.l.b16 %v3478
          %v6340 = vunpack.c.h.b16 %v3478
          %v6341 = vunpack.c.l.b16 %v3479
          %v6342 = vunpack.c.h.b16 %v3479
          %v6343 = vunpack.c.l.b16 %v3480
          %v6344 = vunpack.c.h.b16 %v3480
          %v6345 = vunpack.c.l.b16 %v3481
          %v6346 = vunpack.c.h.b16 %v3481
          %v6347 = vunpack.c.l.b16 %v3482
          %v6348 = vunpack.c.h.b16 %v3482
          %v6349 = vunpack.c.l.b16 %v3483
          %v6350 = vunpack.c.h.b16 %v3483
          %v6351 = vunpack.c.l.b16 %v3484
          %v6352 = vunpack.c.h.b16 %v3484
          %v6353 = vunpack.c.l.b16 %v3485
          %v6354 = vunpack.c.h.b16 %v3485
          %v6355 = vunpack.c.l.b16 %v3486
          %v6356 = vunpack.c.h.b16 %v3486
          %v6357 = vunpack.c.l.b16 %v3487
          %v6358 = vunpack.c.h.b16 %v3487
          %v6359 = vunpack.c.l.b16 %v3488
          %v6360 = vunpack.c.h.b16 %v3488
          %v6361 = vunpack.c.l.b16 %v3489
          %v6362 = vunpack.c.h.b16 %v3489
          %v6363 = vunpack.c.l.b16 %v3490
          %v6364 = vunpack.c.h.b16 %v3490
          %v6365 = vunpack.c.l.b16 %v3491
          %v6366 = vunpack.c.h.b16 %v3491
          %v6367 = vunpack.c.l.b16 %v3492
          %v6368 = vunpack.c.h.b16 %v3492
          %v6369 = vunpack.c.l.b16 %v3493
          %v6370 = vunpack.c.h.b16 %v3493
          %v6371 = vunpack.c.l.b16 %v3494
          %v6372 = vunpack.c.h.b16 %v3494
          %v6373 = vunpack.c.l.b16 %v3495
          %v6374 = vunpack.c.h.b16 %v3495
          %v6375 = vunpack.c.l.b16 %v3496
          %v6376 = vunpack.c.h.b16 %v3496
          %v6377 = vpack.c.b16 %v4465, %v4457
          %v6378 = vpack.c.b16 %v4466, %v4458
          %v6379 = vpack.c.b16 %v4467, %v4459
          %v6380 = vpack.c.b16 %v4468, %v4460
          %v6381 = vpack.c.b16 %v4469, %v4461
          %v6382 = vpack.c.b16 %v4470, %v4462
          %v6383 = vpack.c.b16 %v4471, %v4463
          %v6384 = vpack.c.b16 %v4472, %v4464
          %v6385 = vpack.c.b16 %v4481, %v4473
          %v6386 = vpack.c.b16 %v4482, %v4474
          %v6387 = vpack.c.b16 %v4483, %v4475
          %v6388 = vpack.c.b16 %v4484, %v4476
          %v6389 = vpack.c.b16 %v4485, %v4477
          %v6390 = vpack.c.b16 %v4486, %v4478
          %v6391 = vpack.c.b16 %v4487, %v4479
          %v6392 = vpack.c.b16 %v4488, %v4480
          %v6393 = vpack.c.b16 %v4497, %v4489
          %v6394 = vpack.c.b16 %v4498, %v4490
          %v6395 = vpack.c.b16 %v4499, %v4491
          %v6396 = vpack.c.b16 %v4500, %v4492
          %v6397 = vpack.c.b16 %v4501, %v4493
          %v6398 = vpack.c.b16 %v4502, %v4494
          %v6399 = vpack.c.b16 %v4503, %v4495
          %v6400 = vpack.c.b16 %v4504, %v4496
          %v6401 = vpack.c.b16 %v4513, %v4505
          %v6402 = vpack.c.b16 %v4514, %v4506
          %v6403 = vpack.c.b16 %v4515, %v4507
          %v6404 = vpack.c.b16 %v4516, %v4508
          %v6405 = vpack.c.b16 %v4517, %v4509
          %v6406 = vpack.c.b16 %v4518, %v4510
          %v6407 = vpack.c.b16 %v4519, %v4511
          %v6408 = vpack.c.b16 %v4520, %v4512
          %v6409 = vpack.c.b16 %v4529, %v4521
          %v6410 = vpack.c.b16 %v4530, %v4522
          %v6411 = vpack.c.b16 %v4531, %v4523
          %v6412 = vpack.c.b16 %v4532, %v4524
          %v6413 = vpack.c.b16 %v4533, %v4525
          %v6414 = vpack.c.b16 %v4534, %v4526
          %v6415 = vpack.c.b16 %v4535, %v4527
          %v6416 = vpack.c.b16 %v4536, %v4528
          %v6417 = vpack.c.b16 %v4545, %v4537
          %v6418 = vpack.c.b16 %v4546, %v4538
          %v6419 = vpack.c.b16 %v4547, %v4539
          %v6420 = vpack.c.b16 %v4548, %v4540
          %v6421 = vpack.c.b16 %v4549, %v4541
          %v6422 = vpack.c.b16 %v4550, %v4542
          %v6423 = vpack.c.b16 %v4551, %v4543
          %v6424 = vpack.c.b16 %v4552, %v4544
          %v6425 = vpack.c.b16 %v4561, %v4553
          %v6426 = vpack.c.b16 %v4562, %v4554
          %v6427 = vpack.c.b16 %v4563, %v4555
          %v6428 = vpack.c.b16 %v4564, %v4556
          %v6429 = vpack.c.b16 %v4565, %v4557
          %v6430 = vpack.c.b16 %v4566, %v4558
          %v6431 = vpack.c.b16 %v4567, %v4559
          %v6432 = vpack.c.b16 %v4568, %v4560
          %v6433 = vpack.c.b16 %v4577, %v4569
          %v6434 = vpack.c.b16 %v4578, %v4570
          %v6435 = vpack.c.b16 %v4579, %v4571
          %v6436 = vpack.c.b16 %v4580, %v4572
          %v6437 = vpack.c.b16 %v4581, %v4573
          %v6438 = vpack.c.b16 %v4582, %v4574
          %v6439 = vpack.c.b16 %v4583, %v4575
          %v6440 = vpack.c.b16 %v4584, %v4576
          %v6441 = vpack.c.b16 %v4593, %v4585
          %v6442 = vpack.c.b16 %v4594, %v4586
          %v6443 = vpack.c.b16 %v4595, %v4587
          %v6444 = vpack.c.b16 %v4596, %v4588
          %v6445 = vpack.c.b16 %v4597, %v4589
          %v6446 = vpack.c.b16 %v4598, %v4590
          %v6447 = vpack.c.b16 %v4599, %v4591
          %v6448 = vpack.c.b16 %v4600, %v4592
          %v6449 = vpack.c.b16 %v4609, %v4601
          %v6450 = vpack.c.b16 %v4610, %v4602
          %v6451 = vpack.c.b16 %v4611, %v4603
          %v6452 = vpack.c.b16 %v4612, %v4604
          %v6453 = vpack.c.b16 %v4613, %v4605
          %v6454 = vpack.c.b16 %v4614, %v4606
          %v6455 = vpack.c.b16 %v4615, %v4607
          %v6456 = vpack.c.b16 %v4616, %v4608
          %v6457 = vpack.c.b16 %v4625, %v4617
          %v6458 = vpack.c.b16 %v4626, %v4618
          %v6459 = vpack.c.b16 %v4627, %v4619
          %v6460 = vpack.c.b16 %v4628, %v4620
          %v6461 = vpack.c.b16 %v4629, %v4621
          %v6462 = vpack.c.b16 %v4630, %v4622
          %v6463 = vpack.c.b16 %v4631, %v4623
          %v6464 = vpack.c.b16 %v4632, %v4624
          %v6465 = vpack.c.b16 %v4641, %v4633
          %v6466 = vpack.c.b16 %v4642, %v4634
          %v6467 = vpack.c.b16 %v4643, %v4635
          %v6468 = vpack.c.b16 %v4644, %v4636
          %v6469 = vpack.c.b16 %v4645, %v4637
          %v6470 = vpack.c.b16 %v4646, %v4638
          %v6471 = vpack.c.b16 %v4647, %v4639
          %v6472 = vpack.c.b16 %v4648, %v4640
          %v6473 = vpack.c.b16 %v4657, %v4649
          %v6474 = vpack.c.b16 %v4658, %v4650
          %v6475 = vpack.c.b16 %v4659, %v4651
          %v6476 = vpack.c.b16 %v4660, %v4652
          %v6477 = vpack.c.b16 %v4661, %v4653
          %v6478 = vpack.c.b16 %v4662, %v4654
          %v6479 = vpack.c.b16 %v4663, %v4655
          %v6480 = vpack.c.b16 %v4664, %v4656
          %v6481 = vpack.c.b16 %v4673, %v4665
          %v6482 = vpack.c.b16 %v4674, %v4666
          %v6483 = vpack.c.b16 %v4675, %v4667
          %v6484 = vpack.c.b16 %v4676, %v4668
          %v6485 = vpack.c.b16 %v4677, %v4669
          %v6486 = vpack.c.b16 %v4678, %v4670
          %v6487 = vpack.c.b16 %v4679, %v4671
          %v6488 = vpack.c.b16 %v4680, %v4672
          %v6489 = vpack.c.b16 %v4689, %v4681
          %v6490 = vpack.c.b16 %v4690, %v4682
          %v6491 = vpack.c.b16 %v4691, %v4683
          %v6492 = vpack.c.b16 %v4692, %v4684
          %v6493 = vpack.c.b16 %v4693, %v4685
          %v6494 = vpack.c.b16 %v4694, %v4686
          %v6495 = vpack.c.b16 %v4695, %v4687
          %v6496 = vpack.c.b16 %v4696, %v4688
          %v6497 = vpack.c.b16 %v4705, %v4697
          %v6498 = vpack.c.b16 %v4706, %v4698
          %v6499 = vpack.c.b16 %v4707, %v4699
          %v6500 = vpack.c.b16 %v4708, %v4700
          %v6501 = vpack.c.b16 %v4709, %v4701
          %v6502 = vpack.c.b16 %v4710, %v4702
          %v6503 = vpack.c.b16 %v4711, %v4703
          %v6504 = vpack.c.b16 %v4712, %v4704
          %v6505 = vpack.c.b16 %v4721, %v4713
          %v6506 = vpack.c.b16 %v4722, %v4714
          %v6507 = vpack.c.b16 %v4723, %v4715
          %v6508 = vpack.c.b16 %v4724, %v4716
          %v6509 = vpack.c.b16 %v4725, %v4717
          %v6510 = vpack.c.b16 %v4726, %v4718
          %v6511 = vpack.c.b16 %v4727, %v4719
          %v6512 = vpack.c.b16 %v4728, %v4720
          %v6513 = vpack.c.b16 %v4737, %v4729
          %v6514 = vpack.c.b16 %v4738, %v4730
          %v6515 = vpack.c.b16 %v4739, %v4731
          %v6516 = vpack.c.b16 %v4740, %v4732
          %v6517 = vpack.c.b16 %v4741, %v4733
          %v6518 = vpack.c.b16 %v4742, %v4734
          %v6519 = vpack.c.b16 %v4743, %v4735
          %v6520 = vpack.c.b16 %v4744, %v4736
          %v6521 = vpack.c.b16 %v4753, %v4745
          %v6522 = vpack.c.b16 %v4754, %v4746
          %v6523 = vpack.c.b16 %v4755, %v4747
          %v6524 = vpack.c.b16 %v4756, %v4748
          %v6525 = vpack.c.b16 %v4757, %v4749
          %v6526 = vpack.c.b16 %v4758, %v4750
          %v6527 = vpack.c.b16 %v4759, %v4751
          %v6528 = vpack.c.b16 %v4760, %v4752
          %v6529 = vpack.c.b16 %v4769, %v4761
          %v6530 = vpack.c.b16 %v4770, %v4762
          %v6531 = vpack.c.b16 %v4771, %v4763
          %v6532 = vpack.c.b16 %v4772, %v4764
          %v6533 = vpack.c.b16 %v4773, %v4765
          %v6534 = vpack.c.b16 %v4774, %v4766
          %v6535 = vpack.c.b16 %v4775, %v4767
          %v6536 = vpack.c.b16 %v4776, %v4768
          %v6537 = vpack.c.b16 %v4785, %v4777
          %v6538 = vpack.c.b16 %v4786, %v4778
          %v6539 = vpack.c.b16 %v4787, %v4779
          %v6540 = vpack.c.b16 %v4788, %v4780
          %v6541 = vpack.c.b16 %v4789, %v4781
          %v6542 = vpack.c.b16 %v4790, %v4782
          %v6543 = vpack.c.b16 %v4791, %v4783
          %v6544 = vpack.c.b16 %v4792, %v4784
          %v6545 = vpack.c.b16 %v4801, %v4793
          %v6546 = vpack.c.b16 %v4802, %v4794
          %v6547 = vpack.c.b16 %v4803, %v4795
          %v6548 = vpack.c.b16 %v4804, %v4796
          %v6549 = vpack.c.b16 %v4805, %v4797
          %v6550 = vpack.c.b16 %v4806, %v4798
          %v6551 = vpack.c.b16 %v4807, %v4799
          %v6552 = vpack.c.b16 %v4808, %v4800
          %v6553 = vpack.c.b16 %v4817, %v4809
          %v6554 = vpack.c.b16 %v4818, %v4810
          %v6555 = vpack.c.b16 %v4819, %v4811
          %v6556 = vpack.c.b16 %v4820, %v4812
          %v6557 = vpack.c.b16 %v4821, %v4813
          %v6558 = vpack.c.b16 %v4822, %v4814
          %v6559 = vpack.c.b16 %v4823, %v4815
          %v6560 = vpack.c.b16 %v4824, %v4816
          %v6561 = vpack.c.b16 %v4833, %v4825
          %v6562 = vpack.c.b16 %v4834, %v4826
          %v6563 = vpack.c.b16 %v4835, %v4827
          %v6564 = vpack.c.b16 %v4836, %v4828
          %v6565 = vpack.c.b16 %v4837, %v4829
          %v6566 = vpack.c.b16 %v4838, %v4830
          %v6567 = vpack.c.b16 %v4839, %v4831
          %v6568 = vpack.c.b16 %v4840, %v4832
          %v6569 = vpack.c.b16 %v4849, %v4841
          %v6570 = vpack.c.b16 %v4850, %v4842
          %v6571 = vpack.c.b16 %v4851, %v4843
          %v6572 = vpack.c.b16 %v4852, %v4844
          %v6573 = vpack.c.b16 %v4853, %v4845
          %v6574 = vpack.c.b16 %v4854, %v4846
          %v6575 = vpack.c.b16 %v4855, %v4847
          %v6576 = vpack.c.b16 %v4856, %v4848
          %v6577 = vpack.c.b16 %v4865, %v4857
          %v6578 = vpack.c.b16 %v4866, %v4858
          %v6579 = vpack.c.b16 %v4867, %v4859
          %v6580 = vpack.c.b16 %v4868, %v4860
          %v6581 = vpack.c.b16 %v4869, %v4861
          %v6582 = vpack.c.b16 %v4870, %v4862
          %v6583 = vpack.c.b16 %v4871, %v4863
          %v6584 = vpack.c.b16 %v4872, %v4864
          %v6585 = vpack.c.b16 %v4881, %v4873
          %v6586 = vpack.c.b16 %v4882, %v4874
          %v6587 = vpack.c.b16 %v4883, %v4875
          %v6588 = vpack.c.b16 %v4884, %v4876
          %v6589 = vpack.c.b16 %v4885, %v4877
          %v6590 = vpack.c.b16 %v4886, %v4878
          %v6591 = vpack.c.b16 %v4887, %v4879
          %v6592 = vpack.c.b16 %v4888, %v4880
          %v6593 = vpack.c.b16 %v4897, %v4889
          %v6594 = vpack.c.b16 %v4898, %v4890
          %v6595 = vpack.c.b16 %v4899, %v4891
          %v6596 = vpack.c.b16 %v4900, %v4892
          %v6597 = vpack.c.b16 %v4901, %v4893
          %v6598 = vpack.c.b16 %v4902, %v4894
          %v6599 = vpack.c.b16 %v4903, %v4895
          %v6600 = vpack.c.b16 %v4904, %v4896
          %v6601 = vpack.c.b16 %v4913, %v4905
          %v6602 = vpack.c.b16 %v4914, %v4906
          %v6603 = vpack.c.b16 %v4915, %v4907
          %v6604 = vpack.c.b16 %v4916, %v4908
          %v6605 = vpack.c.b16 %v4917, %v4909
          %v6606 = vpack.c.b16 %v4918, %v4910
          %v6607 = vpack.c.b16 %v4919, %v4911
          %v6608 = vpack.c.b16 %v4920, %v4912
          %v6609 = vpack.c.b16 %v4929, %v4921
          %v6610 = vpack.c.b16 %v4930, %v4922
          %v6611 = vpack.c.b16 %v4931, %v4923
          %v6612 = vpack.c.b16 %v4932, %v4924
          %v6613 = vpack.c.b16 %v4933, %v4925
          %v6614 = vpack.c.b16 %v4934, %v4926
          %v6615 = vpack.c.b16 %v4935, %v4927
          %v6616 = vpack.c.b16 %v4936, %v4928
          %v6617 = vpack.c.b16 %v4945, %v4937
          %v6618 = vpack.c.b16 %v4946, %v4938
          %v6619 = vpack.c.b16 %v4947, %v4939
          %v6620 = vpack.c.b16 %v4948, %v4940
          %v6621 = vpack.c.b16 %v4949, %v4941
          %v6622 = vpack.c.b16 %v4950, %v4942
          %v6623 = vpack.c.b16 %v4951, %v4943
          %v6624 = vpack.c.b16 %v4952, %v4944
          %v6625 = vpack.c.b16 %v4961, %v4953
          %v6626 = vpack.c.b16 %v4962, %v4954
          %v6627 = vpack.c.b16 %v4963, %v4955
          %v6628 = vpack.c.b16 %v4964, %v4956
          %v6629 = vpack.c.b16 %v4965, %v4957
          %v6630 = vpack.c.b16 %v4966, %v4958
          %v6631 = vpack.c.b16 %v4967, %v4959
          %v6632 = vpack.c.b16 %v4968, %v4960
          %v6633 = vpack.c.b16 %v4977, %v4969
          %v6634 = vpack.c.b16 %v4978, %v4970
          %v6635 = vpack.c.b16 %v4979, %v4971
          %v6636 = vpack.c.b16 %v4980, %v4972
          %v6637 = vpack.c.b16 %v4981, %v4973
          %v6638 = vpack.c.b16 %v4982, %v4974
          %v6639 = vpack.c.b16 %v4983, %v4975
          %v6640 = vpack.c.b16 %v4984, %v4976
          %v6641 = vpack.c.b16 %v4993, %v4985
          %v6642 = vpack.c.b16 %v4994, %v4986
          %v6643 = vpack.c.b16 %v4995, %v4987
          %v6644 = vpack.c.b16 %v4996, %v4988
          %v6645 = vpack.c.b16 %v4997, %v4989
          %v6646 = vpack.c.b16 %v4998, %v4990
          %v6647 = vpack.c.b16 %v4999, %v4991
          %v6648 = vpack.c.b16 %v5000, %v4992
          %v6649 = vpack.c.b16 %v5009, %v5001
          %v6650 = vpack.c.b16 %v5010, %v5002
          %v6651 = vpack.c.b16 %v5011, %v5003
          %v6652 = vpack.c.b16 %v5012, %v5004
          %v6653 = vpack.c.b16 %v5013, %v5005
          %v6654 = vpack.c.b16 %v5014, %v5006
          %v6655 = vpack.c.b16 %v5015, %v5007
          %v6656 = vpack.c.b16 %v5016, %v5008
          %v6657 = vpack.c.b16 %v5025, %v5017
          %v6658 = vpack.c.b16 %v5026, %v5018
          %v6659 = vpack.c.b16 %v5027, %v5019
          %v6660 = vpack.c.b16 %v5028, %v5020
          %v6661 = vpack.c.b16 %v5029, %v5021
          %v6662 = vpack.c.b16 %v5030, %v5022
          %v6663 = vpack.c.b16 %v5031, %v5023
          %v6664 = vpack.c.b16 %v5032, %v5024
          %v6665 = vpack.c.b16 %v5041, %v5033
          %v6666 = vpack.c.b16 %v5042, %v5034
          %v6667 = vpack.c.b16 %v5043, %v5035
          %v6668 = vpack.c.b16 %v5044, %v5036
          %v6669 = vpack.c.b16 %v5045, %v5037
          %v6670 = vpack.c.b16 %v5046, %v5038
          %v6671 = vpack.c.b16 %v5047, %v5039
          %v6672 = vpack.c.b16 %v5048, %v5040
          %v6673 = vpack.c.b16 %v5057, %v5049
          %v6674 = vpack.c.b16 %v5058, %v5050
          %v6675 = vpack.c.b16 %v5059, %v5051
          %v6676 = vpack.c.b16 %v5060, %v5052
          %v6677 = vpack.c.b16 %v5061, %v5053
          %v6678 = vpack.c.b16 %v5062, %v5054
          %v6679 = vpack.c.b16 %v5063, %v5055
          %v6680 = vpack.c.b16 %v5064, %v5056
          %v6681 = vpack.c.b16 %v5073, %v5065
          %v6682 = vpack.c.b16 %v5074, %v5066
          %v6683 = vpack.c.b16 %v5075, %v5067
          %v6684 = vpack.c.b16 %v5076, %v5068
          %v6685 = vpack.c.b16 %v5077, %v5069
          %v6686 = vpack.c.b16 %v5078, %v5070
          %v6687 = vpack.c.b16 %v5079, %v5071
          %v6688 = vpack.c.b16 %v5080, %v5072
          %v6689 = vpack.c.b16 %v5089, %v5081
          %v6690 = vpack.c.b16 %v5090, %v5082
          %v6691 = vpack.c.b16 %v5091, %v5083
          %v6692 = vpack.c.b16 %v5092, %v5084
          %v6693 = vpack.c.b16 %v5093, %v5085
          %v6694 = vpack.c.b16 %v5094, %v5086
          %v6695 = vpack.c.b16 %v5095, %v5087
          %v6696 = vpack.c.b16 %v5096, %v5088
          %v6697 = vpack.c.b16 %v5105, %v5097
          %v6698 = vpack.c.b16 %v5106, %v5098
          %v6699 = vpack.c.b16 %v5107, %v5099
          %v6700 = vpack.c.b16 %v5108, %v5100
          %v6701 = vpack.c.b16 %v5109, %v5101
          %v6702 = vpack.c.b16 %v5110, %v5102
          %v6703 = vpack.c.b16 %v5111, %v5103
          %v6704 = vpack.c.b16 %v5112, %v5104
          %v6705 = vpack.c.b16 %v5121, %v5113
          %v6706 = vpack.c.b16 %v5122, %v5114
          %v6707 = vpack.c.b16 %v5123, %v5115
          %v6708 = vpack.c.b16 %v5124, %v5116
          %v6709 = vpack.c.b16 %v5125, %v5117
          %v6710 = vpack.c.b16 %v5126, %v5118
          %v6711 = vpack.c.b16 %v5127, %v5119
          %v6712 = vpack.c.b16 %v5128, %v5120
          %v6713 = vpack.c.b16 %v5137, %v5129
          %v6714 = vpack.c.b16 %v5138, %v5130
          %v6715 = vpack.c.b16 %v5139, %v5131
          %v6716 = vpack.c.b16 %v5140, %v5132
          %v6717 = vpack.c.b16 %v5141, %v5133
          %v6718 = vpack.c.b16 %v5142, %v5134
          %v6719 = vpack.c.b16 %v5143, %v5135
          %v6720 = vpack.c.b16 %v5144, %v5136
          %v6721 = vpack.c.b16 %v5153, %v5145
          %v6722 = vpack.c.b16 %v5154, %v5146
          %v6723 = vpack.c.b16 %v5155, %v5147
          %v6724 = vpack.c.b16 %v5156, %v5148
          %v6725 = vpack.c.b16 %v5157, %v5149
          %v6726 = vpack.c.b16 %v5158, %v5150
          %v6727 = vpack.c.b16 %v5159, %v5151
          %v6728 = vpack.c.b16 %v5160, %v5152
          %v6729 = vpack.c.b16 %v5169, %v5161
          %v6730 = vpack.c.b16 %v5170, %v5162
          %v6731 = vpack.c.b16 %v5171, %v5163
          %v6732 = vpack.c.b16 %v5172, %v5164
          %v6733 = vpack.c.b16 %v5173, %v5165
          %v6734 = vpack.c.b16 %v5174, %v5166
          %v6735 = vpack.c.b16 %v5175, %v5167
          %v6736 = vpack.c.b16 %v5176, %v5168
          %v6737 = vpack.c.b16 %v5185, %v5177
          %v6738 = vpack.c.b16 %v5186, %v5178
          %v6739 = vpack.c.b16 %v5187, %v5179
          %v6740 = vpack.c.b16 %v5188, %v5180
          %v6741 = vpack.c.b16 %v5189, %v5181
          %v6742 = vpack.c.b16 %v5190, %v5182
          %v6743 = vpack.c.b16 %v5191, %v5183
          %v6744 = vpack.c.b16 %v5192, %v5184
          %v6745 = vpack.c.b16 %v5201, %v5193
          %v6746 = vpack.c.b16 %v5202, %v5194
          %v6747 = vpack.c.b16 %v5203, %v5195
          %v6748 = vpack.c.b16 %v5204, %v5196
          %v6749 = vpack.c.b16 %v5205, %v5197
          %v6750 = vpack.c.b16 %v5206, %v5198
          %v6751 = vpack.c.b16 %v5207, %v5199
          %v6752 = vpack.c.b16 %v5208, %v5200
          %v6753 = vpack.c.b16 %v5217, %v5209
          %v6754 = vpack.c.b16 %v5218, %v5210
          %v6755 = vpack.c.b16 %v5219, %v5211
          %v6756 = vpack.c.b16 %v5220, %v5212
          %v6757 = vpack.c.b16 %v5221, %v5213
          %v6758 = vpack.c.b16 %v5222, %v5214
          %v6759 = vpack.c.b16 %v5223, %v5215
          %v6760 = vpack.c.b16 %v5224, %v5216
          %v6761 = vpack.c.b16 %v5233, %v5225
          %v6762 = vpack.c.b16 %v5234, %v5226
          %v6763 = vpack.c.b16 %v5235, %v5227
          %v6764 = vpack.c.b16 %v5236, %v5228
          %v6765 = vpack.c.b16 %v5237, %v5229
          %v6766 = vpack.c.b16 %v5238, %v5230
          %v6767 = vpack.c.b16 %v5239, %v5231
          %v6768 = vpack.c.b16 %v5240, %v5232
          %v6769 = vpack.c.b16 %v5249, %v5241
          %v6770 = vpack.c.b16 %v5250, %v5242
          %v6771 = vpack.c.b16 %v5251, %v5243
          %v6772 = vpack.c.b16 %v5252, %v5244
          %v6773 = vpack.c.b16 %v5253, %v5245
          %v6774 = vpack.c.b16 %v5254, %v5246
          %v6775 = vpack.c.b16 %v5255, %v5247
          %v6776 = vpack.c.b16 %v5256, %v5248
          %v6777 = vpack.c.b16 %v5265, %v5257
          %v6778 = vpack.c.b16 %v5266, %v5258
          %v6779 = vpack.c.b16 %v5267, %v5259
          %v6780 = vpack.c.b16 %v5268, %v5260
          %v6781 = vpack.c.b16 %v5269, %v5261
          %v6782 = vpack.c.b16 %v5270, %v5262
          %v6783 = vpack.c.b16 %v5271, %v5263
          %v6784 = vpack.c.b16 %v5272, %v5264
          %v6785 = vpack.c.b16 %v5281, %v5273
          %v6786 = vpack.c.b16 %v5282, %v5274
          %v6787 = vpack.c.b16 %v5283, %v5275
          %v6788 = vpack.c.b16 %v5284, %v5276
          %v6789 = vpack.c.b16 %v5285, %v5277
          %v6790 = vpack.c.b16 %v5286, %v5278
          %v6791 = vpack.c.b16 %v5287, %v5279
          %v6792 = vpack.c.b16 %v5288, %v5280
          %v6793 = vpack.c.b16 %v5297, %v5289
          %v6794 = vpack.c.b16 %v5298, %v5290
          %v6795 = vpack.c.b16 %v5299, %v5291
          %v6796 = vpack.c.b16 %v5300, %v5292
          %v6797 = vpack.c.b16 %v5301, %v5293
          %v6798 = vpack.c.b16 %v5302, %v5294
          %v6799 = vpack.c.b16 %v5303, %v5295
          %v6800 = vpack.c.b16 %v5304, %v5296
          %v6801 = vpack.c.b16 %v5313, %v5305
          %v6802 = vpack.c.b16 %v5314, %v5306
          %v6803 = vpack.c.b16 %v5315, %v5307
          %v6804 = vpack.c.b16 %v5316, %v5308
          %v6805 = vpack.c.b16 %v5317, %v5309
          %v6806 = vpack.c.b16 %v5318, %v5310
          %v6807 = vpack.c.b16 %v5319, %v5311
          %v6808 = vpack.c.b16 %v5320, %v5312
          %v6809 = vpack.c.b16 %v5329, %v5321
          %v6810 = vpack.c.b16 %v5330, %v5322
          %v6811 = vpack.c.b16 %v5331, %v5323
          %v6812 = vpack.c.b16 %v5332, %v5324
          %v6813 = vpack.c.b16 %v5333, %v5325
          %v6814 = vpack.c.b16 %v5334, %v5326
          %v6815 = vpack.c.b16 %v5335, %v5327
          %v6816 = vpack.c.b16 %v5336, %v5328
          %v6817 = vpack.c.b16 %v5345, %v5337
          %v6818 = vpack.c.b16 %v5346, %v5338
          %v6819 = vpack.c.b16 %v5347, %v5339
          %v6820 = vpack.c.b16 %v5348, %v5340
          %v6821 = vpack.c.b16 %v5349, %v5341
          %v6822 = vpack.c.b16 %v5350, %v5342
          %v6823 = vpack.c.b16 %v5351, %v5343
          %v6824 = vpack.c.b16 %v5352, %v5344
          %v6825 = vpack.c.b16 %v5361, %v5353
          %v6826 = vpack.c.b16 %v5362, %v5354
          %v6827 = vpack.c.b16 %v5363, %v5355
          %v6828 = vpack.c.b16 %v5364, %v5356
          %v6829 = vpack.c.b16 %v5365, %v5357
          %v6830 = vpack.c.b16 %v5366, %v5358
          %v6831 = vpack.c.b16 %v5367, %v5359
          %v6832 = vpack.c.b16 %v5368, %v5360
          %v6833 = vpack.c.b16 %v5377, %v5369
          %v6834 = vpack.c.b16 %v5378, %v5370
          %v6835 = vpack.c.b16 %v5379, %v5371
          %v6836 = vpack.c.b16 %v5380, %v5372
          %v6837 = vpack.c.b16 %v5381, %v5373
          %v6838 = vpack.c.b16 %v5382, %v5374
          %v6839 = vpack.c.b16 %v5383, %v5375
          %v6840 = vpack.c.b16 %v5384, %v5376
          %v6841 = vpack.c.b16 %v5393, %v5385
          %v6842 = vpack.c.b16 %v5394, %v5386
          %v6843 = vpack.c.b16 %v5395, %v5387
          %v6844 = vpack.c.b16 %v5396, %v5388
          %v6845 = vpack.c.b16 %v5397, %v5389
          %v6846 = vpack.c.b16 %v5398, %v5390
          %v6847 = vpack.c.b16 %v5399, %v5391
          %v6848 = vpack.c.b16 %v5400, %v5392
          %v6849 = vpack.c.b16 %v5409, %v5401
          %v6850 = vpack.c.b16 %v5410, %v5402
          %v6851 = vpack.c.b16 %v5411, %v5403
          %v6852 = vpack.c.b16 %v5412, %v5404
          %v6853 = vpack.c.b16 %v5413, %v5405
          %v6854 = vpack.c.b16 %v5414, %v5406
          %v6855 = vpack.c.b16 %v5415, %v5407
          %v6856 = vpack.c.b16 %v5416, %v5408
          %v6857 = vpack.c.b16 %v5425, %v5417
          %v6858 = vpack.c.b16 %v5426, %v5418
          %v6859 = vpack.c.b16 %v5427, %v5419
          %v6860 = vpack.c.b16 %v5428, %v5420
          %v6861 = vpack.c.b16 %v5429, %v5421
          %v6862 = vpack.c.b16 %v5430, %v5422
          %v6863 = vpack.c.b16 %v5431, %v5423
          %v6864 = vpack.c.b16 %v5432, %v5424
          %v6865 = vpack.c.b16 %v5441, %v5433
          %v6866 = vpack.c.b16 %v5442, %v5434
          %v6867 = vpack.c.b16 %v5443, %v5435
          %v6868 = vpack.c.b16 %v5444, %v5436
          %v6869 = vpack.c.b16 %v5445, %v5437
          %v6870 = vpack.c.b16 %v5446, %v5438
          %v6871 = vpack.c.b16 %v5447, %v5439
          %v6872 = vpack.c.b16 %v5448, %v5440
          %v6873 = vpack.c.b16 %v5457, %v5449
          %v6874 = vpack.c.b16 %v5458, %v5450
          %v6875 = vpack.c.b16 %v5459, %v5451
          %v6876 = vpack.c.b16 %v5460, %v5452
          %v6877 = vpack.c.b16 %v5461, %v5453
          %v6878 = vpack.c.b16 %v5462, %v5454
          %v6879 = vpack.c.b16 %v5463, %v5455
          %v6880 = vpack.c.b16 %v5464, %v5456
          %v6881 = vpack.c.b16 %v5473, %v5465
          %v6882 = vpack.c.b16 %v5474, %v5466
          %v6883 = vpack.c.b16 %v5475, %v5467
          %v6884 = vpack.c.b16 %v5476, %v5468
          %v6885 = vpack.c.b16 %v5477, %v5469
          %v6886 = vpack.c.b16 %v5478, %v5470
          %v6887 = vpack.c.b16 %v5479, %v5471
          %v6888 = vpack.c.b16 %v5480, %v5472
          %v6889 = vpack.c.b16 %v5489, %v5481
          %v6890 = vpack.c.b16 %v5490, %v5482
          %v6891 = vpack.c.b16 %v5491, %v5483
          %v6892 = vpack.c.b16 %v5492, %v5484
          %v6893 = vpack.c.b16 %v5493, %v5485
          %v6894 = vpack.c.b16 %v5494, %v5486
          %v6895 = vpack.c.b16 %v5495, %v5487
          %v6896 = vpack.c.b16 %v5496, %v5488
          %v6897 = vpack.c.b16 %v5505, %v5497
          %v6898 = vpack.c.b16 %v5506, %v5498
          %v6899 = vpack.c.b16 %v5507, %v5499
          %v6900 = vpack.c.b16 %v5508, %v5500
          %v6901 = vpack.c.b16 %v5509, %v5501
          %v6902 = vpack.c.b16 %v5510, %v5502
          %v6903 = vpack.c.b16 %v5511, %v5503
          %v6904 = vpack.c.b16 %v5512, %v5504
          %v6905 = vpack.c.b16 %v5521, %v5513
          %v6906 = vpack.c.b16 %v5522, %v5514
          %v6907 = vpack.c.b16 %v5523, %v5515
          %v6908 = vpack.c.b16 %v5524, %v5516
          %v6909 = vpack.c.b16 %v5525, %v5517
          %v6910 = vpack.c.b16 %v5526, %v5518
          %v6911 = vpack.c.b16 %v5527, %v5519
          %v6912 = vpack.c.b16 %v5528, %v5520
          %v6913 = vpack.c.b16 %v5537, %v5529
          %v6914 = vpack.c.b16 %v5538, %v5530
          %v6915 = vpack.c.b16 %v5539, %v5531
          %v6916 = vpack.c.b16 %v5540, %v5532
          %v6917 = vpack.c.b16 %v5541, %v5533
          %v6918 = vpack.c.b16 %v5542, %v5534
          %v6919 = vpack.c.b16 %v5543, %v5535
          %v6920 = vpack.c.b16 %v5544, %v5536
          %v6921 = vpack.c.b16 %v5553, %v5545
          %v6922 = vpack.c.b16 %v5554, %v5546
          %v6923 = vpack.c.b16 %v5555, %v5547
          %v6924 = vpack.c.b16 %v5556, %v5548
          %v6925 = vpack.c.b16 %v5557, %v5549
          %v6926 = vpack.c.b16 %v5558, %v5550
          %v6927 = vpack.c.b16 %v5559, %v5551
          %v6928 = vpack.c.b16 %v5560, %v5552
          %v6929 = vpack.c.b16 %v5569, %v5561
          %v6930 = vpack.c.b16 %v5570, %v5562
          %v6931 = vpack.c.b16 %v5571, %v5563
          %v6932 = vpack.c.b16 %v5572, %v5564
          %v6933 = vpack.c.b16 %v5573, %v5565
          %v6934 = vpack.c.b16 %v5574, %v5566
          %v6935 = vpack.c.b16 %v5575, %v5567
          %v6936 = vpack.c.b16 %v5576, %v5568
          %v6937 = vpack.c.b16 %v5585, %v5577
          %v6938 = vpack.c.b16 %v5586, %v5578
          %v6939 = vpack.c.b16 %v5587, %v5579
          %v6940 = vpack.c.b16 %v5588, %v5580
          %v6941 = vpack.c.b16 %v5589, %v5581
          %v6942 = vpack.c.b16 %v5590, %v5582
          %v6943 = vpack.c.b16 %v5591, %v5583
          %v6944 = vpack.c.b16 %v5592, %v5584
          %v6945 = vpack.c.b16 %v5601, %v5593
          %v6946 = vpack.c.b16 %v5602, %v5594
          %v6947 = vpack.c.b16 %v5603, %v5595
          %v6948 = vpack.c.b16 %v5604, %v5596
          %v6949 = vpack.c.b16 %v5605, %v5597
          %v6950 = vpack.c.b16 %v5606, %v5598
          %v6951 = vpack.c.b16 %v5607, %v5599
          %v6952 = vpack.c.b16 %v5608, %v5600
          %v6953 = vpack.c.b16 %v5617, %v5609
          %v6954 = vpack.c.b16 %v5618, %v5610
          %v6955 = vpack.c.b16 %v5619, %v5611
          %v6956 = vpack.c.b16 %v5620, %v5612
          %v6957 = vpack.c.b16 %v5621, %v5613
          %v6958 = vpack.c.b16 %v5622, %v5614
          %v6959 = vpack.c.b16 %v5623, %v5615
          %v6960 = vpack.c.b16 %v5624, %v5616
          %v6961 = vpack.c.b16 %v5633, %v5625
          %v6962 = vpack.c.b16 %v5634, %v5626
          %v6963 = vpack.c.b16 %v5635, %v5627
          %v6964 = vpack.c.b16 %v5636, %v5628
          %v6965 = vpack.c.b16 %v5637, %v5629
          %v6966 = vpack.c.b16 %v5638, %v5630
          %v6967 = vpack.c.b16 %v5639, %v5631
          %v6968 = vpack.c.b16 %v5640, %v5632
          %v6969 = vpack.c.b16 %v5649, %v5641
          %v6970 = vpack.c.b16 %v5650, %v5642
          %v6971 = vpack.c.b16 %v5651, %v5643
          %v6972 = vpack.c.b16 %v5652, %v5644
          %v6973 = vpack.c.b16 %v5653, %v5645
          %v6974 = vpack.c.b16 %v5654, %v5646
          %v6975 = vpack.c.b16 %v5655, %v5647
          %v6976 = vpack.c.b16 %v5656, %v5648
          %v6977 = vpack.c.b16 %v5665, %v5657
          %v6978 = vpack.c.b16 %v5666, %v5658
          %v6979 = vpack.c.b16 %v5667, %v5659
          %v6980 = vpack.c.b16 %v5668, %v5660
          %v6981 = vpack.c.b16 %v5669, %v5661
          %v6982 = vpack.c.b16 %v5670, %v5662
          %v6983 = vpack.c.b16 %v5671, %v5663
          %v6984 = vpack.c.b16 %v5672, %v5664
          %v6985 = vpack.c.b16 %v5681, %v5673
          %v6986 = vpack.c.b16 %v5682, %v5674
          %v6987 = vpack.c.b16 %v5683, %v5675
          %v6988 = vpack.c.b16 %v5684, %v5676
          %v6989 = vpack.c.b16 %v5685, %v5677
          %v6990 = vpack.c.b16 %v5686, %v5678
          %v6991 = vpack.c.b16 %v5687, %v5679
          %v6992 = vpack.c.b16 %v5688, %v5680
          %v6993 = vpack.c.b16 %v5697, %v5689
          %v6994 = vpack.c.b16 %v5698, %v5690
          %v6995 = vpack.c.b16 %v5699, %v5691
          %v6996 = vpack.c.b16 %v5700, %v5692
          %v6997 = vpack.c.b16 %v5701, %v5693
          %v6998 = vpack.c.b16 %v5702, %v5694
          %v6999 = vpack.c.b16 %v5703, %v5695
          %v7000 = vpack.c.b16 %v5704, %v5696
          %v7001 = vpack.c.b16 %v5713, %v5705
          %v7002 = vpack.c.b16 %v5714, %v5706
          %v7003 = vpack.c.b16 %v5715, %v5707
          %v7004 = vpack.c.b16 %v5716, %v5708
          %v7005 = vpack.c.b16 %v5717, %v5709
          %v7006 = vpack.c.b16 %v5718, %v5710
          %v7007 = vpack.c.b16 %v5719, %v5711
          %v7008 = vpack.c.b16 %v5720, %v5712
          %v7009 = vpack.c.b16 %v5729, %v5721
          %v7010 = vpack.c.b16 %v5730, %v5722
          %v7011 = vpack.c.b16 %v5731, %v5723
          %v7012 = vpack.c.b16 %v5732, %v5724
          %v7013 = vpack.c.b16 %v5733, %v5725
          %v7014 = vpack.c.b16 %v5734, %v5726
          %v7015 = vpack.c.b16 %v5735, %v5727
          %v7016 = vpack.c.b16 %v5736, %v5728
          %v7017 = vpack.c.b16 %v5745, %v5737
          %v7018 = vpack.c.b16 %v5746, %v5738
          %v7019 = vpack.c.b16 %v5747, %v5739
          %v7020 = vpack.c.b16 %v5748, %v5740
          %v7021 = vpack.c.b16 %v5749, %v5741
          %v7022 = vpack.c.b16 %v5750, %v5742
          %v7023 = vpack.c.b16 %v5751, %v5743
          %v7024 = vpack.c.b16 %v5752, %v5744
          %v7025 = vpack.c.b16 %v5761, %v5753
          %v7026 = vpack.c.b16 %v5762, %v5754
          %v7027 = vpack.c.b16 %v5763, %v5755
          %v7028 = vpack.c.b16 %v5764, %v5756
          %v7029 = vpack.c.b16 %v5765, %v5757
          %v7030 = vpack.c.b16 %v5766, %v5758
          %v7031 = vpack.c.b16 %v5767, %v5759
          %v7032 = vpack.c.b16 %v5768, %v5760
          %v7033 = vpack.c.b16 %v5777, %v5769
          %v7034 = vpack.c.b16 %v5778, %v5770
          %v7035 = vpack.c.b16 %v5779, %v5771
          %v7036 = vpack.c.b16 %v5780, %v5772
          %v7037 = vpack.c.b16 %v5781, %v5773
          %v7038 = vpack.c.b16 %v5782, %v5774
          %v7039 = vpack.c.b16 %v5783, %v5775
          %v7040 = vpack.c.b16 %v5784, %v5776
          %v7041 = vpack.c.b16 %v5793, %v5785
          %v7042 = vpack.c.b16 %v5794, %v5786
          %v7043 = vpack.c.b16 %v5795, %v5787
          %v7044 = vpack.c.b16 %v5796, %v5788
          %v7045 = vpack.c.b16 %v5797, %v5789
          %v7046 = vpack.c.b16 %v5798, %v5790
          %v7047 = vpack.c.b16 %v5799, %v5791
          %v7048 = vpack.c.b16 %v5800, %v5792
          %v7049 = vpack.c.b16 %v5809, %v5801
          %v7050 = vpack.c.b16 %v5810, %v5802
          %v7051 = vpack.c.b16 %v5811, %v5803
          %v7052 = vpack.c.b16 %v5812, %v5804
          %v7053 = vpack.c.b16 %v5813, %v5805
          %v7054 = vpack.c.b16 %v5814, %v5806
          %v7055 = vpack.c.b16 %v5815, %v5807
          %v7056 = vpack.c.b16 %v5816, %v5808
          %v7057 = vpack.c.b16 %v5825, %v5817
          %v7058 = vpack.c.b16 %v5826, %v5818
          %v7059 = vpack.c.b16 %v5827, %v5819
          %v7060 = vpack.c.b16 %v5828, %v5820
          %v7061 = vpack.c.b16 %v5829, %v5821
          %v7062 = vpack.c.b16 %v5830, %v5822
          %v7063 = vpack.c.b16 %v5831, %v5823
          %v7064 = vpack.c.b16 %v5832, %v5824
          %v7065 = vpack.c.b16 %v5841, %v5833
          %v7066 = vpack.c.b16 %v5842, %v5834
          %v7067 = vpack.c.b16 %v5843, %v5835
          %v7068 = vpack.c.b16 %v5844, %v5836
          %v7069 = vpack.c.b16 %v5845, %v5837
          %v7070 = vpack.c.b16 %v5846, %v5838
          %v7071 = vpack.c.b16 %v5847, %v5839
          %v7072 = vpack.c.b16 %v5848, %v5840
          %v7073 = vpack.c.b16 %v5857, %v5849
          %v7074 = vpack.c.b16 %v5858, %v5850
          %v7075 = vpack.c.b16 %v5859, %v5851
          %v7076 = vpack.c.b16 %v5860, %v5852
          %v7077 = vpack.c.b16 %v5861, %v5853
          %v7078 = vpack.c.b16 %v5862, %v5854
          %v7079 = vpack.c.b16 %v5863, %v5855
          %v7080 = vpack.c.b16 %v5864, %v5856
          %v7081 = vpack.c.b16 %v5873, %v5865
          %v7082 = vpack.c.b16 %v5874, %v5866
          %v7083 = vpack.c.b16 %v5875, %v5867
          %v7084 = vpack.c.b16 %v5876, %v5868
          %v7085 = vpack.c.b16 %v5877, %v5869
          %v7086 = vpack.c.b16 %v5878, %v5870
          %v7087 = vpack.c.b16 %v5879, %v5871
          %v7088 = vpack.c.b16 %v5880, %v5872
          %v7089 = vpack.c.b16 %v5889, %v5881
          %v7090 = vpack.c.b16 %v5890, %v5882
          %v7091 = vpack.c.b16 %v5891, %v5883
          %v7092 = vpack.c.b16 %v5892, %v5884
          %v7093 = vpack.c.b16 %v5893, %v5885
          %v7094 = vpack.c.b16 %v5894, %v5886
          %v7095 = vpack.c.b16 %v5895, %v5887
          %v7096 = vpack.c.b16 %v5896, %v5888
          %v7097 = vpack.c.b16 %v5905, %v5897
          %v7098 = vpack.c.b16 %v5906, %v5898
          %v7099 = vpack.c.b16 %v5907, %v5899
          %v7100 = vpack.c.b16 %v5908, %v5900
          %v7101 = vpack.c.b16 %v5909, %v5901
          %v7102 = vpack.c.b16 %v5910, %v5902
          %v7103 = vpack.c.b16 %v5911, %v5903
          %v7104 = vpack.c.b16 %v5912, %v5904
          %v7105 = vpack.c.b16 %v5921, %v5913
          %v7106 = vpack.c.b16 %v5922, %v5914
          %v7107 = vpack.c.b16 %v5923, %v5915
          %v7108 = vpack.c.b16 %v5924, %v5916
          %v7109 = vpack.c.b16 %v5925, %v5917
          %v7110 = vpack.c.b16 %v5926, %v5918
          %v7111 = vpack.c.b16 %v5927, %v5919
          %v7112 = vpack.c.b16 %v5928, %v5920
          %v7113 = vpack.c.b16 %v5937, %v5929
          %v7114 = vpack.c.b16 %v5938, %v5930
          %v7115 = vpack.c.b16 %v5939, %v5931
          %v7116 = vpack.c.b16 %v5940, %v5932
          %v7117 = vpack.c.b16 %v5941, %v5933
          %v7118 = vpack.c.b16 %v5942, %v5934
          %v7119 = vpack.c.b16 %v5943, %v5935
          %v7120 = vpack.c.b16 %v5944, %v5936
          %v7121 = vpack.c.b16 %v5953, %v5945
          %v7122 = vpack.c.b16 %v5954, %v5946
          %v7123 = vpack.c.b16 %v5955, %v5947
          %v7124 = vpack.c.b16 %v5956, %v5948
          %v7125 = vpack.c.b16 %v5957, %v5949
          %v7126 = vpack.c.b16 %v5958, %v5950
          %v7127 = vpack.c.b16 %v5959, %v5951
          %v7128 = vpack.c.b16 %v5960, %v5952
          %v7129 = vpack.c.b16 %v5969, %v5961
          %v7130 = vpack.c.b16 %v5970, %v5962
          %v7131 = vpack.c.b16 %v5971, %v5963
          %v7132 = vpack.c.b16 %v5972, %v5964
          %v7133 = vpack.c.b16 %v5973, %v5965
          %v7134 = vpack.c.b16 %v5974, %v5966
          %v7135 = vpack.c.b16 %v5975, %v5967
          %v7136 = vpack.c.b16 %v5976, %v5968
          %v7137 = vpack.c.b16 %v5985, %v5977
          %v7138 = vpack.c.b16 %v5986, %v5978
          %v7139 = vpack.c.b16 %v5987, %v5979
          %v7140 = vpack.c.b16 %v5988, %v5980
          %v7141 = vpack.c.b16 %v5989, %v5981
          %v7142 = vpack.c.b16 %v5990, %v5982
          %v7143 = vpack.c.b16 %v5991, %v5983
          %v7144 = vpack.c.b16 %v5992, %v5984
          %v7145 = vpack.c.b16 %v6001, %v5993
          %v7146 = vpack.c.b16 %v6002, %v5994
          %v7147 = vpack.c.b16 %v6003, %v5995
          %v7148 = vpack.c.b16 %v6004, %v5996
          %v7149 = vpack.c.b16 %v6005, %v5997
          %v7150 = vpack.c.b16 %v6006, %v5998
          %v7151 = vpack.c.b16 %v6007, %v5999
          %v7152 = vpack.c.b16 %v6008, %v6000
          %v7153 = vpack.c.b16 %v6017, %v6009
          %v7154 = vpack.c.b16 %v6018, %v6010
          %v7155 = vpack.c.b16 %v6019, %v6011
          %v7156 = vpack.c.b16 %v6020, %v6012
          %v7157 = vpack.c.b16 %v6021, %v6013
          %v7158 = vpack.c.b16 %v6022, %v6014
          %v7159 = vpack.c.b16 %v6023, %v6015
          %v7160 = vpack.c.b16 %v6024, %v6016
          %v7161 = vpack.c.b16 %v6033, %v6025
          %v7162 = vpack.c.b16 %v6034, %v6026
          %v7163 = vpack.c.b16 %v6035, %v6027
          %v7164 = vpack.c.b16 %v6036, %v6028
          %v7165 = vpack.c.b16 %v6037, %v6029
          %v7166 = vpack.c.b16 %v6038, %v6030
          %v7167 = vpack.c.b16 %v6039, %v6031
          %v7168 = vpack.c.b16 %v6040, %v6032
          %v7169 = vpack.c.b16 %v6049, %v6041
          %v7170 = vpack.c.b16 %v6050, %v6042
          %v7171 = vpack.c.b16 %v6051, %v6043
          %v7172 = vpack.c.b16 %v6052, %v6044
          %v7173 = vpack.c.b16 %v6053, %v6045
          %v7174 = vpack.c.b16 %v6054, %v6046
          %v7175 = vpack.c.b16 %v6055, %v6047
          %v7176 = vpack.c.b16 %v6056, %v6048
          %v7177 = vpack.c.b16 %v6065, %v6057
          %v7178 = vpack.c.b16 %v6066, %v6058
          %v7179 = vpack.c.b16 %v6067, %v6059
          %v7180 = vpack.c.b16 %v6068, %v6060
          %v7181 = vpack.c.b16 %v6069, %v6061
          %v7182 = vpack.c.b16 %v6070, %v6062
          %v7183 = vpack.c.b16 %v6071, %v6063
          %v7184 = vpack.c.b16 %v6072, %v6064
          %v7185 = vpack.c.b16 %v6081, %v6073
          %v7186 = vpack.c.b16 %v6082, %v6074
          %v7187 = vpack.c.b16 %v6083, %v6075
          %v7188 = vpack.c.b16 %v6084, %v6076
          %v7189 = vpack.c.b16 %v6085, %v6077
          %v7190 = vpack.c.b16 %v6086, %v6078
          %v7191 = vpack.c.b16 %v6087, %v6079
          %v7192 = vpack.c.b16 %v6088, %v6080
          %v7193 = vpack.c.b16 %v6097, %v6089
          %v7194 = vpack.c.b16 %v6098, %v6090
          %v7195 = vpack.c.b16 %v6099, %v6091
          %v7196 = vpack.c.b16 %v6100, %v6092
          %v7197 = vpack.c.b16 %v6101, %v6093
          %v7198 = vpack.c.b16 %v6102, %v6094
          %v7199 = vpack.c.b16 %v6103, %v6095
          %v7200 = vpack.c.b16 %v6104, %v6096
          %v7201 = vpack.c.b16 %v6113, %v6105
          %v7202 = vpack.c.b16 %v6114, %v6106
          %v7203 = vpack.c.b16 %v6115, %v6107
          %v7204 = vpack.c.b16 %v6116, %v6108
          %v7205 = vpack.c.b16 %v6117, %v6109
          %v7206 = vpack.c.b16 %v6118, %v6110
          %v7207 = vpack.c.b16 %v6119, %v6111
          %v7208 = vpack.c.b16 %v6120, %v6112
          %v7209 = vpack.c.b16 %v6129, %v6121
          %v7210 = vpack.c.b16 %v6130, %v6122
          %v7211 = vpack.c.b16 %v6131, %v6123
          %v7212 = vpack.c.b16 %v6132, %v6124
          %v7213 = vpack.c.b16 %v6133, %v6125
          %v7214 = vpack.c.b16 %v6134, %v6126
          %v7215 = vpack.c.b16 %v6135, %v6127
          %v7216 = vpack.c.b16 %v6136, %v6128
          %v7217 = vpack.c.b16 %v6145, %v6137
          %v7218 = vpack.c.b16 %v6146, %v6138
          %v7219 = vpack.c.b16 %v6147, %v6139
          %v7220 = vpack.c.b16 %v6148, %v6140
          %v7221 = vpack.c.b16 %v6149, %v6141
          %v7222 = vpack.c.b16 %v6150, %v6142
          %v7223 = vpack.c.b16 %v6151, %v6143
          %v7224 = vpack.c.b16 %v6152, %v6144
          %v7225 = vpack.c.b16 %v6161, %v6153
          %v7226 = vpack.c.b16 %v6162, %v6154
          %v7227 = vpack.c.b16 %v6163, %v6155
          %v7228 = vpack.c.b16 %v6164, %v6156
          %v7229 = vpack.c.b16 %v6165, %v6157
          %v7230 = vpack.c.b16 %v6166, %v6158
          %v7231 = vpack.c.b16 %v6167, %v6159
          %v7232 = vpack.c.b16 %v6168, %v6160
          %v7233 = vpack.c.b16 %v6177, %v6169
          %v7234 = vpack.c.b16 %v6178, %v6170
          %v7235 = vpack.c.b16 %v6179, %v6171
          %v7236 = vpack.c.b16 %v6180, %v6172
          %v7237 = vpack.c.b16 %v6181, %v6173
          %v7238 = vpack.c.b16 %v6182, %v6174
          %v7239 = vpack.c.b16 %v6183, %v6175
          %v7240 = vpack.c.b16 %v6184, %v6176
          %v7241 = vpack.c.b16 %v6193, %v6185
          %v7242 = vpack.c.b16 %v6194, %v6186
          %v7243 = vpack.c.b16 %v6195, %v6187
          %v7244 = vpack.c.b16 %v6196, %v6188
          %v7245 = vpack.c.b16 %v6197, %v6189
          %v7246 = vpack.c.b16 %v6198, %v6190
          %v7247 = vpack.c.b16 %v6199, %v6191
          %v7248 = vpack.c.b16 %v6200, %v6192
          %v7249 = vpack.c.b16 %v6209, %v6201
          %v7250 = vpack.c.b16 %v6210, %v6202
          %v7251 = vpack.c.b16 %v6211, %v6203
          %v7252 = vpack.c.b16 %v6212, %v6204
          %v7253 = vpack.c.b16 %v6213, %v6205
          %v7254 = vpack.c.b16 %v6214, %v6206
          %v7255 = vpack.c.b16 %v6215, %v6207
          %v7256 = vpack.c.b16 %v6216, %v6208
          %v7257 = vpack.c.b16 %v6225, %v6217
          %v7258 = vpack.c.b16 %v6226, %v6218
          %v7259 = vpack.c.b16 %v6227, %v6219
          %v7260 = vpack.c.b16 %v6228, %v6220
          %v7261 = vpack.c.b16 %v6229, %v6221
          %v7262 = vpack.c.b16 %v6230, %v6222
          %v7263 = vpack.c.b16 %v6231, %v6223
          %v7264 = vpack.c.b16 %v6232, %v6224
          %v7265 = vpack.c.b16 %v6241, %v6233
          %v7266 = vpack.c.b16 %v6242, %v6234
          %v7267 = vpack.c.b16 %v6243, %v6235
          %v7268 = vpack.c.b16 %v6244, %v6236
          %v7269 = vpack.c.b16 %v6245, %v6237
          %v7270 = vpack.c.b16 %v6246, %v6238
          %v7271 = vpack.c.b16 %v6247, %v6239
          %v7272 = vpack.c.b16 %v6248, %v6240
          %v7273 = vpack.c.b16 %v6257, %v6249
          %v7274 = vpack.c.b16 %v6258, %v6250
          %v7275 = vpack.c.b16 %v6259, %v6251
          %v7276 = vpack.c.b16 %v6260, %v6252
          %v7277 = vpack.c.b16 %v6261, %v6253
          %v7278 = vpack.c.b16 %v6262, %v6254
          %v7279 = vpack.c.b16 %v6263, %v6255
          %v7280 = vpack.c.b16 %v6264, %v6256
          %v7281 = vpack.c.b16 %v6273, %v6265
          %v7282 = vpack.c.b16 %v6274, %v6266
          %v7283 = vpack.c.b16 %v6275, %v6267
          %v7284 = vpack.c.b16 %v6276, %v6268
          %v7285 = vpack.c.b16 %v6277, %v6269
          %v7286 = vpack.c.b16 %v6278, %v6270
          %v7287 = vpack.c.b16 %v6279, %v6271
          %v7288 = vpack.c.b16 %v6280, %v6272
          %v7289 = vpack.c.b16 %v6289, %v6281
          %v7290 = vpack.c.b16 %v6290, %v6282
          %v7291 = vpack.c.b16 %v6291, %v6283
          %v7292 = vpack.c.b16 %v6292, %v6284
          %v7293 = vpack.c.b16 %v6293, %v6285
          %v7294 = vpack.c.b16 %v6294, %v6286
          %v7295 = vpack.c.b16 %v6295, %v6287
          %v7296 = vpack.c.b16 %v6296, %v6288
          %v7297 = vpack.c.b16 %v6305, %v6297
          %v7298 = vpack.c.b16 %v6306, %v6298
          %v7299 = vpack.c.b16 %v6307, %v6299
          %v7300 = vpack.c.b16 %v6308, %v6300
          %v7301 = vpack.c.b16 %v6309, %v6301
          %v7302 = vpack.c.b16 %v6310, %v6302
          %v7303 = vpack.c.b16 %v6311, %v6303
          %v7304 = vpack.c.b16 %v6312, %v6304
          %v7305 = vpack.c.b16 %v6321, %v6313
          %v7306 = vpack.c.b16 %v6322, %v6314
          %v7307 = vpack.c.b16 %v6323, %v6315
          %v7308 = vpack.c.b16 %v6324, %v6316
          %v7309 = vpack.c.b16 %v6325, %v6317
          %v7310 = vpack.c.b16 %v6326, %v6318
          %v7311 = vpack.c.b16 %v6327, %v6319
          %v7312 = vpack.c.b16 %v6328, %v6320
          %v7313 = vpack.c.b16 %v6337, %v6329
          %v7314 = vpack.c.b16 %v6338, %v6330
          %v7315 = vpack.c.b16 %v6339, %v6331
          %v7316 = vpack.c.b16 %v6340, %v6332
          %v7317 = vpack.c.b16 %v6341, %v6333
          %v7318 = vpack.c.b16 %v6342, %v6334
          %v7319 = vpack.c.b16 %v6343, %v6335
          %v7320 = vpack.c.b16 %v6344, %v6336
          %v7321 = vpack.c.b16 %v6353, %v6345
          %v7322 = vpack.c.b16 %v6354, %v6346
          %v7323 = vpack.c.b16 %v6355, %v6347
          %v7324 = vpack.c.b16 %v6356, %v6348
          %v7325 = vpack.c.b16 %v6357, %v6349
          %v7326 = vpack.c.b16 %v6358, %v6350
          %v7327 = vpack.c.b16 %v6359, %v6351
          %v7328 = vpack.c.b16 %v6360, %v6352
          %v7329 = vpack.c.b16 %v6369, %v6361
          %v7330 = vpack.c.b16 %v6370, %v6362
          %v7331 = vpack.c.b16 %v6371, %v6363
          %v7332 = vpack.c.b16 %v6372, %v6364
          %v7333 = vpack.c.b16 %v6373, %v6365
          %v7334 = vpack.c.b16 %v6374, %v6366
          %v7335 = vpack.c.b16 %v6375, %v6367
          %v7336 = vpack.c.b16 %v6376, %v6368
          %8297 = vmatprep.subr.bf16.mxu0 %v6378
          %8298 = vmatpush1.bf16.msra.mxu0 %v6377
          %8299 = vmatprep.subr.bf16.mxu0 %v6386
          %8300 = vmatpush1.bf16.msra.mxu0 %v6385
          %8301 = vmatprep.subr.bf16.mxu0 %v6394
          %8302 = vmatpush1.bf16.msra.mxu0 %v6393
          %8303 = vmatprep.subr.bf16.mxu0 %v6402
          %8304 = vmatpush1.bf16.msra.mxu0 %v6401
          %8305 = vmatprep.subr.bf16.mxu0 %v6410
          %8306 = vmatpush1.bf16.msra.mxu0 %v6409
          %8307 = vmatprep.subr.bf16.mxu0 %v6418
          %8308 = vmatpush1.bf16.msra.mxu0 %v6417
          %8309 = vmatprep.subr.bf16.mxu0 %v6426
          %8310 = vmatpush1.bf16.msra.mxu0 %v6425
          %8311 = vmatprep.subr.bf16.mxu0 %v6434
          %8312 = vmatpush1.bf16.msra.mxu0 %v6433
          %8313 = vmatprep.subr.bf16.mxu0 %v6442
          %8314 = vmatpush1.bf16.msra.mxu0 %v6441
          %8315 = vmatprep.subr.bf16.mxu0 %v6450
          %8316 = vmatpush1.bf16.msra.mxu0 %v6449
          %8317 = vmatprep.subr.bf16.mxu0 %v6458
          %8318 = vmatpush1.bf16.msra.mxu0 %v6457
          %8319 = vmatprep.subr.bf16.mxu0 %v6466
          %8320 = vmatpush1.bf16.msra.mxu0 %v6465
          %8321 = vmatprep.subr.bf16.mxu0 %v6474
          %8322 = vmatpush1.bf16.msra.mxu0 %v6473
          %8323 = vmatprep.subr.bf16.mxu0 %v6482
          %8324 = vmatpush1.bf16.msra.mxu0 %v6481
          %8325 = vmatprep.subr.bf16.mxu0 %v6490
          %8326 = vmatpush1.bf16.msra.mxu0 %v6489
          %8327 = vmatprep.subr.bf16.mxu0 %v6498
          %8328 = vmatpush1.bf16.msra.mxu0 %v6497
          %8329 = vmatprep.mubr.bf16.mxu0 %v2523
          %8330 = vmatmul.mubr.bf16.gmra.mrb[0].mxu0 %v2522
          %v8331 = vpop.f32.mrb[0].mxu0
          %v8332 = vadd.f32 0.0, %v8331
          %v8333 = vpop.f32.mrb[0].mxu0
          %v8334 = vadd.f32 0.0, %v8333
          %v8335 = vpop.f32.mrb[0].mxu0
          %v8336 = vpop.f32.mrb[0].mxu0
          %8337 = vdwg.mxu0
          %8338 = vmatprep.subr.bf16.mxu0 %v6506
          %8339 = vmatpush1.bf16.msra.mxu0 %v6505
          %8340 = vmatprep.subr.bf16.mxu0 %v6514
          %8341 = vmatpush1.bf16.msra.mxu0 %v6513
          %8342 = vmatprep.subr.bf16.mxu0 %v6522
          %8343 = vmatpush1.bf16.msra.mxu0 %v6521
          %8344 = vmatprep.subr.bf16.mxu0 %v6530
          %8345 = vmatpush1.bf16.msra.mxu0 %v6529
          %8346 = vmatprep.subr.bf16.mxu0 %v6538
          %8347 = vmatpush1.bf16.msra.mxu0 %v6537
          %8348 = vmatprep.subr.bf16.mxu0 %v6546
          %8349 = vmatpush1.bf16.msra.mxu0 %v6545
          %8350 = vmatprep.subr.bf16.mxu0 %v6554
          %8351 = vmatpush1.bf16.msra.mxu0 %v6553
          %8352 = vmatprep.subr.bf16.mxu0 %v6562
          %8353 = vmatpush1.bf16.msra.mxu0 %v6561
          %8354 = vmatprep.subr.bf16.mxu0 %v6570
          %8355 = vmatpush1.bf16.msra.mxu0 %v6569
          %8356 = vmatprep.subr.bf16.mxu0 %v6578
          %8357 = vmatpush1.bf16.msra.mxu0 %v6577
          %8358 = vmatprep.subr.bf16.mxu0 %v6586
          %8359 = vmatpush1.bf16.msra.mxu0 %v6585
          %8360 = vmatprep.subr.bf16.mxu0 %v6594
          %8361 = vmatpush1.bf16.msra.mxu0 %v6593
          %8362 = vmatprep.subr.bf16.mxu0 %v6602
          %8363 = vmatpush1.bf16.msra.mxu0 %v6601
          %8364 = vmatprep.subr.bf16.mxu0 %v6610
          %8365 = vmatpush1.bf16.msra.mxu0 %v6609
          %8366 = vmatprep.subr.bf16.mxu0 %v6618
          %8367 = vmatpush1.bf16.msra.mxu0 %v6617
          %8368 = vmatprep.subr.bf16.mxu0 %v6626
          %8369 = vmatpush1.bf16.msra.mxu0 %v6625
          %8370 = vmatprep.mubr.bf16.mxu0 %v2525
          %8371 = vmatmul.mubr.bf16.gmra.mrb[0].mxu0 %v2524
          %v8372 = vpop.f32.mrb[0].mxu0
          %v8373 = vadd.f32 %v8332, %v8372
          %v8374 = vpop.f32.mrb[0].mxu0
          %v8375 = vadd.f32 %v8334, %v8374
          %v8376 = vpop.f32.mrb[0].mxu0
          %v8377 = vpop.f32.mrb[0].mxu0
          %8378 = vdwg.mxu0
          %8379 = vmatprep.subr.bf16.mxu0 %v6634
          %8380 = vmatpush1.bf16.msra.mxu0 %v6633
          %8381 = vmatprep.subr.bf16.mxu0 %v6642
          %8382 = vmatpush1.bf16.msra.mxu0 %v6641
          %8383 = vmatprep.subr.bf16.mxu0 %v6650
          %8384 = vmatpush1.bf16.msra.mxu0 %v6649
          %8385 = vmatprep.subr.bf16.mxu0 %v6658
          %8386 = vmatpush1.bf16.msra.mxu0 %v6657
          %8387 = vmatprep.subr.bf16.mxu0 %v6666
          %8388 = vmatpush1.bf16.msra.mxu0 %v6665
          %8389 = vmatprep.subr.bf16.mxu0 %v6674
          %8390 = vmatpush1.bf16.msra.mxu0 %v6673
          %8391 = vmatprep.subr.bf16.mxu0 %v6682
          %8392 = vmatpush1.bf16.msra.mxu0 %v6681
          %8393 = vmatprep.subr.bf16.mxu0 %v6690
          %8394 = vmatpush1.bf16.msra.mxu0 %v6689
          %8395 = vmatprep.subr.bf16.mxu0 %v6698
          %8396 = vmatpush1.bf16.msra.mxu0 %v6697
          %8397 = vmatprep.subr.bf16.mxu0 %v6706
          %8398 = vmatpush1.bf16.msra.mxu0 %v6705
          %8399 = vmatprep.subr.bf16.mxu0 %v6714
          %8400 = vmatpush1.bf16.msra.mxu0 %v6713
          %8401 = vmatprep.subr.bf16.mxu0 %v6722
          %8402 = vmatpush1.bf16.msra.mxu0 %v6721
          %8403 = vmatprep.subr.bf16.mxu0 %v6730
          %8404 = vmatpush1.bf16.msra.mxu0 %v6729
          %8405 = vmatprep.subr.bf16.mxu0 %v6738
          %8406 = vmatpush1.bf16.msra.mxu0 %v6737
          %8407 = vmatprep.subr.bf16.mxu0 %v6746
          %8408 = vmatpush1.bf16.msra.mxu0 %v6745
          %8409 = vmatprep.subr.bf16.mxu0 %v6754
          %8410 = vmatpush1.bf16.msra.mxu0 %v6753
          %8411 = vmatprep.mubr.bf16.mxu0 %v2527
          %8412 = vmatmul.mubr.bf16.gmra.mrb[0].mxu0 %v2526
          %v8413 = vpop.f32.mrb[0].mxu0
          %v8414 = vadd.f32 %v8373, %v8413
          %v8415 = vpop.f32.mrb[0].mxu0
          %v8416 = vadd.f32 %v8375, %v8415
          %v8417 = vpop.f32.mrb[0].mxu0
          %v8418 = vpop.f32.mrb[0].mxu0
          %8419 = vdwg.mxu0
          %8420 = vmatprep.subr.bf16.mxu0 %v6762
          %8421 = vmatpush1.bf16.msra.mxu0 %v6761
          %8422 = vmatprep.subr.bf16.mxu0 %v6770
          %8423 = vmatpush1.bf16.msra.mxu0 %v6769
          %8424 = vmatprep.subr.bf16.mxu0 %v6778
          %8425 = vmatpush1.bf16.msra.mxu0 %v6777
          %8426 = vmatprep.subr.bf16.mxu0 %v6786
          %8427 = vmatpush1.bf16.msra.mxu0 %v6785
          %8428 = vmatprep.subr.bf16.mxu0 %v6794
          %8429 = vmatpush1.bf16.msra.mxu0 %v6793
          %8430 = vmatprep.subr.bf16.mxu0 %v6802
          %8431 = vmatpush1.bf16.msra.mxu0 %v6801
          %8432 = vmatprep.subr.bf16.mxu0 %v6810
          %8433 = vmatpush1.bf16.msra.mxu0 %v6809
          %8434 = vmatprep.subr.bf16.mxu0 %v6818
          %8435 = vmatpush1.bf16.msra.mxu0 %v6817
          %8436 = vmatprep.subr.bf16.mxu0 %v6826
          %8437 = vmatpush1.bf16.msra.mxu0 %v6825
          %8438 = vmatprep.subr.bf16.mxu0 %v6834
          %8439 = vmatpush1.bf16.msra.mxu0 %v6833
          %8440 = vmatprep.subr.bf16.mxu0 %v6842
          %8441 = vmatpush1.bf16.msra.mxu0 %v6841
          %8442 = vmatprep.subr.bf16.mxu0 %v6850
          %8443 = vmatpush1.bf16.msra.mxu0 %v6849
          %8444 = vmatprep.subr.bf16.mxu0 %v6858
          %8445 = vmatpush1.bf16.msra.mxu0 %v6857
          %8446 = vmatprep.subr.bf16.mxu0 %v6866
          %8447 = vmatpush1.bf16.msra.mxu0 %v6865
          %8448 = vmatprep.subr.bf16.mxu0 %v6874
          %8449 = vmatpush1.bf16.msra.mxu0 %v6873
          %8450 = vmatprep.subr.bf16.mxu0 %v6882
          %8451 = vmatpush1.bf16.msra.mxu0 %v6881
          %8452 = vmatprep.mubr.bf16.mxu0 %v2529
          %8453 = vmatmul.mubr.bf16.gmra.mrb[0].mxu0 %v2528
          %v8454 = vpop.f32.mrb[0].mxu0
          %v8455 = vadd.f32 %v8414, %v8454
          %v8456 = vpop.f32.mrb[0].mxu0
          %v8457 = vadd.f32 %v8416, %v8456
          %v8458 = vpop.f32.mrb[0].mxu0
          %v8459 = vpop.f32.mrb[0].mxu0
          %8460 = vdwg.mxu0
          %8461 = vmatprep.subr.bf16.mxu0 %v6890
          %8462 = vmatpush1.bf16.msra.mxu0 %v6889
          %8463 = vmatprep.subr.bf16.mxu0 %v6898
          %8464 = vmatpush1.bf16.msra.mxu0 %v6897
          %8465 = vmatprep.subr.bf16.mxu0 %v6906
          %8466 = vmatpush1.bf16.msra.mxu0 %v6905
          %8467 = vmatprep.subr.bf16.mxu0 %v6914
          %8468 = vmatpush1.bf16.msra.mxu0 %v6913
          %8469 = vmatprep.subr.bf16.mxu0 %v6922
          %8470 = vmatpush1.bf16.msra.mxu0 %v6921
          %8471 = vmatprep.subr.bf16.mxu0 %v6930
          %8472 = vmatpush1.bf16.msra.mxu0 %v6929
          %8473 = vmatprep.subr.bf16.mxu0 %v6938
          %8474 = vmatpush1.bf16.msra.mxu0 %v6937
          %8475 = vmatprep.subr.bf16.mxu0 %v6946
          %8476 = vmatpush1.bf16.msra.mxu0 %v6945
          %8477 = vmatprep.subr.bf16.mxu0 %v6954
          %8478 = vmatpush1.bf16.msra.mxu0 %v6953
          %8479 = vmatprep.subr.bf16.mxu0 %v6962
          %8480 = vmatpush1.bf16.msra.mxu0 %v6961
          %8481 = vmatprep.subr.bf16.mxu0 %v6970
          %8482 = vmatpush1.bf16.msra.mxu0 %v6969
          %8483 = vmatprep.subr.bf16.mxu0 %v6978
          %8484 = vmatpush1.bf16.msra.mxu0 %v6977
          %8485 = vmatprep.subr.bf16.mxu0 %v6986
          %8486 = vmatpush1.bf16.msra.mxu0 %v6985
          %8487 = vmatprep.subr.bf16.mxu0 %v6994
          %8488 = vmatpush1.bf16.msra.mxu0 %v6993
          %8489 = vmatprep.subr.bf16.mxu0 %v7002
          %8490 = vmatpush1.bf16.msra.mxu0 %v7001
          %8491 = vmatprep.subr.bf16.mxu0 %v7010
          %8492 = vmatpush1.bf16.msra.mxu0 %v7009
          %8493 = vmatprep.mubr.bf16.mxu0 %v2531
          %8494 = vmatmul.mubr.bf16.gmra.mrb[0].mxu0 %v2530
          %v8495 = vpop.f32.mrb[0].mxu0
          %v8496 = vadd.f32 %v8455, %v8495
          %v8497 = vpop.f32.mrb[0].mxu0
          %v8498 = vadd.f32 %v8457, %v8497
          %v8499 = vpop.f32.mrb[0].mxu0
          %v8500 = vpop.f32.mrb[0].mxu0
          %8501 = vdwg.mxu0
          %8502 = vmatprep.subr.bf16.mxu0 %v7018
          %8503 = vmatpush1.bf16.msra.mxu0 %v7017
          %8504 = vmatprep.subr.bf16.mxu0 %v7026
          %8505 = vmatpush1.bf16.msra.mxu0 %v7025
          %8506 = vmatprep.subr.bf16.mxu0 %v7034
          %8507 = vmatpush1.bf16.msra.mxu0 %v7033
          %8508 = vmatprep.subr.bf16.mxu0 %v7042
          %8509 = vmatpush1.bf16.msra.mxu0 %v7041
          %8510 = vmatprep.subr.bf16.mxu0 %v7050
          %8511 = vmatpush1.bf16.msra.mxu0 %v7049
          %8512 = vmatprep.subr.bf16.mxu0 %v7058
          %8513 = vmatpush1.bf16.msra.mxu0 %v7057
          %8514 = vmatprep.subr.bf16.mxu0 %v7066
          %8515 = vmatpush1.bf16.msra.mxu0 %v7065
          %8516 = vmatprep.subr.bf16.mxu0 %v7074
          %8517 = vmatpush1.bf16.msra.mxu0 %v7073
          %8518 = vmatprep.subr.bf16.mxu0 %v7082
          %8519 = vmatpush1.bf16.msra.mxu0 %v7081
          %8520 = vmatprep.subr.bf16.mxu0 %v7090
          %8521 = vmatpush1.bf16.msra.mxu0 %v7089
          %8522 = vmatprep.subr.bf16.mxu0 %v7098
          %8523 = vmatpush1.bf16.msra.mxu0 %v7097
          %8524 = vmatprep.subr.bf16.mxu0 %v7106
          %8525 = vmatpush1.bf16.msra.mxu0 %v7105
          %8526 = vmatprep.subr.bf16.mxu0 %v7114
          %8527 = vmatpush1.bf16.msra.mxu0 %v7113
          %8528 = vmatprep.subr.bf16.mxu0 %v7122
          %8529 = vmatpush1.bf16.msra.mxu0 %v7121
          %8530 = vmatprep.subr.bf16.mxu0 %v7130
          %8531 = vmatpush1.bf16.msra.mxu0 %v7129
          %8532 = vmatprep.subr.bf16.mxu0 %v7138
          %8533 = vmatpush1.bf16.msra.mxu0 %v7137
          %8534 = vmatprep.mubr.bf16.mxu0 %v2533
          %8535 = vmatmul.mubr.bf16.gmra.mrb[0].mxu0 %v2532
          %v8536 = vpop.f32.mrb[0].mxu0
          %v8537 = vadd.f32 %v8496, %v8536
          %v8538 = vpop.f32.mrb[0].mxu0
          %v8539 = vadd.f32 %v8498, %v8538
          %v8540 = vpop.f32.mrb[0].mxu0
          %v8541 = vpop.f32.mrb[0].mxu0
          %8542 = vdwg.mxu0
          %8543 = vmatprep.subr.bf16.mxu0 %v7146
          %8544 = vmatpush1.bf16.msra.mxu0 %v7145
          %8545 = vmatprep.subr.bf16.mxu0 %v7154
          %8546 = vmatpush1.bf16.msra.mxu0 %v7153
          %8547 = vmatprep.subr.bf16.mxu0 %v7162
          %8548 = vmatpush1.bf16.msra.mxu0 %v7161
          %8549 = vmatprep.subr.bf16.mxu0 %v7170
          %8550 = vmatpush1.bf16.msra.mxu0 %v7169
          %8551 = vmatprep.subr.bf16.mxu0 %v7178
          %8552 = vmatpush1.bf16.msra.mxu0 %v7177
          %8553 = vmatprep.subr.bf16.mxu0 %v7186
          %8554 = vmatpush1.bf16.msra.mxu0 %v7185
          %8555 = vmatprep.subr.bf16.mxu0 %v7194
          %8556 = vmatpush1.bf16.msra.mxu0 %v7193
          %8557 = vmatprep.subr.bf16.mxu0 %v7202
          %8558 = vmatpush1.bf16.msra.mxu0 %v7201
          %8559 = vmatprep.subr.bf16.mxu0 %v7210
          %8560 = vmatpush1.bf16.msra.mxu0 %v7209
          %8561 = vmatprep.subr.bf16.mxu0 %v7218
          %8562 = vmatpush1.bf16.msra.mxu0 %v7217
          %8563 = vmatprep.subr.bf16.mxu0 %v7226
          %8564 = vmatpush1.bf16.msra.mxu0 %v7225
          %8565 = vmatprep.subr.bf16.mxu0 %v7234
          %8566 = vmatpush1.bf16.msra.mxu0 %v7233
          %8567 = vmatprep.subr.bf16.mxu0 %v7242
          %8568 = vmatpush1.bf16.msra.mxu0 %v7241
          %8569 = vmatprep.subr.bf16.mxu0 %v7250
          %8570 = vmatpush1.bf16.msra.mxu0 %v7249
          %8571 = vmatprep.subr.bf16.mxu0 %v7258
          %8572 = vmatpush1.bf16.msra.mxu0 %v7257
          %8573 = vmatprep.subr.bf16.mxu0 %v7266
          %8574 = vmatpush1.bf16.msra.mxu0 %v7265
          %8575 = vmatprep.mubr.bf16.mxu0 %v2535
          %8576 = vmatmul.mubr.bf16.gmra.mrb[0].mxu0 %v2534
          %v8577 = vpop.f32.mrb[0].mxu0
          %v8578 = vadd.f32 %v8537, %v8577
          %v8579 = vpop.f32.mrb[0].mxu0
          %v8580 = vadd.f32 %v8539, %v8579
          %v8581 = vpop.f32.mrb[0].mxu0
          %v8582 = vpop.f32.mrb[0].mxu0
          %8583 = vdwg.mxu0
          %8584 = vmatprep.subr.bf16.mxu0 %v7274
          %8585 = vmatpush1.bf16.msra.mxu0 %v7273
          %8586 = vmatprep.subr.bf16.mxu0 %v7282
          %8587 = vmatpush1.bf16.msra.mxu0 %v7281
          %8588 = vmatprep.subr.bf16.mxu0 %v7290
          %8589 = vmatpush1.bf16.msra.mxu0 %v7289
          %8590 = vmatprep.subr.bf16.mxu0 %v7298
          %8591 = vmatpush1.bf16.msra.mxu0 %v7297
          %8592 = vmatprep.subr.bf16.mxu0 %v7306
          %8593 = vmatpush1.bf16.msra.mxu0 %v7305
          %8594 = vmatprep.subr.bf16.mxu0 %v7314
          %8595 = vmatpush1.bf16.msra.mxu0 %v7313
          %8596 = vmatprep.subr.bf16.mxu0 %v7322
          %8597 = vmatpush1.bf16.msra.mxu0 %v7321
          %8598 = vmatprep.subr.bf16.mxu0 %v7330
          %8599 = vmatpush1.bf16.msra.mxu0 %v7329
          %8600 = vmatprep.subr.bf16.mxu0 0
          %8601 = vmatpush1.bf16.msra.mxu0 0
          %8602 = vmatprep.subr.bf16.mxu0 0
          %8603 = vmatpush1.bf16.msra.mxu0 0
          %8604 = vmatprep.subr.bf16.mxu0 0
          %8605 = vmatpush1.bf16.msra.mxu0 0
          %8606 = vmatprep.subr.bf16.mxu0 0
          %8607 = vmatpush1.bf16.msra.mxu0 0
          %8608 = vmatprep.subr.bf16.mxu0 0
          %8609 = vmatpush1.bf16.msra.mxu0 0
          %8610 = vmatprep.subr.bf16.mxu0 0
          %8611 = vmatpush1.bf16.msra.mxu0 0
          %8612 = vmatprep.subr.bf16.mxu0 0
          %8613 = vmatpush1.bf16.msra.mxu0 0
          %8614 = vmatprep.subr.bf16.mxu0 0
          %8615 = vmatpush1.bf16.msra.mxu0 0
          %8616 = vmatprep.mubr.bf16.mxu0 0
          %8617 = vmatmul.mubr.bf16.gmra.mrb[0].mxu0 %v2536
          %v8618 = vpop.f32.mrb[0].mxu0
          %v8619 = vadd.f32 %v8578, %v8618
          %v8620 = vpop.f32.mrb[0].mxu0
          %v8621 = vadd.f32 %v8580, %v8620
          %v8622 = vpop.f32.mrb[0].mxu0
          %v8623 = vpop.f32.mrb[0].mxu0
          %8624 = vdwg.mxu0
          %8625 = vmatprep.subr.bf16.mxu0 %v6380
          %8626 = vmatpush1.bf16.msra.mxu0 %v6379
          %8627 = vmatprep.subr.bf16.mxu0 %v6388
          %8628 = vmatpush1.bf16.msra.mxu0 %v6387
          %8629 = vmatprep.subr.bf16.mxu0 %v6396
          %8630 = vmatpush1.bf16.msra.mxu0 %v6395
          %8631 = vmatprep.subr.bf16.mxu0 %v6404
          %8632 = vmatpush1.bf16.msra.mxu0 %v6403
          %8633 = vmatprep.subr.bf16.mxu0 %v6412
          %8634 = vmatpush1.bf16.msra.mxu0 %v6411
          %8635 = vmatprep.subr.bf16.mxu0 %v6420
          %8636 = vmatpush1.bf16.msra.mxu0 %v6419
          %8637 = vmatprep.subr.bf16.mxu0 %v6428
          %8638 = vmatpush1.bf16.msra.mxu0 %v6427
          %8639 = vmatprep.subr.bf16.mxu0 %v6436
          %8640 = vmatpush1.bf16.msra.mxu0 %v6435
          %8641 = vmatprep.subr.bf16.mxu0 %v6444
          %8642 = vmatpush1.bf16.msra.mxu0 %v6443
          %8643 = vmatprep.subr.bf16.mxu0 %v6452
          %8644 = vmatpush1.bf16.msra.mxu0 %v6451
          %8645 = vmatprep.subr.bf16.mxu0 %v6460
          %8646 = vmatpush1.bf16.msra.mxu0 %v6459
          %8647 = vmatprep.subr.bf16.mxu0 %v6468
          %8648 = vmatpush1.bf16.msra.mxu0 %v6467
          %8649 = vmatprep.subr.bf16.mxu0 %v6476
          %8650 = vmatpush1.bf16.msra.mxu0 %v6475
          %8651 = vmatprep.subr.bf16.mxu0 %v6484
          %8652 = vmatpush1.bf16.msra.mxu0 %v6483
          %8653 = vmatprep.subr.bf16.mxu0 %v6492
          %8654 = vmatpush1.bf16.msra.mxu0 %v6491
          %8655 = vmatprep.subr.bf16.mxu0 %v6500
          %8656 = vmatpush1.bf16.msra.mxu0 %v6499
          %8657 = vmatprep.mubr.bf16.mxu0 %v2523
          %8658 = vmatmul.mubr.bf16.gmra.mrb[0].mxu0 %v2522
          %v8659 = vpop.f32.mrb[0].mxu0
          %v8660 = vadd.f32 0.0, %v8659
          %v8661 = vpop.f32.mrb[0].mxu0
          %v8662 = vadd.f32 0.0, %v8661
          %v8663 = vpop.f32.mrb[0].mxu0
          %v8664 = vpop.f32.mrb[0].mxu0
          %8665 = vdwg.mxu0
          %8666 = vmatprep.subr.bf16.mxu0 %v6508
          %8667 = vmatpush1.bf16.msra.mxu0 %v6507
          %8668 = vmatprep.subr.bf16.mxu0 %v6516
          %8669 = vmatpush1.bf16.msra.mxu0 %v6515
          %8670 = vmatprep.subr.bf16.mxu0 %v6524
          %8671 = vmatpush1.bf16.msra.mxu0 %v6523
          %8672 = vmatprep.subr.bf16.mxu0 %v6532
          %8673 = vmatpush1.bf16.msra.mxu0 %v6531
          %8674 = vmatprep.subr.bf16.mxu0 %v6540
          %8675 = vmatpush1.bf16.msra.mxu0 %v6539
          %8676 = vmatprep.subr.bf16.mxu0 %v6548
          %8677 = vmatpush1.bf16.msra.mxu0 %v6547
          %8678 = vmatprep.subr.bf16.mxu0 %v6556
          %8679 = vmatpush1.bf16.msra.mxu0 %v6555
          %8680 = vmatprep.subr.bf16.mxu0 %v6564
          %8681 = vmatpush1.bf16.msra.mxu0 %v6563
          %8682 = vmatprep.subr.bf16.mxu0 %v6572
          %8683 = vmatpush1.bf16.msra.mxu0 %v6571
          %8684 = vmatprep.subr.bf16.mxu0 %v6580
          %8685 = vmatpush1.bf16.msra.mxu0 %v6579
          %8686 = vmatprep.subr.bf16.mxu0 %v6588
          %8687 = vmatpush1.bf16.msra.mxu0 %v6587
          %8688 = vmatprep.subr.bf16.mxu0 %v6596
          %8689 = vmatpush1.bf16.msra.mxu0 %v6595
          %8690 = vmatprep.subr.bf16.mxu0 %v6604
          %8691 = vmatpush1.bf16.msra.mxu0 %v6603
          %8692 = vmatprep.subr.bf16.mxu0 %v6612
          %8693 = vmatpush1.bf16.msra.mxu0 %v6611
          %8694 = vmatprep.subr.bf16.mxu0 %v6620
          %8695 = vmatpush1.bf16.msra.mxu0 %v6619
          %8696 = vmatprep.subr.bf16.mxu0 %v6628
          %8697 = vmatpush1.bf16.msra.mxu0 %v6627
          %8698 = vmatprep.mubr.bf16.mxu0 %v2525
          %8699 = vmatmul.mubr.bf16.gmra.mrb[0].mxu0 %v2524
          %v8700 = vpop.f32.mrb[0].mxu0
          %v8701 = vadd.f32 %v8660, %v8700
          %v8702 = vpop.f32.mrb[0].mxu0
          %v8703 = vadd.f32 %v8662, %v8702
          %v8704 = vpop.f32.mrb[0].mxu0
          %v8705 = vpop.f32.mrb[0].mxu0
          %8706 = vdwg.mxu0
          %8707 = vmatprep.subr.bf16.mxu0 %v6636
          %8708 = vmatpush1.bf16.msra.mxu0 %v6635
          %8709 = vmatprep.subr.bf16.mxu0 %v6644
          %8710 = vmatpush1.bf16.msra.mxu0 %v6643
          %8711 = vmatprep.subr.bf16.mxu0 %v6652
          %8712 = vmatpush1.bf16.msra.mxu0 %v6651
          %8713 = vmatprep.subr.bf16.mxu0 %v6660
          %8714 = vmatpush1.bf16.msra.mxu0 %v6659
          %8715 = vmatprep.subr.bf16.mxu0 %v6668
          %8716 = vmatpush1.bf16.msra.mxu0 %v6667
          %8717 = vmatprep.subr.bf16.mxu0 %v6676
          %8718 = vmatpush1.bf16.msra.mxu0 %v6675
          %8719 = vmatprep.subr.bf16.mxu0 %v6684
          %8720 = vmatpush1.bf16.msra.mxu0 %v6683
          %8721 = vmatprep.subr.bf16.mxu0 %v6692
          %8722 = vmatpush1.bf16.msra.mxu0 %v6691
          %8723 = vmatprep.subr.bf16.mxu0 %v6700
          %8724 = vmatpush1.bf16.msra.mxu0 %v6699
          %8725 = vmatprep.subr.bf16.mxu0 %v6708
          %8726 = vmatpush1.bf16.msra.mxu0 %v6707
          %8727 = vmatprep.subr.bf16.mxu0 %v6716
          %8728 = vmatpush1.bf16.msra.mxu0 %v6715
          %8729 = vmatprep.subr.bf16.mxu0 %v6724
          %8730 = vmatpush1.bf16.msra.mxu0 %v6723
          %8731 = vmatprep.subr.bf16.mxu0 %v6732
          %8732 = vmatpush1.bf16.msra.mxu0 %v6731
          %8733 = vmatprep.subr.bf16.mxu0 %v6740
          %8734 = vmatpush1.bf16.msra.mxu0 %v6739
          %8735 = vmatprep.subr.bf16.mxu0 %v6748
          %8736 = vmatpush1.bf16.msra.mxu0 %v6747
          %8737 = vmatprep.subr.bf16.mxu0 %v6756
          %8738 = vmatpush1.bf16.msra.mxu0 %v6755
          %8739 = vmatprep.mubr.bf16.mxu0 %v2527
          %8740 = vmatmul.mubr.bf16.gmra.mrb[0].mxu0 %v2526
          %v8741 = vpop.f32.mrb[0].mxu0
          %v8742 = vadd.f32 %v8701, %v8741
          %v8743 = vpop.f32.mrb[0].mxu0
          %v8744 = vadd.f32 %v8703, %v8743
          %v8745 = vpop.f32.mrb[0].mxu0
          %v8746 = vpop.f32.mrb[0].mxu0
          %8747 = vdwg.mxu0
          %8748 = vmatprep.subr.bf16.mxu0 %v6764
          %8749 = vmatpush1.bf16.msra.mxu0 %v6763
          %8750 = vmatprep.subr.bf16.mxu0 %v6772
          %8751 = vmatpush1.bf16.msra.mxu0 %v6771
          %8752 = vmatprep.subr.bf16.mxu0 %v6780
          %8753 = vmatpush1.bf16.msra.mxu0 %v6779
          %8754 = vmatprep.subr.bf16.mxu0 %v6788
          %8755 = vmatpush1.bf16.msra.mxu0 %v6787
          %8756 = vmatprep.subr.bf16.mxu0 %v6796
          %8757 = vmatpush1.bf16.msra.mxu0 %v6795
          %8758 = vmatprep.subr.bf16.mxu0 %v6804
          %8759 = vmatpush1.bf16.msra.mxu0 %v6803
          %8760 = vmatprep.subr.bf16.mxu0 %v6812
          %8761 = vmatpush1.bf16.msra.mxu0 %v6811
          %8762 = vmatprep.subr.bf16.mxu0 %v6820
          %8763 = vmatpush1.bf16.msra.mxu0 %v6819
          %8764 = vmatprep.subr.bf16.mxu0 %v6828
          %8765 = vmatpush1.bf16.msra.mxu0 %v6827
          %8766 = vmatprep.subr.bf16.mxu0 %v6836
          %8767 = vmatpush1.bf16.msra.mxu0 %v6835
          %8768 = vmatprep.subr.bf16.mxu0 %v6844
          %8769 = vmatpush1.bf16.msra.mxu0 %v6843
          %8770 = vmatprep.subr.bf16.mxu0 %v6852
          %8771 = vmatpush1.bf16.msra.mxu0 %v6851
          %8772 = vmatprep.subr.bf16.mxu0 %v6860
          %8773 = vmatpush1.bf16.msra.mxu0 %v6859
          %8774 = vmatprep.subr.bf16.mxu0 %v6868
          %8775 = vmatpush1.bf16.msra.mxu0 %v6867
          %8776 = vmatprep.subr.bf16.mxu0 %v6876
          %8777 = vmatpush1.bf16.msra.mxu0 %v6875
          %8778 = vmatprep.subr.bf16.mxu0 %v6884
          %8779 = vmatpush1.bf16.msra.mxu0 %v6883
          %8780 = vmatprep.mubr.bf16.mxu0 %v2529
          %8781 = vmatmul.mubr.bf16.gmra.mrb[0].mxu0 %v2528
          %v8782 = vpop.f32.mrb[0].mxu0
          %v8783 = vadd.f32 %v8742, %v8782
          %v8784 = vpop.f32.mrb[0].mxu0
          %v8785 = vadd.f32 %v8744, %v8784
          %v8786 = vpop.f32.mrb[0].mxu0
          %v8787 = vpop.f32.mrb[0].mxu0
          %8788 = vdwg.mxu0
          %8789 = vmatprep.subr.bf16.mxu0 %v6892
          %8790 = vmatpush1.bf16.msra.mxu0 %v6891
          %8791 = vmatprep.subr.bf16.mxu0 %v6900
          %8792 = vmatpush1.bf16.msra.mxu0 %v6899
          %8793 = vmatprep.subr.bf16.mxu0 %v6908
          %8794 = vmatpush1.bf16.msra.mxu0 %v6907
          %8795 = vmatprep.subr.bf16.mxu0 %v6916
          %8796 = vmatpush1.bf16.msra.mxu0 %v6915
          %8797 = vmatprep.subr.bf16.mxu0 %v6924
          %8798 = vmatpush1.bf16.msra.mxu0 %v6923
          %8799 = vmatprep.subr.bf16.mxu0 %v6932
          %8800 = vmatpush1.bf16.msra.mxu0 %v6931
          %8801 = vmatprep.subr.bf16.mxu0 %v6940
          %8802 = vmatpush1.bf16.msra.mxu0 %v6939
          %8803 = vmatprep.subr.bf16.mxu0 %v6948
          %8804 = vmatpush1.bf16.msra.mxu0 %v6947
          %8805 = vmatprep.subr.bf16.mxu0 %v6956
          %8806 = vmatpush1.bf16.msra.mxu0 %v6955
          %8807 = vmatprep.subr.bf16.mxu0 %v6964
          %8808 = vmatpush1.bf16.msra.mxu0 %v6963
          %8809 = vmatprep.subr.bf16.mxu0 %v6972
          %8810 = vmatpush1.bf16.msra.mxu0 %v6971
          %8811 = vmatprep.subr.bf16.mxu0 %v6980
          %8812 = vmatpush1.bf16.msra.mxu0 %v6979
          %8813 = vmatprep.subr.bf16.mxu0 %v6988
          %8814 = vmatpush1.bf16.msra.mxu0 %v6987
          %8815 = vmatprep.subr.bf16.mxu0 %v6996
          %8816 = vmatpush1.bf16.msra.mxu0 %v6995
          %8817 = vmatprep.subr.bf16.mxu0 %v7004
          %8818 = vmatpush1.bf16.msra.mxu0 %v7003
          %8819 = vmatprep.subr.bf16.mxu0 %v7012
          %8820 = vmatpush1.bf16.msra.mxu0 %v7011
          %8821 = vmatprep.mubr.bf16.mxu0 %v2531
          %8822 = vmatmul.mubr.bf16.gmra.mrb[0].mxu0 %v2530
          %v8823 = vpop.f32.mrb[0].mxu0
          %v8824 = vadd.f32 %v8783, %v8823
          %v8825 = vpop.f32.mrb[0].mxu0
          %v8826 = vadd.f32 %v8785, %v8825
          %v8827 = vpop.f32.mrb[0].mxu0
          %v8828 = vpop.f32.mrb[0].mxu0
          %8829 = vdwg.mxu0
          %8830 = vmatprep.subr.bf16.mxu0 %v7020
          %8831 = vmatpush1.bf16.msra.mxu0 %v7019
          %8832 = vmatprep.subr.bf16.mxu0 %v7028
          %8833 = vmatpush1.bf16.msra.mxu0 %v7027
          %8834 = vmatprep.subr.bf16.mxu0 %v7036
          %8835 = vmatpush1.bf16.msra.mxu0 %v7035
          %8836 = vmatprep.subr.bf16.mxu0 %v7044
          %8837 = vmatpush1.bf16.msra.mxu0 %v7043
          %8838 = vmatprep.subr.bf16.mxu0 %v7052
          %8839 = vmatpush1.bf16.msra.mxu0 %v7051
          %8840 = vmatprep.subr.bf16.mxu0 %v7060
          %8841 = vmatpush1.bf16.msra.mxu0 %v7059
          %8842 = vmatprep.subr.bf16.mxu0 %v7068
          %8843 = vmatpush1.bf16.msra.mxu0 %v7067
          %8844 = vmatprep.subr.bf16.mxu0 %v7076
          %8845 = vmatpush1.bf16.msra.mxu0 %v7075
          %8846 = vmatprep.subr.bf16.mxu0 %v7084
          %8847 = vmatpush1.bf16.msra.mxu0 %v7083
          %8848 = vmatprep.subr.bf16.mxu0 %v7092
          %8849 = vmatpush1.bf16.msra.mxu0 %v7091
          %8850 = vmatprep.subr.bf16.mxu0 %v7100
          %8851 = vmatpush1.bf16.msra.mxu0 %v7099
          %8852 = vmatprep.subr.bf16.mxu0 %v7108
          %8853 = vmatpush1.bf16.msra.mxu0 %v7107
          %8854 = vmatprep.subr.bf16.mxu0 %v7116
          %8855 = vmatpush1.bf16.msra.mxu0 %v7115
          %8856 = vmatprep.subr.bf16.mxu0 %v7124
          %8857 = vmatpush1.bf16.msra.mxu0 %v7123
          %8858 = vmatprep.subr.bf16.mxu0 %v7132
          %8859 = vmatpush1.bf16.msra.mxu0 %v7131
          %8860 = vmatprep.subr.bf16.mxu0 %v7140
          %8861 = vmatpush1.bf16.msra.mxu0 %v7139
          %8862 = vmatprep.mubr.bf16.mxu0 %v2533
          %8863 = vmatmul.mubr.bf16.gmra.mrb[0].mxu0 %v2532
          %v8864 = vpop.f32.mrb[0].mxu0
          %v8865 = vadd.f32 %v8824, %v8864
          %v8866 = vpop.f32.mrb[0].mxu0
          %v8867 = vadd.f32 %v8826, %v8866
          %v8868 = vpop.f32.mrb[0].mxu0
          %v8869 = vpop.f32.mrb[0].mxu0
          %8870 = vdwg.mxu0
          %8871 = vmatprep.subr.bf16.mxu0 %v7148
          %8872 = vmatpush1.bf16.msra.mxu0 %v7147
          %8873 = vmatprep.subr.bf16.mxu0 %v7156
          %8874 = vmatpush1.bf16.msra.mxu0 %v7155
          %8875 = vmatprep.subr.bf16.mxu0 %v7164
          %8876 = vmatpush1.bf16.msra.mxu0 %v7163
          %8877 = vmatprep.subr.bf16.mxu0 %v7172
          %8878 = vmatpush1.bf16.msra.mxu0 %v7171
          %8879 = vmatprep.subr.bf16.mxu0 %v7180
          %8880 = vmatpush1.bf16.msra.mxu0 %v7179
          %8881 = vmatprep.subr.bf16.mxu0 %v7188
          %8882 = vmatpush1.bf16.msra.mxu0 %v7187
          %8883 = vmatprep.subr.bf16.mxu0 %v7196
          %8884 = vmatpush1.bf16.msra.mxu0 %v7195
          %8885 = vmatprep.subr.bf16.mxu0 %v7204
          %8886 = vmatpush1.bf16.msra.mxu0 %v7203
          %8887 = vmatprep.subr.bf16.mxu0 %v7212
          %8888 = vmatpush1.bf16.msra.mxu0 %v7211
          %8889 = vmatprep.subr.bf16.mxu0 %v7220
          %8890 = vmatpush1.bf16.msra.mxu0 %v7219
          %8891 = vmatprep.subr.bf16.mxu0 %v7228
          %8892 = vmatpush1.bf16.msra.mxu0 %v7227
          %8893 = vmatprep.subr.bf16.mxu0 %v7236
          %8894 = vmatpush1.bf16.msra.mxu0 %v7235
          %8895 = vmatprep.subr.bf16.mxu0 %v7244
          %8896 = vmatpush1.bf16.msra.mxu0 %v7243
          %8897 = vmatprep.subr.bf16.mxu0 %v7252
          %8898 = vmatpush1.bf16.msra.mxu0 %v7251
          %8899 = vmatprep.subr.bf16.mxu0 %v7260
          %8900 = vmatpush1.bf16.msra.mxu0 %v7259
          %8901 = vmatprep.subr.bf16.mxu0 %v7268
          %8902 = vmatpush1.bf16.msra.mxu0 %v7267
          %8903 = vmatprep.mubr.bf16.mxu0 %v2535
          %8904 = vmatmul.mubr.bf16.gmra.mrb[0].mxu0 %v2534
          %v8905 = vpop.f32.mrb[0].mxu0
          %v8906 = vadd.f32 %v8865, %v8905
          %v8907 = vpop.f32.mrb[0].mxu0
          %v8908 = vadd.f32 %v8867, %v8907
          %v8909 = vpop.f32.mrb[0].mxu0
          %v8910 = vpop.f32.mrb[0].mxu0
          %8911 = vdwg.mxu0
          %8912 = vmatprep.subr.bf16.mxu0 %v7276
          %8913 = vmatpush1.bf16.msra.mxu0 %v7275
          %8914 = vmatprep.subr.bf16.mxu0 %v7284
          %8915 = vmatpush1.bf16.msra.mxu0 %v7283
          %8916 = vmatprep.subr.bf16.mxu0 %v7292
          %8917 = vmatpush1.bf16.msra.mxu0 %v7291
          %8918 = vmatprep.subr.bf16.mxu0 %v7300
          %8919 = vmatpush1.bf16.msra.mxu0 %v7299
          %8920 = vmatprep.subr.bf16.mxu0 %v7308
          %8921 = vmatpush1.bf16.msra.mxu0 %v7307
          %8922 = vmatprep.subr.bf16.mxu0 %v7316
          %8923 = vmatpush1.bf16.msra.mxu0 %v7315
          %8924 = vmatprep.subr.bf16.mxu0 %v7324
          %8925 = vmatpush1.bf16.msra.mxu0 %v7323
          %8926 = vmatprep.subr.bf16.mxu0 %v7332
          %8927 = vmatpush1.bf16.msra.mxu0 %v7331
          %8928 = vmatprep.subr.bf16.mxu0 0
          %8929 = vmatpush1.bf16.msra.mxu0 0
          %8930 = vmatprep.subr.bf16.mxu0 0
          %8931 = vmatpush1.bf16.msra.mxu0 0
          %8932 = vmatprep.subr.bf16.mxu0 0
          %8933 = vmatpush1.bf16.msra.mxu0 0
          %8934 = vmatprep.subr.bf16.mxu0 0
          %8935 = vmatpush1.bf16.msra.mxu0 0
          %8936 = vmatprep.subr.bf16.mxu0 0
          %8937 = vmatpush1.bf16.msra.mxu0 0
          %8938 = vmatprep.subr.bf16.mxu0 0
          %8939 = vmatpush1.bf16.msra.mxu0 0
          %8940 = vmatprep.subr.bf16.mxu0 0
          %8941 = vmatpush1.bf16.msra.mxu0 0
          %8942 = vmatprep.subr.bf16.mxu0 0
          %8943 = vmatpush1.bf16.msra.mxu0 0
          %8944 = vmatprep.mubr.bf16.mxu0 0
          %8945 = vmatmul.mubr.bf16.gmra.mrb[0].mxu0 %v2536
          %v8946 = vpop.f32.mrb[0].mxu0
          %v8947 = vadd.f32 %v8906, %v8946
          %v8948 = vpop.f32.mrb[0].mxu0
          %v8949 = vadd.f32 %v8908, %v8948
          %v8950 = vpop.f32.mrb[0].mxu0
          %v8951 = vpop.f32.mrb[0].mxu0
          %8952 = vdwg.mxu0
          %8953 = vmatprep.subr.bf16.mxu0 %v6382
          %8954 = vmatpush1.bf16.msra.mxu0 %v6381
          %8955 = vmatprep.subr.bf16.mxu0 %v6390
          %8956 = vmatpush1.bf16.msra.mxu0 %v6389
          %8957 = vmatprep.subr.bf16.mxu0 %v6398
          %8958 = vmatpush1.bf16.msra.mxu0 %v6397
          %8959 = vmatprep.subr.bf16.mxu0 %v6406
          %8960 = vmatpush1.bf16.msra.mxu0 %v6405
          %8961 = vmatprep.subr.bf16.mxu0 %v6414
          %8962 = vmatpush1.bf16.msra.mxu0 %v6413
          %8963 = vmatprep.subr.bf16.mxu0 %v6422
          %8964 = vmatpush1.bf16.msra.mxu0 %v6421
          %8965 = vmatprep.subr.bf16.mxu0 %v6430
          %8966 = vmatpush1.bf16.msra.mxu0 %v6429
          %8967 = vmatprep.subr.bf16.mxu0 %v6438
          %8968 = vmatpush1.bf16.msra.mxu0 %v6437
          %8969 = vmatprep.subr.bf16.mxu0 %v6446
          %8970 = vmatpush1.bf16.msra.mxu0 %v6445
          %8971 = vmatprep.subr.bf16.mxu0 %v6454
          %8972 = vmatpush1.bf16.msra.mxu0 %v6453
          %8973 = vmatprep.subr.bf16.mxu0 %v6462
          %8974 = vmatpush1.bf16.msra.mxu0 %v6461
          %8975 = vmatprep.subr.bf16.mxu0 %v6470
          %8976 = vmatpush1.bf16.msra.mxu0 %v6469
          %8977 = vmatprep.subr.bf16.mxu0 %v6478
          %8978 = vmatpush1.bf16.msra.mxu0 %v6477
          %8979 = vmatprep.subr.bf16.mxu0 %v6486
          %8980 = vmatpush1.bf16.msra.mxu0 %v6485
          %8981 = vmatprep.subr.bf16.mxu0 %v6494
          %8982 = vmatpush1.bf16.msra.mxu0 %v6493
          %8983 = vmatprep.subr.bf16.mxu0 %v6502
          %8984 = vmatpush1.bf16.msra.mxu0 %v6501
          %8985 = vmatprep.mubr.bf16.mxu0 %v2523
          %8986 = vmatmul.mubr.bf16.gmra.mrb[0].mxu0 %v2522
          %v8987 = vpop.f32.mrb[0].mxu0
          %v8988 = vadd.f32 0.0, %v8987
          %v8989 = vpop.f32.mrb[0].mxu0
          %v8990 = vadd.f32 0.0, %v8989
          %v8991 = vpop.f32.mrb[0].mxu0
          %v8992 = vpop.f32.mrb[0].mxu0
          %8993 = vdwg.mxu0
          %8994 = vmatprep.subr.bf16.mxu0 %v6510
          %8995 = vmatpush1.bf16.msra.mxu0 %v6509
          %8996 = vmatprep.subr.bf16.mxu0 %v6518
          %8997 = vmatpush1.bf16.msra.mxu0 %v6517
          %8998 = vmatprep.subr.bf16.mxu0 %v6526
          %8999 = vmatpush1.bf16.msra.mxu0 %v6525
          %9000 = vmatprep.subr.bf16.mxu0 %v6534
          %9001 = vmatpush1.bf16.msra.mxu0 %v6533
          %9002 = vmatprep.subr.bf16.mxu0 %v6542
          %9003 = vmatpush1.bf16.msra.mxu0 %v6541
          %9004 = vmatprep.subr.bf16.mxu0 %v6550
          %9005 = vmatpush1.bf16.msra.mxu0 %v6549
          %9006 = vmatprep.subr.bf16.mxu0 %v6558
          %9007 = vmatpush1.bf16.msra.mxu0 %v6557
          %9008 = vmatprep.subr.bf16.mxu0 %v6566
          %9009 = vmatpush1.bf16.msra.mxu0 %v6565
          %9010 = vmatprep.subr.bf16.mxu0 %v6574
          %9011 = vmatpush1.bf16.msra.mxu0 %v6573
          %9012 = vmatprep.subr.bf16.mxu0 %v6582
          %9013 = vmatpush1.bf16.msra.mxu0 %v6581
          %9014 = vmatprep.subr.bf16.mxu0 %v6590
          %9015 = vmatpush1.bf16.msra.mxu0 %v6589
          %9016 = vmatprep.subr.bf16.mxu0 %v6598
          %9017 = vmatpush1.bf16.msra.mxu0 %v6597
          %9018 = vmatprep.subr.bf16.mxu0 %v6606
          %9019 = vmatpush1.bf16.msra.mxu0 %v6605
          %9020 = vmatprep.subr.bf16.mxu0 %v6614
          %9021 = vmatpush1.bf16.msra.mxu0 %v6613
          %9022 = vmatprep.subr.bf16.mxu0 %v6622
          %9023 = vmatpush1.bf16.msra.mxu0 %v6621
          %9024 = vmatprep.subr.bf16.mxu0 %v6630
          %9025 = vmatpush1.bf16.msra.mxu0 %v6629
          %9026 = vmatprep.mubr.bf16.mxu0 %v2525
          %9027 = vmatmul.mubr.bf16.gmra.mrb[0].mxu0 %v2524
          %v9028 = vpop.f32.mrb[0].mxu0
          %v9029 = vadd.f32 %v8988, %v9028
          %v9030 = vpop.f32.mrb[0].mxu0
          %v9031 = vadd.f32 %v8990, %v9030
          %v9032 = vpop.f32.mrb[0].mxu0
          %v9033 = vpop.f32.mrb[0].mxu0
          %9034 = vdwg.mxu0
          %9035 = vmatprep.subr.bf16.mxu0 %v6638
          %9036 = vmatpush1.bf16.msra.mxu0 %v6637
          %9037 = vmatprep.subr.bf16.mxu0 %v6646
          %9038 = vmatpush1.bf16.msra.mxu0 %v6645
          %9039 = vmatprep.subr.bf16.mxu0 %v6654
          %9040 = vmatpush1.bf16.msra.mxu0 %v6653
          %9041 = vmatprep.subr.bf16.mxu0 %v6662
          %9042 = vmatpush1.bf16.msra.mxu0 %v6661
          %9043 = vmatprep.subr.bf16.mxu0 %v6670
          %9044 = vmatpush1.bf16.msra.mxu0 %v6669
          %9045 = vmatprep.subr.bf16.mxu0 %v6678
          %9046 = vmatpush1.bf16.msra.mxu0 %v6677
          %9047 = vmatprep.subr.bf16.mxu0 %v6686
          %9048 = vmatpush1.bf16.msra.mxu0 %v6685
          %9049 = vmatprep.subr.bf16.mxu0 %v6694
          %9050 = vmatpush1.bf16.msra.mxu0 %v6693
          %9051 = vmatprep.subr.bf16.mxu0 %v6702
          %9052 = vmatpush1.bf16.msra.mxu0 %v6701
          %9053 = vmatprep.subr.bf16.mxu0 %v6710
          %9054 = vmatpush1.bf16.msra.mxu0 %v6709
          %9055 = vmatprep.subr.bf16.mxu0 %v6718
          %9056 = vmatpush1.bf16.msra.mxu0 %v6717
          %9057 = vmatprep.subr.bf16.mxu0 %v6726
          %9058 = vmatpush1.bf16.msra.mxu0 %v6725
          %9059 = vmatprep.subr.bf16.mxu0 %v6734
          %9060 = vmatpush1.bf16.msra.mxu0 %v6733
          %9061 = vmatprep.subr.bf16.mxu0 %v6742
          %9062 = vmatpush1.bf16.msra.mxu0 %v6741
          %9063 = vmatprep.subr.bf16.mxu0 %v6750
          %9064 = vmatpush1.bf16.msra.mxu0 %v6749
          %9065 = vmatprep.subr.bf16.mxu0 %v6758
          %9066 = vmatpush1.bf16.msra.mxu0 %v6757
          %9067 = vmatprep.mubr.bf16.mxu0 %v2527
          %9068 = vmatmul.mubr.bf16.gmra.mrb[0].mxu0 %v2526
          %v9069 = vpop.f32.mrb[0].mxu0
          %v9070 = vadd.f32 %v9029, %v9069
          %v9071 = vpop.f32.mrb[0].mxu0
          %v9072 = vadd.f32 %v9031, %v9071
          %v9073 = vpop.f32.mrb[0].mxu0
          %v9074 = vpop.f32.mrb[0].mxu0
          %9075 = vdwg.mxu0
          %9076 = vmatprep.subr.bf16.mxu0 %v6766
          %9077 = vmatpush1.bf16.msra.mxu0 %v6765
          %9078 = vmatprep.subr.bf16.mxu0 %v6774
          %9079 = vmatpush1.bf16.msra.mxu0 %v6773
          %9080 = vmatprep.subr.bf16.mxu0 %v6782
          %9081 = vmatpush1.bf16.msra.mxu0 %v6781
          %9082 = vmatprep.subr.bf16.mxu0 %v6790
          %9083 = vmatpush1.bf16.msra.mxu0 %v6789
          %9084 = vmatprep.subr.bf16.mxu0 %v6798
          %9085 = vmatpush1.bf16.msra.mxu0 %v6797
          %9086 = vmatprep.subr.bf16.mxu0 %v6806
          %9087 = vmatpush1.bf16.msra.mxu0 %v6805
          %9088 = vmatprep.subr.bf16.mxu0 %v6814
          %9089 = vmatpush1.bf16.msra.mxu0 %v6813
          %9090 = vmatprep.subr.bf16.mxu0 %v6822
          %9091 = vmatpush1.bf16.msra.mxu0 %v6821
          %9092 = vmatprep.subr.bf16.mxu0 %v6830
          %9093 = vmatpush1.bf16.msra.mxu0 %v6829
          %9094 = vmatprep.subr.bf16.mxu0 %v6838
          %9095 = vmatpush1.bf16.msra.mxu0 %v6837
          %9096 = vmatprep.subr.bf16.mxu0 %v6846
          %9097 = vmatpush1.bf16.msra.mxu0 %v6845
          %9098 = vmatprep.subr.bf16.mxu0 %v6854
          %9099 = vmatpush1.bf16.msra.mxu0 %v6853
          %9100 = vmatprep.subr.bf16.mxu0 %v6862
          %9101 = vmatpush1.bf16.msra.mxu0 %v6861
          %9102 = vmatprep.subr.bf16.mxu0 %v6870
          %9103 = vmatpush1.bf16.msra.mxu0 %v6869
          %9104 = vmatprep.subr.bf16.mxu0 %v6878
          %9105 = vmatpush1.bf16.msra.mxu0 %v6877
          %9106 = vmatprep.subr.bf16.mxu0 %v6886
          %9107 = vmatpush1.bf16.msra.mxu0 %v6885
          %9108 = vmatprep.mubr.bf16.mxu0 %v2529
          %9109 = vmatmul.mubr.bf16.gmra.mrb[0].mxu0 %v2528
          %v9110 = vpop.f32.mrb[0].mxu0
          %v9111 = vadd.f32 %v9070, %v9110
          %v9112 = vpop.f32.mrb[0].mxu0
          %v9113 = vadd.f32 %v9072, %v9112
          %v9114 = vpop.f32.mrb[0].mxu0
          %v9115 = vpop.f32.mrb[0].mxu0
          %9116 = vdwg.mxu0
          %9117 = vmatprep.subr.bf16.mxu0 %v6894
          %9118 = vmatpush1.bf16.msra.mxu0 %v6893
          %9119 = vmatprep.subr.bf16.mxu0 %v6902
          %9120 = vmatpush1.bf16.msra.mxu0 %v6901
          %9121 = vmatprep.subr.bf16.mxu0 %v6910
          %9122 = vmatpush1.bf16.msra.mxu0 %v6909
          %9123 = vmatprep.subr.bf16.mxu0 %v6918
          %9124 = vmatpush1.bf16.msra.mxu0 %v6917
          %9125 = vmatprep.subr.bf16.mxu0 %v6926
          %9126 = vmatpush1.bf16.msra.mxu0 %v6925
          %9127 = vmatprep.subr.bf16.mxu0 %v6934
          %9128 = vmatpush1.bf16.msra.mxu0 %v6933
          %9129 = vmatprep.subr.bf16.mxu0 %v6942
          %9130 = vmatpush1.bf16.msra.mxu0 %v6941
          %9131 = vmatprep.subr.bf16.mxu0 %v6950
          %9132 = vmatpush1.bf16.msra.mxu0 %v6949
          %9133 = vmatprep.subr.bf16.mxu0 %v6958
          %9134 = vmatpush1.bf16.msra.mxu0 %v6957
          %9135 = vmatprep.subr.bf16.mxu0 %v6966
          %9136 = vmatpush1.bf16.msra.mxu0 %v6965
          %9137 = vmatprep.subr.bf16.mxu0 %v6974
          %9138 = vmatpush1.bf16.msra.mxu0 %v6973
          %9139 = vmatprep.subr.bf16.mxu0 %v6982
          %9140 = vmatpush1.bf16.msra.mxu0 %v6981
          %9141 = vmatprep.subr.bf16.mxu0 %v6990
          %9142 = vmatpush1.bf16.msra.mxu0 %v6989
          %9143 = vmatprep.subr.bf16.mxu0 %v6998
          %9144 = vmatpush1.bf16.msra.mxu0 %v6997
          %9145 = vmatprep.subr.bf16.mxu0 %v7006
          %9146 = vmatpush1.bf16.msra.mxu0 %v7005
          %9147 = vmatprep.subr.bf16.mxu0 %v7014
          %9148 = vmatpush1.bf16.msra.mxu0 %v7013
          %9149 = vmatprep.mubr.bf16.mxu0 %v2531
          %9150 = vmatmul.mubr.bf16.gmra.mrb[0].mxu0 %v2530
          %v9151 = vpop.f32.mrb[0].mxu0
          %v9152 = vadd.f32 %v9111, %v9151
          %v9153 = vpop.f32.mrb[0].mxu0
          %v9154 = vadd.f32 %v9113, %v9153
          %v9155 = vpop.f32.mrb[0].mxu0
          %v9156 = vpop.f32.mrb[0].mxu0
          %9157 = vdwg.mxu0
          %9158 = vmatprep.subr.bf16.mxu0 %v7022
          %9159 = vmatpush1.bf16.msra.mxu0 %v7021
          %9160 = vmatprep.subr.bf16.mxu0 %v7030
          %9161 = vmatpush1.bf16.msra.mxu0 %v7029
          %9162 = vmatprep.subr.bf16.mxu0 %v7038
          %9163 = vmatpush1.bf16.msra.mxu0 %v7037
          %9164 = vmatprep.subr.bf16.mxu0 %v7046
          %9165 = vmatpush1.bf16.msra.mxu0 %v7045
          %9166 = vmatprep.subr.bf16.mxu0 %v7054
          %9167 = vmatpush1.bf16.msra.mxu0 %v7053
          %9168 = vmatprep.subr.bf16.mxu0 %v7062
          %9169 = vmatpush1.bf16.msra.mxu0 %v7061
          %9170 = vmatprep.subr.bf16.mxu0 %v7070
          %9171 = vmatpush1.bf16.msra.mxu0 %v7069
          %9172 = vmatprep.subr.bf16.mxu0 %v7078
          %9173 = vmatpush1.bf16.msra.mxu0 %v7077
          %9174 = vmatprep.subr.bf16.mxu0 %v7086
          %9175 = vmatpush1.bf16.msra.mxu0 %v7085
          %9176 = vmatprep.subr.bf16.mxu0 %v7094
          %9177 = vmatpush1.bf16.msra.mxu0 %v7093
          %9178 = vmatprep.subr.bf16.mxu0 %v7102
          %9179 = vmatpush1.bf16.msra.mxu0 %v7101
          %9180 = vmatprep.subr.bf16.mxu0 %v7110
          %9181 = vmatpush1.bf16.msra.mxu0 %v7109
          %9182 = vmatprep.subr.bf16.mxu0 %v7118
          %9183 = vmatpush1.bf16.msra.mxu0 %v7117
          %9184 = vmatprep.subr.bf16.mxu0 %v7126
          %9185 = vmatpush1.bf16.msra.mxu0 %v7125
          %9186 = vmatprep.subr.bf16.mxu0 %v7134
          %9187 = vmatpush1.bf16.msra.mxu0 %v7133
          %9188 = vmatprep.subr.bf16.mxu0 %v7142
          %9189 = vmatpush1.bf16.msra.mxu0 %v7141
          %9190 = vmatprep.mubr.bf16.mxu0 %v2533
          %9191 = vmatmul.mubr.bf16.gmra.mrb[0].mxu0 %v2532
          %v9192 = vpop.f32.mrb[0].mxu0
          %v9193 = vadd.f32 %v9152, %v9192
          %v9194 = vpop.f32.mrb[0].mxu0
          %v9195 = vadd.f32 %v9154, %v9194
          %v9196 = vpop.f32.mrb[0].mxu0
          %v9197 = vpop.f32.mrb[0].mxu0
          %9198 = vdwg.mxu0
          %9199 = vmatprep.subr.bf16.mxu0 %v7150
          %9200 = vmatpush1.bf16.msra.mxu0 %v7149
          %9201 = vmatprep.subr.bf16.mxu0 %v7158
          %9202 = vmatpush1.bf16.msra.mxu0 %v7157
          %9203 = vmatprep.subr.bf16.mxu0 %v7166
          %9204 = vmatpush1.bf16.msra.mxu0 %v7165
          %9205 = vmatprep.subr.bf16.mxu0 %v7174
          %9206 = vmatpush1.bf16.msra.mxu0 %v7173
          %9207 = vmatprep.subr.bf16.mxu0 %v7182
          %9208 = vmatpush1.bf16.msra.mxu0 %v7181
          %9209 = vmatprep.subr.bf16.mxu0 %v7190
          %9210 = vmatpush1.bf16.msra.mxu0 %v7189
          %9211 = vmatprep.subr.bf16.mxu0 %v7198
          %9212 = vmatpush1.bf16.msra.mxu0 %v7197
          %9213 = vmatprep.subr.bf16.mxu0 %v7206
          %9214 = vmatpush1.bf16.msra.mxu0 %v7205
          %9215 = vmatprep.subr.bf16.mxu0 %v7214
          %9216 = vmatpush1.bf16.msra.mxu0 %v7213
          %9217 = vmatprep.subr.bf16.mxu0 %v7222
          %9218 = vmatpush1.bf16.msra.mxu0 %v7221
          %9219 = vmatprep.subr.bf16.mxu0 %v7230
          %9220 = vmatpush1.bf16.msra.mxu0 %v7229
          %9221 = vmatprep.subr.bf16.mxu0 %v7238
          %9222 = vmatpush1.bf16.msra.mxu0 %v7237
          %9223 = vmatprep.subr.bf16.mxu0 %v7246
          %9224 = vmatpush1.bf16.msra.mxu0 %v7245
          %9225 = vmatprep.subr.bf16.mxu0 %v7254
          %9226 = vmatpush1.bf16.msra.mxu0 %v7253
          %9227 = vmatprep.subr.bf16.mxu0 %v7262
          %9228 = vmatpush1.bf16.msra.mxu0 %v7261
          %9229 = vmatprep.subr.bf16.mxu0 %v7270
          %9230 = vmatpush1.bf16.msra.mxu0 %v7269
          %9231 = vmatprep.mubr.bf16.mxu0 %v2535
          %9232 = vmatmul.mubr.bf16.gmra.mrb[0].mxu0 %v2534
          %v9233 = vpop.f32.mrb[0].mxu0
          %v9234 = vadd.f32 %v9193, %v9233
          %v9235 = vpop.f32.mrb[0].mxu0
          %v9236 = vadd.f32 %v9195, %v9235
          %v9237 = vpop.f32.mrb[0].mxu0
          %v9238 = vpop.f32.mrb[0].mxu0
          %9239 = vdwg.mxu0
          %9240 = vmatprep.subr.bf16.mxu0 %v7278
          %9241 = vmatpush1.bf16.msra.mxu0 %v7277
          %9242 = vmatprep.subr.bf16.mxu0 %v7286
          %9243 = vmatpush1.bf16.msra.mxu0 %v7285
          %9244 = vmatprep.subr.bf16.mxu0 %v7294
          %9245 = vmatpush1.bf16.msra.mxu0 %v7293
          %9246 = vmatprep.subr.bf16.mxu0 %v7302
          %9247 = vmatpush1.bf16.msra.mxu0 %v7301
          %9248 = vmatprep.subr.bf16.mxu0 %v7310
          %9249 = vmatpush1.bf16.msra.mxu0 %v7309
          %9250 = vmatprep.subr.bf16.mxu0 %v7318
          %9251 = vmatpush1.bf16.msra.mxu0 %v7317
          %9252 = vmatprep.subr.bf16.mxu0 %v7326
          %9253 = vmatpush1.bf16.msra.mxu0 %v7325
          %9254 = vmatprep.subr.bf16.mxu0 %v7334
          %9255 = vmatpush1.bf16.msra.mxu0 %v7333
          %9256 = vmatprep.subr.bf16.mxu0 0
          %9257 = vmatpush1.bf16.msra.mxu0 0
          %9258 = vmatprep.subr.bf16.mxu0 0
          %9259 = vmatpush1.bf16.msra.mxu0 0
          %9260 = vmatprep.subr.bf16.mxu0 0
          %9261 = vmatpush1.bf16.msra.mxu0 0
          %9262 = vmatprep.subr.bf16.mxu0 0
          %9263 = vmatpush1.bf16.msra.mxu0 0
          %9264 = vmatprep.subr.bf16.mxu0 0
          %9265 = vmatpush1.bf16.msra.mxu0 0
          %9266 = vmatprep.subr.bf16.mxu0 0
          %9267 = vmatpush1.bf16.msra.mxu0 0
          %9268 = vmatprep.subr.bf16.mxu0 0
          %9269 = vmatpush1.bf16.msra.mxu0 0
          %9270 = vmatprep.subr.bf16.mxu0 0
          %9271 = vmatpush1.bf16.msra.mxu0 0
          %9272 = vmatprep.mubr.bf16.mxu0 0
          %9273 = vmatmul.mubr.bf16.gmra.mrb[0].mxu0 %v2536
          %v9274 = vpop.f32.mrb[0].mxu0
          %v9275 = vadd.f32 %v9234, %v9274
          %v9276 = vpop.f32.mrb[0].mxu0
          %v9277 = vadd.f32 %v9236, %v9276
          %v9278 = vpop.f32.mrb[0].mxu0
          %v9279 = vpop.f32.mrb[0].mxu0
          %9280 = vdwg.mxu0
          %9281 = vmatprep.subr.bf16.mxu0 %v6384
          %9282 = vmatpush1.bf16.msra.mxu0 %v6383
          %9283 = vmatprep.subr.bf16.mxu0 %v6392
          %9284 = vmatpush1.bf16.msra.mxu0 %v6391
          %9285 = vmatprep.subr.bf16.mxu0 %v6400
          %9286 = vmatpush1.bf16.msra.mxu0 %v6399
          %9287 = vmatprep.subr.bf16.mxu0 %v6408
          %9288 = vmatpush1.bf16.msra.mxu0 %v6407
          %9289 = vmatprep.subr.bf16.mxu0 %v6416
          %9290 = vmatpush1.bf16.msra.mxu0 %v6415
          %9291 = vmatprep.subr.bf16.mxu0 %v6424
          %9292 = vmatpush1.bf16.msra.mxu0 %v6423
          %9293 = vmatprep.subr.bf16.mxu0 %v6432
          %9294 = vmatpush1.bf16.msra.mxu0 %v6431
          %9295 = vmatprep.subr.bf16.mxu0 %v6440
          %9296 = vmatpush1.bf16.msra.mxu0 %v6439
          %9297 = vmatprep.subr.bf16.mxu0 %v6448
          %9298 = vmatpush1.bf16.msra.mxu0 %v6447
          %9299 = vmatprep.subr.bf16.mxu0 %v6456
          %9300 = vmatpush1.bf16.msra.mxu0 %v6455
          %9301 = vmatprep.subr.bf16.mxu0 %v6464
          %9302 = vmatpush1.bf16.msra.mxu0 %v6463
          %9303 = vmatprep.subr.bf16.mxu0 %v6472
          %9304 = vmatpush1.bf16.msra.mxu0 %v6471
          %9305 = vmatprep.subr.bf16.mxu0 %v6480
          %9306 = vmatpush1.bf16.msra.mxu0 %v6479
          %9307 = vmatprep.subr.bf16.mxu0 %v6488
          %9308 = vmatpush1.bf16.msra.mxu0 %v6487
          %9309 = vmatprep.subr.bf16.mxu0 %v6496
          %9310 = vmatpush1.bf16.msra.mxu0 %v6495
          %9311 = vmatprep.subr.bf16.mxu0 %v6504
          %9312 = vmatpush1.bf16.msra.mxu0 %v6503
          %9313 = vmatprep.mubr.bf16.mxu0 %v2523
          %9314 = vmatmul.mubr.bf16.gmra.mrb[0].mxu0 %v2522
          %v9315 = vpop.f32.mrb[0].mxu0
          %v9316 = vadd.f32 0.0, %v9315
          %v9317 = vpop.f32.mrb[0].mxu0
          %v9318 = vadd.f32 0.0, %v9317
          %v9319 = vpop.f32.mrb[0].mxu0
          %v9320 = vpop.f32.mrb[0].mxu0
          %9321 = vdwg.mxu0
          %9322 = vmatprep.subr.bf16.mxu0 %v6512
          %9323 = vmatpush1.bf16.msra.mxu0 %v6511
          %9324 = vmatprep.subr.bf16.mxu0 %v6520
          %9325 = vmatpush1.bf16.msra.mxu0 %v6519
          %9326 = vmatprep.subr.bf16.mxu0 %v6528
          %9327 = vmatpush1.bf16.msra.mxu0 %v6527
          %9328 = vmatprep.subr.bf16.mxu0 %v6536
          %9329 = vmatpush1.bf16.msra.mxu0 %v6535
          %9330 = vmatprep.subr.bf16.mxu0 %v6544
          %9331 = vmatpush1.bf16.msra.mxu0 %v6543
          %9332 = vmatprep.subr.bf16.mxu0 %v6552
          %9333 = vmatpush1.bf16.msra.mxu0 %v6551
          %9334 = vmatprep.subr.bf16.mxu0 %v6560
          %9335 = vmatpush1.bf16.msra.mxu0 %v6559
          %9336 = vmatprep.subr.bf16.mxu0 %v6568
          %9337 = vmatpush1.bf16.msra.mxu0 %v6567
          %9338 = vmatprep.subr.bf16.mxu0 %v6576
          %9339 = vmatpush1.bf16.msra.mxu0 %v6575
          %9340 = vmatprep.subr.bf16.mxu0 %v6584
          %9341 = vmatpush1.bf16.msra.mxu0 %v6583
          %9342 = vmatprep.subr.bf16.mxu0 %v6592
          %9343 = vmatpush1.bf16.msra.mxu0 %v6591
          %9344 = vmatprep.subr.bf16.mxu0 %v6600
          %9345 = vmatpush1.bf16.msra.mxu0 %v6599
          %9346 = vmatprep.subr.bf16.mxu0 %v6608
          %9347 = vmatpush1.bf16.msra.mxu0 %v6607
          %9348 = vmatprep.subr.bf16.mxu0 %v6616
          %9349 = vmatpush1.bf16.msra.mxu0 %v6615
          %9350 = vmatprep.subr.bf16.mxu0 %v6624
          %9351 = vmatpush1.bf16.msra.mxu0 %v6623
          %9352 = vmatprep.subr.bf16.mxu0 %v6632
          %9353 = vmatpush1.bf16.msra.mxu0 %v6631
          %9354 = vmatprep.mubr.bf16.mxu0 %v2525
          %9355 = vmatmul.mubr.bf16.gmra.mrb[0].mxu0 %v2524
          %v9356 = vpop.f32.mrb[0].mxu0
          %v9357 = vadd.f32 %v9316, %v9356
          %v9358 = vpop.f32.mrb[0].mxu0
          %v9359 = vadd.f32 %v9318, %v9358
          %v9360 = vpop.f32.mrb[0].mxu0
          %v9361 = vpop.f32.mrb[0].mxu0
          %9362 = vdwg.mxu0
          %9363 = vmatprep.subr.bf16.mxu0 %v6640
          %9364 = vmatpush1.bf16.msra.mxu0 %v6639
          %9365 = vmatprep.subr.bf16.mxu0 %v6648
          %9366 = vmatpush1.bf16.msra.mxu0 %v6647
          %9367 = vmatprep.subr.bf16.mxu0 %v6656
          %9368 = vmatpush1.bf16.msra.mxu0 %v6655
          %9369 = vmatprep.subr.bf16.mxu0 %v6664
          %9370 = vmatpush1.bf16.msra.mxu0 %v6663
          %9371 = vmatprep.subr.bf16.mxu0 %v6672
          %9372 = vmatpush1.bf16.msra.mxu0 %v6671
          %9373 = vmatprep.subr.bf16.mxu0 %v6680
          %9374 = vmatpush1.bf16.msra.mxu0 %v6679
          %9375 = vmatprep.subr.bf16.mxu0 %v6688
          %9376 = vmatpush1.bf16.msra.mxu0 %v6687
          %9377 = vmatprep.subr.bf16.mxu0 %v6696
          %9378 = vmatpush1.bf16.msra.mxu0 %v6695
          %9379 = vmatprep.subr.bf16.mxu0 %v6704
          %9380 = vmatpush1.bf16.msra.mxu0 %v6703
          %9381 = vmatprep.subr.bf16.mxu0 %v6712
          %9382 = vmatpush1.bf16.msra.mxu0 %v6711
          %9383 = vmatprep.subr.bf16.mxu0 %v6720
          %9384 = vmatpush1.bf16.msra.mxu0 %v6719
          %9385 = vmatprep.subr.bf16.mxu0 %v6728
          %9386 = vmatpush1.bf16.msra.mxu0 %v6727
          %9387 = vmatprep.subr.bf16.mxu0 %v6736
          %9388 = vmatpush1.bf16.msra.mxu0 %v6735
          %9389 = vmatprep.subr.bf16.mxu0 %v6744
          %9390 = vmatpush1.bf16.msra.mxu0 %v6743
          %9391 = vmatprep.subr.bf16.mxu0 %v6752
          %9392 = vmatpush1.bf16.msra.mxu0 %v6751
          %9393 = vmatprep.subr.bf16.mxu0 %v6760
          %9394 = vmatpush1.bf16.msra.mxu0 %v6759
          %9395 = vmatprep.mubr.bf16.mxu0 %v2527
          %9396 = vmatmul.mubr.bf16.gmra.mrb[0].mxu0 %v2526
          %v9397 = vpop.f32.mrb[0].mxu0
          %v9398 = vadd.f32 %v9357, %v9397
          %v9399 = vpop.f32.mrb[0].mxu0
          %v9400 = vadd.f32 %v9359, %v9399
          %v9401 = vpop.f32.mrb[0].mxu0
          %v9402 = vpop.f32.mrb[0].mxu0
          %9403 = vdwg.mxu0
          %9404 = vmatprep.subr.bf16.mxu0 %v6768
          %9405 = vmatpush1.bf16.msra.mxu0 %v6767
          %9406 = vmatprep.subr.bf16.mxu0 %v6776
          %9407 = vmatpush1.bf16.msra.mxu0 %v6775
          %9408 = vmatprep.subr.bf16.mxu0 %v6784
          %9409 = vmatpush1.bf16.msra.mxu0 %v6783
          %9410 = vmatprep.subr.bf16.mxu0 %v6792
          %9411 = vmatpush1.bf16.msra.mxu0 %v6791
          %9412 = vmatprep.subr.bf16.mxu0 %v6800
          %9413 = vmatpush1.bf16.msra.mxu0 %v6799
          %9414 = vmatprep.subr.bf16.mxu0 %v6808
          %9415 = vmatpush1.bf16.msra.mxu0 %v6807
          %9416 = vmatprep.subr.bf16.mxu0 %v6816
          %9417 = vmatpush1.bf16.msra.mxu0 %v6815
          %9418 = vmatprep.subr.bf16.mxu0 %v6824
          %9419 = vmatpush1.bf16.msra.mxu0 %v6823
          %9420 = vmatprep.subr.bf16.mxu0 %v6832
          %9421 = vmatpush1.bf16.msra.mxu0 %v6831
          %9422 = vmatprep.subr.bf16.mxu0 %v6840
          %9423 = vmatpush1.bf16.msra.mxu0 %v6839
          %9424 = vmatprep.subr.bf16.mxu0 %v6848
          %9425 = vmatpush1.bf16.msra.mxu0 %v6847
          %9426 = vmatprep.subr.bf16.mxu0 %v6856
          %9427 = vmatpush1.bf16.msra.mxu0 %v6855
          %9428 = vmatprep.subr.bf16.mxu0 %v6864
          %9429 = vmatpush1.bf16.msra.mxu0 %v6863
          %9430 = vmatprep.subr.bf16.mxu0 %v6872
          %9431 = vmatpush1.bf16.msra.mxu0 %v6871
          %9432 = vmatprep.subr.bf16.mxu0 %v6880
          %9433 = vmatpush1.bf16.msra.mxu0 %v6879
          %9434 = vmatprep.subr.bf16.mxu0 %v6888
          %9435 = vmatpush1.bf16.msra.mxu0 %v6887
          %9436 = vmatprep.mubr.bf16.mxu0 %v2529
          %9437 = vmatmul.mubr.bf16.gmra.mrb[0].mxu0 %v2528
          %v9438 = vpop.f32.mrb[0].mxu0
          %v9439 = vadd.f32 %v9398, %v9438
          %v9440 = vpop.f32.mrb[0].mxu0
          %v9441 = vadd.f32 %v9400, %v9440
          %v9442 = vpop.f32.mrb[0].mxu0
          %v9443 = vpop.f32.mrb[0].mxu0
          %9444 = vdwg.mxu0
          %9445 = vmatprep.subr.bf16.mxu0 %v6896
          %9446 = vmatpush1.bf16.msra.mxu0 %v6895
          %9447 = vmatprep.subr.bf16.mxu0 %v6904
          %9448 = vmatpush1.bf16.msra.mxu0 %v6903
          %9449 = vmatprep.subr.bf16.mxu0 %v6912
          %9450 = vmatpush1.bf16.msra.mxu0 %v6911
          %9451 = vmatprep.subr.bf16.mxu0 %v6920
          %9452 = vmatpush1.bf16.msra.mxu0 %v6919
          %9453 = vmatprep.subr.bf16.mxu0 %v6928
          %9454 = vmatpush1.bf16.msra.mxu0 %v6927
          %9455 = vmatprep.subr.bf16.mxu0 %v6936
          %9456 = vmatpush1.bf16.msra.mxu0 %v6935
          %9457 = vmatprep.subr.bf16.mxu0 %v6944
          %9458 = vmatpush1.bf16.msra.mxu0 %v6943
          %9459 = vmatprep.subr.bf16.mxu0 %v6952
          %9460 = vmatpush1.bf16.msra.mxu0 %v6951
          %9461 = vmatprep.subr.bf16.mxu0 %v6960
          %9462 = vmatpush1.bf16.msra.mxu0 %v6959
          %9463 = vmatprep.subr.bf16.mxu0 %v6968
          %9464 = vmatpush1.bf16.msra.mxu0 %v6967
          %9465 = vmatprep.subr.bf16.mxu0 %v6976
          %9466 = vmatpush1.bf16.msra.mxu0 %v6975
          %9467 = vmatprep.subr.bf16.mxu0 %v6984
          %9468 = vmatpush1.bf16.msra.mxu0 %v6983
          %9469 = vmatprep.subr.bf16.mxu0 %v6992
          %9470 = vmatpush1.bf16.msra.mxu0 %v6991
          %9471 = vmatprep.subr.bf16.mxu0 %v7000
          %9472 = vmatpush1.bf16.msra.mxu0 %v6999
          %9473 = vmatprep.subr.bf16.mxu0 %v7008
          %9474 = vmatpush1.bf16.msra.mxu0 %v7007
          %9475 = vmatprep.subr.bf16.mxu0 %v7016
          %9476 = vmatpush1.bf16.msra.mxu0 %v7015
          %9477 = vmatprep.mubr.bf16.mxu0 %v2531
          %9478 = vmatmul.mubr.bf16.gmra.mrb[0].mxu0 %v2530
          %v9479 = vpop.f32.mrb[0].mxu0
          %v9480 = vadd.f32 %v9439, %v9479
          %v9481 = vpop.f32.mrb[0].mxu0
          %v9482 = vadd.f32 %v9441, %v9481
          %v9483 = vpop.f32.mrb[0].mxu0
          %v9484 = vpop.f32.mrb[0].mxu0
          %9485 = vdwg.mxu0
          %9486 = vmatprep.subr.bf16.mxu0 %v7024
          %9487 = vmatpush1.bf16.msra.mxu0 %v7023
          %9488 = vmatprep.subr.bf16.mxu0 %v7032
          %9489 = vmatpush1.bf16.msra.mxu0 %v7031
          %9490 = vmatprep.subr.bf16.mxu0 %v7040
          %9491 = vmatpush1.bf16.msra.mxu0 %v7039
          %9492 = vmatprep.subr.bf16.mxu0 %v7048
          %9493 = vmatpush1.bf16.msra.mxu0 %v7047
          %9494 = vmatprep.subr.bf16.mxu0 %v7056
          %9495 = vmatpush1.bf16.msra.mxu0 %v7055
          %9496 = vmatprep.subr.bf16.mxu0 %v7064
          %9497 = vmatpush1.bf16.msra.mxu0 %v7063
          %9498 = vmatprep.subr.bf16.mxu0 %v7072
          %9499 = vmatpush1.bf16.msra.mxu0 %v7071
          %9500 = vmatprep.subr.bf16.mxu0 %v7080
          %9501 = vmatpush1.bf16.msra.mxu0 %v7079
          %9502 = vmatprep.subr.bf16.mxu0 %v7088
          %9503 = vmatpush1.bf16.msra.mxu0 %v7087
          %9504 = vmatprep.subr.bf16.mxu0 %v7096
          %9505 = vmatpush1.bf16.msra.mxu0 %v7095
          %9506 = vmatprep.subr.bf16.mxu0 %v7104
          %9507 = vmatpush1.bf16.msra.mxu0 %v7103
          %9508 = vmatprep.subr.bf16.mxu0 %v7112
          %9509 = vmatpush1.bf16.msra.mxu0 %v7111
          %9510 = vmatprep.subr.bf16.mxu0 %v7120
          %9511 = vmatpush1.bf16.msra.mxu0 %v7119
          %9512 = vmatprep.subr.bf16.mxu0 %v7128
          %9513 = vmatpush1.bf16.msra.mxu0 %v7127
          %9514 = vmatprep.subr.bf16.mxu0 %v7136
          %9515 = vmatpush1.bf16.msra.mxu0 %v7135
          %9516 = vmatprep.subr.bf16.mxu0 %v7144
          %9517 = vmatpush1.bf16.msra.mxu0 %v7143
          %9518 = vmatprep.mubr.bf16.mxu0 %v2533
          %9519 = vmatmul.mubr.bf16.gmra.mrb[0].mxu0 %v2532
          %v9520 = vpop.f32.mrb[0].mxu0
          %v9521 = vadd.f32 %v9480, %v9520
          %v9522 = vpop.f32.mrb[0].mxu0
          %v9523 = vadd.f32 %v9482, %v9522
          %v9524 = vpop.f32.mrb[0].mxu0
          %v9525 = vpop.f32.mrb[0].mxu0
          %9526 = vdwg.mxu0
          %9527 = vmatprep.subr.bf16.mxu0 %v7152
          %9528 = vmatpush1.bf16.msra.mxu0 %v7151
          %9529 = vmatprep.subr.bf16.mxu0 %v7160
          %9530 = vmatpush1.bf16.msra.mxu0 %v7159
          %9531 = vmatprep.subr.bf16.mxu0 %v7168
          %9532 = vmatpush1.bf16.msra.mxu0 %v7167
          %9533 = vmatprep.subr.bf16.mxu0 %v7176
          %9534 = vmatpush1.bf16.msra.mxu0 %v7175
          %9535 = vmatprep.subr.bf16.mxu0 %v7184
          %9536 = vmatpush1.bf16.msra.mxu0 %v7183
          %9537 = vmatprep.subr.bf16.mxu0 %v7192
          %9538 = vmatpush1.bf16.msra.mxu0 %v7191
          %9539 = vmatprep.subr.bf16.mxu0 %v7200
          %9540 = vmatpush1.bf16.msra.mxu0 %v7199
          %9541 = vmatprep.subr.bf16.mxu0 %v7208
          %9542 = vmatpush1.bf16.msra.mxu0 %v7207
          %9543 = vmatprep.subr.bf16.mxu0 %v7216
          %9544 = vmatpush1.bf16.msra.mxu0 %v7215
          %9545 = vmatprep.subr.bf16.mxu0 %v7224
          %9546 = vmatpush1.bf16.msra.mxu0 %v7223
          %9547 = vmatprep.subr.bf16.mxu0 %v7232
          %9548 = vmatpush1.bf16.msra.mxu0 %v7231
          %9549 = vmatprep.subr.bf16.mxu0 %v7240
          %9550 = vmatpush1.bf16.msra.mxu0 %v7239
          %9551 = vmatprep.subr.bf16.mxu0 %v7248
          %9552 = vmatpush1.bf16.msra.mxu0 %v7247
          %9553 = vmatprep.subr.bf16.mxu0 %v7256
          %9554 = vmatpush1.bf16.msra.mxu0 %v7255
          %9555 = vmatprep.subr.bf16.mxu0 %v7264
          %9556 = vmatpush1.bf16.msra.mxu0 %v7263
          %9557 = vmatprep.subr.bf16.mxu0 %v7272
          %9558 = vmatpush1.bf16.msra.mxu0 %v7271
          %9559 = vmatprep.mubr.bf16.mxu0 %v2535
          %9560 = vmatmul.mubr.bf16.gmra.mrb[0].mxu0 %v2534
          %v9561 = vpop.f32.mrb[0].mxu0
          %v9562 = vadd.f32 %v9521, %v9561
          %v9563 = vpop.f32.mrb[0].mxu0
          %v9564 = vadd.f32 %v9523, %v9563
          %v9565 = vpop.f32.mrb[0].mxu0
          %v9566 = vpop.f32.mrb[0].mxu0
          %9567 = vdwg.mxu0
          %9568 = vmatprep.subr.bf16.mxu0 %v7280
          %9569 = vmatpush1.bf16.msra.mxu0 %v7279
          %9570 = vmatprep.subr.bf16.mxu0 %v7288
          %9571 = vmatpush1.bf16.msra.mxu0 %v7287
          %9572 = vmatprep.subr.bf16.mxu0 %v7296
          %9573 = vmatpush1.bf16.msra.mxu0 %v7295
          %9574 = vmatprep.subr.bf16.mxu0 %v7304
          %9575 = vmatpush1.bf16.msra.mxu0 %v7303
          %9576 = vmatprep.subr.bf16.mxu0 %v7312
          %9577 = vmatpush1.bf16.msra.mxu0 %v7311
          %9578 = vmatprep.subr.bf16.mxu0 %v7320
          %9579 = vmatpush1.bf16.msra.mxu0 %v7319
          %9580 = vmatprep.subr.bf16.mxu0 %v7328
          %9581 = vmatpush1.bf16.msra.mxu0 %v7327
          %9582 = vmatprep.subr.bf16.mxu0 %v7336
          %9583 = vmatpush1.bf16.msra.mxu0 %v7335
          %9584 = vmatprep.subr.bf16.mxu0 0
          %9585 = vmatpush1.bf16.msra.mxu0 0
          %9586 = vmatprep.subr.bf16.mxu0 0
          %9587 = vmatpush1.bf16.msra.mxu0 0
          %9588 = vmatprep.subr.bf16.mxu0 0
          %9589 = vmatpush1.bf16.msra.mxu0 0
          %9590 = vmatprep.subr.bf16.mxu0 0
          %9591 = vmatpush1.bf16.msra.mxu0 0
          %9592 = vmatprep.subr.bf16.mxu0 0
          %9593 = vmatpush1.bf16.msra.mxu0 0
          %9594 = vmatprep.subr.bf16.mxu0 0
          %9595 = vmatpush1.bf16.msra.mxu0 0
          %9596 = vmatprep.subr.bf16.mxu0 0
          %9597 = vmatpush1.bf16.msra.mxu0 0
          %9598 = vmatprep.subr.bf16.mxu0 0
          %9599 = vmatpush1.bf16.msra.mxu0 0
          %9600 = vmatprep.mubr.bf16.mxu0 0
          %9601 = vmatmul.mubr.bf16.gmra.mrb[0].mxu0 %v2536
          %v9602 = vpop.f32.mrb[0].mxu0
          %v9603 = vadd.f32 %v9562, %v9602
          %v9604 = vpop.f32.mrb[0].mxu0
          %v9605 = vadd.f32 %v9564, %v9604
          %v9606 = vpop.f32.mrb[0].mxu0
          %v9607 = vpop.f32.mrb[0].mxu0
          %9608 = vdwg.mxu0
          %v9609 = vld [vmem:[#allocation9] sm:$0xff]
          %v9611 = vlaneseq
          %v9612 = vshrl.u32 %v9611, 7
          %v9613 = vsub.s32 0, %v9612
          %v9614 = vrot.slane %v9609, %v9613
          %v9615 = vlaneseq
          %v9616 = vshrl.u32 %v9615, 7
          %v9617 = vsub.s32 1, %v9616
          %v9618 = vrot.slane %v9609, %v9617
          %v9619 = vlaneseq
          %v9620 = vshrl.u32 %v9619, 7
          %v9621 = vsub.s32 2, %v9620
          %v9622 = vrot.slane %v9609, %v9621
          %v9623 = vlaneseq
          %v9624 = vshrl.u32 %v9623, 7
          %v9625 = vsub.s32 3, %v9624
          %v9626 = vrot.slane %v9609, %v9625
          %v9627 = vlaneseq
          %v9628 = vshrl.u32 %v9627, 7
          %v9629 = vsub.s32 4, %v9628
          %v9630 = vrot.slane %v9609, %v9629
          %v9631 = vlaneseq
          %v9632 = vshrl.u32 %v9631, 7
          %v9633 = vsub.s32 5, %v9632
          %v9634 = vrot.slane %v9609, %v9633
          %v9635 = vlaneseq
          %v9636 = vshrl.u32 %v9635, 7
          %v9637 = vsub.s32 6, %v9636
          %v9638 = vrot.slane %v9609, %v9637
          %v9639 = vlaneseq
          %v9640 = vshrl.u32 %v9639, 7
          %v9641 = vsub.s32 7, %v9640
          %v9642 = vrot.slane %v9609, %v9641
          %v9651 = vmul.f32 %v8619, %v9614
          %v9652 = vmul.f32 %v8621, %v9618
          %v9653 = vmul.f32 %v8947, %v9622
          %v9654 = vmul.f32 %v8949, %v9626
          %v9655 = vmul.f32 %v9275, %v9630
          %v9656 = vmul.f32 %v9277, %v9634
          %v9657 = vmul.f32 %v9603, %v9638
          %v9658 = vmul.f32 %v9605, %v9642
          %v9659 = vld [vmem:[#allocation11] sm:$0xff]
          %v9661 = vlaneseq
          %v9662 = vshrl.u32 %v9661, 7
          %v9663 = vsub.s32 0, %v9662
          %v9664 = vrot.slane %v9659, %v9663
          %v9665 = vlaneseq
          %v9666 = vshrl.u32 %v9665, 7
          %v9667 = vsub.s32 1, %v9666
          %v9668 = vrot.slane %v9659, %v9667
          %v9669 = vlaneseq
          %v9670 = vshrl.u32 %v9669, 7
          %v9671 = vsub.s32 2, %v9670
          %v9672 = vrot.slane %v9659, %v9671
          %v9673 = vlaneseq
          %v9674 = vshrl.u32 %v9673, 7
          %v9675 = vsub.s32 3, %v9674
          %v9676 = vrot.slane %v9659, %v9675
          %v9677 = vlaneseq
          %v9678 = vshrl.u32 %v9677, 7
          %v9679 = vsub.s32 4, %v9678
          %v9680 = vrot.slane %v9659, %v9679
          %v9681 = vlaneseq
          %v9682 = vshrl.u32 %v9681, 7
          %v9683 = vsub.s32 5, %v9682
          %v9684 = vrot.slane %v9659, %v9683
          %v9685 = vlaneseq
          %v9686 = vshrl.u32 %v9685, 7
          %v9687 = vsub.s32 6, %v9686
          %v9688 = vrot.slane %v9659, %v9687
          %v9689 = vlaneseq
          %v9690 = vshrl.u32 %v9689, 7
          %v9691 = vsub.s32 7, %v9690
          %v9692 = vrot.slane %v9659, %v9691
          %v9701 = vadd.f32 %v9651, %v9664
          %v9702 = vadd.f32 %v9652, %v9668
          %v9703 = vadd.f32 %v9653, %v9672
          %v9704 = vadd.f32 %v9654, %v9676
          %v9705 = vadd.f32 %v9655, %v9680
          %v9706 = vadd.f32 %v9656, %v9684
          %v9707 = vadd.f32 %v9657, %v9688
          %v9708 = vadd.f32 %v9658, %v9692
          %v9709 = vmax.f32 %v9701, 0.0
          %v9710 = vmax.f32 %v9702, 0.0
          %v9711 = vmax.f32 %v9703, 0.0
          %v9712 = vmax.f32 %v9704, 0.0
          %v9713 = vmax.f32 %v9705, 0.0
          %v9714 = vmax.f32 %v9706, 0.0
          %v9715 = vmax.f32 %v9707, 0.0
          %v9716 = vmax.f32 %v9708, 0.0
          %v9717 = vpack.c.bf16 %v9709, %v9709
          %v9718 = vpack.c.bf16 %v9710, %v9710
          %v9719 = vpack.c.bf16 %v9711, %v9711
          %v9720 = vpack.c.bf16 %v9712, %v9712
          %v9721 = vpack.c.bf16 %v9713, %v9713
          %v9722 = vpack.c.bf16 %v9714, %v9714
          %v9723 = vpack.c.bf16 %v9715, %v9715
          %v9724 = vpack.c.bf16 %v9716, %v9716
          %v9725 = vld [vmem:[#allocation12] sm:$0xff]
          %v9726 = vld [vmem:[#allocation12 + $0x8] sm:$0xff]
          %v9727 = vld [vmem:[#allocation12 + $0x10] sm:$0xff]
          %v9728 = vld [vmem:[#allocation12 + $0x18] sm:$0xff]
          %v9729 = vld [vmem:[#allocation12 + $0x20] sm:$0xff]
          %v9730 = vld [vmem:[#allocation12 + $0x28] sm:$0xff]
          %v9731 = vld [vmem:[#allocation12 + $0x30] sm:$0xff]
          %v9732 = vld [vmem:[#allocation12 + $0x38] sm:$0xff]
          %v9733 = vld [vmem:[#allocation12 + $0x40] sm:$0xff]
          %v9734 = vld [vmem:[#allocation12 + $0x48] sm:$0xff]
          %v9735 = vld [vmem:[#allocation12 + $0x50] sm:$0xff]
          %v9736 = vld [vmem:[#allocation12 + $0x58] sm:$0xff]
          %v9737 = vld [vmem:[#allocation12 + $0x60] sm:$0xff]
          %v9738 = vld [vmem:[#allocation12 + $0x68] sm:$0xff]
          %v9739 = vld [vmem:[#allocation12 + $0x70] sm:$0xff]
          %v9740 = vld [vmem:[#allocation12 + $0x78] sm:$0xff]
          %v9741 = vld [vmem:[#allocation12 + $0x80] sm:$0xff]
          %v9742 = vld [vmem:[#allocation12 + $0x88] sm:$0xff]
          %v9743 = vld [vmem:[#allocation12 + $0x90] sm:$0xff]
          %v9744 = vld [vmem:[#allocation12 + $0x98] sm:$0xff]
          %v9745 = vld [vmem:[#allocation12 + $0xa0] sm:$0xff]
          %v9746 = vld [vmem:[#allocation12 + $0xa8] sm:$0xff]
          %v9747 = vld [vmem:[#allocation12 + $0xb0] sm:$0xff]
          %v9748 = vld [vmem:[#allocation12 + $0xb8] sm:$0xff]
          %v9749 = vld [vmem:[#allocation12 + $0xc0] sm:$0xff]
          %v9750 = vld [vmem:[#allocation12 + $0xc8] sm:$0xff]
          %v9751 = vld [vmem:[#allocation12 + $0xd0] sm:$0xff]
          %v9752 = vld [vmem:[#allocation12 + $0xd8] sm:$0xff]
          %v9753 = vld [vmem:[#allocation12 + $0xe0] sm:$0xff]
          %v9754 = vld [vmem:[#allocation12 + $0xe8] sm:$0xff]
          %v9755 = vld [vmem:[#allocation12 + $0xf0] sm:$0xff]
          %v9756 = vld [vmem:[#allocation12 + $0xf8] sm:$0xff]
          %v9757 = vld [vmem:[#allocation12 + $0x100] sm:$0xff]
          %v9758 = vld [vmem:[#allocation12 + $0x108] sm:$0xff]
          %v9759 = vld [vmem:[#allocation12 + $0x110] sm:$0xff]
          %v9760 = vld [vmem:[#allocation12 + $0x118] sm:$0xff]
          %v9761 = vld [vmem:[#allocation12 + $0x120] sm:$0xff]
          %v9762 = vld [vmem:[#allocation12 + $0x128] sm:$0xff]
          %v9763 = vld [vmem:[#allocation12 + $0x130] sm:$0xff]
          %v9764 = vld [vmem:[#allocation12 + $0x138] sm:$0xff]
          %v9765 = vld [vmem:[#allocation12 + $0x140] sm:$0xff]
          %v9766 = vld [vmem:[#allocation12 + $0x148] sm:$0xff]
          %v9767 = vld [vmem:[#allocation12 + $0x150] sm:$0xff]
          %v9768 = vld [vmem:[#allocation12 + $0x158] sm:$0xff]
          %v9769 = vld [vmem:[#allocation12 + $0x160] sm:$0xff]
          %v9770 = vld [vmem:[#allocation12 + $0x168] sm:$0xff]
          %v9771 = vld [vmem:[#allocation12 + $0x170] sm:$0xff]
          %v9772 = vld [vmem:[#allocation12 + $0x178] sm:$0xff]
          %v9773 = vld [vmem:[#allocation12 + $0x180] sm:$0xff]
          %v9774 = vld [vmem:[#allocation12 + $0x188] sm:$0xff]
          %v9775 = vld [vmem:[#allocation12 + $0x190] sm:$0xff]
          %v9776 = vld [vmem:[#allocation12 + $0x198] sm:$0xff]
          %v9777 = vld [vmem:[#allocation12 + $0x1a0] sm:$0xff]
          %v9778 = vld [vmem:[#allocation12 + $0x1a8] sm:$0xff]
          %v9779 = vld [vmem:[#allocation12 + $0x1b0] sm:$0xff]
          %v9780 = vld [vmem:[#allocation12 + $0x1b8] sm:$0xff]
          %v9781 = vld [vmem:[#allocation12 + $0x1c0] sm:$0xff]
          %v9782 = vld [vmem:[#allocation12 + $0x1c8] sm:$0xff]
          %v9783 = vld [vmem:[#allocation12 + $0x1d0] sm:$0xff]
          %v9784 = vld [vmem:[#allocation12 + $0x1d8] sm:$0xff]
          %v9785 = vld [vmem:[#allocation12 + $0x1e0] sm:$0xff]
          %v9786 = vld [vmem:[#allocation12 + $0x1e8] sm:$0xff]
          %v9787 = vld [vmem:[#allocation12 + $0x1f0] sm:$0xff]
          %v9788 = vld [vmem:[#allocation12 + $0x1f8] sm:$0xff]
          %v9789 = vld [vmem:[#allocation12 + $0x200] sm:$0xff]
          %v9790 = vld [vmem:[#allocation12 + $0x208] sm:$0xff]
          %v9791 = vld [vmem:[#allocation12 + $0x210] sm:$0xff]
          %v9792 = vld [vmem:[#allocation12 + $0x218] sm:$0xff]
          %v9793 = vld [vmem:[#allocation12 + $0x220] sm:$0xff]
          %v9794 = vld [vmem:[#allocation12 + $0x228] sm:$0xff]
          %v9795 = vld [vmem:[#allocation12 + $0x230] sm:$0xff]
          %v9796 = vld [vmem:[#allocation12 + $0x238] sm:$0xff]
          %v9797 = vld [vmem:[#allocation12 + $0x240] sm:$0xff]
          %v9798 = vld [vmem:[#allocation12 + $0x248] sm:$0xff]
          %v9799 = vld [vmem:[#allocation12 + $0x250] sm:$0xff]
          %v9800 = vld [vmem:[#allocation12 + $0x258] sm:$0xff]
          %v9801 = vld [vmem:[#allocation12 + $0x260] sm:$0xff]
          %v9802 = vld [vmem:[#allocation12 + $0x268] sm:$0xff]
          %v9803 = vld [vmem:[#allocation12 + $0x270] sm:$0xff]
          %v9804 = vld [vmem:[#allocation12 + $0x278] sm:$0xff]
          %v9805 = vld [vmem:[#allocation12 + $0x280] sm:$0xff]
          %v9806 = vld [vmem:[#allocation12 + $0x288] sm:$0xff]
          %v9807 = vld [vmem:[#allocation12 + $0x290] sm:$0xff]
          %v9808 = vld [vmem:[#allocation12 + $0x298] sm:$0xff]
          %v9809 = vld [vmem:[#allocation12 + $0x2a0] sm:$0xff]
          %v9810 = vld [vmem:[#allocation12 + $0x2a8] sm:$0xff]
          %v9811 = vld [vmem:[#allocation12 + $0x2b0] sm:$0xff]
          %v9812 = vld [vmem:[#allocation12 + $0x2b8] sm:$0xff]
          %v9813 = vld [vmem:[#allocation12 + $0x2c0] sm:$0xff]
          %v9814 = vld [vmem:[#allocation12 + $0x2c8] sm:$0xff]
          %v9815 = vld [vmem:[#allocation12 + $0x2d0] sm:$0xff]
          %v9816 = vld [vmem:[#allocation12 + $0x2d8] sm:$0xff]
          %v9817 = vld [vmem:[#allocation12 + $0x2e0] sm:$0xff]
          %v9818 = vld [vmem:[#allocation12 + $0x2e8] sm:$0xff]
          %v9819 = vld [vmem:[#allocation12 + $0x2f0] sm:$0xff]
          %v9820 = vld [vmem:[#allocation12 + $0x2f8] sm:$0xff]
          %v9821 = vld [vmem:[#allocation12 + $0x300] sm:$0xff]
          %v9822 = vld [vmem:[#allocation12 + $0x308] sm:$0xff]
          %v9823 = vld [vmem:[#allocation12 + $0x310] sm:$0xff]
          %v9824 = vld [vmem:[#allocation12 + $0x318] sm:$0xff]
          %v9825 = vld [vmem:[#allocation12 + $0x320] sm:$0xff]
          %v9826 = vld [vmem:[#allocation12 + $0x328] sm:$0xff]
          %v9827 = vld [vmem:[#allocation12 + $0x330] sm:$0xff]
          %v9828 = vld [vmem:[#allocation12 + $0x338] sm:$0xff]
          %v9829 = vld [vmem:[#allocation12 + $0x340] sm:$0xff]
          %v9830 = vld [vmem:[#allocation12 + $0x348] sm:$0xff]
          %v9831 = vld [vmem:[#allocation12 + $0x350] sm:$0xff]
          %v9832 = vld [vmem:[#allocation12 + $0x358] sm:$0xff]
          %v9833 = vld [vmem:[#allocation12 + $0x360] sm:$0xff]
          %v9834 = vld [vmem:[#allocation12 + $0x368] sm:$0xff]
          %v9835 = vld [vmem:[#allocation12 + $0x370] sm:$0xff]
          %v9836 = vld [vmem:[#allocation12 + $0x378] sm:$0xff]
          %v9837 = vld [vmem:[#allocation12 + $0x380] sm:$0xff]
          %v9838 = vld [vmem:[#allocation12 + $0x388] sm:$0xff]
          %v9839 = vld [vmem:[#allocation12 + $0x390] sm:$0xff]
          %v9840 = vld [vmem:[#allocation12 + $0x398] sm:$0xff]
          %v9841 = vld [vmem:[#allocation12 + $0x3a0] sm:$0xff]
          %v9842 = vld [vmem:[#allocation12 + $0x3a8] sm:$0xff]
          %v9843 = vld [vmem:[#allocation12 + $0x3b0] sm:$0xff]
          %v9844 = vld [vmem:[#allocation12 + $0x3b8] sm:$0xff]
          %v9845 = vld [vmem:[#allocation12 + $0x3c0] sm:$0xff]
          %v9846 = vld [vmem:[#allocation12 + $0x3c8] sm:$0xff]
          %v9847 = vld [vmem:[#allocation12 + $0x3d0] sm:$0xff]
          %v9848 = vld [vmem:[#allocation12 + $0x3d8] sm:$0xff]
          %v9849 = vld [vmem:[#allocation12 + $0x3e0] sm:$0xff]
          %v9850 = vld [vmem:[#allocation12 + $0x3e8] sm:$0xff]
          %v9851 = vld [vmem:[#allocation12 + $0x3f0] sm:$0xff]
          %v9852 = vld [vmem:[#allocation12 + $0x3f8] sm:$0xff]
          %v9853 = vld [vmem:[#allocation12 + $0x400] sm:$0xff]
          %v9854 = vld [vmem:[#allocation12 + $0x408] sm:$0xff]
          %v9855 = vld [vmem:[#allocation12 + $0x410] sm:$0xff]
          %v9856 = vld [vmem:[#allocation12 + $0x418] sm:$0xff]
          %v9857 = vld [vmem:[#allocation12 + $0x420] sm:$0xff]
          %v9858 = vld [vmem:[#allocation12 + $0x428] sm:$0xff]
          %v9859 = vld [vmem:[#allocation12 + $0x430] sm:$0xff]
          %v9860 = vld [vmem:[#allocation12 + $0x438] sm:$0xff]
          %v9861 = vld [vmem:[#allocation12 + $0x440] sm:$0xff]
          %v9862 = vld [vmem:[#allocation12 + $0x448] sm:$0xff]
          %v9863 = vld [vmem:[#allocation12 + $0x450] sm:$0xff]
          %v9864 = vld [vmem:[#allocation12 + $0x458] sm:$0xff]
          %v9865 = vld [vmem:[#allocation12 + $0x460] sm:$0xff]
          %v9866 = vld [vmem:[#allocation12 + $0x468] sm:$0xff]
          %v9867 = vld [vmem:[#allocation12 + $0x470] sm:$0xff]
          %v9868 = vld [vmem:[#allocation12 + $0x478] sm:$0xff]
          %v9869 = vld [vmem:[#allocation12 + $0x480] sm:$0xff]
          %v9870 = vld [vmem:[#allocation12 + $0x488] sm:$0xff]
          %v9871 = vld [vmem:[#allocation12 + $0x490] sm:$0xff]
          %v9872 = vld [vmem:[#allocation12 + $0x498] sm:$0xff]
          %v9873 = vld [vmem:[#allocation12 + $0x4a0] sm:$0xff]
          %v9874 = vld [vmem:[#allocation12 + $0x4a8] sm:$0xff]
          %v9875 = vld [vmem:[#allocation12 + $0x4b0] sm:$0xff]
          %v9876 = vld [vmem:[#allocation12 + $0x4b8] sm:$0xff]
          %v9877 = vld [vmem:[#allocation12 + $0x4c0] sm:$0xff]
          %v9878 = vld [vmem:[#allocation12 + $0x4c8] sm:$0xff]
          %v9879 = vld [vmem:[#allocation12 + $0x4d0] sm:$0xff]
          %v9880 = vld [vmem:[#allocation12 + $0x4d8] sm:$0xff]
          %v9881 = vld [vmem:[#allocation12 + $0x4e0] sm:$0xff]
          %v9882 = vld [vmem:[#allocation12 + $0x4e8] sm:$0xff]
          %v9883 = vld [vmem:[#allocation12 + $0x4f0] sm:$0xff]
          %v9884 = vld [vmem:[#allocation12 + $0x4f8] sm:$0xff]
          %v9885 = vld [vmem:[#allocation12 + $0x500] sm:$0xff]
          %v9886 = vld [vmem:[#allocation12 + $0x508] sm:$0xff]
          %v9887 = vld [vmem:[#allocation12 + $0x510] sm:$0xff]
          %v9888 = vld [vmem:[#allocation12 + $0x518] sm:$0xff]
          %v9889 = vld [vmem:[#allocation12 + $0x520] sm:$0xff]
          %v9890 = vld [vmem:[#allocation12 + $0x528] sm:$0xff]
          %v9891 = vld [vmem:[#allocation12 + $0x530] sm:$0xff]
          %v9892 = vld [vmem:[#allocation12 + $0x538] sm:$0xff]
          %v9893 = vld [vmem:[#allocation12 + $0x540] sm:$0xff]
          %v9894 = vld [vmem:[#allocation12 + $0x548] sm:$0xff]
          %v9895 = vld [vmem:[#allocation12 + $0x550] sm:$0xff]
          %v9896 = vld [vmem:[#allocation12 + $0x558] sm:$0xff]
          %v9897 = vld [vmem:[#allocation12 + $0x560] sm:$0xff]
          %v9898 = vld [vmem:[#allocation12 + $0x568] sm:$0xff]
          %v9899 = vld [vmem:[#allocation12 + $0x570] sm:$0xff]
          %v9900 = vld [vmem:[#allocation12 + $0x578] sm:$0xff]
          %v9901 = vld [vmem:[#allocation12 + $0x580] sm:$0xff]
          %v9902 = vld [vmem:[#allocation12 + $0x588] sm:$0xff]
          %v9903 = vld [vmem:[#allocation12 + $0x590] sm:$0xff]
          %v9904 = vld [vmem:[#allocation12 + $0x598] sm:$0xff]
          %v9905 = vld [vmem:[#allocation12 + $0x5a0] sm:$0xff]
          %v9906 = vld [vmem:[#allocation12 + $0x5a8] sm:$0xff]
          %v9907 = vld [vmem:[#allocation12 + $0x5b0] sm:$0xff]
          %v9908 = vld [vmem:[#allocation12 + $0x5b8] sm:$0xff]
          %v9909 = vld [vmem:[#allocation12 + $0x5c0] sm:$0xff]
          %v9910 = vld [vmem:[#allocation12 + $0x5c8] sm:$0xff]
          %v9911 = vld [vmem:[#allocation12 + $0x5d0] sm:$0xff]
          %v9912 = vld [vmem:[#allocation12 + $0x5d8] sm:$0xff]
          %v9913 = vld [vmem:[#allocation12 + $0x5e0] sm:$0xff]
          %v9914 = vld [vmem:[#allocation12 + $0x5e8] sm:$0xff]
          %v9915 = vld [vmem:[#allocation12 + $0x5f0] sm:$0xff]
          %v9916 = vld [vmem:[#allocation12 + $0x5f8] sm:$0xff]
          %v9917 = vld [vmem:[#allocation12 + $0x600] sm:$0xff]
          %v9918 = vld [vmem:[#allocation12 + $0x608] sm:$0xff]
          %v9919 = vld [vmem:[#allocation12 + $0x610] sm:$0xff]
          %v9920 = vld [vmem:[#allocation12 + $0x618] sm:$0xff]
          %v9921 = vld [vmem:[#allocation12 + $0x620] sm:$0xff]
          %v9922 = vld [vmem:[#allocation12 + $0x628] sm:$0xff]
          %v9923 = vld [vmem:[#allocation12 + $0x630] sm:$0xff]
          %v9924 = vld [vmem:[#allocation12 + $0x638] sm:$0xff]
          %v9925 = vld [vmem:[#allocation12 + $0x640] sm:$0xff]
          %v9926 = vld [vmem:[#allocation12 + $0x648] sm:$0xff]
          %v9927 = vld [vmem:[#allocation12 + $0x650] sm:$0xff]
          %v9928 = vld [vmem:[#allocation12 + $0x658] sm:$0xff]
          %v9929 = vld [vmem:[#allocation12 + $0x660] sm:$0xff]
          %v9930 = vld [vmem:[#allocation12 + $0x668] sm:$0xff]
          %v9931 = vld [vmem:[#allocation12 + $0x670] sm:$0xff]
          %v9932 = vld [vmem:[#allocation12 + $0x678] sm:$0xff]
          %v9933 = vld [vmem:[#allocation12 + $0x680] sm:$0xff]
          %v9934 = vld [vmem:[#allocation12 + $0x688] sm:$0xff]
          %v9935 = vld [vmem:[#allocation12 + $0x690] sm:$0xff]
          %v9936 = vld [vmem:[#allocation12 + $0x698] sm:$0xff]
          %v9937 = vld [vmem:[#allocation12 + $0x6a0] sm:$0xff]
          %v9938 = vld [vmem:[#allocation12 + $0x6a8] sm:$0xff]
          %v9939 = vld [vmem:[#allocation12 + $0x6b0] sm:$0xff]
          %v9940 = vld [vmem:[#allocation12 + $0x6b8] sm:$0xff]
          %v9941 = vld [vmem:[#allocation12 + $0x6c0] sm:$0xff]
          %v9942 = vld [vmem:[#allocation12 + $0x6c8] sm:$0xff]
          %v9943 = vld [vmem:[#allocation12 + $0x6d0] sm:$0xff]
          %v9944 = vld [vmem:[#allocation12 + $0x6d8] sm:$0xff]
          %v9945 = vld [vmem:[#allocation12 + $0x6e0] sm:$0xff]
          %v9946 = vld [vmem:[#allocation12 + $0x6e8] sm:$0xff]
          %v9947 = vld [vmem:[#allocation12 + $0x6f0] sm:$0xff]
          %v9948 = vld [vmem:[#allocation12 + $0x6f8] sm:$0xff]
          %v9949 = vld [vmem:[#allocation12 + $0x700] sm:$0xff]
          %v9950 = vld [vmem:[#allocation12 + $0x708] sm:$0xff]
          %v9951 = vld [vmem:[#allocation12 + $0x710] sm:$0xff]
          %v9952 = vld [vmem:[#allocation12 + $0x718] sm:$0xff]
          %v9953 = vld [vmem:[#allocation12 + $0x720] sm:$0xff]
          %v9954 = vld [vmem:[#allocation12 + $0x728] sm:$0xff]
          %v9955 = vld [vmem:[#allocation12 + $0x730] sm:$0xff]
          %v9956 = vld [vmem:[#allocation12 + $0x738] sm:$0xff]
          %v9957 = vld [vmem:[#allocation12 + $0x740] sm:$0xff]
          %v9958 = vld [vmem:[#allocation12 + $0x748] sm:$0xff]
          %v9959 = vld [vmem:[#allocation12 + $0x750] sm:$0xff]
          %v9960 = vld [vmem:[#allocation12 + $0x758] sm:$0xff]
          %v9961 = vld [vmem:[#allocation12 + $0x760] sm:$0xff]
          %v9962 = vld [vmem:[#allocation12 + $0x768] sm:$0xff]
          %v9963 = vld [vmem:[#allocation12 + $0x770] sm:$0xff]
          %v9964 = vld [vmem:[#allocation12 + $0x778] sm:$0xff]
          %v9965 = vld [vmem:[#allocation12 + $0x780] sm:$0xff]
          %v9966 = vld [vmem:[#allocation12 + $0x788] sm:$0xff]
          %v9967 = vld [vmem:[#allocation12 + $0x790] sm:$0xff]
          %v9968 = vld [vmem:[#allocation12 + $0x798] sm:$0xff]
          %v9969 = vld [vmem:[#allocation12 + $0x7a0] sm:$0xff]
          %v9970 = vld [vmem:[#allocation12 + $0x7a8] sm:$0xff]
          %v9971 = vld [vmem:[#allocation12 + $0x7b0] sm:$0xff]
          %v9972 = vld [vmem:[#allocation12 + $0x7b8] sm:$0xff]
          %v9973 = vld [vmem:[#allocation12 + $0x7c0] sm:$0xff]
          %v9974 = vld [vmem:[#allocation12 + $0x7c8] sm:$0xff]
          %v9975 = vld [vmem:[#allocation12 + $0x7d0] sm:$0xff]
          %v9976 = vld [vmem:[#allocation12 + $0x7d8] sm:$0xff]
          %v9977 = vld [vmem:[#allocation12 + $0x7e0] sm:$0xff]
          %v9978 = vld [vmem:[#allocation12 + $0x7e8] sm:$0xff]
          %v9979 = vld [vmem:[#allocation12 + $0x7f0] sm:$0xff]
          %v9980 = vld [vmem:[#allocation12 + $0x7f8] sm:$0xff]
          %v10237 = vunpack.c.l.b16 %v9725
          %v10238 = vunpack.c.h.b16 %v9725
          %v10239 = vunpack.c.l.b16 %v9726
          %v10240 = vunpack.c.h.b16 %v9726
          %v10241 = vunpack.c.l.b16 %v9727
          %v10242 = vunpack.c.h.b16 %v9727
          %v10243 = vunpack.c.l.b16 %v9728
          %v10244 = vunpack.c.h.b16 %v9728
          %v10245 = vunpack.c.l.b16 %v9729
          %v10246 = vunpack.c.h.b16 %v9729
          %v10247 = vunpack.c.l.b16 %v9730
          %v10248 = vunpack.c.h.b16 %v9730
          %v10249 = vunpack.c.l.b16 %v9731
          %v10250 = vunpack.c.h.b16 %v9731
          %v10251 = vunpack.c.l.b16 %v9732
          %v10252 = vunpack.c.h.b16 %v9732
          %v10253 = vunpack.c.l.b16 %v9733
          %v10254 = vunpack.c.h.b16 %v9733
          %v10255 = vunpack.c.l.b16 %v9734
          %v10256 = vunpack.c.h.b16 %v9734
          %v10257 = vunpack.c.l.b16 %v9735
          %v10258 = vunpack.c.h.b16 %v9735
          %v10259 = vunpack.c.l.b16 %v9736
          %v10260 = vunpack.c.h.b16 %v9736
          %v10261 = vunpack.c.l.b16 %v9737
          %v10262 = vunpack.c.h.b16 %v9737
          %v10263 = vunpack.c.l.b16 %v9738
          %v10264 = vunpack.c.h.b16 %v9738
          %v10265 = vunpack.c.l.b16 %v9739
          %v10266 = vunpack.c.h.b16 %v9739
          %v10267 = vunpack.c.l.b16 %v9740
          %v10268 = vunpack.c.h.b16 %v9740
          %v10269 = vunpack.c.l.b16 %v9741
          %v10270 = vunpack.c.h.b16 %v9741
          %v10271 = vunpack.c.l.b16 %v9742
          %v10272 = vunpack.c.h.b16 %v9742
          %v10273 = vunpack.c.l.b16 %v9743
          %v10274 = vunpack.c.h.b16 %v9743
          %v10275 = vunpack.c.l.b16 %v9744
          %v10276 = vunpack.c.h.b16 %v9744
          %v10277 = vunpack.c.l.b16 %v9745
          %v10278 = vunpack.c.h.b16 %v9745
          %v10279 = vunpack.c.l.b16 %v9746
          %v10280 = vunpack.c.h.b16 %v9746
          %v10281 = vunpack.c.l.b16 %v9747
          %v10282 = vunpack.c.h.b16 %v9747
          %v10283 = vunpack.c.l.b16 %v9748
          %v10284 = vunpack.c.h.b16 %v9748
          %v10285 = vunpack.c.l.b16 %v9749
          %v10286 = vunpack.c.h.b16 %v9749
          %v10287 = vunpack.c.l.b16 %v9750
          %v10288 = vunpack.c.h.b16 %v9750
          %v10289 = vunpack.c.l.b16 %v9751
          %v10290 = vunpack.c.h.b16 %v9751
          %v10291 = vunpack.c.l.b16 %v9752
          %v10292 = vunpack.c.h.b16 %v9752
          %v10293 = vunpack.c.l.b16 %v9753
          %v10294 = vunpack.c.h.b16 %v9753
          %v10295 = vunpack.c.l.b16 %v9754
          %v10296 = vunpack.c.h.b16 %v9754
          %v10297 = vunpack.c.l.b16 %v9755
          %v10298 = vunpack.c.h.b16 %v9755
          %v10299 = vunpack.c.l.b16 %v9756
          %v10300 = vunpack.c.h.b16 %v9756
          %v10301 = vunpack.c.l.b16 %v9757
          %v10302 = vunpack.c.h.b16 %v9757
          %v10303 = vunpack.c.l.b16 %v9758
          %v10304 = vunpack.c.h.b16 %v9758
          %v10305 = vunpack.c.l.b16 %v9759
          %v10306 = vunpack.c.h.b16 %v9759
          %v10307 = vunpack.c.l.b16 %v9760
          %v10308 = vunpack.c.h.b16 %v9760
          %v10309 = vunpack.c.l.b16 %v9761
          %v10310 = vunpack.c.h.b16 %v9761
          %v10311 = vunpack.c.l.b16 %v9762
          %v10312 = vunpack.c.h.b16 %v9762
          %v10313 = vunpack.c.l.b16 %v9763
          %v10314 = vunpack.c.h.b16 %v9763
          %v10315 = vunpack.c.l.b16 %v9764
          %v10316 = vunpack.c.h.b16 %v9764
          %v10317 = vunpack.c.l.b16 %v9765
          %v10318 = vunpack.c.h.b16 %v9765
          %v10319 = vunpack.c.l.b16 %v9766
          %v10320 = vunpack.c.h.b16 %v9766
          %v10321 = vunpack.c.l.b16 %v9767
          %v10322 = vunpack.c.h.b16 %v9767
          %v10323 = vunpack.c.l.b16 %v9768
          %v10324 = vunpack.c.h.b16 %v9768
          %v10325 = vunpack.c.l.b16 %v9769
          %v10326 = vunpack.c.h.b16 %v9769
          %v10327 = vunpack.c.l.b16 %v9770
          %v10328 = vunpack.c.h.b16 %v9770
          %v10329 = vunpack.c.l.b16 %v9771
          %v10330 = vunpack.c.h.b16 %v9771
          %v10331 = vunpack.c.l.b16 %v9772
          %v10332 = vunpack.c.h.b16 %v9772
          %v10333 = vunpack.c.l.b16 %v9773
          %v10334 = vunpack.c.h.b16 %v9773
          %v10335 = vunpack.c.l.b16 %v9774
          %v10336 = vunpack.c.h.b16 %v9774
          %v10337 = vunpack.c.l.b16 %v9775
          %v10338 = vunpack.c.h.b16 %v9775
          %v10339 = vunpack.c.l.b16 %v9776
          %v10340 = vunpack.c.h.b16 %v9776
          %v10341 = vunpack.c.l.b16 %v9777
          %v10342 = vunpack.c.h.b16 %v9777
          %v10343 = vunpack.c.l.b16 %v9778
          %v10344 = vunpack.c.h.b16 %v9778
          %v10345 = vunpack.c.l.b16 %v9779
          %v10346 = vunpack.c.h.b16 %v9779
          %v10347 = vunpack.c.l.b16 %v9780
          %v10348 = vunpack.c.h.b16 %v9780
          %v10349 = vunpack.c.l.b16 %v9781
          %v10350 = vunpack.c.h.b16 %v9781
          %v10351 = vunpack.c.l.b16 %v9782
          %v10352 = vunpack.c.h.b16 %v9782
          %v10353 = vunpack.c.l.b16 %v9783
          %v10354 = vunpack.c.h.b16 %v9783
          %v10355 = vunpack.c.l.b16 %v9784
          %v10356 = vunpack.c.h.b16 %v9784
          %v10357 = vunpack.c.l.b16 %v9785
          %v10358 = vunpack.c.h.b16 %v9785
          %v10359 = vunpack.c.l.b16 %v9786
          %v10360 = vunpack.c.h.b16 %v9786
          %v10361 = vunpack.c.l.b16 %v9787
          %v10362 = vunpack.c.h.b16 %v9787
          %v10363 = vunpack.c.l.b16 %v9788
          %v10364 = vunpack.c.h.b16 %v9788
          %v10365 = vunpack.c.l.b16 %v9789
          %v10366 = vunpack.c.h.b16 %v9789
          %v10367 = vunpack.c.l.b16 %v9790
          %v10368 = vunpack.c.h.b16 %v9790
          %v10369 = vunpack.c.l.b16 %v9791
          %v10370 = vunpack.c.h.b16 %v9791
          %v10371 = vunpack.c.l.b16 %v9792
          %v10372 = vunpack.c.h.b16 %v9792
          %v10373 = vunpack.c.l.b16 %v9793
          %v10374 = vunpack.c.h.b16 %v9793
          %v10375 = vunpack.c.l.b16 %v9794
          %v10376 = vunpack.c.h.b16 %v9794
          %v10377 = vunpack.c.l.b16 %v9795
          %v10378 = vunpack.c.h.b16 %v9795
          %v10379 = vunpack.c.l.b16 %v9796
          %v10380 = vunpack.c.h.b16 %v9796
          %v10381 = vunpack.c.l.b16 %v9797
          %v10382 = vunpack.c.h.b16 %v9797
          %v10383 = vunpack.c.l.b16 %v9798
          %v10384 = vunpack.c.h.b16 %v9798
          %v10385 = vunpack.c.l.b16 %v9799
          %v10386 = vunpack.c.h.b16 %v9799
          %v10387 = vunpack.c.l.b16 %v9800
          %v10388 = vunpack.c.h.b16 %v9800
          %v10389 = vunpack.c.l.b16 %v9801
          %v10390 = vunpack.c.h.b16 %v9801
          %v10391 = vunpack.c.l.b16 %v9802
          %v10392 = vunpack.c.h.b16 %v9802
          %v10393 = vunpack.c.l.b16 %v9803
          %v10394 = vunpack.c.h.b16 %v9803
          %v10395 = vunpack.c.l.b16 %v9804
          %v10396 = vunpack.c.h.b16 %v9804
          %v10397 = vunpack.c.l.b16 %v9805
          %v10398 = vunpack.c.h.b16 %v9805
          %v10399 = vunpack.c.l.b16 %v9806
          %v10400 = vunpack.c.h.b16 %v9806
          %v10401 = vunpack.c.l.b16 %v9807
          %v10402 = vunpack.c.h.b16 %v9807
          %v10403 = vunpack.c.l.b16 %v9808
          %v10404 = vunpack.c.h.b16 %v9808
          %v10405 = vunpack.c.l.b16 %v9809
          %v10406 = vunpack.c.h.b16 %v9809
          %v10407 = vunpack.c.l.b16 %v9810
          %v10408 = vunpack.c.h.b16 %v9810
          %v10409 = vunpack.c.l.b16 %v9811
          %v10410 = vunpack.c.h.b16 %v9811
          %v10411 = vunpack.c.l.b16 %v9812
          %v10412 = vunpack.c.h.b16 %v9812
          %v10413 = vunpack.c.l.b16 %v9813
          %v10414 = vunpack.c.h.b16 %v9813
          %v10415 = vunpack.c.l.b16 %v9814
          %v10416 = vunpack.c.h.b16 %v9814
          %v10417 = vunpack.c.l.b16 %v9815
          %v10418 = vunpack.c.h.b16 %v9815
          %v10419 = vunpack.c.l.b16 %v9816
          %v10420 = vunpack.c.h.b16 %v9816
          %v10421 = vunpack.c.l.b16 %v9817
          %v10422 = vunpack.c.h.b16 %v9817
          %v10423 = vunpack.c.l.b16 %v9818
          %v10424 = vunpack.c.h.b16 %v9818
          %v10425 = vunpack.c.l.b16 %v9819
          %v10426 = vunpack.c.h.b16 %v9819
          %v10427 = vunpack.c.l.b16 %v9820
          %v10428 = vunpack.c.h.b16 %v9820
          %v10429 = vunpack.c.l.b16 %v9821
          %v10430 = vunpack.c.h.b16 %v9821
          %v10431 = vunpack.c.l.b16 %v9822
          %v10432 = vunpack.c.h.b16 %v9822
          %v10433 = vunpack.c.l.b16 %v9823
          %v10434 = vunpack.c.h.b16 %v9823
          %v10435 = vunpack.c.l.b16 %v9824
          %v10436 = vunpack.c.h.b16 %v9824
          %v10437 = vunpack.c.l.b16 %v9825
          %v10438 = vunpack.c.h.b16 %v9825
          %v10439 = vunpack.c.l.b16 %v9826
          %v10440 = vunpack.c.h.b16 %v9826
          %v10441 = vunpack.c.l.b16 %v9827
          %v10442 = vunpack.c.h.b16 %v9827
          %v10443 = vunpack.c.l.b16 %v9828
          %v10444 = vunpack.c.h.b16 %v9828
          %v10445 = vunpack.c.l.b16 %v9829
          %v10446 = vunpack.c.h.b16 %v9829
          %v10447 = vunpack.c.l.b16 %v9830
          %v10448 = vunpack.c.h.b16 %v9830
          %v10449 = vunpack.c.l.b16 %v9831
          %v10450 = vunpack.c.h.b16 %v9831
          %v10451 = vunpack.c.l.b16 %v9832
          %v10452 = vunpack.c.h.b16 %v9832
          %v10453 = vunpack.c.l.b16 %v9833
          %v10454 = vunpack.c.h.b16 %v9833
          %v10455 = vunpack.c.l.b16 %v9834
          %v10456 = vunpack.c.h.b16 %v9834
          %v10457 = vunpack.c.l.b16 %v9835
          %v10458 = vunpack.c.h.b16 %v9835
          %v10459 = vunpack.c.l.b16 %v9836
          %v10460 = vunpack.c.h.b16 %v9836
          %v10461 = vunpack.c.l.b16 %v9837
          %v10462 = vunpack.c.h.b16 %v9837
          %v10463 = vunpack.c.l.b16 %v9838
          %v10464 = vunpack.c.h.b16 %v9838
          %v10465 = vunpack.c.l.b16 %v9839
          %v10466 = vunpack.c.h.b16 %v9839
          %v10467 = vunpack.c.l.b16 %v9840
          %v10468 = vunpack.c.h.b16 %v9840
          %v10469 = vunpack.c.l.b16 %v9841
          %v10470 = vunpack.c.h.b16 %v9841
          %v10471 = vunpack.c.l.b16 %v9842
          %v10472 = vunpack.c.h.b16 %v9842
          %v10473 = vunpack.c.l.b16 %v9843
          %v10474 = vunpack.c.h.b16 %v9843
          %v10475 = vunpack.c.l.b16 %v9844
          %v10476 = vunpack.c.h.b16 %v9844
          %v10477 = vunpack.c.l.b16 %v9845
          %v10478 = vunpack.c.h.b16 %v9845
          %v10479 = vunpack.c.l.b16 %v9846
          %v10480 = vunpack.c.h.b16 %v9846
          %v10481 = vunpack.c.l.b16 %v9847
          %v10482 = vunpack.c.h.b16 %v9847
          %v10483 = vunpack.c.l.b16 %v9848
          %v10484 = vunpack.c.h.b16 %v9848
          %v10485 = vunpack.c.l.b16 %v9849
          %v10486 = vunpack.c.h.b16 %v9849
          %v10487 = vunpack.c.l.b16 %v9850
          %v10488 = vunpack.c.h.b16 %v9850
          %v10489 = vunpack.c.l.b16 %v9851
          %v10490 = vunpack.c.h.b16 %v9851
          %v10491 = vunpack.c.l.b16 %v9852
          %v10492 = vunpack.c.h.b16 %v9852
          %v10493 = vunpack.c.l.b16 %v9853
          %v10494 = vunpack.c.h.b16 %v9853
          %v10495 = vunpack.c.l.b16 %v9854
          %v10496 = vunpack.c.h.b16 %v9854
          %v10497 = vunpack.c.l.b16 %v9855
          %v10498 = vunpack.c.h.b16 %v9855
          %v10499 = vunpack.c.l.b16 %v9856
          %v10500 = vunpack.c.h.b16 %v9856
          %v10501 = vunpack.c.l.b16 %v9857
          %v10502 = vunpack.c.h.b16 %v9857
          %v10503 = vunpack.c.l.b16 %v9858
          %v10504 = vunpack.c.h.b16 %v9858
          %v10505 = vunpack.c.l.b16 %v9859
          %v10506 = vunpack.c.h.b16 %v9859
          %v10507 = vunpack.c.l.b16 %v9860
          %v10508 = vunpack.c.h.b16 %v9860
          %v10509 = vunpack.c.l.b16 %v9861
          %v10510 = vunpack.c.h.b16 %v9861
          %v10511 = vunpack.c.l.b16 %v9862
          %v10512 = vunpack.c.h.b16 %v9862
          %v10513 = vunpack.c.l.b16 %v9863
          %v10514 = vunpack.c.h.b16 %v9863
          %v10515 = vunpack.c.l.b16 %v9864
          %v10516 = vunpack.c.h.b16 %v9864
          %v10517 = vunpack.c.l.b16 %v9865
          %v10518 = vunpack.c.h.b16 %v9865
          %v10519 = vunpack.c.l.b16 %v9866
          %v10520 = vunpack.c.h.b16 %v9866
          %v10521 = vunpack.c.l.b16 %v9867
          %v10522 = vunpack.c.h.b16 %v9867
          %v10523 = vunpack.c.l.b16 %v9868
          %v10524 = vunpack.c.h.b16 %v9868
          %v10525 = vunpack.c.l.b16 %v9869
          %v10526 = vunpack.c.h.b16 %v9869
          %v10527 = vunpack.c.l.b16 %v9870
          %v10528 = vunpack.c.h.b16 %v9870
          %v10529 = vunpack.c.l.b16 %v9871
          %v10530 = vunpack.c.h.b16 %v9871
          %v10531 = vunpack.c.l.b16 %v9872
          %v10532 = vunpack.c.h.b16 %v9872
          %v10533 = vunpack.c.l.b16 %v9873
          %v10534 = vunpack.c.h.b16 %v9873
          %v10535 = vunpack.c.l.b16 %v9874
          %v10536 = vunpack.c.h.b16 %v9874
          %v10537 = vunpack.c.l.b16 %v9875
          %v10538 = vunpack.c.h.b16 %v9875
          %v10539 = vunpack.c.l.b16 %v9876
          %v10540 = vunpack.c.h.b16 %v9876
          %v10541 = vunpack.c.l.b16 %v9877
          %v10542 = vunpack.c.h.b16 %v9877
          %v10543 = vunpack.c.l.b16 %v9878
          %v10544 = vunpack.c.h.b16 %v9878
          %v10545 = vunpack.c.l.b16 %v9879
          %v10546 = vunpack.c.h.b16 %v9879
          %v10547 = vunpack.c.l.b16 %v9880
          %v10548 = vunpack.c.h.b16 %v9880
          %v10549 = vunpack.c.l.b16 %v9881
          %v10550 = vunpack.c.h.b16 %v9881
          %v10551 = vunpack.c.l.b16 %v9882
          %v10552 = vunpack.c.h.b16 %v9882
          %v10553 = vunpack.c.l.b16 %v9883
          %v10554 = vunpack.c.h.b16 %v9883
          %v10555 = vunpack.c.l.b16 %v9884
          %v10556 = vunpack.c.h.b16 %v9884
          %v10557 = vunpack.c.l.b16 %v9885
          %v10558 = vunpack.c.h.b16 %v9885
          %v10559 = vunpack.c.l.b16 %v9886
          %v10560 = vunpack.c.h.b16 %v9886
          %v10561 = vunpack.c.l.b16 %v9887
          %v10562 = vunpack.c.h.b16 %v9887
          %v10563 = vunpack.c.l.b16 %v9888
          %v10564 = vunpack.c.h.b16 %v9888
          %v10565 = vunpack.c.l.b16 %v9889
          %v10566 = vunpack.c.h.b16 %v9889
          %v10567 = vunpack.c.l.b16 %v9890
          %v10568 = vunpack.c.h.b16 %v9890
          %v10569 = vunpack.c.l.b16 %v9891
          %v10570 = vunpack.c.h.b16 %v9891
          %v10571 = vunpack.c.l.b16 %v9892
          %v10572 = vunpack.c.h.b16 %v9892
          %v10573 = vunpack.c.l.b16 %v9893
          %v10574 = vunpack.c.h.b16 %v9893
          %v10575 = vunpack.c.l.b16 %v9894
          %v10576 = vunpack.c.h.b16 %v9894
          %v10577 = vunpack.c.l.b16 %v9895
          %v10578 = vunpack.c.h.b16 %v9895
          %v10579 = vunpack.c.l.b16 %v9896
          %v10580 = vunpack.c.h.b16 %v9896
          %v10581 = vunpack.c.l.b16 %v9897
          %v10582 = vunpack.c.h.b16 %v9897
          %v10583 = vunpack.c.l.b16 %v9898
          %v10584 = vunpack.c.h.b16 %v9898
          %v10585 = vunpack.c.l.b16 %v9899
          %v10586 = vunpack.c.h.b16 %v9899
          %v10587 = vunpack.c.l.b16 %v9900
          %v10588 = vunpack.c.h.b16 %v9900
          %v10589 = vunpack.c.l.b16 %v9901
          %v10590 = vunpack.c.h.b16 %v9901
          %v10591 = vunpack.c.l.b16 %v9902
          %v10592 = vunpack.c.h.b16 %v9902
          %v10593 = vunpack.c.l.b16 %v9903
          %v10594 = vunpack.c.h.b16 %v9903
          %v10595 = vunpack.c.l.b16 %v9904
          %v10596 = vunpack.c.h.b16 %v9904
          %v10597 = vunpack.c.l.b16 %v9905
          %v10598 = vunpack.c.h.b16 %v9905
          %v10599 = vunpack.c.l.b16 %v9906
          %v10600 = vunpack.c.h.b16 %v9906
          %v10601 = vunpack.c.l.b16 %v9907
          %v10602 = vunpack.c.h.b16 %v9907
          %v10603 = vunpack.c.l.b16 %v9908
          %v10604 = vunpack.c.h.b16 %v9908
          %v10605 = vunpack.c.l.b16 %v9909
          %v10606 = vunpack.c.h.b16 %v9909
          %v10607 = vunpack.c.l.b16 %v9910
          %v10608 = vunpack.c.h.b16 %v9910
          %v10609 = vunpack.c.l.b16 %v9911
          %v10610 = vunpack.c.h.b16 %v9911
          %v10611 = vunpack.c.l.b16 %v9912
          %v10612 = vunpack.c.h.b16 %v9912
          %v10613 = vunpack.c.l.b16 %v9913
          %v10614 = vunpack.c.h.b16 %v9913
          %v10615 = vunpack.c.l.b16 %v9914
          %v10616 = vunpack.c.h.b16 %v9914
          %v10617 = vunpack.c.l.b16 %v9915
          %v10618 = vunpack.c.h.b16 %v9915
          %v10619 = vunpack.c.l.b16 %v9916
          %v10620 = vunpack.c.h.b16 %v9916
          %v10621 = vunpack.c.l.b16 %v9917
          %v10622 = vunpack.c.h.b16 %v9917
          %v10623 = vunpack.c.l.b16 %v9918
          %v10624 = vunpack.c.h.b16 %v9918
          %v10625 = vunpack.c.l.b16 %v9919
          %v10626 = vunpack.c.h.b16 %v9919
          %v10627 = vunpack.c.l.b16 %v9920
          %v10628 = vunpack.c.h.b16 %v9920
          %v10629 = vunpack.c.l.b16 %v9921
          %v10630 = vunpack.c.h.b16 %v9921
          %v10631 = vunpack.c.l.b16 %v9922
          %v10632 = vunpack.c.h.b16 %v9922
          %v10633 = vunpack.c.l.b16 %v9923
          %v10634 = vunpack.c.h.b16 %v9923
          %v10635 = vunpack.c.l.b16 %v9924
          %v10636 = vunpack.c.h.b16 %v9924
          %v10637 = vunpack.c.l.b16 %v9925
          %v10638 = vunpack.c.h.b16 %v9925
          %v10639 = vunpack.c.l.b16 %v9926
          %v10640 = vunpack.c.h.b16 %v9926
          %v10641 = vunpack.c.l.b16 %v9927
          %v10642 = vunpack.c.h.b16 %v9927
          %v10643 = vunpack.c.l.b16 %v9928
          %v10644 = vunpack.c.h.b16 %v9928
          %v10645 = vunpack.c.l.b16 %v9929
          %v10646 = vunpack.c.h.b16 %v9929
          %v10647 = vunpack.c.l.b16 %v9930
          %v10648 = vunpack.c.h.b16 %v9930
          %v10649 = vunpack.c.l.b16 %v9931
          %v10650 = vunpack.c.h.b16 %v9931
          %v10651 = vunpack.c.l.b16 %v9932
          %v10652 = vunpack.c.h.b16 %v9932
          %v10653 = vunpack.c.l.b16 %v9933
          %v10654 = vunpack.c.h.b16 %v9933
          %v10655 = vunpack.c.l.b16 %v9934
          %v10656 = vunpack.c.h.b16 %v9934
          %v10657 = vunpack.c.l.b16 %v9935
          %v10658 = vunpack.c.h.b16 %v9935
          %v10659 = vunpack.c.l.b16 %v9936
          %v10660 = vunpack.c.h.b16 %v9936
          %v10661 = vunpack.c.l.b16 %v9937
          %v10662 = vunpack.c.h.b16 %v9937
          %v10663 = vunpack.c.l.b16 %v9938
          %v10664 = vunpack.c.h.b16 %v9938
          %v10665 = vunpack.c.l.b16 %v9939
          %v10666 = vunpack.c.h.b16 %v9939
          %v10667 = vunpack.c.l.b16 %v9940
          %v10668 = vunpack.c.h.b16 %v9940
          %v10669 = vunpack.c.l.b16 %v9941
          %v10670 = vunpack.c.h.b16 %v9941
          %v10671 = vunpack.c.l.b16 %v9942
          %v10672 = vunpack.c.h.b16 %v9942
          %v10673 = vunpack.c.l.b16 %v9943
          %v10674 = vunpack.c.h.b16 %v9943
          %v10675 = vunpack.c.l.b16 %v9944
          %v10676 = vunpack.c.h.b16 %v9944
          %v10677 = vunpack.c.l.b16 %v9945
          %v10678 = vunpack.c.h.b16 %v9945
          %v10679 = vunpack.c.l.b16 %v9946
          %v10680 = vunpack.c.h.b16 %v9946
          %v10681 = vunpack.c.l.b16 %v9947
          %v10682 = vunpack.c.h.b16 %v9947
          %v10683 = vunpack.c.l.b16 %v9948
          %v10684 = vunpack.c.h.b16 %v9948
          %v10685 = vunpack.c.l.b16 %v9949
          %v10686 = vunpack.c.h.b16 %v9949
          %v10687 = vunpack.c.l.b16 %v9950
          %v10688 = vunpack.c.h.b16 %v9950
          %v10689 = vunpack.c.l.b16 %v9951
          %v10690 = vunpack.c.h.b16 %v9951
          %v10691 = vunpack.c.l.b16 %v9952
          %v10692 = vunpack.c.h.b16 %v9952
          %v10693 = vunpack.c.l.b16 %v9953
          %v10694 = vunpack.c.h.b16 %v9953
          %v10695 = vunpack.c.l.b16 %v9954
          %v10696 = vunpack.c.h.b16 %v9954
          %v10697 = vunpack.c.l.b16 %v9955
          %v10698 = vunpack.c.h.b16 %v9955
          %v10699 = vunpack.c.l.b16 %v9956
          %v10700 = vunpack.c.h.b16 %v9956
          %v10701 = vunpack.c.l.b16 %v9957
          %v10702 = vunpack.c.h.b16 %v9957
          %v10703 = vunpack.c.l.b16 %v9958
          %v10704 = vunpack.c.h.b16 %v9958
          %v10705 = vunpack.c.l.b16 %v9959
          %v10706 = vunpack.c.h.b16 %v9959
          %v10707 = vunpack.c.l.b16 %v9960
          %v10708 = vunpack.c.h.b16 %v9960
          %v10709 = vunpack.c.l.b16 %v9961
          %v10710 = vunpack.c.h.b16 %v9961
          %v10711 = vunpack.c.l.b16 %v9962
          %v10712 = vunpack.c.h.b16 %v9962
          %v10713 = vunpack.c.l.b16 %v9963
          %v10714 = vunpack.c.h.b16 %v9963
          %v10715 = vunpack.c.l.b16 %v9964
          %v10716 = vunpack.c.h.b16 %v9964
          %v10717 = vunpack.c.l.b16 %v9965
          %v10718 = vunpack.c.h.b16 %v9965
          %v10719 = vunpack.c.l.b16 %v9966
          %v10720 = vunpack.c.h.b16 %v9966
          %v10721 = vunpack.c.l.b16 %v9967
          %v10722 = vunpack.c.h.b16 %v9967
          %v10723 = vunpack.c.l.b16 %v9968
          %v10724 = vunpack.c.h.b16 %v9968
          %v10725 = vunpack.c.l.b16 %v9969
          %v10726 = vunpack.c.h.b16 %v9969
          %v10727 = vunpack.c.l.b16 %v9970
          %v10728 = vunpack.c.h.b16 %v9970
          %v10729 = vunpack.c.l.b16 %v9971
          %v10730 = vunpack.c.h.b16 %v9971
          %v10731 = vunpack.c.l.b16 %v9972
          %v10732 = vunpack.c.h.b16 %v9972
          %v10733 = vunpack.c.l.b16 %v9973
          %v10734 = vunpack.c.h.b16 %v9973
          %v10735 = vunpack.c.l.b16 %v9974
          %v10736 = vunpack.c.h.b16 %v9974
          %v10737 = vunpack.c.l.b16 %v9975
          %v10738 = vunpack.c.h.b16 %v9975
          %v10739 = vunpack.c.l.b16 %v9976
          %v10740 = vunpack.c.h.b16 %v9976
          %v10741 = vunpack.c.l.b16 %v9977
          %v10742 = vunpack.c.h.b16 %v9977
          %v10743 = vunpack.c.l.b16 %v9978
          %v10744 = vunpack.c.h.b16 %v9978
          %v10745 = vunpack.c.l.b16 %v9979
          %v10746 = vunpack.c.h.b16 %v9979
          %v10747 = vunpack.c.l.b16 %v9980
          %v10748 = vunpack.c.h.b16 %v9980
          %v10749 = vpack.c.b16 %v10241, %v10237
          %v10750 = vpack.c.b16 %v10242, %v10238
          %v10751 = vpack.c.b16 %v10243, %v10239
          %v10752 = vpack.c.b16 %v10244, %v10240
          %v10753 = vpack.c.b16 %v10249, %v10245
          %v10754 = vpack.c.b16 %v10250, %v10246
          %v10755 = vpack.c.b16 %v10251, %v10247
          %v10756 = vpack.c.b16 %v10252, %v10248
          %v10757 = vpack.c.b16 %v10257, %v10253
          %v10758 = vpack.c.b16 %v10258, %v10254
          %v10759 = vpack.c.b16 %v10259, %v10255
          %v10760 = vpack.c.b16 %v10260, %v10256
          %v10761 = vpack.c.b16 %v10265, %v10261
          %v10762 = vpack.c.b16 %v10266, %v10262
          %v10763 = vpack.c.b16 %v10267, %v10263
          %v10764 = vpack.c.b16 %v10268, %v10264
          %v10765 = vpack.c.b16 %v10273, %v10269
          %v10766 = vpack.c.b16 %v10274, %v10270
          %v10767 = vpack.c.b16 %v10275, %v10271
          %v10768 = vpack.c.b16 %v10276, %v10272
          %v10769 = vpack.c.b16 %v10281, %v10277
          %v10770 = vpack.c.b16 %v10282, %v10278
          %v10771 = vpack.c.b16 %v10283, %v10279
          %v10772 = vpack.c.b16 %v10284, %v10280
          %v10773 = vpack.c.b16 %v10289, %v10285
          %v10774 = vpack.c.b16 %v10290, %v10286
          %v10775 = vpack.c.b16 %v10291, %v10287
          %v10776 = vpack.c.b16 %v10292, %v10288
          %v10777 = vpack.c.b16 %v10297, %v10293
          %v10778 = vpack.c.b16 %v10298, %v10294
          %v10779 = vpack.c.b16 %v10299, %v10295
          %v10780 = vpack.c.b16 %v10300, %v10296
          %v10781 = vpack.c.b16 %v10305, %v10301
          %v10782 = vpack.c.b16 %v10306, %v10302
          %v10783 = vpack.c.b16 %v10307, %v10303
          %v10784 = vpack.c.b16 %v10308, %v10304
          %v10785 = vpack.c.b16 %v10313, %v10309
          %v10786 = vpack.c.b16 %v10314, %v10310
          %v10787 = vpack.c.b16 %v10315, %v10311
          %v10788 = vpack.c.b16 %v10316, %v10312
          %v10789 = vpack.c.b16 %v10321, %v10317
          %v10790 = vpack.c.b16 %v10322, %v10318
          %v10791 = vpack.c.b16 %v10323, %v10319
          %v10792 = vpack.c.b16 %v10324, %v10320
          %v10793 = vpack.c.b16 %v10329, %v10325
          %v10794 = vpack.c.b16 %v10330, %v10326
          %v10795 = vpack.c.b16 %v10331, %v10327
          %v10796 = vpack.c.b16 %v10332, %v10328
          %v10797 = vpack.c.b16 %v10337, %v10333
          %v10798 = vpack.c.b16 %v10338, %v10334
          %v10799 = vpack.c.b16 %v10339, %v10335
          %v10800 = vpack.c.b16 %v10340, %v10336
          %v10801 = vpack.c.b16 %v10345, %v10341
          %v10802 = vpack.c.b16 %v10346, %v10342
          %v10803 = vpack.c.b16 %v10347, %v10343
          %v10804 = vpack.c.b16 %v10348, %v10344
          %v10805 = vpack.c.b16 %v10353, %v10349
          %v10806 = vpack.c.b16 %v10354, %v10350
          %v10807 = vpack.c.b16 %v10355, %v10351
          %v10808 = vpack.c.b16 %v10356, %v10352
          %v10809 = vpack.c.b16 %v10361, %v10357
          %v10810 = vpack.c.b16 %v10362, %v10358
          %v10811 = vpack.c.b16 %v10363, %v10359
          %v10812 = vpack.c.b16 %v10364, %v10360
          %v10813 = vpack.c.b16 %v10369, %v10365
          %v10814 = vpack.c.b16 %v10370, %v10366
          %v10815 = vpack.c.b16 %v10371, %v10367
          %v10816 = vpack.c.b16 %v10372, %v10368
          %v10817 = vpack.c.b16 %v10377, %v10373
          %v10818 = vpack.c.b16 %v10378, %v10374
          %v10819 = vpack.c.b16 %v10379, %v10375
          %v10820 = vpack.c.b16 %v10380, %v10376
          %v10821 = vpack.c.b16 %v10385, %v10381
          %v10822 = vpack.c.b16 %v10386, %v10382
          %v10823 = vpack.c.b16 %v10387, %v10383
          %v10824 = vpack.c.b16 %v10388, %v10384
          %v10825 = vpack.c.b16 %v10393, %v10389
          %v10826 = vpack.c.b16 %v10394, %v10390
          %v10827 = vpack.c.b16 %v10395, %v10391
          %v10828 = vpack.c.b16 %v10396, %v10392
          %v10829 = vpack.c.b16 %v10401, %v10397
          %v10830 = vpack.c.b16 %v10402, %v10398
          %v10831 = vpack.c.b16 %v10403, %v10399
          %v10832 = vpack.c.b16 %v10404, %v10400
          %v10833 = vpack.c.b16 %v10409, %v10405
          %v10834 = vpack.c.b16 %v10410, %v10406
          %v10835 = vpack.c.b16 %v10411, %v10407
          %v10836 = vpack.c.b16 %v10412, %v10408
          %v10837 = vpack.c.b16 %v10417, %v10413
          %v10838 = vpack.c.b16 %v10418, %v10414
          %v10839 = vpack.c.b16 %v10419, %v10415
          %v10840 = vpack.c.b16 %v10420, %v10416
          %v10841 = vpack.c.b16 %v10425, %v10421
          %v10842 = vpack.c.b16 %v10426, %v10422
          %v10843 = vpack.c.b16 %v10427, %v10423
          %v10844 = vpack.c.b16 %v10428, %v10424
          %v10845 = vpack.c.b16 %v10433, %v10429
          %v10846 = vpack.c.b16 %v10434, %v10430
          %v10847 = vpack.c.b16 %v10435, %v10431
          %v10848 = vpack.c.b16 %v10436, %v10432
          %v10849 = vpack.c.b16 %v10441, %v10437
          %v10850 = vpack.c.b16 %v10442, %v10438
          %v10851 = vpack.c.b16 %v10443, %v10439
          %v10852 = vpack.c.b16 %v10444, %v10440
          %v10853 = vpack.c.b16 %v10449, %v10445
          %v10854 = vpack.c.b16 %v10450, %v10446
          %v10855 = vpack.c.b16 %v10451, %v10447
          %v10856 = vpack.c.b16 %v10452, %v10448
          %v10857 = vpack.c.b16 %v10457, %v10453
          %v10858 = vpack.c.b16 %v10458, %v10454
          %v10859 = vpack.c.b16 %v10459, %v10455
          %v10860 = vpack.c.b16 %v10460, %v10456
          %v10861 = vpack.c.b16 %v10465, %v10461
          %v10862 = vpack.c.b16 %v10466, %v10462
          %v10863 = vpack.c.b16 %v10467, %v10463
          %v10864 = vpack.c.b16 %v10468, %v10464
          %v10865 = vpack.c.b16 %v10473, %v10469
          %v10866 = vpack.c.b16 %v10474, %v10470
          %v10867 = vpack.c.b16 %v10475, %v10471
          %v10868 = vpack.c.b16 %v10476, %v10472
          %v10869 = vpack.c.b16 %v10481, %v10477
          %v10870 = vpack.c.b16 %v10482, %v10478
          %v10871 = vpack.c.b16 %v10483, %v10479
          %v10872 = vpack.c.b16 %v10484, %v10480
          %v10873 = vpack.c.b16 %v10489, %v10485
          %v10874 = vpack.c.b16 %v10490, %v10486
          %v10875 = vpack.c.b16 %v10491, %v10487
          %v10876 = vpack.c.b16 %v10492, %v10488
          %v10877 = vpack.c.b16 %v10497, %v10493
          %v10878 = vpack.c.b16 %v10498, %v10494
          %v10879 = vpack.c.b16 %v10499, %v10495
          %v10880 = vpack.c.b16 %v10500, %v10496
          %v10881 = vpack.c.b16 %v10505, %v10501
          %v10882 = vpack.c.b16 %v10506, %v10502
          %v10883 = vpack.c.b16 %v10507, %v10503
          %v10884 = vpack.c.b16 %v10508, %v10504
          %v10885 = vpack.c.b16 %v10513, %v10509
          %v10886 = vpack.c.b16 %v10514, %v10510
          %v10887 = vpack.c.b16 %v10515, %v10511
          %v10888 = vpack.c.b16 %v10516, %v10512
          %v10889 = vpack.c.b16 %v10521, %v10517
          %v10890 = vpack.c.b16 %v10522, %v10518
          %v10891 = vpack.c.b16 %v10523, %v10519
          %v10892 = vpack.c.b16 %v10524, %v10520
          %v10893 = vpack.c.b16 %v10529, %v10525
          %v10894 = vpack.c.b16 %v10530, %v10526
          %v10895 = vpack.c.b16 %v10531, %v10527
          %v10896 = vpack.c.b16 %v10532, %v10528
          %v10897 = vpack.c.b16 %v10537, %v10533
          %v10898 = vpack.c.b16 %v10538, %v10534
          %v10899 = vpack.c.b16 %v10539, %v10535
          %v10900 = vpack.c.b16 %v10540, %v10536
          %v10901 = vpack.c.b16 %v10545, %v10541
          %v10902 = vpack.c.b16 %v10546, %v10542
          %v10903 = vpack.c.b16 %v10547, %v10543
          %v10904 = vpack.c.b16 %v10548, %v10544
          %v10905 = vpack.c.b16 %v10553, %v10549
          %v10906 = vpack.c.b16 %v10554, %v10550
          %v10907 = vpack.c.b16 %v10555, %v10551
          %v10908 = vpack.c.b16 %v10556, %v10552
          %v10909 = vpack.c.b16 %v10561, %v10557
          %v10910 = vpack.c.b16 %v10562, %v10558
          %v10911 = vpack.c.b16 %v10563, %v10559
          %v10912 = vpack.c.b16 %v10564, %v10560
          %v10913 = vpack.c.b16 %v10569, %v10565
          %v10914 = vpack.c.b16 %v10570, %v10566
          %v10915 = vpack.c.b16 %v10571, %v10567
          %v10916 = vpack.c.b16 %v10572, %v10568
          %v10917 = vpack.c.b16 %v10577, %v10573
          %v10918 = vpack.c.b16 %v10578, %v10574
          %v10919 = vpack.c.b16 %v10579, %v10575
          %v10920 = vpack.c.b16 %v10580, %v10576
          %v10921 = vpack.c.b16 %v10585, %v10581
          %v10922 = vpack.c.b16 %v10586, %v10582
          %v10923 = vpack.c.b16 %v10587, %v10583
          %v10924 = vpack.c.b16 %v10588, %v10584
          %v10925 = vpack.c.b16 %v10593, %v10589
          %v10926 = vpack.c.b16 %v10594, %v10590
          %v10927 = vpack.c.b16 %v10595, %v10591
          %v10928 = vpack.c.b16 %v10596, %v10592
          %v10929 = vpack.c.b16 %v10601, %v10597
          %v10930 = vpack.c.b16 %v10602, %v10598
          %v10931 = vpack.c.b16 %v10603, %v10599
          %v10932 = vpack.c.b16 %v10604, %v10600
          %v10933 = vpack.c.b16 %v10609, %v10605
          %v10934 = vpack.c.b16 %v10610, %v10606
          %v10935 = vpack.c.b16 %v10611, %v10607
          %v10936 = vpack.c.b16 %v10612, %v10608
          %v10937 = vpack.c.b16 %v10617, %v10613
          %v10938 = vpack.c.b16 %v10618, %v10614
          %v10939 = vpack.c.b16 %v10619, %v10615
          %v10940 = vpack.c.b16 %v10620, %v10616
          %v10941 = vpack.c.b16 %v10625, %v10621
          %v10942 = vpack.c.b16 %v10626, %v10622
          %v10943 = vpack.c.b16 %v10627, %v10623
          %v10944 = vpack.c.b16 %v10628, %v10624
          %v10945 = vpack.c.b16 %v10633, %v10629
          %v10946 = vpack.c.b16 %v10634, %v10630
          %v10947 = vpack.c.b16 %v10635, %v10631
          %v10948 = vpack.c.b16 %v10636, %v10632
          %v10949 = vpack.c.b16 %v10641, %v10637
          %v10950 = vpack.c.b16 %v10642, %v10638
          %v10951 = vpack.c.b16 %v10643, %v10639
          %v10952 = vpack.c.b16 %v10644, %v10640
          %v10953 = vpack.c.b16 %v10649, %v10645
          %v10954 = vpack.c.b16 %v10650, %v10646
          %v10955 = vpack.c.b16 %v10651, %v10647
          %v10956 = vpack.c.b16 %v10652, %v10648
          %v10957 = vpack.c.b16 %v10657, %v10653
          %v10958 = vpack.c.b16 %v10658, %v10654
          %v10959 = vpack.c.b16 %v10659, %v10655
          %v10960 = vpack.c.b16 %v10660, %v10656
          %v10961 = vpack.c.b16 %v10665, %v10661
          %v10962 = vpack.c.b16 %v10666, %v10662
          %v10963 = vpack.c.b16 %v10667, %v10663
          %v10964 = vpack.c.b16 %v10668, %v10664
          %v10965 = vpack.c.b16 %v10673, %v10669
          %v10966 = vpack.c.b16 %v10674, %v10670
          %v10967 = vpack.c.b16 %v10675, %v10671
          %v10968 = vpack.c.b16 %v10676, %v10672
          %v10969 = vpack.c.b16 %v10681, %v10677
          %v10970 = vpack.c.b16 %v10682, %v10678
          %v10971 = vpack.c.b16 %v10683, %v10679
          %v10972 = vpack.c.b16 %v10684, %v10680
          %v10973 = vpack.c.b16 %v10689, %v10685
          %v10974 = vpack.c.b16 %v10690, %v10686
          %v10975 = vpack.c.b16 %v10691, %v10687
          %v10976 = vpack.c.b16 %v10692, %v10688
          %v10977 = vpack.c.b16 %v10697, %v10693
          %v10978 = vpack.c.b16 %v10698, %v10694
          %v10979 = vpack.c.b16 %v10699, %v10695
          %v10980 = vpack.c.b16 %v10700, %v10696
          %v10981 = vpack.c.b16 %v10705, %v10701
          %v10982 = vpack.c.b16 %v10706, %v10702
          %v10983 = vpack.c.b16 %v10707, %v10703
          %v10984 = vpack.c.b16 %v10708, %v10704
          %v10985 = vpack.c.b16 %v10713, %v10709
          %v10986 = vpack.c.b16 %v10714, %v10710
          %v10987 = vpack.c.b16 %v10715, %v10711
          %v10988 = vpack.c.b16 %v10716, %v10712
          %v10989 = vpack.c.b16 %v10721, %v10717
          %v10990 = vpack.c.b16 %v10722, %v10718
          %v10991 = vpack.c.b16 %v10723, %v10719
          %v10992 = vpack.c.b16 %v10724, %v10720
          %v10993 = vpack.c.b16 %v10729, %v10725
          %v10994 = vpack.c.b16 %v10730, %v10726
          %v10995 = vpack.c.b16 %v10731, %v10727
          %v10996 = vpack.c.b16 %v10732, %v10728
          %v10997 = vpack.c.b16 %v10737, %v10733
          %v10998 = vpack.c.b16 %v10738, %v10734
          %v10999 = vpack.c.b16 %v10739, %v10735
          %v11000 = vpack.c.b16 %v10740, %v10736
          %v11001 = vpack.c.b16 %v10745, %v10741
          %v11002 = vpack.c.b16 %v10746, %v10742
          %v11003 = vpack.c.b16 %v10747, %v10743
          %v11004 = vpack.c.b16 %v10748, %v10744
          %11261 = vmatprep.subr.bf16.mxu0 %v10750
          %11262 = vmatpush1.bf16.msra.mxu0 %v10749
          %11263 = vmatprep.subr.bf16.mxu0 %v10754
          %11264 = vmatpush1.bf16.msra.mxu0 %v10753
          %11265 = vmatprep.subr.bf16.mxu0 %v10758
          %11266 = vmatpush1.bf16.msra.mxu0 %v10757
          %11267 = vmatprep.subr.bf16.mxu0 %v10762
          %11268 = vmatpush1.bf16.msra.mxu0 %v10761
          %11269 = vmatprep.subr.bf16.mxu0 %v10766
          %11270 = vmatpush1.bf16.msra.mxu0 %v10765
          %11271 = vmatprep.subr.bf16.mxu0 %v10770
          %11272 = vmatpush1.bf16.msra.mxu0 %v10769
          %11273 = vmatprep.subr.bf16.mxu0 %v10774
          %11274 = vmatpush1.bf16.msra.mxu0 %v10773
          %11275 = vmatprep.subr.bf16.mxu0 %v10778
          %11276 = vmatpush1.bf16.msra.mxu0 %v10777
          %11277 = vmatprep.subr.bf16.mxu0 %v10782
          %11278 = vmatpush1.bf16.msra.mxu0 %v10781
          %11279 = vmatprep.subr.bf16.mxu0 %v10786
          %11280 = vmatpush1.bf16.msra.mxu0 %v10785
          %11281 = vmatprep.subr.bf16.mxu0 %v10790
          %11282 = vmatpush1.bf16.msra.mxu0 %v10789
          %11283 = vmatprep.subr.bf16.mxu0 %v10794
          %11284 = vmatpush1.bf16.msra.mxu0 %v10793
          %11285 = vmatprep.subr.bf16.mxu0 %v10798
          %11286 = vmatpush1.bf16.msra.mxu0 %v10797
          %11287 = vmatprep.subr.bf16.mxu0 %v10802
          %11288 = vmatpush1.bf16.msra.mxu0 %v10801
          %11289 = vmatprep.subr.bf16.mxu0 %v10806
          %11290 = vmatpush1.bf16.msra.mxu0 %v10805
          %11291 = vmatprep.subr.bf16.mxu0 %v10810
          %11292 = vmatpush1.bf16.msra.mxu0 %v10809
          %11293 = vmatprep.mubr.bf16.mxu0 %v9718
          %11294 = vmatmul.mubr.bf16.gmra.mrb[0].mxu0 %v9717
          %v11295 = vpop.f32.mrb[0].mxu0
          %v11296 = vadd.f32 0.0, %v11295
          %v11297 = vpop.f32.mrb[0].mxu0
          %v11298 = vadd.f32 0.0, %v11297
          %v11299 = vpop.f32.mrb[0].mxu0
          %v11300 = vpop.f32.mrb[0].mxu0
          %11301 = vdwg.mxu0
          %11302 = vmatprep.subr.bf16.mxu0 %v10814
          %11303 = vmatpush1.bf16.msra.mxu0 %v10813
          %11304 = vmatprep.subr.bf16.mxu0 %v10818
          %11305 = vmatpush1.bf16.msra.mxu0 %v10817
          %11306 = vmatprep.subr.bf16.mxu0 %v10822
          %11307 = vmatpush1.bf16.msra.mxu0 %v10821
          %11308 = vmatprep.subr.bf16.mxu0 %v10826
          %11309 = vmatpush1.bf16.msra.mxu0 %v10825
          %11310 = vmatprep.subr.bf16.mxu0 %v10830
          %11311 = vmatpush1.bf16.msra.mxu0 %v10829
          %11312 = vmatprep.subr.bf16.mxu0 %v10834
          %11313 = vmatpush1.bf16.msra.mxu0 %v10833
          %11314 = vmatprep.subr.bf16.mxu0 %v10838
          %11315 = vmatpush1.bf16.msra.mxu0 %v10837
          %11316 = vmatprep.subr.bf16.mxu0 %v10842
          %11317 = vmatpush1.bf16.msra.mxu0 %v10841
          %11318 = vmatprep.subr.bf16.mxu0 %v10846
          %11319 = vmatpush1.bf16.msra.mxu0 %v10845
          %11320 = vmatprep.subr.bf16.mxu0 %v10850
          %11321 = vmatpush1.bf16.msra.mxu0 %v10849
          %11322 = vmatprep.subr.bf16.mxu0 %v10854
          %11323 = vmatpush1.bf16.msra.mxu0 %v10853
          %11324 = vmatprep.subr.bf16.mxu0 %v10858
          %11325 = vmatpush1.bf16.msra.mxu0 %v10857
          %11326 = vmatprep.subr.bf16.mxu0 %v10862
          %11327 = vmatpush1.bf16.msra.mxu0 %v10861
          %11328 = vmatprep.subr.bf16.mxu0 %v10866
          %11329 = vmatpush1.bf16.msra.mxu0 %v10865
          %11330 = vmatprep.subr.bf16.mxu0 %v10870
          %11331 = vmatpush1.bf16.msra.mxu0 %v10869
          %11332 = vmatprep.subr.bf16.mxu0 %v10874
          %11333 = vmatpush1.bf16.msra.mxu0 %v10873
          %11334 = vmatprep.mubr.bf16.mxu0 %v9720
          %11335 = vmatmul.mubr.bf16.gmra.mrb[0].mxu0 %v9719
          %v11336 = vpop.f32.mrb[0].mxu0
          %v11337 = vadd.f32 %v11296, %v11336
          %v11338 = vpop.f32.mrb[0].mxu0
          %v11339 = vadd.f32 %v11298, %v11338
          %v11340 = vpop.f32.mrb[0].mxu0
          %v11341 = vpop.f32.mrb[0].mxu0
          %11342 = vdwg.mxu0
          %11343 = vmatprep.subr.bf16.mxu0 %v10878
          %11344 = vmatpush1.bf16.msra.mxu0 %v10877
          %11345 = vmatprep.subr.bf16.mxu0 %v10882
          %11346 = vmatpush1.bf16.msra.mxu0 %v10881
          %11347 = vmatprep.subr.bf16.mxu0 %v10886
          %11348 = vmatpush1.bf16.msra.mxu0 %v10885
          %11349 = vmatprep.subr.bf16.mxu0 %v10890
          %11350 = vmatpush1.bf16.msra.mxu0 %v10889
          %11351 = vmatprep.subr.bf16.mxu0 %v10894
          %11352 = vmatpush1.bf16.msra.mxu0 %v10893
          %11353 = vmatprep.subr.bf16.mxu0 %v10898
          %11354 = vmatpush1.bf16.msra.mxu0 %v10897
          %11355 = vmatprep.subr.bf16.mxu0 %v10902
          %11356 = vmatpush1.bf16.msra.mxu0 %v10901
          %11357 = vmatprep.subr.bf16.mxu0 %v10906
          %11358 = vmatpush1.bf16.msra.mxu0 %v10905
          %11359 = vmatprep.subr.bf16.mxu0 %v10910
          %11360 = vmatpush1.bf16.msra.mxu0 %v10909
          %11361 = vmatprep.subr.bf16.mxu0 %v10914
          %11362 = vmatpush1.bf16.msra.mxu0 %v10913
          %11363 = vmatprep.subr.bf16.mxu0 %v10918
          %11364 = vmatpush1.bf16.msra.mxu0 %v10917
          %11365 = vmatprep.subr.bf16.mxu0 %v10922
          %11366 = vmatpush1.bf16.msra.mxu0 %v10921
          %11367 = vmatprep.subr.bf16.mxu0 %v10926
          %11368 = vmatpush1.bf16.msra.mxu0 %v10925
          %11369 = vmatprep.subr.bf16.mxu0 %v10930
          %11370 = vmatpush1.bf16.msra.mxu0 %v10929
          %11371 = vmatprep.subr.bf16.mxu0 %v10934
          %11372 = vmatpush1.bf16.msra.mxu0 %v10933
          %11373 = vmatprep.subr.bf16.mxu0 %v10938
          %11374 = vmatpush1.bf16.msra.mxu0 %v10937
          %11375 = vmatprep.mubr.bf16.mxu0 %v9722
          %11376 = vmatmul.mubr.bf16.gmra.mrb[0].mxu0 %v9721
          %v11377 = vpop.f32.mrb[0].mxu0
          %v11378 = vadd.f32 %v11337, %v11377
          %v11379 = vpop.f32.mrb[0].mxu0
          %v11380 = vadd.f32 %v11339, %v11379
          %v11381 = vpop.f32.mrb[0].mxu0
          %v11382 = vpop.f32.mrb[0].mxu0
          %11383 = vdwg.mxu0
          %11384 = vmatprep.subr.bf16.mxu0 %v10942
          %11385 = vmatpush1.bf16.msra.mxu0 %v10941
          %11386 = vmatprep.subr.bf16.mxu0 %v10946
          %11387 = vmatpush1.bf16.msra.mxu0 %v10945
          %11388 = vmatprep.subr.bf16.mxu0 %v10950
          %11389 = vmatpush1.bf16.msra.mxu0 %v10949
          %11390 = vmatprep.subr.bf16.mxu0 %v10954
          %11391 = vmatpush1.bf16.msra.mxu0 %v10953
          %11392 = vmatprep.subr.bf16.mxu0 %v10958
          %11393 = vmatpush1.bf16.msra.mxu0 %v10957
          %11394 = vmatprep.subr.bf16.mxu0 %v10962
          %11395 = vmatpush1.bf16.msra.mxu0 %v10961
          %11396 = vmatprep.subr.bf16.mxu0 %v10966
          %11397 = vmatpush1.bf16.msra.mxu0 %v10965
          %11398 = vmatprep.subr.bf16.mxu0 %v10970
          %11399 = vmatpush1.bf16.msra.mxu0 %v10969
          %11400 = vmatprep.subr.bf16.mxu0 %v10974
          %11401 = vmatpush1.bf16.msra.mxu0 %v10973
          %11402 = vmatprep.subr.bf16.mxu0 %v10978
          %11403 = vmatpush1.bf16.msra.mxu0 %v10977
          %11404 = vmatprep.subr.bf16.mxu0 %v10982
          %11405 = vmatpush1.bf16.msra.mxu0 %v10981
          %11406 = vmatprep.subr.bf16.mxu0 %v10986
          %11407 = vmatpush1.bf16.msra.mxu0 %v10985
          %11408 = vmatprep.subr.bf16.mxu0 %v10990
          %11409 = vmatpush1.bf16.msra.mxu0 %v10989
          %11410 = vmatprep.subr.bf16.mxu0 %v10994
          %11411 = vmatpush1.bf16.msra.mxu0 %v10993
          %11412 = vmatprep.subr.bf16.mxu0 %v10998
          %11413 = vmatpush1.bf16.msra.mxu0 %v10997
          %11414 = vmatprep.subr.bf16.mxu0 %v11002
          %11415 = vmatpush1.bf16.msra.mxu0 %v11001
          %11416 = vmatprep.mubr.bf16.mxu0 %v9724
          %11417 = vmatmul.mubr.bf16.gmra.mrb[0].mxu0 %v9723
          %v11418 = vpop.f32.mrb[0].mxu0
          %v11419 = vadd.f32 %v11378, %v11418
          %v11420 = vpop.f32.mrb[0].mxu0
          %v11421 = vadd.f32 %v11380, %v11420
          %v11422 = vpop.f32.mrb[0].mxu0
          %v11423 = vpop.f32.mrb[0].mxu0
          %11424 = vdwg.mxu0
          %11425 = vmatprep.subr.bf16.mxu0 %v10752
          %11426 = vmatpush1.bf16.msra.mxu0 %v10751
          %11427 = vmatprep.subr.bf16.mxu0 %v10756
          %11428 = vmatpush1.bf16.msra.mxu0 %v10755
          %11429 = vmatprep.subr.bf16.mxu0 %v10760
          %11430 = vmatpush1.bf16.msra.mxu0 %v10759
          %11431 = vmatprep.subr.bf16.mxu0 %v10764
          %11432 = vmatpush1.bf16.msra.mxu0 %v10763
          %11433 = vmatprep.subr.bf16.mxu0 %v10768
          %11434 = vmatpush1.bf16.msra.mxu0 %v10767
          %11435 = vmatprep.subr.bf16.mxu0 %v10772
          %11436 = vmatpush1.bf16.msra.mxu0 %v10771
          %11437 = vmatprep.subr.bf16.mxu0 %v10776
          %11438 = vmatpush1.bf16.msra.mxu0 %v10775
          %11439 = vmatprep.subr.bf16.mxu0 %v10780
          %11440 = vmatpush1.bf16.msra.mxu0 %v10779
          %11441 = vmatprep.subr.bf16.mxu0 %v10784
          %11442 = vmatpush1.bf16.msra.mxu0 %v10783
          %11443 = vmatprep.subr.bf16.mxu0 %v10788
          %11444 = vmatpush1.bf16.msra.mxu0 %v10787
          %11445 = vmatprep.subr.bf16.mxu0 %v10792
          %11446 = vmatpush1.bf16.msra.mxu0 %v10791
          %11447 = vmatprep.subr.bf16.mxu0 %v10796
          %11448 = vmatpush1.bf16.msra.mxu0 %v10795
          %11449 = vmatprep.subr.bf16.mxu0 %v10800
          %11450 = vmatpush1.bf16.msra.mxu0 %v10799
          %11451 = vmatprep.subr.bf16.mxu0 %v10804
          %11452 = vmatpush1.bf16.msra.mxu0 %v10803
          %11453 = vmatprep.subr.bf16.mxu0 %v10808
          %11454 = vmatpush1.bf16.msra.mxu0 %v10807
          %11455 = vmatprep.subr.bf16.mxu0 %v10812
          %11456 = vmatpush1.bf16.msra.mxu0 %v10811
          %11457 = vmatprep.mubr.bf16.mxu0 %v9718
          %11458 = vmatmul.mubr.bf16.gmra.mrb[0].mxu0 %v9717
          %v11459 = vpop.f32.mrb[0].mxu0
          %v11460 = vadd.f32 0.0, %v11459
          %v11461 = vpop.f32.mrb[0].mxu0
          %v11462 = vadd.f32 0.0, %v11461
          %v11463 = vpop.f32.mrb[0].mxu0
          %v11464 = vpop.f32.mrb[0].mxu0
          %11465 = vdwg.mxu0
          %11466 = vmatprep.subr.bf16.mxu0 %v10816
          %11467 = vmatpush1.bf16.msra.mxu0 %v10815
          %11468 = vmatprep.subr.bf16.mxu0 %v10820
          %11469 = vmatpush1.bf16.msra.mxu0 %v10819
          %11470 = vmatprep.subr.bf16.mxu0 %v10824
          %11471 = vmatpush1.bf16.msra.mxu0 %v10823
          %11472 = vmatprep.subr.bf16.mxu0 %v10828
          %11473 = vmatpush1.bf16.msra.mxu0 %v10827
          %11474 = vmatprep.subr.bf16.mxu0 %v10832
          %11475 = vmatpush1.bf16.msra.mxu0 %v10831
          %11476 = vmatprep.subr.bf16.mxu0 %v10836
          %11477 = vmatpush1.bf16.msra.mxu0 %v10835
          %11478 = vmatprep.subr.bf16.mxu0 %v10840
          %11479 = vmatpush1.bf16.msra.mxu0 %v10839
          %11480 = vmatprep.subr.bf16.mxu0 %v10844
          %11481 = vmatpush1.bf16.msra.mxu0 %v10843
          %11482 = vmatprep.subr.bf16.mxu0 %v10848
          %11483 = vmatpush1.bf16.msra.mxu0 %v10847
          %11484 = vmatprep.subr.bf16.mxu0 %v10852
          %11485 = vmatpush1.bf16.msra.mxu0 %v10851
          %11486 = vmatprep.subr.bf16.mxu0 %v10856
          %11487 = vmatpush1.bf16.msra.mxu0 %v10855
          %11488 = vmatprep.subr.bf16.mxu0 %v10860
          %11489 = vmatpush1.bf16.msra.mxu0 %v10859
          %11490 = vmatprep.subr.bf16.mxu0 %v10864
          %11491 = vmatpush1.bf16.msra.mxu0 %v10863
          %11492 = vmatprep.subr.bf16.mxu0 %v10868
          %11493 = vmatpush1.bf16.msra.mxu0 %v10867
          %11494 = vmatprep.subr.bf16.mxu0 %v10872
          %11495 = vmatpush1.bf16.msra.mxu0 %v10871
          %11496 = vmatprep.subr.bf16.mxu0 %v10876
          %11497 = vmatpush1.bf16.msra.mxu0 %v10875
          %11498 = vmatprep.mubr.bf16.mxu0 %v9720
          %11499 = vmatmul.mubr.bf16.gmra.mrb[0].mxu0 %v9719
          %v11500 = vpop.f32.mrb[0].mxu0
          %v11501 = vadd.f32 %v11460, %v11500
          %v11502 = vpop.f32.mrb[0].mxu0
          %v11503 = vadd.f32 %v11462, %v11502
          %v11504 = vpop.f32.mrb[0].mxu0
          %v11505 = vpop.f32.mrb[0].mxu0
          %11506 = vdwg.mxu0
          %11507 = vmatprep.subr.bf16.mxu0 %v10880
          %11508 = vmatpush1.bf16.msra.mxu0 %v10879
          %11509 = vmatprep.subr.bf16.mxu0 %v10884
          %11510 = vmatpush1.bf16.msra.mxu0 %v10883
          %11511 = vmatprep.subr.bf16.mxu0 %v10888
          %11512 = vmatpush1.bf16.msra.mxu0 %v10887
          %11513 = vmatprep.subr.bf16.mxu0 %v10892
          %11514 = vmatpush1.bf16.msra.mxu0 %v10891
          %11515 = vmatprep.subr.bf16.mxu0 %v10896
          %11516 = vmatpush1.bf16.msra.mxu0 %v10895
          %11517 = vmatprep.subr.bf16.mxu0 %v10900
          %11518 = vmatpush1.bf16.msra.mxu0 %v10899
          %11519 = vmatprep.subr.bf16.mxu0 %v10904
          %11520 = vmatpush1.bf16.msra.mxu0 %v10903
          %11521 = vmatprep.subr.bf16.mxu0 %v10908
          %11522 = vmatpush1.bf16.msra.mxu0 %v10907
          %11523 = vmatprep.subr.bf16.mxu0 %v10912
          %11524 = vmatpush1.bf16.msra.mxu0 %v10911
          %11525 = vmatprep.subr.bf16.mxu0 %v10916
          %11526 = vmatpush1.bf16.msra.mxu0 %v10915
          %11527 = vmatprep.subr.bf16.mxu0 %v10920
          %11528 = vmatpush1.bf16.msra.mxu0 %v10919
          %11529 = vmatprep.subr.bf16.mxu0 %v10924
          %11530 = vmatpush1.bf16.msra.mxu0 %v10923
          %11531 = vmatprep.subr.bf16.mxu0 %v10928
          %11532 = vmatpush1.bf16.msra.mxu0 %v10927
          %11533 = vmatprep.subr.bf16.mxu0 %v10932
          %11534 = vmatpush1.bf16.msra.mxu0 %v10931
          %11535 = vmatprep.subr.bf16.mxu0 %v10936
          %11536 = vmatpush1.bf16.msra.mxu0 %v10935
          %11537 = vmatprep.subr.bf16.mxu0 %v10940
          %11538 = vmatpush1.bf16.msra.mxu0 %v10939
          %11539 = vmatprep.mubr.bf16.mxu0 %v9722
          %11540 = vmatmul.mubr.bf16.gmra.mrb[0].mxu0 %v9721
          %v11541 = vpop.f32.mrb[0].mxu0
          %v11542 = vadd.f32 %v11501, %v11541
          %v11543 = vpop.f32.mrb[0].mxu0
          %v11544 = vadd.f32 %v11503, %v11543
          %v11545 = vpop.f32.mrb[0].mxu0
          %v11546 = vpop.f32.mrb[0].mxu0
          %11547 = vdwg.mxu0
          %11548 = vmatprep.subr.bf16.mxu0 %v10944
          %11549 = vmatpush1.bf16.msra.mxu0 %v10943
          %11550 = vmatprep.subr.bf16.mxu0 %v10948
          %11551 = vmatpush1.bf16.msra.mxu0 %v10947
          %11552 = vmatprep.subr.bf16.mxu0 %v10952
          %11553 = vmatpush1.bf16.msra.mxu0 %v10951
          %11554 = vmatprep.subr.bf16.mxu0 %v10956
          %11555 = vmatpush1.bf16.msra.mxu0 %v10955
          %11556 = vmatprep.subr.bf16.mxu0 %v10960
          %11557 = vmatpush1.bf16.msra.mxu0 %v10959
          %11558 = vmatprep.subr.bf16.mxu0 %v10964
          %11559 = vmatpush1.bf16.msra.mxu0 %v10963
          %11560 = vmatprep.subr.bf16.mxu0 %v10968
          %11561 = vmatpush1.bf16.msra.mxu0 %v10967
          %11562 = vmatprep.subr.bf16.mxu0 %v10972
          %11563 = vmatpush1.bf16.msra.mxu0 %v10971
          %11564 = vmatprep.subr.bf16.mxu0 %v10976
          %11565 = vmatpush1.bf16.msra.mxu0 %v10975
          %11566 = vmatprep.subr.bf16.mxu0 %v10980
          %11567 = vmatpush1.bf16.msra.mxu0 %v10979
          %11568 = vmatprep.subr.bf16.mxu0 %v10984
          %11569 = vmatpush1.bf16.msra.mxu0 %v10983
          %11570 = vmatprep.subr.bf16.mxu0 %v10988
          %11571 = vmatpush1.bf16.msra.mxu0 %v10987
          %11572 = vmatprep.subr.bf16.mxu0 %v10992
          %11573 = vmatpush1.bf16.msra.mxu0 %v10991
          %11574 = vmatprep.subr.bf16.mxu0 %v10996
          %11575 = vmatpush1.bf16.msra.mxu0 %v10995
          %11576 = vmatprep.subr.bf16.mxu0 %v11000
          %11577 = vmatpush1.bf16.msra.mxu0 %v10999
          %11578 = vmatprep.subr.bf16.mxu0 %v11004
          %11579 = vmatpush1.bf16.msra.mxu0 %v11003
          %11580 = vmatprep.mubr.bf16.mxu0 %v9724
          %11581 = vmatmul.mubr.bf16.gmra.mrb[0].mxu0 %v9723
          %v11582 = vpop.f32.mrb[0].mxu0
          %v11583 = vadd.f32 %v11542, %v11582
          %v11584 = vpop.f32.mrb[0].mxu0
          %v11585 = vadd.f32 %v11544, %v11584
          %v11586 = vpop.f32.mrb[0].mxu0
          %v11587 = vpop.f32.mrb[0].mxu0
          %11588 = vdwg.mxu0
          %v11589 = vld [vmem:[#allocation14] sm:$0xf]
          %v11591 = vlaneseq
          %v11592 = vshrl.u32 %v11591, 7
          %v11593 = vsub.s32 0, %v11592
          %v11594 = vrot.slane %v11589, %v11593
          %v11595 = vlaneseq
          %v11596 = vshrl.u32 %v11595, 7
          %v11597 = vsub.s32 1, %v11596
          %v11598 = vrot.slane %v11589, %v11597
          %v11599 = vlaneseq
          %v11600 = vshrl.u32 %v11599, 7
          %v11601 = vsub.s32 2, %v11600
          %v11602 = vrot.slane %v11589, %v11601
          %v11603 = vlaneseq
          %v11604 = vshrl.u32 %v11603, 7
          %v11605 = vsub.s32 3, %v11604
          %v11606 = vrot.slane %v11589, %v11605
          %v11611 = vmul.f32 %v11419, %v11594
          %v11612 = vmul.f32 %v11421, %v11598
          %v11613 = vmul.f32 %v11583, %v11602
          %v11614 = vmul.f32 %v11585, %v11606
          %v11615 = vld [vmem:[#allocation15] sm:$0xf]
          %v11617 = vlaneseq
          %v11618 = vshrl.u32 %v11617, 7
          %v11619 = vsub.s32 0, %v11618
          %v11620 = vrot.slane %v11615, %v11619
          %v11621 = vlaneseq
          %v11622 = vshrl.u32 %v11621, 7
          %v11623 = vsub.s32 1, %v11622
          %v11624 = vrot.slane %v11615, %v11623
          %v11625 = vlaneseq
          %v11626 = vshrl.u32 %v11625, 7
          %v11627 = vsub.s32 2, %v11626
          %v11628 = vrot.slane %v11615, %v11627
          %v11629 = vlaneseq
          %v11630 = vshrl.u32 %v11629, 7
          %v11631 = vsub.s32 3, %v11630
          %v11632 = vrot.slane %v11615, %v11631
          %v11637 = vadd.f32 %v11611, %v11620
          %v11638 = vadd.f32 %v11612, %v11624
          %v11639 = vadd.f32 %v11613, %v11628
          %v11640 = vadd.f32 %v11614, %v11632
          %v11641 = vmax.f32 %v11637, 0.0
          %v11642 = vmax.f32 %v11638, 0.0
          %v11643 = vmax.f32 %v11639, 0.0
          %v11644 = vmax.f32 %v11640, 0.0
          %v11645 = vpack.c.bf16 %v11641, %v11641
          %v11646 = vpack.c.bf16 %v11642, %v11642
          %v11647 = vpack.c.bf16 %v11643, %v11643
          %v11648 = vpack.c.bf16 %v11644, %v11644
          %v11649 = vld [vmem:[#allocation17] sm:$0xf]
          %v11650 = vld [vmem:[#allocation17 + $0x4] sm:$0xf]
          %v11651 = vld [vmem:[#allocation17 + $0x8] sm:$0xf]
          %v11652 = vld [vmem:[#allocation17 + $0xc] sm:$0xf]
          %v11653 = vld [vmem:[#allocation17 + $0x10] sm:$0xf]
          %v11654 = vld [vmem:[#allocation17 + $0x14] sm:$0xf]
          %v11655 = vld [vmem:[#allocation17 + $0x18] sm:$0xf]
          %v11656 = vld [vmem:[#allocation17 + $0x1c] sm:$0xf]
          %v11657 = vld [vmem:[#allocation17 + $0x20] sm:$0xf]
          %v11658 = vld [vmem:[#allocation17 + $0x24] sm:$0xf]
          %v11659 = vld [vmem:[#allocation17 + $0x28] sm:$0xf]
          %v11660 = vld [vmem:[#allocation17 + $0x2c] sm:$0xf]
          %v11661 = vld [vmem:[#allocation17 + $0x30] sm:$0xf]
          %v11662 = vld [vmem:[#allocation17 + $0x34] sm:$0xf]
          %v11663 = vld [vmem:[#allocation17 + $0x38] sm:$0xf]
          %v11664 = vld [vmem:[#allocation17 + $0x3c] sm:$0xf]
          %v11665 = vld [vmem:[#allocation17 + $0x40] sm:$0xf]
          %v11666 = vld [vmem:[#allocation17 + $0x44] sm:$0xf]
          %v11667 = vld [vmem:[#allocation17 + $0x48] sm:$0xf]
          %v11668 = vld [vmem:[#allocation17 + $0x4c] sm:$0xf]
          %v11669 = vld [vmem:[#allocation17 + $0x50] sm:$0xf]
          %v11670 = vld [vmem:[#allocation17 + $0x54] sm:$0xf]
          %v11671 = vld [vmem:[#allocation17 + $0x58] sm:$0xf]
          %v11672 = vld [vmem:[#allocation17 + $0x5c] sm:$0xf]
          %v11673 = vld [vmem:[#allocation17 + $0x60] sm:$0xf]
          %v11674 = vld [vmem:[#allocation17 + $0x64] sm:$0xf]
          %v11675 = vld [vmem:[#allocation17 + $0x68] sm:$0xf]
          %v11676 = vld [vmem:[#allocation17 + $0x6c] sm:$0xf]
          %v11677 = vld [vmem:[#allocation17 + $0x70] sm:$0xf]
          %v11678 = vld [vmem:[#allocation17 + $0x74] sm:$0xf]
          %v11679 = vld [vmem:[#allocation17 + $0x78] sm:$0xf]
          %v11680 = vld [vmem:[#allocation17 + $0x7c] sm:$0xf]
          %v11681 = vld [vmem:[#allocation17 + $0x80] sm:$0xf]
          %v11682 = vld [vmem:[#allocation17 + $0x84] sm:$0xf]
          %v11683 = vld [vmem:[#allocation17 + $0x88] sm:$0xf]
          %v11684 = vld [vmem:[#allocation17 + $0x8c] sm:$0xf]
          %v11685 = vld [vmem:[#allocation17 + $0x90] sm:$0xf]
          %v11686 = vld [vmem:[#allocation17 + $0x94] sm:$0xf]
          %v11687 = vld [vmem:[#allocation17 + $0x98] sm:$0xf]
          %v11688 = vld [vmem:[#allocation17 + $0x9c] sm:$0xf]
          %v11689 = vld [vmem:[#allocation17 + $0xa0] sm:$0xf]
          %v11690 = vld [vmem:[#allocation17 + $0xa4] sm:$0xf]
          %v11691 = vld [vmem:[#allocation17 + $0xa8] sm:$0xf]
          %v11692 = vld [vmem:[#allocation17 + $0xac] sm:$0xf]
          %v11693 = vld [vmem:[#allocation17 + $0xb0] sm:$0xf]
          %v11694 = vld [vmem:[#allocation17 + $0xb4] sm:$0xf]
          %v11695 = vld [vmem:[#allocation17 + $0xb8] sm:$0xf]
          %v11696 = vld [vmem:[#allocation17 + $0xbc] sm:$0xf]
          %v11697 = vld [vmem:[#allocation17 + $0xc0] sm:$0xf]
          %v11698 = vld [vmem:[#allocation17 + $0xc4] sm:$0xf]
          %v11699 = vld [vmem:[#allocation17 + $0xc8] sm:$0xf]
          %v11700 = vld [vmem:[#allocation17 + $0xcc] sm:$0xf]
          %v11701 = vld [vmem:[#allocation17 + $0xd0] sm:$0xf]
          %v11702 = vld [vmem:[#allocation17 + $0xd4] sm:$0xf]
          %v11703 = vld [vmem:[#allocation17 + $0xd8] sm:$0xf]
          %v11704 = vld [vmem:[#allocation17 + $0xdc] sm:$0xf]
          %v11705 = vld [vmem:[#allocation17 + $0xe0] sm:$0xf]
          %v11706 = vld [vmem:[#allocation17 + $0xe4] sm:$0xf]
          %v11707 = vld [vmem:[#allocation17 + $0xe8] sm:$0xf]
          %v11708 = vld [vmem:[#allocation17 + $0xec] sm:$0xf]
          %v11709 = vld [vmem:[#allocation17 + $0xf0] sm:$0xf]
          %v11710 = vld [vmem:[#allocation17 + $0xf4] sm:$0xf]
          %v11711 = vld [vmem:[#allocation17 + $0xf8] sm:$0xf]
          %v11712 = vld [vmem:[#allocation17 + $0xfc] sm:$0xf]
          %v11713 = vld [vmem:[#allocation18] sm:$0x1]
          %v11715 = vlaneseq
          %v11716 = vshrl.u32 %v11715, 7
          %v11717 = vsub.s32 0, %v11716
          %v11718 = vrot.slane %v11713, %v11717
          %v11784 = vunpack.c.l.b16 %v11649
          %v11785 = vunpack.c.l.b16 %v11650
          %v11786 = vunpack.c.l.b16 %v11651
          %v11787 = vunpack.c.l.b16 %v11652
          %v11788 = vunpack.c.l.b16 %v11653
          %v11789 = vunpack.c.l.b16 %v11654
          %v11790 = vunpack.c.l.b16 %v11655
          %v11791 = vunpack.c.l.b16 %v11656
          %v11792 = vunpack.c.l.b16 %v11657
          %v11793 = vunpack.c.l.b16 %v11658
          %v11794 = vunpack.c.l.b16 %v11659
          %v11795 = vunpack.c.l.b16 %v11660
          %v11796 = vunpack.c.l.b16 %v11661
          %v11797 = vunpack.c.l.b16 %v11662
          %v11798 = vunpack.c.l.b16 %v11663
          %v11799 = vunpack.c.l.b16 %v11664
          %v11800 = vunpack.c.l.b16 %v11665
          %v11801 = vunpack.c.l.b16 %v11666
          %v11802 = vunpack.c.l.b16 %v11667
          %v11803 = vunpack.c.l.b16 %v11668
          %v11804 = vunpack.c.l.b16 %v11669
          %v11805 = vunpack.c.l.b16 %v11670
          %v11806 = vunpack.c.l.b16 %v11671
          %v11807 = vunpack.c.l.b16 %v11672
          %v11808 = vunpack.c.l.b16 %v11673
          %v11809 = vunpack.c.l.b16 %v11674
          %v11810 = vunpack.c.l.b16 %v11675
          %v11811 = vunpack.c.l.b16 %v11676
          %v11812 = vunpack.c.l.b16 %v11677
          %v11813 = vunpack.c.l.b16 %v11678
          %v11814 = vunpack.c.l.b16 %v11679
          %v11815 = vunpack.c.l.b16 %v11680
          %v11816 = vunpack.c.l.b16 %v11681
          %v11817 = vunpack.c.l.b16 %v11682
          %v11818 = vunpack.c.l.b16 %v11683
          %v11819 = vunpack.c.l.b16 %v11684
          %v11820 = vunpack.c.l.b16 %v11685
          %v11821 = vunpack.c.l.b16 %v11686
          %v11822 = vunpack.c.l.b16 %v11687
          %v11823 = vunpack.c.l.b16 %v11688
          %v11824 = vunpack.c.l.b16 %v11689
          %v11825 = vunpack.c.l.b16 %v11690
          %v11826 = vunpack.c.l.b16 %v11691
          %v11827 = vunpack.c.l.b16 %v11692
          %v11828 = vunpack.c.l.b16 %v11693
          %v11829 = vunpack.c.l.b16 %v11694
          %v11830 = vunpack.c.l.b16 %v11695
          %v11831 = vunpack.c.l.b16 %v11696
          %v11832 = vunpack.c.l.b16 %v11697
          %v11833 = vunpack.c.l.b16 %v11698
          %v11834 = vunpack.c.l.b16 %v11699
          %v11835 = vunpack.c.l.b16 %v11700
          %v11836 = vunpack.c.l.b16 %v11701
          %v11837 = vunpack.c.l.b16 %v11702
          %v11838 = vunpack.c.l.b16 %v11703
          %v11839 = vunpack.c.l.b16 %v11704
          %v11840 = vunpack.c.l.b16 %v11705
          %v11841 = vunpack.c.l.b16 %v11706
          %v11842 = vunpack.c.l.b16 %v11707
          %v11843 = vunpack.c.l.b16 %v11708
          %v11844 = vunpack.c.l.b16 %v11709
          %v11845 = vunpack.c.l.b16 %v11710
          %v11846 = vunpack.c.l.b16 %v11711
          %v11847 = vunpack.c.l.b16 %v11712
          %v11848 = vpack.c.b16 %v11785, %v11784
          %v11849 = vpack.c.b16 %v11787, %v11786
          %v11850 = vpack.c.b16 %v11789, %v11788
          %v11851 = vpack.c.b16 %v11791, %v11790
          %v11852 = vpack.c.b16 %v11793, %v11792
          %v11853 = vpack.c.b16 %v11795, %v11794
          %v11854 = vpack.c.b16 %v11797, %v11796
          %v11855 = vpack.c.b16 %v11799, %v11798
          %v11856 = vpack.c.b16 %v11801, %v11800
          %v11857 = vpack.c.b16 %v11803, %v11802
          %v11858 = vpack.c.b16 %v11805, %v11804
          %v11859 = vpack.c.b16 %v11807, %v11806
          %v11860 = vpack.c.b16 %v11809, %v11808
          %v11861 = vpack.c.b16 %v11811, %v11810
          %v11862 = vpack.c.b16 %v11813, %v11812
          %v11863 = vpack.c.b16 %v11815, %v11814
          %v11864 = vpack.c.b16 %v11817, %v11816
          %v11865 = vpack.c.b16 %v11819, %v11818
          %v11866 = vpack.c.b16 %v11821, %v11820
          %v11867 = vpack.c.b16 %v11823, %v11822
          %v11868 = vpack.c.b16 %v11825, %v11824
          %v11869 = vpack.c.b16 %v11827, %v11826
          %v11870 = vpack.c.b16 %v11829, %v11828
          %v11871 = vpack.c.b16 %v11831, %v11830
          %v11872 = vpack.c.b16 %v11833, %v11832
          %v11873 = vpack.c.b16 %v11835, %v11834
          %v11874 = vpack.c.b16 %v11837, %v11836
          %v11875 = vpack.c.b16 %v11839, %v11838
          %v11876 = vpack.c.b16 %v11841, %v11840
          %v11877 = vpack.c.b16 %v11843, %v11842
          %v11878 = vpack.c.b16 %v11845, %v11844
          %v11879 = vpack.c.b16 %v11847, %v11846
          %11912 = vmatprep.subr.bf16.mxu0 0
          %11913 = vmatpush1.bf16.msra.mxu0 %v11848
          %11914 = vmatprep.subr.bf16.mxu0 0
          %11915 = vmatpush1.bf16.msra.mxu0 %v11849
          %11916 = vmatprep.subr.bf16.mxu0 0
          %11917 = vmatpush1.bf16.msra.mxu0 %v11850
          %11918 = vmatprep.subr.bf16.mxu0 0
          %11919 = vmatpush1.bf16.msra.mxu0 %v11851
          %11920 = vmatprep.subr.bf16.mxu0 0
          %11921 = vmatpush1.bf16.msra.mxu0 %v11852
          %11922 = vmatprep.subr.bf16.mxu0 0
          %11923 = vmatpush1.bf16.msra.mxu0 %v11853
          %11924 = vmatprep.subr.bf16.mxu0 0
          %11925 = vmatpush1.bf16.msra.mxu0 %v11854
          %11926 = vmatprep.subr.bf16.mxu0 0
          %11927 = vmatpush1.bf16.msra.mxu0 %v11855
          %11928 = vmatprep.subr.bf16.mxu0 0
          %11929 = vmatpush1.bf16.msra.mxu0 %v11856
          %11930 = vmatprep.subr.bf16.mxu0 0
          %11931 = vmatpush1.bf16.msra.mxu0 %v11857
          %11932 = vmatprep.subr.bf16.mxu0 0
          %11933 = vmatpush1.bf16.msra.mxu0 %v11858
          %11934 = vmatprep.subr.bf16.mxu0 0
          %11935 = vmatpush1.bf16.msra.mxu0 %v11859
          %11936 = vmatprep.subr.bf16.mxu0 0
          %11937 = vmatpush1.bf16.msra.mxu0 %v11860
          %11938 = vmatprep.subr.bf16.mxu0 0
          %11939 = vmatpush1.bf16.msra.mxu0 %v11861
          %11940 = vmatprep.subr.bf16.mxu0 0
          %11941 = vmatpush1.bf16.msra.mxu0 %v11862
          %11942 = vmatprep.subr.bf16.mxu0 0
          %11943 = vmatpush1.bf16.msra.mxu0 %v11863
          %11944 = vmatprep.mubr.bf16.mxu0 %v11646
          %11945 = vmatmul.mubr.bf16.gmra.mrb[0].mxu0 %v11645
          %v11946 = vpop.f32.mrb[0].mxu0
          %v11947 = vadd.f32 %v11718, %v11946
          %v11948 = vpop.f32.mrb[0].mxu0
          %v11949 = vpop.f32.mrb[0].mxu0
          %v11950 = vpop.f32.mrb[0].mxu0
          %11951 = vdwg.mxu0
          %11952 = vmatprep.subr.bf16.mxu0 0
          %11953 = vmatpush1.bf16.msra.mxu0 %v11864
          %11954 = vmatprep.subr.bf16.mxu0 0
          %11955 = vmatpush1.bf16.msra.mxu0 %v11865
          %11956 = vmatprep.subr.bf16.mxu0 0
          %11957 = vmatpush1.bf16.msra.mxu0 %v11866
          %11958 = vmatprep.subr.bf16.mxu0 0
          %11959 = vmatpush1.bf16.msra.mxu0 %v11867
          %11960 = vmatprep.subr.bf16.mxu0 0
          %11961 = vmatpush1.bf16.msra.mxu0 %v11868
          %11962 = vmatprep.subr.bf16.mxu0 0
          %11963 = vmatpush1.bf16.msra.mxu0 %v11869
          %11964 = vmatprep.subr.bf16.mxu0 0
          %11965 = vmatpush1.bf16.msra.mxu0 %v11870
          %11966 = vmatprep.subr.bf16.mxu0 0
          %11967 = vmatpush1.bf16.msra.mxu0 %v11871
          %11968 = vmatprep.subr.bf16.mxu0 0
          %11969 = vmatpush1.bf16.msra.mxu0 %v11872
          %11970 = vmatprep.subr.bf16.mxu0 0
          %11971 = vmatpush1.bf16.msra.mxu0 %v11873
          %11972 = vmatprep.subr.bf16.mxu0 0
          %11973 = vmatpush1.bf16.msra.mxu0 %v11874
          %11974 = vmatprep.subr.bf16.mxu0 0
          %11975 = vmatpush1.bf16.msra.mxu0 %v11875
          %11976 = vmatprep.subr.bf16.mxu0 0
          %11977 = vmatpush1.bf16.msra.mxu0 %v11876
          %11978 = vmatprep.subr.bf16.mxu0 0
          %11979 = vmatpush1.bf16.msra.mxu0 %v11877
          %11980 = vmatprep.subr.bf16.mxu0 0
          %11981 = vmatpush1.bf16.msra.mxu0 %v11878
          %11982 = vmatprep.subr.bf16.mxu0 0
          %11983 = vmatpush1.bf16.msra.mxu0 %v11879
          %11984 = vmatprep.mubr.bf16.mxu0 %v11648
          %11985 = vmatmul.mubr.bf16.gmra.mrb[0].mxu0 %v11647
          %v11986 = vpop.f32.mrb[0].mxu0
          %v11987 = vadd.f32 %v11947, %v11986
          %v11988 = vpop.f32.mrb[0].mxu0
          %v11989 = vpop.f32.mrb[0].mxu0
          %v11990 = vpop.f32.mrb[0].mxu0
          %11991 = vdwg.mxu0
          %11992 = vst [vmem:[#allocation20] sm:$0xff] %v11987
          %v11993 = vlaneseq
          %v11994 = vand.u32 %v11993, 127
          %vm11995 = vcmp.lt.s32.totalorder %v11994, 104
          %v11996 = vsel %vm11995, %v11987, -1e+30
          %11997 = vmax.xlane.f32.xlu0 %v11996
          %v11998 = vpop.xlane.xlu0 %11997
          %v11999 = vsub.f32 %v11996, %v11998
          %v12000 = vmul.f32 %v11999, 1.442695
          %v12001 = vpow.pop %v12000
          %12002 = vadd.xlane.f32.xlu0 %v12001
          %v12003 = vpop.xlane.xlu0 %12002
          %v12004 = vlog2.pop %v12003
          %v12005 = vmul.f32 %v12004, 0.6931472
          %v12006 = vadd.f32 %v11998, %v12005
          %v12007 = vld [vmem:[%s611] sm:$0xff]
          %12008 = vset.pattern.permute.xlu0 0
          %12009 = vperm.xlu0 %12008, %v12007
          %v12010 = vpop.permute.xlu0 %12009
          %vm12011 = vcmp.eq.s32.totalorder %v11994, %v12010
          %v12012 = vsel %vm12011, %v11987, 0.0
          %12013 = vadd.xlane.f32.xlu0 %v12012
          %v12014 = vpop.xlane.xlu0 %12013
          %v12015 = vlaneseq
          %v12016 = vshrl.u32 %v12015, 7
          %s12017 = smul.u32 %s39, 8
          %v12018 = vstv %s12017
          %v12019 = vadd.s32 %v12016, %v12018
          %vm12020 = vcmp.lt.s32.totalorder %v12019, 2
          %v12021 = vsub.f32 %v12006, %v12014
          %v12022 = vsel %vm12020, %v12021, 0.0
          %vm12023 = vcmask 7168
          %12024 = vst.msk [vmem:[%s615] sm:$0xff] %vm12023, %v12022
        $region112: #{tpu_custom_call.1} parent=63 // pred_fallthru
          _
        %p12025 = scmp.lt.s32.totalorder %s39, 0
        %s12026 = scalar_select %p12025, %s39, 0
        %s12027 = smul.addr %s12026, 8
        %s12028 = scalar_lea.vmem %s12, %s12027
        // Predicated region
        $region113: #{tpu_custom_call.1} parent=63 // pred_check
          %p12029 = pneg %p313
        $region114: #{tpu_custom_call.1} parent=63 // pred_check_branch
          %12031 = sbr.rel (%p12029) target = $region116
        $region115: #{tpu_custom_call.1} parent=63 // pred_region
          %s12033 = ssub.s32 128, 128
          %12034 = vsyncadd [#allocation5], %s12033
          %s12035 = smul.addr %s39, 128
          %s12036 = scalar_lea.hbm %s11, %s12035
          %s12038 = sshll.u32 [#allocation20], 4
          %s12039 = int_to_ptr.vmem [resolvable:$true] %s12038
          %12041 = dma.vmem_to_hbm [thread:$0]  %s12039, 128, %s12036, [#allocation5]
        $region116: #{tpu_custom_call.1} parent=63 // pred_fallthru
          _
        // Predicated region
        $region117: #{tpu_custom_call.1} parent=63 // pred_check
          %p12042 = pneg %p339
        $region118: #{tpu_custom_call.1} parent=63 // pred_check_branch
          %12044 = sbr.rel (%p12042) target = $region120
        $region119: #{tpu_custom_call.1} parent=63 // pred_region
          _
        $region120: #{tpu_custom_call.1} parent=63 // pred_fallthru
          _
        // Predicated region
        $region121: #{tpu_custom_call.1} parent=63 // pred_check
          %p12045 = pneg %p313
        $region122: #{tpu_custom_call.1} parent=63 // pred_check_branch
          %12047 = sbr.rel (%p12045) target = $region124
        $region123: #{tpu_custom_call.1} parent=63 // pred_region
          %12048 = dma.done [#allocation5], 128
        $region124: #{tpu_custom_call.1} parent=63 // pred_fallthru
          _
        // Predicated region
        $region125: #{tpu_custom_call.1} parent=63 // pred_check
          %p12049 = pneg %p339
        $region126: #{tpu_custom_call.1} parent=63 // pred_check_branch
          %12051 = sbr.rel (%p12049) target = $region128
        $region127: #{tpu_custom_call.1} parent=63 // pred_region
          %p12052 = scmp.lt.s32.totalorder %s39, 0
          %s12053 = scalar_select %p12052, %s39, 0
          %s12054 = smul.addr %s12053, 8
          %s12055 = scalar_lea.vmem %s12, %s12054
        $region128: #{tpu_custom_call.1} parent=63 // pred_fallthru
          _
      $region64: #{tpu_custom_call.1} parent=5 // pred_fallthru
        _
      %p12056 = scmp.le.s32.totalorder 2, %s30
      // Predicated region
      $region129: #{tpu_custom_call.1} parent=5 // pred_check
        %p12057 = pneg %p12056
      $region130: #{tpu_custom_call.1} parent=5 // pred_check_branch
        %12059 = sbr.rel (%p12057) target = $region132
      $region131: #{tpu_custom_call.1} parent=5 // pred_region
        %s12060 = ssub.s32 %s30, 2
      $region132: #{tpu_custom_call.1} parent=5 // pred_fallthru
        _
    $region6: #{tpu_custom_call.1} parent=1 // loop_footer
      %s34 = sadd.s32 1, %s30
    $region7: #{tpu_custom_call.1} parent=1 // loop_footer_branch
      %29 = sbr.rel target = $region3
    $region8: #{tpu_custom_call.1} parent=1 // loop_exit
      _
    %12061 = vsyncpa [#allocation4], 1
    %s12062 = scalar_lea.sflag [#allocation4], 1
    %12063 = vsyncpa %s12062, 1
    %12064 = vsyncpa [#allocation7], 1
    %s12065 = scalar_lea.sflag [#allocation7], 1
    %12066 = vsyncpa %s12065, 1
    %12067 = vsyncpa [#allocation10], 1
    %12068 = vsyncpa [#allocation13], 1
    %12069 = vsyncpa [#allocation16], 1
    %12070 = vsyncpa [#allocation19], 1
    %12071 = vsyncpa [#allocation5], 1
    %s12072 = scalar_lea.sflag [#allocation5], 1
    %12073 = vsyncpa %s12072, 1

</llo_original>
